<compile_context>
chip_gen: v6e
topology: v6e:2x2x1
jax: 0.10.0
libtpu: 0.0.40
codegen_flags: <defaults>
</compile_context>

<pallas_src>
import jax
import jax.numpy as jnp
from jax.experimental import pallas as pl
from jax.experimental.pallas import tpu as pltpu


# ----------------------------------------------------------------------------
# Fused Pallas kernel: one grid step == one eye (full batch).
# ----------------------------------------------------------------------------

def _eye_tower_kernel(x_ref, w1_ref, s1_ref, b1_ref, w2_ref, s2_ref, b2_ref,
                      fwp_ref, o_ref, pad1_ref, pad2_ref):
    """conv1+BN+ReLU -> conv2+BN+ReLU -> concat-pool -> per-eye FC partial.

    x_ref:    (B, H, W, C0)   f32  one eye, whole batch
    w1_ref:   (9*C0, C1)      bf16 im2col conv weights
    s1_ref:   (1, C1) f32     folded BN scale;  b1_ref: (1, C1) folded BN bias
    w2_ref:   (9*C1, C2)      bf16
    s2_ref:   (1, C2) f32;    b2_ref: (1, C2)
    fwp_ref:  (2*C2, Fout)    bf16  this eye's row-slice of the FC weight
    o_ref:    (1, B, Fout)    f32   this eye's partial FC output (no bias)
    pad*_ref: VMEM scratch for the spatially padded activations
    """
    B, H, W, _ = x_ref.shape
    C1 = s1_ref.shape[1]
    C2 = s2_ref.shape[1]

    def conv3x3_bn_relu(x, pad_ref, w_ref, s_ref, b_ref):
        cin = x.shape[-1]
        # Zero-pad H and W by 1 entirely inside VMEM.
        pad_ref[...] = jnp.zeros_like(pad_ref)
        pad_ref[:, 1:H + 1, 1:W + 1, :] = x
        # im2col: one MXU matmul with contraction depth 9*cin.
        cols = [pad_ref[:, dy:dy + H, dx:dx + W, :].reshape(B * H * W, cin)
                for dy in range(3) for dx in range(3)]
        patches = jnp.concatenate(cols, axis=1).astype(jnp.bfloat16)
        acc = jnp.dot(patches, w_ref[...], preferred_element_type=jnp.float32)
        # Folded BN + ReLU epilogue in f32.
        return jnp.maximum(acc * s_ref[...] + b_ref[...], 0.0)   # (B*H*W, cout)

    y1 = conv3x3_bn_relu(x_ref[...], pad1_ref, w1_ref, s1_ref, b1_ref)
    y2 = conv3x3_bn_relu(y1.reshape(B, H, W, C1), pad2_ref,
                         w2_ref, s2_ref, b2_ref)

    # AdaptiveConcatPool2d(1) + Flatten: [max, avg] per channel (fastai order).
    flat = y2.reshape(B, H * W, C2)
    mx = jnp.max(flat, axis=1)                       # (B, C2)
    av = jnp.mean(flat, axis=1)                      # (B, C2)
    feat = jnp.concatenate([mx, av], axis=1).astype(jnp.bfloat16)   # (B, 2*C2)

    # Per-eye partial of the head: cat([fl, fr], 1) @ W == fl@W[:2C2] + fr@W[2C2:]
    o_ref[0] = jnp.dot(feat, fwp_ref[...],
                       preferred_element_type=jnp.float32).astype(o_ref.dtype)


# ----------------------------------------------------------------------------
# Wrapper: single pallas_call for both eyes + tiny XLA epilogue.
# ----------------------------------------------------------------------------

def eye_model_forward(xl_nchw, xr_nchw, conv_params, fc_params):
    (w1, s1, b1), (w2, s2, b2) = conv_params
    fw, fb = fc_params

    # NCHW (PyTorch) -> NHWC; stack eyes along batch: rows [0:B]=left, [B:2B]=right.
    xl = jnp.transpose(xl_nchw, (0, 2, 3, 1)).astype(jnp.float32)
    xr = jnp.transpose(xr_nchw, (0, 2, 3, 1)).astype(jnp.float32)
    x = jnp.concatenate([xl, xr], axis=0)            # (2B, H, W, C0)

    B, H, W, C0 = xl.shape
    C1 = w1.shape[-1]
    C2 = w2.shape[-1]
    Fout = fw.shape[-1]

    # im2col weight layout + bf16 MXU operands (f32 accumulation in-kernel).
    w1i = w1.reshape(9 * C0, C1).astype(jnp.bfloat16)
    w2i = w2.reshape(9 * C1, C2).astype(jnp.bfloat16)
    fwi = fw.astype(jnp.bfloat16)                    # (4*C2, Fout)

    partials = pl.pallas_call(
        _eye_tower_kernel,
        out_shape=jax.ShapeDtypeStruct((2, B, Fout), jnp.float32),
        grid=(2,),                                   # one grid step per eye
        in_specs=[
            pl.BlockSpec((B, H, W, C0), lambda e: (e, 0, 0, 0)),   # this eye's batch
            pl.BlockSpec((9 * C0, C1), lambda e: (0, 0)),
            pl.BlockSpec((1, C1), lambda e: (0, 0)),
            pl.BlockSpec((1, C1), lambda e: (0, 0)),
            pl.BlockSpec((9 * C1, C2), lambda e: (0, 0)),
            pl.BlockSpec((1, C2), lambda e: (0, 0)),
            pl.BlockSpec((1, C2), lambda e: (0, 0)),
            pl.BlockSpec((2 * C2, Fout), lambda e: (e, 0)),        # per-eye FC rows
        ],
        out_specs=pl.BlockSpec((1, B, Fout), lambda e: (e, 0, 0)),
        scratch_shapes=[
            pltpu.VMEM((B, H + 2, W + 2, C0), jnp.float32),
            pltpu.VMEM((B, H + 2, W + 2, C1), jnp.float32),
        ],
        compiler_params=pltpu.CompilerParams(
            dimension_semantics=("parallel",)),      # v7x: one eye per TensorCore
    )(x, w1i, s1, b1, w2i, s2, b2, fwi)

    # Sum the per-eye partial products and add the FC bias (tiny; plain XLA).
    return partials[0] + partials[1] + fb


# ----------------------------------------------------------------------------
# Parameter init + pure-JAX reference (for a correctness sanity check).
# ----------------------------------------------------------------------------

def init_eye_model_params(key, layer_params):
    """Deterministic synthetic parameters. layer_params like [[4,8],[8,16],[64,10]]."""
    conv_params = []
    for cin, cout in layer_params[:-1]:
        key, k1, k2, k3 = jax.random.split(key, 4)
        w = (jax.random.normal(k1, (3, 3, cin, cout), jnp.float32)
             * (1.0 / (3 * 3 * cin) ** 0.5))
        gamma = 1.0 + 0.1 * jax.random.normal(k2, (1, cout), jnp.float32)
        beta = 0.1 * jax.random.normal(k3, (1, cout), jnp.float32)
        # Fold eval-mode BN (running_mean=0, running_var=1, eps=1e-5).
        scale = gamma / jnp.sqrt(1.0 + 1e-5)
        bias = beta
        conv_params.append((w, scale, bias))
    fin, fout = layer_params[-1]
    key, k1, k2 = jax.random.split(key, 3)
    fw = jax.random.normal(k1, (fin, fout), jnp.float32) * (1.0 / fin ** 0.5)
    fb = 0.1 * jax.random.normal(k2, (1, fout), jnp.float32)
    return conv_params, (fw, fb)


def _reference_forward(xl_nchw, xr_nchw, conv_params, fc_params):
    """Plain-JAX f32 reference of the same forward pass."""
    def cnn(x_nchw):
        x = jnp.transpose(x_nchw, (0, 2, 3, 1)).astype(jnp.float32)
        for w, scale, bias in conv_params:
            B, H, W, _ = x.shape
            cout = w.shape[-1]
            xp = jnp.pad(x, ((0, 0), (1, 1), (1, 1), (0, 0)))
            acc = jnp.zeros((B, H, W, cout), jnp.float32)
            for dy in range(3):
                for dx in range(3):
                    acc += jnp.einsum("bhwc,cd->bhwd",
                                      xp[:, dy:dy + H, dx:dx + W, :], w[dy, dx])
            x = jnp.maximum(acc * scale.reshape(1, 1, 1, cout)
                            + bias.reshape(1, 1, 1, cout), 0.0)
        B, H, W, C = x.shape
        flat = x.reshape(B, H * W, C)
        return jnp.concatenate([flat.max(axis=1), flat.mean(axis=1)], axis=1)

    fl = cnn(xl_nchw)
    fr = cnn(xr_nchw)
    fw, fb = fc_params
    return jnp.concatenate([fl, fr], axis=1) @ fw + fb


# ----------------------------------------------------------------------------

if __name__ == "__main__":
    # params = [[cin, cout], [cin, cout], [fc_in, fc_out]]
    # Last conv has 16 channels -> concat-pool gives 32 per eye -> 64 after cat.
    layer_params = [[4, 8], [8, 16], [64, 10]]

    key = jax.random.PRNGKey(0)
    kp, kl, kr = jax.random.split(key, 3)
    conv_params, fc_params = init_eye_model_params(kp, layer_params)

    B, C, H, W = 2, 4, 16, 16
    xl = jax.random.normal(kl, (B, C, H, W), jnp.float32)
    xr = jax.random.normal(kr, (B, C, H, W), jnp.float32)

    forward = jax.jit(eye_model_forward)
    out = forward(xl, xr, conv_params, fc_params)
    out = jax.block_until_ready(out)
    assert out.shape == (B, layer_params[-1][1]), out.shape

    # Loose tolerance: kernel uses bf16 MXU operands, reference is pure f32.
    ref = _reference_forward(xl, xr, conv_params, fc_params)
    max_err = float(jnp.max(jnp.abs(out - ref)))
    assert max_err < 1e-1, f"max abs error {max_err}"

    print("KERNEL_OK")
</pallas_src>

<mosaic_0001>
module attributes {stable_mosaic.version = 11 : i64} {
  func.func @_eye_tower_kernel(%arg0: i32, %arg1: memref<2x16x16x4xf32, #tpu.memory_space<vmem>>, %arg2: memref<36x8xbf16, #tpu.memory_space<vmem>>, %arg3: memref<1x8xf32, #tpu.memory_space<vmem>>, %arg4: memref<1x8xf32, #tpu.memory_space<vmem>>, %arg5: memref<72x16xbf16, #tpu.memory_space<vmem>>, %arg6: memref<1x16xf32, #tpu.memory_space<vmem>>, %arg7: memref<1x16xf32, #tpu.memory_space<vmem>>, %arg8: memref<32x10xbf16, #tpu.memory_space<vmem>>, %arg9: memref<1x2x10xf32, #tpu.memory_space<vmem>>, %arg10: memref<2x18x18x4xf32, #tpu.memory_space<vmem>>, %arg11: memref<2x18x18x8xf32, #tpu.memory_space<vmem>>) attributes {dimension_semantics = [#tpu.dimension_semantics<parallel>], iteration_bounds = array<i64: 2>, scalar_prefetch = 0 : i64, scratch_operands = 2 : i64, tpu.core_type = #tpu.core_type<tc>, window_params = [{transform_indices = @transform_0, window_bounds = array<i64: 2, 16, 16, 4>}, {pipeline_mode = #tpu.pipeline_mode<synchronous>, transform_indices = @transform_1, window_bounds = array<i64: 36, 8>}, {pipeline_mode = #tpu.pipeline_mode<synchronous>, transform_indices = @transform_2, window_bounds = array<i64: 1, 8>}, {pipeline_mode = #tpu.pipeline_mode<synchronous>, transform_indices = @transform_3, window_bounds = array<i64: 1, 8>}, {pipeline_mode = #tpu.pipeline_mode<synchronous>, transform_indices = @transform_4, window_bounds = array<i64: 72, 16>}, {pipeline_mode = #tpu.pipeline_mode<synchronous>, transform_indices = @transform_5, window_bounds = array<i64: 1, 16>}, {pipeline_mode = #tpu.pipeline_mode<synchronous>, transform_indices = @transform_6, window_bounds = array<i64: 1, 16>}, {transform_indices = @transform_7, window_bounds = array<i64: 32, 10>}, {transform_indices = @transform_8, window_bounds = array<i64: 1, 2, 10>}]} {
    %c0 = arith.constant 0 : index
    %c0_0 = arith.constant 0 : index
    %c0_1 = arith.constant 0 : index
    %c0_2 = arith.constant 0 : index
    %0 = vector.load %arg1[%c0, %c0_0, %c0_1, %c0_2] : memref<2x16x16x4xf32, #tpu.memory_space<vmem>>, vector<2x16x16x4xf32>
    %cst = arith.constant 0.000000e+00 : f32
    %1 = vector.broadcast %cst : f32 to vector<2x18x18x4xf32>
    %c0_3 = arith.constant 0 : index
    %c0_4 = arith.constant 0 : index
    %c0_5 = arith.constant 0 : index
    %c0_6 = arith.constant 0 : index
    %2 = vector.load %arg10[%c0_3, %c0_4, %c0_5, %c0_6] : memref<2x18x18x4xf32, #tpu.memory_space<vmem>>, vector<2x18x18x4xf32>
    tpu.vector_store %arg10[%c0_3, %c0_4, %c0_5, %c0_6], %1 {strides = array<i32>} : memref<2x18x18x4xf32, #tpu.memory_space<vmem>>, vector<2x18x18x4xf32>,
    %c0_7 = arith.constant 0 : index
    %c1 = arith.constant 1 : index
    %c1_8 = arith.constant 1 : index
    %c0_9 = arith.constant 0 : index
    %3 = vector.load %arg10[%c0_7, %c1, %c1_8, %c0_9] : memref<2x18x18x4xf32, #tpu.memory_space<vmem>>, vector<2x16x16x4xf32>
    tpu.vector_store %arg10[%c0_7, %c1, %c1_8, %c0_9], %0 {strides = array<i32>} : memref<2x18x18x4xf32, #tpu.memory_space<vmem>>, vector<2x16x16x4xf32>,
    %c0_10 = arith.constant 0 : index
    %c0_11 = arith.constant 0 : index
    %c0_12 = arith.constant 0 : index
    %c0_13 = arith.constant 0 : index
    %4 = vector.load %arg10[%c0_10, %c0_11, %c0_12, %c0_13] : memref<2x18x18x4xf32, #tpu.memory_space<vmem>>, vector<2x16x16x4xf32>
    %5 = vector.shape_cast %4 : vector<2x16x16x4xf32> to vector<512x4xf32>
    %c0_14 = arith.constant 0 : index
    %c0_15 = arith.constant 0 : index
    %c1_16 = arith.constant 1 : index
    %c0_17 = arith.constant 0 : index
    %6 = vector.load %arg10[%c0_14, %c0_15, %c1_16, %c0_17] : memref<2x18x18x4xf32, #tpu.memory_space<vmem>>, vector<2x16x16x4xf32>
    %7 = vector.shape_cast %6 : vector<2x16x16x4xf32> to vector<512x4xf32>
    %c0_18 = arith.constant 0 : index
    %c0_19 = arith.constant 0 : index
    %c2 = arith.constant 2 : index
    %c0_20 = arith.constant 0 : index
    %8 = vector.load %arg10[%c0_18, %c0_19, %c2, %c0_20] : memref<2x18x18x4xf32, #tpu.memory_space<vmem>>, vector<2x16x16x4xf32>
    %9 = vector.shape_cast %8 : vector<2x16x16x4xf32> to vector<512x4xf32>
    %c0_21 = arith.constant 0 : index
    %c1_22 = arith.constant 1 : index
    %c0_23 = arith.constant 0 : index
    %c0_24 = arith.constant 0 : index
    %10 = vector.load %arg10[%c0_21, %c1_22, %c0_23, %c0_24] : memref<2x18x18x4xf32, #tpu.memory_space<vmem>>, vector<2x16x16x4xf32>
    %11 = vector.shape_cast %10 : vector<2x16x16x4xf32> to vector<512x4xf32>
    %c0_25 = arith.constant 0 : index
    %c1_26 = arith.constant 1 : index
    %c1_27 = arith.constant 1 : index
    %c0_28 = arith.constant 0 : index
    %12 = vector.load %arg10[%c0_25, %c1_26, %c1_27, %c0_28] : memref<2x18x18x4xf32, #tpu.memory_space<vmem>>, vector<2x16x16x4xf32>
    %13 = vector.shape_cast %12 : vector<2x16x16x4xf32> to vector<512x4xf32>
    %c0_29 = arith.constant 0 : index
    %c1_30 = arith.constant 1 : index
    %c2_31 = arith.constant 2 : index
    %c0_32 = arith.constant 0 : index
    %14 = vector.load %arg10[%c0_29, %c1_30, %c2_31, %c0_32] : memref<2x18x18x4xf32, #tpu.memory_space<vmem>>, vector<2x16x16x4xf32>
    %15 = vector.shape_cast %14 : vector<2x16x16x4xf32> to vector<512x4xf32>
    %c0_33 = arith.constant 0 : index
    %c2_34 = arith.constant 2 : index
    %c0_35 = arith.constant 0 : index
    %c0_36 = arith.constant 0 : index
    %16 = vector.load %arg10[%c0_33, %c2_34, %c0_35, %c0_36] : memref<2x18x18x4xf32, #tpu.memory_space<vmem>>, vector<2x16x16x4xf32>
    %17 = vector.shape_cast %16 : vector<2x16x16x4xf32> to vector<512x4xf32>
    %c0_37 = arith.constant 0 : index
    %c2_38 = arith.constant 2 : index
    %c1_39 = arith.constant 1 : index
    %c0_40 = arith.constant 0 : index
    %18 = vector.load %arg10[%c0_37, %c2_38, %c1_39, %c0_40] : memref<2x18x18x4xf32, #tpu.memory_space<vmem>>, vector<2x16x16x4xf32>
    %19 = vector.shape_cast %18 : vector<2x16x16x4xf32> to vector<512x4xf32>
    %c0_41 = arith.constant 0 : index
    %c2_42 = arith.constant 2 : index
    %c2_43 = arith.constant 2 : index
    %c0_44 = arith.constant 0 : index
    %20 = vector.load %arg10[%c0_41, %c2_42, %c2_43, %c0_44] : memref<2x18x18x4xf32, #tpu.memory_space<vmem>>, vector<2x16x16x4xf32>
    %21 = vector.shape_cast %20 : vector<2x16x16x4xf32> to vector<512x4xf32>
    %22 = tpu.concatenate %5, %7, %9, %11, %13, %15, %17, %19, %21 in 1 : vector<512x4xf32>, vector<512x4xf32>, vector<512x4xf32>, vector<512x4xf32>, vector<512x4xf32>, vector<512x4xf32>, vector<512x4xf32>, vector<512x4xf32>, vector<512x4xf32> -> vector<512x36xf32>
    %23 = arith.truncf %22 : vector<512x36xf32> to vector<512x36xbf16>
    %c0_45 = arith.constant 0 : index
    %c0_46 = arith.constant 0 : index
    %24 = vector.load %arg2[%c0_45, %c0_46] : memref<36x8xbf16, #tpu.memory_space<vmem>>, vector<36x8xbf16>
    %cst_47 = arith.constant dense<0.000000e+00> : vector<512x8xf32>
    %25 = tpu.matmul %23, %24, %cst_47 {dimension_numbers = #tpu.dot_dimension_numbers<[1], [0], [0], [1], [0, 0, 1, 1], [], []>} : vector<512x36xbf16>, vector<36x8xbf16>, vector<512x8xf32> -> vector<512x8xf32>
    %c0_48 = arith.constant 0 : index
    %c0_49 = arith.constant 0 : index
    %26 = vector.load %arg3[%c0_48, %c0_49] : memref<1x8xf32, #tpu.memory_space<vmem>>, vector<1x8xf32>
    %27 = vector.broadcast %26 : vector<1x8xf32> to vector<512x8xf32>
    %28 = arith.mulf %25, %27 : vector<512x8xf32>
    %c0_50 = arith.constant 0 : index
    %c0_51 = arith.constant 0 : index
    %29 = vector.load %arg4[%c0_50, %c0_51] : memref<1x8xf32, #tpu.memory_space<vmem>>, vector<1x8xf32>
    %30 = vector.broadcast %29 : vector<1x8xf32> to vector<512x8xf32>
    %31 = arith.addf %28, %30 : vector<512x8xf32>
    %cst_52 = arith.constant 0.000000e+00 : f32
    %32 = vector.broadcast %cst_52 : f32 to vector<512x8xf32>
    %33 = arith.maximumf %31, %32 : vector<512x8xf32>
    %34 = vector.shape_cast %33 : vector<512x8xf32> to vector<2x16x16x8xf32>
    %cst_53 = arith.constant 0.000000e+00 : f32
    %35 = vector.broadcast %cst_53 : f32 to vector<2x18x18x8xf32>
    %c0_54 = arith.constant 0 : index
    %c0_55 = arith.constant 0 : index
    %c0_56 = arith.constant 0 : index
    %c0_57 = arith.constant 0 : index
    %36 = vector.load %arg11[%c0_54, %c0_55, %c0_56, %c0_57] : memref<2x18x18x8xf32, #tpu.memory_space<vmem>>, vector<2x18x18x8xf32>
    tpu.vector_store %arg11[%c0_54, %c0_55, %c0_56, %c0_57], %35 {strides = array<i32>} : memref<2x18x18x8xf32, #tpu.memory_space<vmem>>, vector<2x18x18x8xf32>,
    %c0_58 = arith.constant 0 : index
    %c1_59 = arith.constant 1 : index
    %c1_60 = arith.constant 1 : index
    %c0_61 = arith.constant 0 : index
    %37 = vector.load %arg11[%c0_58, %c1_59, %c1_60, %c0_61] : memref<2x18x18x8xf32, #tpu.memory_space<vmem>>, vector<2x16x16x8xf32>
    tpu.vector_store %arg11[%c0_58, %c1_59, %c1_60, %c0_61], %34 {strides = array<i32>} : memref<2x18x18x8xf32, #tpu.memory_space<vmem>>, vector<2x16x16x8xf32>,
    %c0_62 = arith.constant 0 : index
    %c0_63 = arith.constant 0 : index
    %c0_64 = arith.constant 0 : index
    %c0_65 = arith.constant 0 : index
    %38 = vector.load %arg11[%c0_62, %c0_63, %c0_64, %c0_65] : memref<2x18x18x8xf32, #tpu.memory_space<vmem>>, vector<2x16x16x8xf32>
    %39 = vector.shape_cast %38 : vector<2x16x16x8xf32> to vector<512x8xf32>
    %c0_66 = arith.constant 0 : index
    %c0_67 = arith.constant 0 : index
    %c1_68 = arith.constant 1 : index
    %c0_69 = arith.constant 0 : index
    %40 = vector.load %arg11[%c0_66, %c0_67, %c1_68, %c0_69] : memref<2x18x18x8xf32, #tpu.memory_space<vmem>>, vector<2x16x16x8xf32>
    %41 = vector.shape_cast %40 : vector<2x16x16x8xf32> to vector<512x8xf32>
    %c0_70 = arith.constant 0 : index
    %c0_71 = arith.constant 0 : index
    %c2_72 = arith.constant 2 : index
    %c0_73 = arith.constant 0 : index
    %42 = vector.load %arg11[%c0_70, %c0_71, %c2_72, %c0_73] : memref<2x18x18x8xf32, #tpu.memory_space<vmem>>, vector<2x16x16x8xf32>
    %43 = vector.shape_cast %42 : vector<2x16x16x8xf32> to vector<512x8xf32>
    %c0_74 = arith.constant 0 : index
    %c1_75 = arith.constant 1 : index
    %c0_76 = arith.constant 0 : index
    %c0_77 = arith.constant 0 : index
    %44 = vector.load %arg11[%c0_74, %c1_75, %c0_76, %c0_77] : memref<2x18x18x8xf32, #tpu.memory_space<vmem>>, vector<2x16x16x8xf32>
    %45 = vector.shape_cast %44 : vector<2x16x16x8xf32> to vector<512x8xf32>
    %c0_78 = arith.constant 0 : index
    %c1_79 = arith.constant 1 : index
    %c1_80 = arith.constant 1 : index
    %c0_81 = arith.constant 0 : index
    %46 = vector.load %arg11[%c0_78, %c1_79, %c1_80, %c0_81] : memref<2x18x18x8xf32, #tpu.memory_space<vmem>>, vector<2x16x16x8xf32>
    %47 = vector.shape_cast %46 : vector<2x16x16x8xf32> to vector<512x8xf32>
    %c0_82 = arith.constant 0 : index
    %c1_83 = arith.constant 1 : index
    %c2_84 = arith.constant 2 : index
    %c0_85 = arith.constant 0 : index
    %48 = vector.load %arg11[%c0_82, %c1_83, %c2_84, %c0_85] : memref<2x18x18x8xf32, #tpu.memory_space<vmem>>, vector<2x16x16x8xf32>
    %49 = vector.shape_cast %48 : vector<2x16x16x8xf32> to vector<512x8xf32>
    %c0_86 = arith.constant 0 : index
    %c2_87 = arith.constant 2 : index
    %c0_88 = arith.constant 0 : index
    %c0_89 = arith.constant 0 : index
    %50 = vector.load %arg11[%c0_86, %c2_87, %c0_88, %c0_89] : memref<2x18x18x8xf32, #tpu.memory_space<vmem>>, vector<2x16x16x8xf32>
    %51 = vector.shape_cast %50 : vector<2x16x16x8xf32> to vector<512x8xf32>
    %c0_90 = arith.constant 0 : index
    %c2_91 = arith.constant 2 : index
    %c1_92 = arith.constant 1 : index
    %c0_93 = arith.constant 0 : index
    %52 = vector.load %arg11[%c0_90, %c2_91, %c1_92, %c0_93] : memref<2x18x18x8xf32, #tpu.memory_space<vmem>>, vector<2x16x16x8xf32>
    %53 = vector.shape_cast %52 : vector<2x16x16x8xf32> to vector<512x8xf32>
    %c0_94 = arith.constant 0 : index
    %c2_95 = arith.constant 2 : index
    %c2_96 = arith.constant 2 : index
    %c0_97 = arith.constant 0 : index
    %54 = vector.load %arg11[%c0_94, %c2_95, %c2_96, %c0_97] : memref<2x18x18x8xf32, #tpu.memory_space<vmem>>, vector<2x16x16x8xf32>
    %55 = vector.shape_cast %54 : vector<2x16x16x8xf32> to vector<512x8xf32>
    %56 = tpu.concatenate %39, %41, %43, %45, %47, %49, %51, %53, %55 in 1 : vector<512x8xf32>, vector<512x8xf32>, vector<512x8xf32>, vector<512x8xf32>, vector<512x8xf32>, vector<512x8xf32>, vector<512x8xf32>, vector<512x8xf32>, vector<512x8xf32> -> vector<512x72xf32>
    %57 = arith.truncf %56 : vector<512x72xf32> to vector<512x72xbf16>
    %c0_98 = arith.constant 0 : index
    %c0_99 = arith.constant 0 : index
    %58 = vector.load %arg5[%c0_98, %c0_99] : memref<72x16xbf16, #tpu.memory_space<vmem>>, vector<72x16xbf16>
    %cst_100 = arith.constant dense<0.000000e+00> : vector<512x16xf32>
    %59 = tpu.matmul %57, %58, %cst_100 {dimension_numbers = #tpu.dot_dimension_numbers<[1], [0], [0], [1], [0, 0, 1, 1], [], []>} : vector<512x72xbf16>, vector<72x16xbf16>, vector<512x16xf32> -> vector<512x16xf32>
    %c0_101 = arith.constant 0 : index
    %c0_102 = arith.constant 0 : index
    %60 = vector.load %arg6[%c0_101, %c0_102] : memref<1x16xf32, #tpu.memory_space<vmem>>, vector<1x16xf32>
    %61 = vector.broadcast %60 : vector<1x16xf32> to vector<512x16xf32>
    %62 = arith.mulf %59, %61 : vector<512x16xf32>
    %c0_103 = arith.constant 0 : index
    %c0_104 = arith.constant 0 : index
    %63 = vector.load %arg7[%c0_103, %c0_104] : memref<1x16xf32, #tpu.memory_space<vmem>>, vector<1x16xf32>
    %64 = vector.broadcast %63 : vector<1x16xf32> to vector<512x16xf32>
    %65 = arith.addf %62, %64 : vector<512x16xf32>
    %cst_105 = arith.constant 0.000000e+00 : f32
    %66 = vector.broadcast %cst_105 : f32 to vector<512x16xf32>
    %67 = arith.maximumf %65, %66 : vector<512x16xf32>
    %68 = vector.shape_cast %67 : vector<512x16xf32> to vector<2x256x16xf32>
    %cst_106 = arith.constant dense<0xFF800000> : vector<2x16xf32>
    %69 = vector.multi_reduction <maximumf>, %68, %cst_106 [1] : vector<2x256x16xf32> to vector<2x16xf32>
    %cst_107 = arith.constant dense<0.000000e+00> : vector<2x16xf32>
    %70 = vector.multi_reduction <add>, %68, %cst_107 [1] : vector<2x256x16xf32> to vector<2x16xf32>
    %cst_108 = arith.constant 2.560000e+02 : f32
    %71 = vector.broadcast %cst_108 : f32 to vector<2x16xf32>
    %72 = arith.divf %70, %71 : vector<2x16xf32>
    %73 = tpu.concatenate %69, %72 in 1 : vector<2x16xf32>, vector<2x16xf32> -> vector<2x32xf32>
    %74 = arith.truncf %73 : vector<2x32xf32> to vector<2x32xbf16>
    %c0_109 = arith.constant 0 : index
    %c0_110 = arith.constant 0 : index
    %75 = vector.load %arg8[%c0_109, %c0_110] : memref<32x10xbf16, #tpu.memory_space<vmem>>, vector<32x10xbf16>
    %cst_111 = arith.constant dense<0.000000e+00> : vector<2x10xf32>
    %76 = tpu.matmul %74, %75, %cst_111 {dimension_numbers = #tpu.dot_dimension_numbers<[1], [0], [0], [1], [0, 0, 1, 1], [], []>} : vector<2x32xbf16>, vector<32x10xbf16>, vector<2x10xf32> -> vector<2x10xf32>
    %c0_112 = arith.constant 0 : index
    %c0_113 = arith.constant 0 : index
    %c0_114 = arith.constant 0 : index
    %77 = vector.load %arg9[%c0_112, %c0_113, %c0_114] : memref<1x2x10xf32, #tpu.memory_space<vmem>>, vector<1x2x10xf32>
    %78 = vector.shape_cast %77 : vector<1x2x10xf32> to vector<2x10xf32>
    %79 = vector.shape_cast %76 : vector<2x10xf32> to vector<1x2x10xf32>
    tpu.vector_store %arg9[%c0_112, %c0_113, %c0_114], %79 {strides = array<i32>} : memref<1x2x10xf32, #tpu.memory_space<vmem>>, vector<1x2x10xf32>,
    return
  }
  func.func @transform_0(%arg0: i32) -> (i32, i32, i32, i32) {
    %c0_i32 = arith.constant 0 : i32
    %c0_i32_0 = arith.constant 0 : i32
    %c0_i32_1 = arith.constant 0 : i32
    %c0_i32_2 = arith.constant 0 : i32
    return %arg0, %c0_i32, %c0_i32_0, %c0_i32_1 : i32, i32, i32, i32
  }
  func.func @transform_1(%arg0: i32) -> (i32, i32) {
    %c0_i32 = arith.constant 0 : i32
    %c0_i32_0 = arith.constant 0 : i32
    %c0_i32_1 = arith.constant 0 : i32
    return %c0_i32, %c0_i32_0 : i32, i32
  }
  func.func @transform_2(%arg0: i32) -> (i32, i32) {
    %c0_i32 = arith.constant 0 : i32
    %c0_i32_0 = arith.constant 0 : i32
    %c0_i32_1 = arith.constant 0 : i32
    return %c0_i32, %c0_i32_0 : i32, i32
  }
  func.func @transform_3(%arg0: i32) -> (i32, i32) {
    %c0_i32 = arith.constant 0 : i32
    %c0_i32_0 = arith.constant 0 : i32
    %c0_i32_1 = arith.constant 0 : i32
    return %c0_i32, %c0_i32_0 : i32, i32
  }
  func.func @transform_4(%arg0: i32) -> (i32, i32) {
    %c0_i32 = arith.constant 0 : i32
    %c0_i32_0 = arith.constant 0 : i32
    %c0_i32_1 = arith.constant 0 : i32
    return %c0_i32, %c0_i32_0 : i32, i32
  }
  func.func @transform_5(%arg0: i32) -> (i32, i32) {
    %c0_i32 = arith.constant 0 : i32
    %c0_i32_0 = arith.constant 0 : i32
    %c0_i32_1 = arith.constant 0 : i32
    return %c0_i32, %c0_i32_0 : i32, i32
  }
  func.func @transform_6(%arg0: i32) -> (i32, i32) {
    %c0_i32 = arith.constant 0 : i32
    %c0_i32_0 = arith.constant 0 : i32
    %c0_i32_1 = arith.constant 0 : i32
    return %c0_i32, %c0_i32_0 : i32, i32
  }
  func.func @transform_7(%arg0: i32) -> (i32, i32) {
    %c0_i32 = arith.constant 0 : i32
    %c0_i32_0 = arith.constant 0 : i32
    return %arg0, %c0_i32 : i32, i32
  }
  func.func @transform_8(%arg0: i32) -> (i32, i32, i32) {
    %c0_i32 = arith.constant 0 : i32
    %c0_i32_0 = arith.constant 0 : i32
    %c0_i32_1 = arith.constant 0 : i32
    return %arg0, %c0_i32, %c0_i32_0 : i32, i32, i32
  }
}

</mosaic_0001>

<llo_original>
// kernel: eye_model_forward.1
$region0: #{eye_model_forward.1}
  #allocation0 [shape = 'u32[]', space=smem, size = 0x4, offset = 0x4, fixed_abs, tag = 'smem constant byte address 0x4 - core index']
  #allocation1 [shape = 'u32[144,128]{1,0:T(1,128)}', space=vmem, size = 0x12000, scoped, tag = 'internal scratch']
  #allocation2 [shape = 'f32[2,18,18,4]{3,2,1,0:T(8,128)}', space=vmem, size = 0x6c000, scoped, tag = 'scratch operand']
  #allocation3 [shape = 'f32[2,18,18,8]{3,2,1,0:T(8,128)}', space=vmem, size = 0x6c000, scoped, tag = 'scratch operand']
  %s0 = inlined_call_operand.vmem [shape: f32[4,16,16,4], index: 0, kind: input, shape index: {}]
  %s1 = inlined_call_operand.vmem [shape: bf16[36,8], index: 1, kind: input, shape index: {}]
  %s2 = inlined_call_operand.vmem [shape: f32[1,8], index: 2, kind: input, shape index: {}]
  %s3 = inlined_call_operand.vmem [shape: f32[1,8], index: 3, kind: input, shape index: {}]
  %s4 = inlined_call_operand.vmem [shape: bf16[72,16], index: 4, kind: input, shape index: {}]
  %s5 = inlined_call_operand.vmem [shape: f32[1,16], index: 5, kind: input, shape index: {}]
  %s6 = inlined_call_operand.vmem [shape: f32[1,16], index: 6, kind: input, shape index: {}]
  %s7 = inlined_call_operand.vmem [shape: bf16[64,10], index: 7, kind: input, shape index: {}]
  %s8 = inlined_call_operand.vmem [shape: f32[2,2,10], index: 8, kind: output, shape index: {}]
  %s9 = sld [smem:[#allocation0]]
  $region65: #{eye_model_forward.1} parent=0
    _
  %s11 = ssub.s32 1, %s9
  %s12 = scalar_select 0, %s11, %s9
  loop: start=0, step=1, limit=4
  $region2: #{eye_model_forward.1} parent=0 // loop_pre_header
    _
  $region3: #{eye_model_forward.1} parent=0 // loop_header
    %s14 = sphi 0, %s18
    %p15 = scmp.ge.s32.totalorder %s14, 4
    %s24 = sphi 0, %s26
    %s27 = sphi 0, %s24
    %s28 = sphi 0, %s27
    %s44 = sphi 0, %s28
    %s48 = sphi 0, %s48
    %s50 = sphi 0, %s48
    %s51 = sphi 0, %s50
    %s65 = sphi 0, %s51
    %s69 = sphi 0, %s69
    %s71 = sphi 0, %s69
    %s72 = sphi 0, %s71
    %s86 = sphi 0, %s72
    %s90 = sphi 0, %s90
    %s92 = sphi 0, %s90
    %s93 = sphi 0, %s92
    %s107 = sphi 0, %s93
    %s111 = sphi 0, %s111
    %s113 = sphi 0, %s111
    %s114 = sphi 0, %s113
    %s128 = sphi 0, %s114
    %s132 = sphi 0, %s132
    %s134 = sphi 0, %s132
    %s135 = sphi 0, %s134
    %s149 = sphi 0, %s135
    %s153 = sphi 0, %s153
    %s155 = sphi 0, %s153
    %s156 = sphi 0, %s155
    %s170 = sphi 0, %s156
    %s176 = sphi 0, %s178
    %s179 = sphi 0, %s176
    %s180 = sphi 0, %s179
    %s196 = sphi 0, %s180
    %s202 = sphi 0, %s204
    %s205 = sphi 0, %s202
    %s206 = sphi 0, %s205
    %s222 = sphi 0, %s206
  $region4: #{eye_model_forward.1} parent=0 // loop_header_branch
    %17 = sbr.rel (%p15) target = $region8
  $region5: #{eye_model_forward.1} parent=0 // loop_body
    %s19 = ssub.s32 %s14, 1
    %s20 = ssub.s32 %s14, 2
    %s21 = sadd.s32 %s14, 1
    %s22 = ssub.s32 %s14, %s21
    %p23 = scmp.eq.s32.totalorder %s22, 0
    %s25 = sadd.s32 %s24, 1
    %s26 = scalar_select %p23, %s24, %s25
    %p29 = pneg %p23
    %p30 = scmp.eq.s32.totalorder %s14, 1
    %p31 = por %p29, %p30
    %p32 = scmp.ne.s32.totalorder %s24, %s27
    %p33 = scmp.eq.s32.totalorder %s14, 0
    %p34 = por %p32, %p33
    %p35 = scmp.ne.s32.totalorder %s24, %s27
    %p36 = scmp.eq.s32.totalorder %s19, 1
    %p37 = por %p35, %p36
    %p38 = scmp.ne.s32.totalorder %s27, %s28
    %p39 = scmp.eq.s32.totalorder %s19, 0
    %p40 = por %p38, %p39
    %p41 = scmp.ne.s32.totalorder %s27, %s28
    %p42 = scmp.eq.s32.totalorder %s20, 1
    %p43 = por %p41, %p42
    %p45 = scmp.ne.s32.totalorder %s28, %s44
    %p46 = scmp.eq.s32.totalorder %s20, 0
    %p47 = por %p45, %p46
    %s49 = sadd.s32 %s48, 1
    %p52 = scmp.eq.s32.totalorder %s14, 1
    %p53 = scmp.ne.s32.totalorder %s48, %s50
    %p54 = scmp.eq.s32.totalorder %s14, 0
    %p55 = por %p53, %p54
    %p56 = scmp.ne.s32.totalorder %s48, %s50
    %p57 = scmp.eq.s32.totalorder %s19, 1
    %p58 = por %p56, %p57
    %p59 = scmp.ne.s32.totalorder %s50, %s51
    %p60 = scmp.eq.s32.totalorder %s19, 0
    %p61 = por %p59, %p60
    %p62 = scmp.ne.s32.totalorder %s50, %s51
    %p63 = scmp.eq.s32.totalorder %s20, 1
    %p64 = por %p62, %p63
    %p66 = scmp.ne.s32.totalorder %s51, %s65
    %p67 = scmp.eq.s32.totalorder %s20, 0
    %p68 = por %p66, %p67
    %s70 = sadd.s32 %s69, 1
    %p73 = scmp.eq.s32.totalorder %s14, 1
    %p74 = scmp.ne.s32.totalorder %s69, %s71
    %p75 = scmp.eq.s32.totalorder %s14, 0
    %p76 = por %p74, %p75
    %p77 = scmp.ne.s32.totalorder %s69, %s71
    %p78 = scmp.eq.s32.totalorder %s19, 1
    %p79 = por %p77, %p78
    %p80 = scmp.ne.s32.totalorder %s71, %s72
    %p81 = scmp.eq.s32.totalorder %s19, 0
    %p82 = por %p80, %p81
    %p83 = scmp.ne.s32.totalorder %s71, %s72
    %p84 = scmp.eq.s32.totalorder %s20, 1
    %p85 = por %p83, %p84
    %p87 = scmp.ne.s32.totalorder %s72, %s86
    %p88 = scmp.eq.s32.totalorder %s20, 0
    %p89 = por %p87, %p88
    %s91 = sadd.s32 %s90, 1
    %p94 = scmp.eq.s32.totalorder %s14, 1
    %p95 = scmp.ne.s32.totalorder %s90, %s92
    %p96 = scmp.eq.s32.totalorder %s14, 0
    %p97 = por %p95, %p96
    %p98 = scmp.ne.s32.totalorder %s90, %s92
    %p99 = scmp.eq.s32.totalorder %s19, 1
    %p100 = por %p98, %p99
    %p101 = scmp.ne.s32.totalorder %s92, %s93
    %p102 = scmp.eq.s32.totalorder %s19, 0
    %p103 = por %p101, %p102
    %p104 = scmp.ne.s32.totalorder %s92, %s93
    %p105 = scmp.eq.s32.totalorder %s20, 1
    %p106 = por %p104, %p105
    %p108 = scmp.ne.s32.totalorder %s93, %s107
    %p109 = scmp.eq.s32.totalorder %s20, 0
    %p110 = por %p108, %p109
    %s112 = sadd.s32 %s111, 1
    %p115 = scmp.eq.s32.totalorder %s14, 1
    %p116 = scmp.ne.s32.totalorder %s111, %s113
    %p117 = scmp.eq.s32.totalorder %s14, 0
    %p118 = por %p116, %p117
    %p119 = scmp.ne.s32.totalorder %s111, %s113
    %p120 = scmp.eq.s32.totalorder %s19, 1
    %p121 = por %p119, %p120
    %p122 = scmp.ne.s32.totalorder %s113, %s114
    %p123 = scmp.eq.s32.totalorder %s19, 0
    %p124 = por %p122, %p123
    %p125 = scmp.ne.s32.totalorder %s113, %s114
    %p126 = scmp.eq.s32.totalorder %s20, 1
    %p127 = por %p125, %p126
    %p129 = scmp.ne.s32.totalorder %s114, %s128
    %p130 = scmp.eq.s32.totalorder %s20, 0
    %p131 = por %p129, %p130
    %s133 = sadd.s32 %s132, 1
    %p136 = scmp.eq.s32.totalorder %s14, 1
    %p137 = scmp.ne.s32.totalorder %s132, %s134
    %p138 = scmp.eq.s32.totalorder %s14, 0
    %p139 = por %p137, %p138
    %p140 = scmp.ne.s32.totalorder %s132, %s134
    %p141 = scmp.eq.s32.totalorder %s19, 1
    %p142 = por %p140, %p141
    %p143 = scmp.ne.s32.totalorder %s134, %s135
    %p144 = scmp.eq.s32.totalorder %s19, 0
    %p145 = por %p143, %p144
    %p146 = scmp.ne.s32.totalorder %s134, %s135
    %p147 = scmp.eq.s32.totalorder %s20, 1
    %p148 = por %p146, %p147
    %p150 = scmp.ne.s32.totalorder %s135, %s149
    %p151 = scmp.eq.s32.totalorder %s20, 0
    %p152 = por %p150, %p151
    %s154 = sadd.s32 %s153, 1
    %p157 = scmp.eq.s32.totalorder %s14, 1
    %p158 = scmp.ne.s32.totalorder %s153, %s155
    %p159 = scmp.eq.s32.totalorder %s14, 0
    %p160 = por %p158, %p159
    %p161 = scmp.ne.s32.totalorder %s153, %s155
    %p162 = scmp.eq.s32.totalorder %s19, 1
    %p163 = por %p161, %p162
    %p164 = scmp.ne.s32.totalorder %s155, %s156
    %p165 = scmp.eq.s32.totalorder %s19, 0
    %p166 = por %p164, %p165
    %p167 = scmp.ne.s32.totalorder %s155, %s156
    %p168 = scmp.eq.s32.totalorder %s20, 1
    %p169 = por %p167, %p168
    %p171 = scmp.ne.s32.totalorder %s156, %s170
    %p172 = scmp.eq.s32.totalorder %s20, 0
    %p173 = por %p171, %p172
    %s174 = ssub.s32 %s14, %s21
    %p175 = scmp.eq.s32.totalorder %s174, 0
    %s177 = sadd.s32 %s176, 1
    %s178 = scalar_select %p175, %s176, %s177
    %p181 = pneg %p175
    %p182 = scmp.eq.s32.totalorder %s14, 1
    %p183 = por %p181, %p182
    %p184 = scmp.ne.s32.totalorder %s176, %s179
    %p185 = scmp.eq.s32.totalorder %s14, 0
    %p186 = por %p184, %p185
    %p187 = scmp.ne.s32.totalorder %s176, %s179
    %p188 = scmp.eq.s32.totalorder %s19, 1
    %p189 = por %p187, %p188
    %p190 = scmp.ne.s32.totalorder %s179, %s180
    %p191 = scmp.eq.s32.totalorder %s19, 0
    %p192 = por %p190, %p191
    %p193 = scmp.ne.s32.totalorder %s179, %s180
    %p194 = scmp.eq.s32.totalorder %s20, 1
    %p195 = por %p193, %p194
    %p197 = scmp.ne.s32.totalorder %s180, %s196
    %p198 = scmp.eq.s32.totalorder %s20, 0
    %p199 = por %p197, %p198
    %s200 = ssub.s32 %s14, %s21
    %p201 = scmp.eq.s32.totalorder %s200, 0
    %s203 = sadd.s32 %s202, 1
    %s204 = scalar_select %p201, %s202, %s203
    %p207 = pneg %p201
    %p208 = scmp.eq.s32.totalorder %s14, 1
    %p209 = por %p207, %p208
    %p210 = scmp.ne.s32.totalorder %s202, %s205
    %p211 = scmp.eq.s32.totalorder %s14, 0
    %p212 = por %p210, %p211
    %p213 = scmp.ne.s32.totalorder %s202, %s205
    %p214 = scmp.eq.s32.totalorder %s19, 1
    %p215 = por %p213, %p214
    %p216 = scmp.ne.s32.totalorder %s205, %s206
    %p217 = scmp.eq.s32.totalorder %s19, 0
    %p218 = por %p216, %p217
    %p219 = scmp.ne.s32.totalorder %s205, %s206
    %p220 = scmp.eq.s32.totalorder %s20, 1
    %p221 = por %p219, %p220
    %p223 = scmp.ne.s32.totalorder %s206, %s222
    %p224 = scmp.eq.s32.totalorder %s20, 0
    %p225 = por %p223, %p224
    %p226 = scmp.le.s32.totalorder 1, %s14
    %p227 = scmp.lt.s32.totalorder %s14, 3
    %p228 = pnand %p226, %p227
    %p229 = pneg %p228
    // Predicated region
    $region9: #{eye_model_forward.1} parent=5 // pred_check
      _
    $region10: #{eye_model_forward.1} parent=5 // pred_check_branch
      %231 = sbr.rel (%p228) target = $region12
    $region11: #{eye_model_forward.1} parent=5 // pred_region
      %s232 = ssub.s32 %s14, 1
      // Predicated region
      $region13: #{eye_model_forward.1} parent=11 // pred_check
        %p233 = pneg %p61
      $region14: #{eye_model_forward.1} parent=11 // pred_check_branch
        %235 = sbr.rel (%p233) target = $region16
      $region15: #{eye_model_forward.1} parent=11 // pred_region
        _
      $region16: #{eye_model_forward.1} parent=11 // pred_fallthru
        _
      // Predicated region
      $region17: #{eye_model_forward.1} parent=11 // pred_check
        %p236 = pneg %p82
      $region18: #{eye_model_forward.1} parent=11 // pred_check_branch
        %238 = sbr.rel (%p236) target = $region20
      $region19: #{eye_model_forward.1} parent=11 // pred_region
        _
      $region20: #{eye_model_forward.1} parent=11 // pred_fallthru
        _
      // Predicated region
      $region21: #{eye_model_forward.1} parent=11 // pred_check
        %p239 = pneg %p103
      $region22: #{eye_model_forward.1} parent=11 // pred_check_branch
        %241 = sbr.rel (%p239) target = $region24
      $region23: #{eye_model_forward.1} parent=11 // pred_region
        _
      $region24: #{eye_model_forward.1} parent=11 // pred_fallthru
        _
      // Predicated region
      $region25: #{eye_model_forward.1} parent=11 // pred_check
        %p242 = pneg %p124
      $region26: #{eye_model_forward.1} parent=11 // pred_check_branch
        %244 = sbr.rel (%p242) target = $region28
      $region27: #{eye_model_forward.1} parent=11 // pred_region
        _
      $region28: #{eye_model_forward.1} parent=11 // pred_fallthru
        _
      // Predicated region
      $region29: #{eye_model_forward.1} parent=11 // pred_check
        %p245 = pneg %p145
      $region30: #{eye_model_forward.1} parent=11 // pred_check_branch
        %247 = sbr.rel (%p245) target = $region32
      $region31: #{eye_model_forward.1} parent=11 // pred_region
        _
      $region32: #{eye_model_forward.1} parent=11 // pred_fallthru
        _
      // Predicated region
      $region33: #{eye_model_forward.1} parent=11 // pred_check
        %p248 = pneg %p166
      $region34: #{eye_model_forward.1} parent=11 // pred_check_branch
        %250 = sbr.rel (%p248) target = $region36
      $region35: #{eye_model_forward.1} parent=11 // pred_region
        _
      $region36: #{eye_model_forward.1} parent=11 // pred_fallthru
        _
    $region12: #{eye_model_forward.1} parent=5 // pred_fallthru
      _
    %p251 = scmp.lt.s32.totalorder %s14, 2
    // Predicated region
    $region37: #{eye_model_forward.1} parent=5 // pred_check
      %p252 = pneg %p251
    $region38: #{eye_model_forward.1} parent=5 // pred_check_branch
      %254 = sbr.rel (%p252) target = $region40
    $region39: #{eye_model_forward.1} parent=5 // pred_region
      // Predicated region
      $region41: #{eye_model_forward.1} parent=39 // pred_check
        %p255 = pneg %p34
      $region42: #{eye_model_forward.1} parent=39 // pred_check_branch
        %257 = sbr.rel (%p255) target = $region44
      $region43: #{eye_model_forward.1} parent=39 // pred_region
        %s258 = smul.u32 2, %s14
        %p259 = scmp.lt.s32.totalorder %s258, 3
        %s260 = scalar_select %p259, %s258, 3
        %s261 = smul.addr %s260, 32
        %s262 = smul.addr %s261, 8
        %s263 = scalar_lea.vmem %s0, %s262
        %s264 = smul.u32 2, %s14
      $region44: #{eye_model_forward.1} parent=39 // pred_fallthru
        _
      // Predicated region
      $region45: #{eye_model_forward.1} parent=39 // pred_check
        %p265 = pneg %p186
      $region46: #{eye_model_forward.1} parent=39 // pred_check_branch
        %267 = sbr.rel (%p265) target = $region48
      $region47: #{eye_model_forward.1} parent=39 // pred_region
        %s268 = smul.u32 4, %s14
        %p269 = scmp.lt.s32.totalorder %s268, 7
        %s270 = scalar_select %p269, %s268, 7
        %s271 = smul.addr %s270, 4
        %s272 = scalar_lea.vmem %s7, %s271
        %s273 = smul.u32 4, %s14
      $region48: #{eye_model_forward.1} parent=39 // pred_fallthru
        _
    $region40: #{eye_model_forward.1} parent=5 // pred_fallthru
      _
    %p274 = scmp.le.s32.totalorder 1, %s14
    %p275 = scmp.lt.s32.totalorder %s14, 3
    %p276 = pnand %p274, %p275
    %p277 = pneg %p276
    // Predicated region
    $region49: #{eye_model_forward.1} parent=5 // pred_check
      _
    $region50: #{eye_model_forward.1} parent=5 // pred_check_branch
      %279 = sbr.rel (%p276) target = $region52
    $region51: #{eye_model_forward.1} parent=5 // pred_region
      %s280 = ssub.s32 %s14, 1
      %s281 = smul.u32 2, %s19
      %p282 = scmp.lt.s32.totalorder %s281, 3
      %s283 = scalar_select %p282, %s281, 3
      %s284 = smul.addr %s283, 32
      %s285 = smul.addr %s284, 8
      %s286 = scalar_lea.vmem %s0, %s285
      %p287 = pneg %p40
      %p288 = pneg %p37
      %p289 = pneg %p61
      %p290 = pneg %p58
      %p291 = pneg %p82
      %p292 = pneg %p79
      %p293 = pneg %p103
      %p294 = pneg %p100
      %p295 = pneg %p124
      %p296 = pneg %p121
      %p297 = pneg %p145
      %p298 = pneg %p142
      %p299 = pneg %p166
      %p300 = pneg %p163
      %s301 = smul.u32 4, %s19
      %p302 = scmp.lt.s32.totalorder %s301, 7
      %s303 = scalar_select %p302, %s301, 7
      %s304 = smul.addr %s303, 4
      %s305 = scalar_lea.vmem %s7, %s304
      %p306 = pneg %p192
      %p307 = pneg %p189
      %p308 = pneg %p218
      %p309 = pneg %p215
      %p310 = scmp.lt.s32.totalorder %s19, 1
      %s311 = scalar_select %p310, %s19, 1
      %s312 = smul.addr %s311, 2
      %s313 = scalar_lea.vmem %s8, %s312
      %s314 = smul.u32 2, %s19
      %p315 = scmp.lt.s32.totalorder %s314, 3
      %s316 = scalar_select %p315, %s314, 3
      %s317 = smul.addr %s316, 32
      %s318 = smul.addr %s317, 8
      %s319 = scalar_lea.vmem %s0, %s318
      %s320 = smul.u32 2, %s19
      %s321 = smul.u32 4, %s19
      %p322 = scmp.lt.s32.totalorder %s321, 7
      %s323 = scalar_select %p322, %s321, 7
      %s324 = smul.addr %s323, 4
      %s325 = scalar_lea.vmem %s7, %s324
      %s326 = smul.u32 4, %s19
      %p327 = scmp.lt.s32.totalorder %s19, 1
      %s328 = scalar_select %p327, %s19, 1
      %s329 = smul.addr %s328, 2
      %s330 = scalar_lea.vmem %s8, %s329
      %v332 = vld [vmem:[%s319] sm:$0xff]
      %v333 = vld [vmem:[%s319 + $0x8] sm:$0xff]
      %v334 = vld [vmem:[%s319 + $0x10] sm:$0xff]
      %v335 = vld [vmem:[%s319 + $0x18] sm:$0xff]
      %v336 = vld [vmem:[%s319 + $0x20] sm:$0xff]
      %v337 = vld [vmem:[%s319 + $0x28] sm:$0xff]
      %v338 = vld [vmem:[%s319 + $0x30] sm:$0xff]
      %v339 = vld [vmem:[%s319 + $0x38] sm:$0xff]
      %v340 = vld [vmem:[%s319 + $0x40] sm:$0xff]
      %v341 = vld [vmem:[%s319 + $0x48] sm:$0xff]
      %v342 = vld [vmem:[%s319 + $0x50] sm:$0xff]
      %v343 = vld [vmem:[%s319 + $0x58] sm:$0xff]
      %v344 = vld [vmem:[%s319 + $0x60] sm:$0xff]
      %v345 = vld [vmem:[%s319 + $0x68] sm:$0xff]
      %v346 = vld [vmem:[%s319 + $0x70] sm:$0xff]
      %v347 = vld [vmem:[%s319 + $0x78] sm:$0xff]
      %v348 = vld [vmem:[%s319 + $0x80] sm:$0xff]
      %v349 = vld [vmem:[%s319 + $0x88] sm:$0xff]
      %v350 = vld [vmem:[%s319 + $0x90] sm:$0xff]
      %v351 = vld [vmem:[%s319 + $0x98] sm:$0xff]
      %v352 = vld [vmem:[%s319 + $0xa0] sm:$0xff]
      %v353 = vld [vmem:[%s319 + $0xa8] sm:$0xff]
      %v354 = vld [vmem:[%s319 + $0xb0] sm:$0xff]
      %v355 = vld [vmem:[%s319 + $0xb8] sm:$0xff]
      %v356 = vld [vmem:[%s319 + $0xc0] sm:$0xff]
      %v357 = vld [vmem:[%s319 + $0xc8] sm:$0xff]
      %v358 = vld [vmem:[%s319 + $0xd0] sm:$0xff]
      %v359 = vld [vmem:[%s319 + $0xd8] sm:$0xff]
      %v360 = vld [vmem:[%s319 + $0xe0] sm:$0xff]
      %v361 = vld [vmem:[%s319 + $0xe8] sm:$0xff]
      %v362 = vld [vmem:[%s319 + $0xf0] sm:$0xff]
      %v363 = vld [vmem:[%s319 + $0xf8] sm:$0xff]
      %v364 = vld [vmem:[%s319 + $0x100] sm:$0xff]
      %v365 = vld [vmem:[%s319 + $0x108] sm:$0xff]
      %v366 = vld [vmem:[%s319 + $0x110] sm:$0xff]
      %v367 = vld [vmem:[%s319 + $0x118] sm:$0xff]
      %v368 = vld [vmem:[%s319 + $0x120] sm:$0xff]
      %v369 = vld [vmem:[%s319 + $0x128] sm:$0xff]
      %v370 = vld [vmem:[%s319 + $0x130] sm:$0xff]
      %v371 = vld [vmem:[%s319 + $0x138] sm:$0xff]
      %v372 = vld [vmem:[%s319 + $0x140] sm:$0xff]
      %v373 = vld [vmem:[%s319 + $0x148] sm:$0xff]
      %v374 = vld [vmem:[%s319 + $0x150] sm:$0xff]
      %v375 = vld [vmem:[%s319 + $0x158] sm:$0xff]
      %v376 = vld [vmem:[%s319 + $0x160] sm:$0xff]
      %v377 = vld [vmem:[%s319 + $0x168] sm:$0xff]
      %v378 = vld [vmem:[%s319 + $0x170] sm:$0xff]
      %v379 = vld [vmem:[%s319 + $0x178] sm:$0xff]
      %v380 = vld [vmem:[%s319 + $0x180] sm:$0xff]
      %v381 = vld [vmem:[%s319 + $0x188] sm:$0xff]
      %v382 = vld [vmem:[%s319 + $0x190] sm:$0xff]
      %v383 = vld [vmem:[%s319 + $0x198] sm:$0xff]
      %v384 = vld [vmem:[%s319 + $0x1a0] sm:$0xff]
      %v385 = vld [vmem:[%s319 + $0x1a8] sm:$0xff]
      %v386 = vld [vmem:[%s319 + $0x1b0] sm:$0xff]
      %v387 = vld [vmem:[%s319 + $0x1b8] sm:$0xff]
      %v388 = vld [vmem:[%s319 + $0x1c0] sm:$0xff]
      %v389 = vld [vmem:[%s319 + $0x1c8] sm:$0xff]
      %v390 = vld [vmem:[%s319 + $0x1d0] sm:$0xff]
      %v391 = vld [vmem:[%s319 + $0x1d8] sm:$0xff]
      %v392 = vld [vmem:[%s319 + $0x1e0] sm:$0xff]
      %v393 = vld [vmem:[%s319 + $0x1e8] sm:$0xff]
      %v394 = vld [vmem:[%s319 + $0x1f0] sm:$0xff]
      %v395 = vld [vmem:[%s319 + $0x1f8] sm:$0xff]
      %vm396 = vcmask 31744
      %397 = vst.msk [vmem:[#allocation2] sm:$0xff] %vm396, 0.0
      %398 = vst.msk [vmem:[#allocation2 + $0x8] sm:$0xff] %vm396, 0.0
      %vm399 = vcmask 25600
      %400 = vst.msk [vmem:[#allocation2 + $0x10] sm:$0x3] %vm399, 0.0
      %401 = vst.msk [vmem:[#allocation2 + $0x18] sm:$0xff] %vm396, 0.0
      %402 = vst.msk [vmem:[#allocation2 + $0x20] sm:$0xff] %vm396, 0.0
      %403 = vst.msk [vmem:[#allocation2 + $0x28] sm:$0x3] %vm399, 0.0
      %404 = vst.msk [vmem:[#allocation2 + $0x30] sm:$0xff] %vm396, 0.0
      %405 = vst.msk [vmem:[#allocation2 + $0x38] sm:$0xff] %vm396, 0.0
      %406 = vst.msk [vmem:[#allocation2 + $0x40] sm:$0x3] %vm399, 0.0
      %407 = vst.msk [vmem:[#allocation2 + $0x48] sm:$0xff] %vm396, 0.0
      %408 = vst.msk [vmem:[#allocation2 + $0x50] sm:$0xff] %vm396, 0.0
      %409 = vst.msk [vmem:[#allocation2 + $0x58] sm:$0x3] %vm399, 0.0
      %410 = vst.msk [vmem:[#allocation2 + $0x60] sm:$0xff] %vm396, 0.0
      %411 = vst.msk [vmem:[#allocation2 + $0x68] sm:$0xff] %vm396, 0.0
      %412 = vst.msk [vmem:[#allocation2 + $0x70] sm:$0x3] %vm399, 0.0
      %413 = vst.msk [vmem:[#allocation2 + $0x78] sm:$0xff] %vm396, 0.0
      %414 = vst.msk [vmem:[#allocation2 + $0x80] sm:$0xff] %vm396, 0.0
      %415 = vst.msk [vmem:[#allocation2 + $0x88] sm:$0x3] %vm399, 0.0
      %416 = vst.msk [vmem:[#allocation2 + $0x90] sm:$0xff] %vm396, 0.0
      %417 = vst.msk [vmem:[#allocation2 + $0x98] sm:$0xff] %vm396, 0.0
      %418 = vst.msk [vmem:[#allocation2 + $0xa0] sm:$0x3] %vm399, 0.0
      %419 = vst.msk [vmem:[#allocation2 + $0xa8] sm:$0xff] %vm396, 0.0
      %420 = vst.msk [vmem:[#allocation2 + $0xb0] sm:$0xff] %vm396, 0.0
      %421 = vst.msk [vmem:[#allocation2 + $0xb8] sm:$0x3] %vm399, 0.0
      %422 = vst.msk [vmem:[#allocation2 + $0xc0] sm:$0xff] %vm396, 0.0
      %423 = vst.msk [vmem:[#allocation2 + $0xc8] sm:$0xff] %vm396, 0.0
      %424 = vst.msk [vmem:[#allocation2 + $0xd0] sm:$0x3] %vm399, 0.0
      %425 = vst.msk [vmem:[#allocation2 + $0xd8] sm:$0xff] %vm396, 0.0
      %426 = vst.msk [vmem:[#allocation2 + $0xe0] sm:$0xff] %vm396, 0.0
      %427 = vst.msk [vmem:[#allocation2 + $0xe8] sm:$0x3] %vm399, 0.0
      %428 = vst.msk [vmem:[#allocation2 + $0xf0] sm:$0xff] %vm396, 0.0
      %429 = vst.msk [vmem:[#allocation2 + $0xf8] sm:$0xff] %vm396, 0.0
      %430 = vst.msk [vmem:[#allocation2 + $0x100] sm:$0x3] %vm399, 0.0
      %431 = vst.msk [vmem:[#allocation2 + $0x108] sm:$0xff] %vm396, 0.0
      %432 = vst.msk [vmem:[#allocation2 + $0x110] sm:$0xff] %vm396, 0.0
      %433 = vst.msk [vmem:[#allocation2 + $0x118] sm:$0x3] %vm399, 0.0
      %434 = vst.msk [vmem:[#allocation2 + $0x120] sm:$0xff] %vm396, 0.0
      %435 = vst.msk [vmem:[#allocation2 + $0x128] sm:$0xff] %vm396, 0.0
      %436 = vst.msk [vmem:[#allocation2 + $0x130] sm:$0x3] %vm399, 0.0
      %437 = vst.msk [vmem:[#allocation2 + $0x138] sm:$0xff] %vm396, 0.0
      %438 = vst.msk [vmem:[#allocation2 + $0x140] sm:$0xff] %vm396, 0.0
      %439 = vst.msk [vmem:[#allocation2 + $0x148] sm:$0x3] %vm399, 0.0
      %440 = vst.msk [vmem:[#allocation2 + $0x150] sm:$0xff] %vm396, 0.0
      %441 = vst.msk [vmem:[#allocation2 + $0x158] sm:$0xff] %vm396, 0.0
      %442 = vst.msk [vmem:[#allocation2 + $0x160] sm:$0x3] %vm399, 0.0
      %443 = vst.msk [vmem:[#allocation2 + $0x168] sm:$0xff] %vm396, 0.0
      %444 = vst.msk [vmem:[#allocation2 + $0x170] sm:$0xff] %vm396, 0.0
      %445 = vst.msk [vmem:[#allocation2 + $0x178] sm:$0x3] %vm399, 0.0
      %446 = vst.msk [vmem:[#allocation2 + $0x180] sm:$0xff] %vm396, 0.0
      %447 = vst.msk [vmem:[#allocation2 + $0x188] sm:$0xff] %vm396, 0.0
      %448 = vst.msk [vmem:[#allocation2 + $0x190] sm:$0x3] %vm399, 0.0
      %449 = vst.msk [vmem:[#allocation2 + $0x198] sm:$0xff] %vm396, 0.0
      %450 = vst.msk [vmem:[#allocation2 + $0x1a0] sm:$0xff] %vm396, 0.0
      %451 = vst.msk [vmem:[#allocation2 + $0x1a8] sm:$0x3] %vm399, 0.0
      %452 = vst.msk [vmem:[#allocation2 + $0x1b0] sm:$0xff] %vm396, 0.0
      %453 = vst.msk [vmem:[#allocation2 + $0x1b8] sm:$0xff] %vm396, 0.0
      %454 = vst.msk [vmem:[#allocation2 + $0x1c0] sm:$0x3] %vm399, 0.0
      %455 = vst.msk [vmem:[#allocation2 + $0x1c8] sm:$0xff] %vm396, 0.0
      %456 = vst.msk [vmem:[#allocation2 + $0x1d0] sm:$0xff] %vm396, 0.0
      %457 = vst.msk [vmem:[#allocation2 + $0x1d8] sm:$0x3] %vm399, 0.0
      %458 = vst.msk [vmem:[#allocation2 + $0x1e0] sm:$0xff] %vm396, 0.0
      %459 = vst.msk [vmem:[#allocation2 + $0x1e8] sm:$0xff] %vm396, 0.0
      %460 = vst.msk [vmem:[#allocation2 + $0x1f0] sm:$0x3] %vm399, 0.0
      %461 = vst.msk [vmem:[#allocation2 + $0x1f8] sm:$0xff] %vm396, 0.0
      %462 = vst.msk [vmem:[#allocation2 + $0x200] sm:$0xff] %vm396, 0.0
      %463 = vst.msk [vmem:[#allocation2 + $0x208] sm:$0x3] %vm399, 0.0
      %464 = vst.msk [vmem:[#allocation2 + $0x210] sm:$0xff] %vm396, 0.0
      %465 = vst.msk [vmem:[#allocation2 + $0x218] sm:$0xff] %vm396, 0.0
      %466 = vst.msk [vmem:[#allocation2 + $0x220] sm:$0x3] %vm399, 0.0
      %467 = vst.msk [vmem:[#allocation2 + $0x228] sm:$0xff] %vm396, 0.0
      %468 = vst.msk [vmem:[#allocation2 + $0x230] sm:$0xff] %vm396, 0.0
      %469 = vst.msk [vmem:[#allocation2 + $0x238] sm:$0x3] %vm399, 0.0
      %470 = vst.msk [vmem:[#allocation2 + $0x240] sm:$0xff] %vm396, 0.0
      %471 = vst.msk [vmem:[#allocation2 + $0x248] sm:$0xff] %vm396, 0.0
      %472 = vst.msk [vmem:[#allocation2 + $0x250] sm:$0x3] %vm399, 0.0
      %473 = vst.msk [vmem:[#allocation2 + $0x258] sm:$0xff] %vm396, 0.0
      %474 = vst.msk [vmem:[#allocation2 + $0x260] sm:$0xff] %vm396, 0.0
      %475 = vst.msk [vmem:[#allocation2 + $0x268] sm:$0x3] %vm399, 0.0
      %476 = vst.msk [vmem:[#allocation2 + $0x270] sm:$0xff] %vm396, 0.0
      %477 = vst.msk [vmem:[#allocation2 + $0x278] sm:$0xff] %vm396, 0.0
      %478 = vst.msk [vmem:[#allocation2 + $0x280] sm:$0x3] %vm399, 0.0
      %479 = vst.msk [vmem:[#allocation2 + $0x288] sm:$0xff] %vm396, 0.0
      %480 = vst.msk [vmem:[#allocation2 + $0x290] sm:$0xff] %vm396, 0.0
      %481 = vst.msk [vmem:[#allocation2 + $0x298] sm:$0x3] %vm399, 0.0
      %482 = vst.msk [vmem:[#allocation2 + $0x2a0] sm:$0xff] %vm396, 0.0
      %483 = vst.msk [vmem:[#allocation2 + $0x2a8] sm:$0xff] %vm396, 0.0
      %484 = vst.msk [vmem:[#allocation2 + $0x2b0] sm:$0x3] %vm399, 0.0
      %485 = vst.msk [vmem:[#allocation2 + $0x2b8] sm:$0xff] %vm396, 0.0
      %486 = vst.msk [vmem:[#allocation2 + $0x2c0] sm:$0xff] %vm396, 0.0
      %487 = vst.msk [vmem:[#allocation2 + $0x2c8] sm:$0x3] %vm399, 0.0
      %488 = vst.msk [vmem:[#allocation2 + $0x2d0] sm:$0xff] %vm396, 0.0
      %489 = vst.msk [vmem:[#allocation2 + $0x2d8] sm:$0xff] %vm396, 0.0
      %490 = vst.msk [vmem:[#allocation2 + $0x2e0] sm:$0x3] %vm399, 0.0
      %491 = vst.msk [vmem:[#allocation2 + $0x2e8] sm:$0xff] %vm396, 0.0
      %492 = vst.msk [vmem:[#allocation2 + $0x2f0] sm:$0xff] %vm396, 0.0
      %493 = vst.msk [vmem:[#allocation2 + $0x2f8] sm:$0x3] %vm399, 0.0
      %494 = vst.msk [vmem:[#allocation2 + $0x300] sm:$0xff] %vm396, 0.0
      %495 = vst.msk [vmem:[#allocation2 + $0x308] sm:$0xff] %vm396, 0.0
      %496 = vst.msk [vmem:[#allocation2 + $0x310] sm:$0x3] %vm399, 0.0
      %497 = vst.msk [vmem:[#allocation2 + $0x318] sm:$0xff] %vm396, 0.0
      %498 = vst.msk [vmem:[#allocation2 + $0x320] sm:$0xff] %vm396, 0.0
      %499 = vst.msk [vmem:[#allocation2 + $0x328] sm:$0x3] %vm399, 0.0
      %500 = vst.msk [vmem:[#allocation2 + $0x330] sm:$0xff] %vm396, 0.0
      %501 = vst.msk [vmem:[#allocation2 + $0x338] sm:$0xff] %vm396, 0.0
      %502 = vst.msk [vmem:[#allocation2 + $0x340] sm:$0x3] %vm399, 0.0
      %503 = vst.msk [vmem:[#allocation2 + $0x348] sm:$0xff] %vm396, 0.0
      %504 = vst.msk [vmem:[#allocation2 + $0x350] sm:$0xff] %vm396, 0.0
      %505 = vst.msk [vmem:[#allocation2 + $0x358] sm:$0x3] %vm399, 0.0
      %s506 = scalar_lea.vmem [#allocation2], 24
      %507 = vst.msk [vmem:[%s506 + $0x1] sm:$0xff] %vm396, %v332
      %508 = vst.msk [vmem:[%s506 + $0x9] sm:$0xff] %vm396, %v333
      %509 = vst.msk [vmem:[%s506 + $0x19] sm:$0xff] %vm396, %v334
      %510 = vst.msk [vmem:[%s506 + $0x21] sm:$0xff] %vm396, %v335
      %511 = vst.msk [vmem:[%s506 + $0x31] sm:$0xff] %vm396, %v336
      %512 = vst.msk [vmem:[%s506 + $0x39] sm:$0xff] %vm396, %v337
      %513 = vst.msk [vmem:[%s506 + $0x49] sm:$0xff] %vm396, %v338
      %514 = vst.msk [vmem:[%s506 + $0x51] sm:$0xff] %vm396, %v339
      %515 = vst.msk [vmem:[%s506 + $0x61] sm:$0xff] %vm396, %v340
      %516 = vst.msk [vmem:[%s506 + $0x69] sm:$0xff] %vm396, %v341
      %517 = vst.msk [vmem:[%s506 + $0x79] sm:$0xff] %vm396, %v342
      %518 = vst.msk [vmem:[%s506 + $0x81] sm:$0xff] %vm396, %v343
      %519 = vst.msk [vmem:[%s506 + $0x91] sm:$0xff] %vm396, %v344
      %520 = vst.msk [vmem:[%s506 + $0x99] sm:$0xff] %vm396, %v345
      %521 = vst.msk [vmem:[%s506 + $0xa9] sm:$0xff] %vm396, %v346
      %522 = vst.msk [vmem:[%s506 + $0xb1] sm:$0xff] %vm396, %v347
      %523 = vst.msk [vmem:[%s506 + $0xc1] sm:$0xff] %vm396, %v348
      %524 = vst.msk [vmem:[%s506 + $0xc9] sm:$0xff] %vm396, %v349
      %525 = vst.msk [vmem:[%s506 + $0xd9] sm:$0xff] %vm396, %v350
      %526 = vst.msk [vmem:[%s506 + $0xe1] sm:$0xff] %vm396, %v351
      %527 = vst.msk [vmem:[%s506 + $0xf1] sm:$0xff] %vm396, %v352
      %528 = vst.msk [vmem:[%s506 + $0xf9] sm:$0xff] %vm396, %v353
      %529 = vst.msk [vmem:[%s506 + $0x109] sm:$0xff] %vm396, %v354
      %530 = vst.msk [vmem:[%s506 + $0x111] sm:$0xff] %vm396, %v355
      %531 = vst.msk [vmem:[%s506 + $0x121] sm:$0xff] %vm396, %v356
      %532 = vst.msk [vmem:[%s506 + $0x129] sm:$0xff] %vm396, %v357
      %533 = vst.msk [vmem:[%s506 + $0x139] sm:$0xff] %vm396, %v358
      %534 = vst.msk [vmem:[%s506 + $0x141] sm:$0xff] %vm396, %v359
      %535 = vst.msk [vmem:[%s506 + $0x151] sm:$0xff] %vm396, %v360
      %536 = vst.msk [vmem:[%s506 + $0x159] sm:$0xff] %vm396, %v361
      %537 = vst.msk [vmem:[%s506 + $0x169] sm:$0xff] %vm396, %v362
      %538 = vst.msk [vmem:[%s506 + $0x171] sm:$0xff] %vm396, %v363
      %539 = vst.msk [vmem:[%s506 + $0x1b1] sm:$0xff] %vm396, %v364
      %540 = vst.msk [vmem:[%s506 + $0x1b9] sm:$0xff] %vm396, %v365
      %541 = vst.msk [vmem:[%s506 + $0x1c9] sm:$0xff] %vm396, %v366
      %542 = vst.msk [vmem:[%s506 + $0x1d1] sm:$0xff] %vm396, %v367
      %543 = vst.msk [vmem:[%s506 + $0x1e1] sm:$0xff] %vm396, %v368
      %544 = vst.msk [vmem:[%s506 + $0x1e9] sm:$0xff] %vm396, %v369
      %545 = vst.msk [vmem:[%s506 + $0x1f9] sm:$0xff] %vm396, %v370
      %546 = vst.msk [vmem:[%s506 + $0x201] sm:$0xff] %vm396, %v371
      %547 = vst.msk [vmem:[%s506 + $0x211] sm:$0xff] %vm396, %v372
      %548 = vst.msk [vmem:[%s506 + $0x219] sm:$0xff] %vm396, %v373
      %549 = vst.msk [vmem:[%s506 + $0x229] sm:$0xff] %vm396, %v374
      %550 = vst.msk [vmem:[%s506 + $0x231] sm:$0xff] %vm396, %v375
      %551 = vst.msk [vmem:[%s506 + $0x241] sm:$0xff] %vm396, %v376
      %552 = vst.msk [vmem:[%s506 + $0x249] sm:$0xff] %vm396, %v377
      %553 = vst.msk [vmem:[%s506 + $0x259] sm:$0xff] %vm396, %v378
      %554 = vst.msk [vmem:[%s506 + $0x261] sm:$0xff] %vm396, %v379
      %555 = vst.msk [vmem:[%s506 + $0x271] sm:$0xff] %vm396, %v380
      %556 = vst.msk [vmem:[%s506 + $0x279] sm:$0xff] %vm396, %v381
      %557 = vst.msk [vmem:[%s506 + $0x289] sm:$0xff] %vm396, %v382
      %558 = vst.msk [vmem:[%s506 + $0x291] sm:$0xff] %vm396, %v383
      %559 = vst.msk [vmem:[%s506 + $0x2a1] sm:$0xff] %vm396, %v384
      %560 = vst.msk [vmem:[%s506 + $0x2a9] sm:$0xff] %vm396, %v385
      %561 = vst.msk [vmem:[%s506 + $0x2b9] sm:$0xff] %vm396, %v386
      %562 = vst.msk [vmem:[%s506 + $0x2c1] sm:$0xff] %vm396, %v387
      %563 = vst.msk [vmem:[%s506 + $0x2d1] sm:$0xff] %vm396, %v388
      %564 = vst.msk [vmem:[%s506 + $0x2d9] sm:$0xff] %vm396, %v389
      %565 = vst.msk [vmem:[%s506 + $0x2e9] sm:$0xff] %vm396, %v390
      %566 = vst.msk [vmem:[%s506 + $0x2f1] sm:$0xff] %vm396, %v391
      %567 = vst.msk [vmem:[%s506 + $0x301] sm:$0xff] %vm396, %v392
      %568 = vst.msk [vmem:[%s506 + $0x309] sm:$0xff] %vm396, %v393
      %569 = vst.msk [vmem:[%s506 + $0x319] sm:$0xff] %vm396, %v394
      %570 = vst.msk [vmem:[%s506 + $0x321] sm:$0xff] %vm396, %v395
      %v571 = vld [vmem:[#allocation2] sm:$0xff]
      %v572 = vld [vmem:[#allocation2 + $0x8] sm:$0xff]
      %v573 = vld [vmem:[#allocation2 + $0x18] sm:$0xff]
      %v574 = vld [vmem:[#allocation2 + $0x20] sm:$0xff]
      %v575 = vld [vmem:[#allocation2 + $0x30] sm:$0xff]
      %v576 = vld [vmem:[#allocation2 + $0x38] sm:$0xff]
      %v577 = vld [vmem:[#allocation2 + $0x48] sm:$0xff]
      %v578 = vld [vmem:[#allocation2 + $0x50] sm:$0xff]
      %v579 = vld [vmem:[#allocation2 + $0x60] sm:$0xff]
      %v580 = vld [vmem:[#allocation2 + $0x68] sm:$0xff]
      %v581 = vld [vmem:[#allocation2 + $0x78] sm:$0xff]
      %v582 = vld [vmem:[#allocation2 + $0x80] sm:$0xff]
      %v583 = vld [vmem:[#allocation2 + $0x90] sm:$0xff]
      %v584 = vld [vmem:[#allocation2 + $0x98] sm:$0xff]
      %v585 = vld [vmem:[#allocation2 + $0xa8] sm:$0xff]
      %v586 = vld [vmem:[#allocation2 + $0xb0] sm:$0xff]
      %v587 = vld [vmem:[#allocation2 + $0xc0] sm:$0xff]
      %v588 = vld [vmem:[#allocation2 + $0xc8] sm:$0xff]
      %v589 = vld [vmem:[#allocation2 + $0xd8] sm:$0xff]
      %v590 = vld [vmem:[#allocation2 + $0xe0] sm:$0xff]
      %v591 = vld [vmem:[#allocation2 + $0xf0] sm:$0xff]
      %v592 = vld [vmem:[#allocation2 + $0xf8] sm:$0xff]
      %v593 = vld [vmem:[#allocation2 + $0x108] sm:$0xff]
      %v594 = vld [vmem:[#allocation2 + $0x110] sm:$0xff]
      %v595 = vld [vmem:[#allocation2 + $0x120] sm:$0xff]
      %v596 = vld [vmem:[#allocation2 + $0x128] sm:$0xff]
      %v597 = vld [vmem:[#allocation2 + $0x138] sm:$0xff]
      %v598 = vld [vmem:[#allocation2 + $0x140] sm:$0xff]
      %v599 = vld [vmem:[#allocation2 + $0x150] sm:$0xff]
      %v600 = vld [vmem:[#allocation2 + $0x158] sm:$0xff]
      %v601 = vld [vmem:[#allocation2 + $0x168] sm:$0xff]
      %v602 = vld [vmem:[#allocation2 + $0x170] sm:$0xff]
      %v603 = vld [vmem:[#allocation2 + $0x1b0] sm:$0xff]
      %v604 = vld [vmem:[#allocation2 + $0x1b8] sm:$0xff]
      %v605 = vld [vmem:[#allocation2 + $0x1c8] sm:$0xff]
      %v606 = vld [vmem:[#allocation2 + $0x1d0] sm:$0xff]
      %v607 = vld [vmem:[#allocation2 + $0x1e0] sm:$0xff]
      %v608 = vld [vmem:[#allocation2 + $0x1e8] sm:$0xff]
      %v609 = vld [vmem:[#allocation2 + $0x1f8] sm:$0xff]
      %v610 = vld [vmem:[#allocation2 + $0x200] sm:$0xff]
      %v611 = vld [vmem:[#allocation2 + $0x210] sm:$0xff]
      %v612 = vld [vmem:[#allocation2 + $0x218] sm:$0xff]
      %v613 = vld [vmem:[#allocation2 + $0x228] sm:$0xff]
      %v614 = vld [vmem:[#allocation2 + $0x230] sm:$0xff]
      %v615 = vld [vmem:[#allocation2 + $0x240] sm:$0xff]
      %v616 = vld [vmem:[#allocation2 + $0x248] sm:$0xff]
      %v617 = vld [vmem:[#allocation2 + $0x258] sm:$0xff]
      %v618 = vld [vmem:[#allocation2 + $0x260] sm:$0xff]
      %v619 = vld [vmem:[#allocation2 + $0x270] sm:$0xff]
      %v620 = vld [vmem:[#allocation2 + $0x278] sm:$0xff]
      %v621 = vld [vmem:[#allocation2 + $0x288] sm:$0xff]
      %v622 = vld [vmem:[#allocation2 + $0x290] sm:$0xff]
      %v623 = vld [vmem:[#allocation2 + $0x2a0] sm:$0xff]
      %v624 = vld [vmem:[#allocation2 + $0x2a8] sm:$0xff]
      %v625 = vld [vmem:[#allocation2 + $0x2b8] sm:$0xff]
      %v626 = vld [vmem:[#allocation2 + $0x2c0] sm:$0xff]
      %v627 = vld [vmem:[#allocation2 + $0x2d0] sm:$0xff]
      %v628 = vld [vmem:[#allocation2 + $0x2d8] sm:$0xff]
      %v629 = vld [vmem:[#allocation2 + $0x2e8] sm:$0xff]
      %v630 = vld [vmem:[#allocation2 + $0x2f0] sm:$0xff]
      %v631 = vld [vmem:[#allocation2 + $0x300] sm:$0xff]
      %v632 = vld [vmem:[#allocation2 + $0x308] sm:$0xff]
      %v633 = vld [vmem:[#allocation2 + $0x318] sm:$0xff]
      %v634 = vld [vmem:[#allocation2 + $0x320] sm:$0xff]
      %v635 = vld [vmem:[#allocation2 + $0x1] sm:$0xff]
      %v636 = vld [vmem:[#allocation2 + $0x9] sm:$0xff]
      %v637 = vld [vmem:[#allocation2 + $0x19] sm:$0xff]
      %v638 = vld [vmem:[#allocation2 + $0x21] sm:$0xff]
      %v639 = vld [vmem:[#allocation2 + $0x31] sm:$0xff]
      %v640 = vld [vmem:[#allocation2 + $0x39] sm:$0xff]
      %v641 = vld [vmem:[#allocation2 + $0x49] sm:$0xff]
      %v642 = vld [vmem:[#allocation2 + $0x51] sm:$0xff]
      %v643 = vld [vmem:[#allocation2 + $0x61] sm:$0xff]
      %v644 = vld [vmem:[#allocation2 + $0x69] sm:$0xff]
      %v645 = vld [vmem:[#allocation2 + $0x79] sm:$0xff]
      %v646 = vld [vmem:[#allocation2 + $0x81] sm:$0xff]
      %v647 = vld [vmem:[#allocation2 + $0x91] sm:$0xff]
      %v648 = vld [vmem:[#allocation2 + $0x99] sm:$0xff]
      %v649 = vld [vmem:[#allocation2 + $0xa9] sm:$0xff]
      %v650 = vld [vmem:[#allocation2 + $0xb1] sm:$0xff]
      %v651 = vld [vmem:[#allocation2 + $0xc1] sm:$0xff]
      %v652 = vld [vmem:[#allocation2 + $0xc9] sm:$0xff]
      %v653 = vld [vmem:[#allocation2 + $0xd9] sm:$0xff]
      %v654 = vld [vmem:[#allocation2 + $0xe1] sm:$0xff]
      %v655 = vld [vmem:[#allocation2 + $0xf1] sm:$0xff]
      %v656 = vld [vmem:[#allocation2 + $0xf9] sm:$0xff]
      %v657 = vld [vmem:[#allocation2 + $0x109] sm:$0xff]
      %v658 = vld [vmem:[#allocation2 + $0x111] sm:$0xff]
      %v659 = vld [vmem:[#allocation2 + $0x121] sm:$0xff]
      %v660 = vld [vmem:[#allocation2 + $0x129] sm:$0xff]
      %v661 = vld [vmem:[#allocation2 + $0x139] sm:$0xff]
      %v662 = vld [vmem:[#allocation2 + $0x141] sm:$0xff]
      %v663 = vld [vmem:[#allocation2 + $0x151] sm:$0xff]
      %v664 = vld [vmem:[#allocation2 + $0x159] sm:$0xff]
      %v665 = vld [vmem:[#allocation2 + $0x169] sm:$0xff]
      %v666 = vld [vmem:[#allocation2 + $0x171] sm:$0xff]
      %v667 = vld [vmem:[#allocation2 + $0x1b1] sm:$0xff]
      %v668 = vld [vmem:[#allocation2 + $0x1b9] sm:$0xff]
      %v669 = vld [vmem:[#allocation2 + $0x1c9] sm:$0xff]
      %v670 = vld [vmem:[#allocation2 + $0x1d1] sm:$0xff]
      %v671 = vld [vmem:[#allocation2 + $0x1e1] sm:$0xff]
      %v672 = vld [vmem:[#allocation2 + $0x1e9] sm:$0xff]
      %v673 = vld [vmem:[#allocation2 + $0x1f9] sm:$0xff]
      %v674 = vld [vmem:[#allocation2 + $0x201] sm:$0xff]
      %v675 = vld [vmem:[#allocation2 + $0x211] sm:$0xff]
      %v676 = vld [vmem:[#allocation2 + $0x219] sm:$0xff]
      %v677 = vld [vmem:[#allocation2 + $0x229] sm:$0xff]
      %v678 = vld [vmem:[#allocation2 + $0x231] sm:$0xff]
      %v679 = vld [vmem:[#allocation2 + $0x241] sm:$0xff]
      %v680 = vld [vmem:[#allocation2 + $0x249] sm:$0xff]
      %v681 = vld [vmem:[#allocation2 + $0x259] sm:$0xff]
      %v682 = vld [vmem:[#allocation2 + $0x261] sm:$0xff]
      %v683 = vld [vmem:[#allocation2 + $0x271] sm:$0xff]
      %v684 = vld [vmem:[#allocation2 + $0x279] sm:$0xff]
      %v685 = vld [vmem:[#allocation2 + $0x289] sm:$0xff]
      %v686 = vld [vmem:[#allocation2 + $0x291] sm:$0xff]
      %v687 = vld [vmem:[#allocation2 + $0x2a1] sm:$0xff]
      %v688 = vld [vmem:[#allocation2 + $0x2a9] sm:$0xff]
      %v689 = vld [vmem:[#allocation2 + $0x2b9] sm:$0xff]
      %v690 = vld [vmem:[#allocation2 + $0x2c1] sm:$0xff]
      %v691 = vld [vmem:[#allocation2 + $0x2d1] sm:$0xff]
      %v692 = vld [vmem:[#allocation2 + $0x2d9] sm:$0xff]
      %v693 = vld [vmem:[#allocation2 + $0x2e9] sm:$0xff]
      %v694 = vld [vmem:[#allocation2 + $0x2f1] sm:$0xff]
      %v695 = vld [vmem:[#allocation2 + $0x301] sm:$0xff]
      %v696 = vld [vmem:[#allocation2 + $0x309] sm:$0xff]
      %v697 = vld [vmem:[#allocation2 + $0x319] sm:$0xff]
      %v698 = vld [vmem:[#allocation2 + $0x321] sm:$0xff]
      %v699 = vld [vmem:[#allocation2 + $0x2] sm:$0xff]
      %v700 = vld [vmem:[#allocation2 + $0xa] sm:$0xff]
      %v701 = vld [vmem:[#allocation2 + $0x1a] sm:$0xff]
      %v702 = vld [vmem:[#allocation2 + $0x22] sm:$0xff]
      %v703 = vld [vmem:[#allocation2 + $0x32] sm:$0xff]
      %v704 = vld [vmem:[#allocation2 + $0x3a] sm:$0xff]
      %v705 = vld [vmem:[#allocation2 + $0x4a] sm:$0xff]
      %v706 = vld [vmem:[#allocation2 + $0x52] sm:$0xff]
      %v707 = vld [vmem:[#allocation2 + $0x62] sm:$0xff]
      %v708 = vld [vmem:[#allocation2 + $0x6a] sm:$0xff]
      %v709 = vld [vmem:[#allocation2 + $0x7a] sm:$0xff]
      %v710 = vld [vmem:[#allocation2 + $0x82] sm:$0xff]
      %v711 = vld [vmem:[#allocation2 + $0x92] sm:$0xff]
      %v712 = vld [vmem:[#allocation2 + $0x9a] sm:$0xff]
      %v713 = vld [vmem:[#allocation2 + $0xaa] sm:$0xff]
      %v714 = vld [vmem:[#allocation2 + $0xb2] sm:$0xff]
      %v715 = vld [vmem:[#allocation2 + $0xc2] sm:$0xff]
      %v716 = vld [vmem:[#allocation2 + $0xca] sm:$0xff]
      %v717 = vld [vmem:[#allocation2 + $0xda] sm:$0xff]
      %v718 = vld [vmem:[#allocation2 + $0xe2] sm:$0xff]
      %v719 = vld [vmem:[#allocation2 + $0xf2] sm:$0xff]
      %v720 = vld [vmem:[#allocation2 + $0xfa] sm:$0xff]
      %v721 = vld [vmem:[#allocation2 + $0x10a] sm:$0xff]
      %v722 = vld [vmem:[#allocation2 + $0x112] sm:$0xff]
      %v723 = vld [vmem:[#allocation2 + $0x122] sm:$0xff]
      %v724 = vld [vmem:[#allocation2 + $0x12a] sm:$0xff]
      %v725 = vld [vmem:[#allocation2 + $0x13a] sm:$0xff]
      %v726 = vld [vmem:[#allocation2 + $0x142] sm:$0xff]
      %v727 = vld [vmem:[#allocation2 + $0x152] sm:$0xff]
      %v728 = vld [vmem:[#allocation2 + $0x15a] sm:$0xff]
      %v729 = vld [vmem:[#allocation2 + $0x16a] sm:$0xff]
      %v730 = vld [vmem:[#allocation2 + $0x172] sm:$0xff]
      %v731 = vld [vmem:[#allocation2 + $0x1b2] sm:$0xff]
      %v732 = vld [vmem:[#allocation2 + $0x1ba] sm:$0xff]
      %v733 = vld [vmem:[#allocation2 + $0x1ca] sm:$0xff]
      %v734 = vld [vmem:[#allocation2 + $0x1d2] sm:$0xff]
      %v735 = vld [vmem:[#allocation2 + $0x1e2] sm:$0xff]
      %v736 = vld [vmem:[#allocation2 + $0x1ea] sm:$0xff]
      %v737 = vld [vmem:[#allocation2 + $0x1fa] sm:$0xff]
      %v738 = vld [vmem:[#allocation2 + $0x202] sm:$0xff]
      %v739 = vld [vmem:[#allocation2 + $0x212] sm:$0xff]
      %v740 = vld [vmem:[#allocation2 + $0x21a] sm:$0xff]
      %v741 = vld [vmem:[#allocation2 + $0x22a] sm:$0xff]
      %v742 = vld [vmem:[#allocation2 + $0x232] sm:$0xff]
      %v743 = vld [vmem:[#allocation2 + $0x242] sm:$0xff]
      %v744 = vld [vmem:[#allocation2 + $0x24a] sm:$0xff]
      %v745 = vld [vmem:[#allocation2 + $0x25a] sm:$0xff]
      %v746 = vld [vmem:[#allocation2 + $0x262] sm:$0xff]
      %v747 = vld [vmem:[#allocation2 + $0x272] sm:$0xff]
      %v748 = vld [vmem:[#allocation2 + $0x27a] sm:$0xff]
      %v749 = vld [vmem:[#allocation2 + $0x28a] sm:$0xff]
      %v750 = vld [vmem:[#allocation2 + $0x292] sm:$0xff]
      %v751 = vld [vmem:[#allocation2 + $0x2a2] sm:$0xff]
      %v752 = vld [vmem:[#allocation2 + $0x2aa] sm:$0xff]
      %v753 = vld [vmem:[#allocation2 + $0x2ba] sm:$0xff]
      %v754 = vld [vmem:[#allocation2 + $0x2c2] sm:$0xff]
      %v755 = vld [vmem:[#allocation2 + $0x2d2] sm:$0xff]
      %v756 = vld [vmem:[#allocation2 + $0x2da] sm:$0xff]
      %v757 = vld [vmem:[#allocation2 + $0x2ea] sm:$0xff]
      %v758 = vld [vmem:[#allocation2 + $0x2f2] sm:$0xff]
      %v759 = vld [vmem:[#allocation2 + $0x302] sm:$0xff]
      %v760 = vld [vmem:[#allocation2 + $0x30a] sm:$0xff]
      %v761 = vld [vmem:[#allocation2 + $0x31a] sm:$0xff]
      %v762 = vld [vmem:[#allocation2 + $0x322] sm:$0xff]
      %v763 = vld [vmem:[%s506] sm:$0xff]
      %v764 = vld [vmem:[%s506 + $0x8] sm:$0xff]
      %v765 = vld [vmem:[%s506 + $0x18] sm:$0xff]
      %v766 = vld [vmem:[%s506 + $0x20] sm:$0xff]
      %v767 = vld [vmem:[%s506 + $0x30] sm:$0xff]
      %v768 = vld [vmem:[%s506 + $0x38] sm:$0xff]
      %v769 = vld [vmem:[%s506 + $0x48] sm:$0xff]
      %v770 = vld [vmem:[%s506 + $0x50] sm:$0xff]
      %v771 = vld [vmem:[%s506 + $0x60] sm:$0xff]
      %v772 = vld [vmem:[%s506 + $0x68] sm:$0xff]
      %v773 = vld [vmem:[%s506 + $0x78] sm:$0xff]
      %v774 = vld [vmem:[%s506 + $0x80] sm:$0xff]
      %v775 = vld [vmem:[%s506 + $0x90] sm:$0xff]
      %v776 = vld [vmem:[%s506 + $0x98] sm:$0xff]
      %v777 = vld [vmem:[%s506 + $0xa8] sm:$0xff]
      %v778 = vld [vmem:[%s506 + $0xb0] sm:$0xff]
      %v779 = vld [vmem:[%s506 + $0xc0] sm:$0xff]
      %v780 = vld [vmem:[%s506 + $0xc8] sm:$0xff]
      %v781 = vld [vmem:[%s506 + $0xd8] sm:$0xff]
      %v782 = vld [vmem:[%s506 + $0xe0] sm:$0xff]
      %v783 = vld [vmem:[%s506 + $0xf0] sm:$0xff]
      %v784 = vld [vmem:[%s506 + $0xf8] sm:$0xff]
      %v785 = vld [vmem:[%s506 + $0x108] sm:$0xff]
      %v786 = vld [vmem:[%s506 + $0x110] sm:$0xff]
      %v787 = vld [vmem:[%s506 + $0x120] sm:$0xff]
      %v788 = vld [vmem:[%s506 + $0x128] sm:$0xff]
      %v789 = vld [vmem:[%s506 + $0x138] sm:$0xff]
      %v790 = vld [vmem:[%s506 + $0x140] sm:$0xff]
      %v791 = vld [vmem:[%s506 + $0x150] sm:$0xff]
      %v792 = vld [vmem:[%s506 + $0x158] sm:$0xff]
      %v793 = vld [vmem:[%s506 + $0x168] sm:$0xff]
      %v794 = vld [vmem:[%s506 + $0x170] sm:$0xff]
      %v795 = vld [vmem:[%s506 + $0x1b0] sm:$0xff]
      %v796 = vld [vmem:[%s506 + $0x1b8] sm:$0xff]
      %v797 = vld [vmem:[%s506 + $0x1c8] sm:$0xff]
      %v798 = vld [vmem:[%s506 + $0x1d0] sm:$0xff]
      %v799 = vld [vmem:[%s506 + $0x1e0] sm:$0xff]
      %v800 = vld [vmem:[%s506 + $0x1e8] sm:$0xff]
      %v801 = vld [vmem:[%s506 + $0x1f8] sm:$0xff]
      %v802 = vld [vmem:[%s506 + $0x200] sm:$0xff]
      %v803 = vld [vmem:[%s506 + $0x210] sm:$0xff]
      %v804 = vld [vmem:[%s506 + $0x218] sm:$0xff]
      %v805 = vld [vmem:[%s506 + $0x228] sm:$0xff]
      %v806 = vld [vmem:[%s506 + $0x230] sm:$0xff]
      %v807 = vld [vmem:[%s506 + $0x240] sm:$0xff]
      %v808 = vld [vmem:[%s506 + $0x248] sm:$0xff]
      %v809 = vld [vmem:[%s506 + $0x258] sm:$0xff]
      %v810 = vld [vmem:[%s506 + $0x260] sm:$0xff]
      %v811 = vld [vmem:[%s506 + $0x270] sm:$0xff]
      %v812 = vld [vmem:[%s506 + $0x278] sm:$0xff]
      %v813 = vld [vmem:[%s506 + $0x288] sm:$0xff]
      %v814 = vld [vmem:[%s506 + $0x290] sm:$0xff]
      %v815 = vld [vmem:[%s506 + $0x2a0] sm:$0xff]
      %v816 = vld [vmem:[%s506 + $0x2a8] sm:$0xff]
      %v817 = vld [vmem:[%s506 + $0x2b8] sm:$0xff]
      %v818 = vld [vmem:[%s506 + $0x2c0] sm:$0xff]
      %v819 = vld [vmem:[%s506 + $0x2d0] sm:$0xff]
      %v820 = vld [vmem:[%s506 + $0x2d8] sm:$0xff]
      %v821 = vld [vmem:[%s506 + $0x2e8] sm:$0xff]
      %v822 = vld [vmem:[%s506 + $0x2f0] sm:$0xff]
      %v823 = vld [vmem:[%s506 + $0x300] sm:$0xff]
      %v824 = vld [vmem:[%s506 + $0x308] sm:$0xff]
      %v825 = vld [vmem:[%s506 + $0x318] sm:$0xff]
      %v826 = vld [vmem:[%s506 + $0x320] sm:$0xff]
      %v827 = vld [vmem:[%s506 + $0x1] sm:$0xff]
      %v828 = vld [vmem:[%s506 + $0x9] sm:$0xff]
      %v829 = vld [vmem:[%s506 + $0x19] sm:$0xff]
      %v830 = vld [vmem:[%s506 + $0x21] sm:$0xff]
      %v831 = vld [vmem:[%s506 + $0x31] sm:$0xff]
      %v832 = vld [vmem:[%s506 + $0x39] sm:$0xff]
      %v833 = vld [vmem:[%s506 + $0x49] sm:$0xff]
      %v834 = vld [vmem:[%s506 + $0x51] sm:$0xff]
      %v835 = vld [vmem:[%s506 + $0x61] sm:$0xff]
      %v836 = vld [vmem:[%s506 + $0x69] sm:$0xff]
      %v837 = vld [vmem:[%s506 + $0x79] sm:$0xff]
      %v838 = vld [vmem:[%s506 + $0x81] sm:$0xff]
      %v839 = vld [vmem:[%s506 + $0x91] sm:$0xff]
      %v840 = vld [vmem:[%s506 + $0x99] sm:$0xff]
      %v841 = vld [vmem:[%s506 + $0xa9] sm:$0xff]
      %v842 = vld [vmem:[%s506 + $0xb1] sm:$0xff]
      %v843 = vld [vmem:[%s506 + $0xc1] sm:$0xff]
      %v844 = vld [vmem:[%s506 + $0xc9] sm:$0xff]
      %v845 = vld [vmem:[%s506 + $0xd9] sm:$0xff]
      %v846 = vld [vmem:[%s506 + $0xe1] sm:$0xff]
      %v847 = vld [vmem:[%s506 + $0xf1] sm:$0xff]
      %v848 = vld [vmem:[%s506 + $0xf9] sm:$0xff]
      %v849 = vld [vmem:[%s506 + $0x109] sm:$0xff]
      %v850 = vld [vmem:[%s506 + $0x111] sm:$0xff]
      %v851 = vld [vmem:[%s506 + $0x121] sm:$0xff]
      %v852 = vld [vmem:[%s506 + $0x129] sm:$0xff]
      %v853 = vld [vmem:[%s506 + $0x139] sm:$0xff]
      %v854 = vld [vmem:[%s506 + $0x141] sm:$0xff]
      %v855 = vld [vmem:[%s506 + $0x151] sm:$0xff]
      %v856 = vld [vmem:[%s506 + $0x159] sm:$0xff]
      %v857 = vld [vmem:[%s506 + $0x169] sm:$0xff]
      %v858 = vld [vmem:[%s506 + $0x171] sm:$0xff]
      %v859 = vld [vmem:[%s506 + $0x1b1] sm:$0xff]
      %v860 = vld [vmem:[%s506 + $0x1b9] sm:$0xff]
      %v861 = vld [vmem:[%s506 + $0x1c9] sm:$0xff]
      %v862 = vld [vmem:[%s506 + $0x1d1] sm:$0xff]
      %v863 = vld [vmem:[%s506 + $0x1e1] sm:$0xff]
      %v864 = vld [vmem:[%s506 + $0x1e9] sm:$0xff]
      %v865 = vld [vmem:[%s506 + $0x1f9] sm:$0xff]
      %v866 = vld [vmem:[%s506 + $0x201] sm:$0xff]
      %v867 = vld [vmem:[%s506 + $0x211] sm:$0xff]
      %v868 = vld [vmem:[%s506 + $0x219] sm:$0xff]
      %v869 = vld [vmem:[%s506 + $0x229] sm:$0xff]
      %v870 = vld [vmem:[%s506 + $0x231] sm:$0xff]
      %v871 = vld [vmem:[%s506 + $0x241] sm:$0xff]
      %v872 = vld [vmem:[%s506 + $0x249] sm:$0xff]
      %v873 = vld [vmem:[%s506 + $0x259] sm:$0xff]
      %v874 = vld [vmem:[%s506 + $0x261] sm:$0xff]
      %v875 = vld [vmem:[%s506 + $0x271] sm:$0xff]
      %v876 = vld [vmem:[%s506 + $0x279] sm:$0xff]
      %v877 = vld [vmem:[%s506 + $0x289] sm:$0xff]
      %v878 = vld [vmem:[%s506 + $0x291] sm:$0xff]
      %v879 = vld [vmem:[%s506 + $0x2a1] sm:$0xff]
      %v880 = vld [vmem:[%s506 + $0x2a9] sm:$0xff]
      %v881 = vld [vmem:[%s506 + $0x2b9] sm:$0xff]
      %v882 = vld [vmem:[%s506 + $0x2c1] sm:$0xff]
      %v883 = vld [vmem:[%s506 + $0x2d1] sm:$0xff]
      %v884 = vld [vmem:[%s506 + $0x2d9] sm:$0xff]
      %v885 = vld [vmem:[%s506 + $0x2e9] sm:$0xff]
      %v886 = vld [vmem:[%s506 + $0x2f1] sm:$0xff]
      %v887 = vld [vmem:[%s506 + $0x301] sm:$0xff]
      %v888 = vld [vmem:[%s506 + $0x309] sm:$0xff]
      %v889 = vld [vmem:[%s506 + $0x319] sm:$0xff]
      %v890 = vld [vmem:[%s506 + $0x321] sm:$0xff]
      %v891 = vld [vmem:[%s506 + $0x2] sm:$0xff]
      %v892 = vld [vmem:[%s506 + $0xa] sm:$0xff]
      %v893 = vld [vmem:[%s506 + $0x1a] sm:$0xff]
      %v894 = vld [vmem:[%s506 + $0x22] sm:$0xff]
      %v895 = vld [vmem:[%s506 + $0x32] sm:$0xff]
      %v896 = vld [vmem:[%s506 + $0x3a] sm:$0xff]
      %v897 = vld [vmem:[%s506 + $0x4a] sm:$0xff]
      %v898 = vld [vmem:[%s506 + $0x52] sm:$0xff]
      %v899 = vld [vmem:[%s506 + $0x62] sm:$0xff]
      %v900 = vld [vmem:[%s506 + $0x6a] sm:$0xff]
      %v901 = vld [vmem:[%s506 + $0x7a] sm:$0xff]
      %v902 = vld [vmem:[%s506 + $0x82] sm:$0xff]
      %v903 = vld [vmem:[%s506 + $0x92] sm:$0xff]
      %v904 = vld [vmem:[%s506 + $0x9a] sm:$0xff]
      %v905 = vld [vmem:[%s506 + $0xaa] sm:$0xff]
      %v906 = vld [vmem:[%s506 + $0xb2] sm:$0xff]
      %v907 = vld [vmem:[%s506 + $0xc2] sm:$0xff]
      %v908 = vld [vmem:[%s506 + $0xca] sm:$0xff]
      %v909 = vld [vmem:[%s506 + $0xda] sm:$0xff]
      %v910 = vld [vmem:[%s506 + $0xe2] sm:$0xff]
      %v911 = vld [vmem:[%s506 + $0xf2] sm:$0xff]
      %v912 = vld [vmem:[%s506 + $0xfa] sm:$0xff]
      %v913 = vld [vmem:[%s506 + $0x10a] sm:$0xff]
      %v914 = vld [vmem:[%s506 + $0x112] sm:$0xff]
      %v915 = vld [vmem:[%s506 + $0x122] sm:$0xff]
      %v916 = vld [vmem:[%s506 + $0x12a] sm:$0xff]
      %v917 = vld [vmem:[%s506 + $0x13a] sm:$0xff]
      %v918 = vld [vmem:[%s506 + $0x142] sm:$0xff]
      %v919 = vld [vmem:[%s506 + $0x152] sm:$0xff]
      %v920 = vld [vmem:[%s506 + $0x15a] sm:$0xff]
      %v921 = vld [vmem:[%s506 + $0x16a] sm:$0xff]
      %v922 = vld [vmem:[%s506 + $0x172] sm:$0xff]
      %v923 = vld [vmem:[%s506 + $0x1b2] sm:$0xff]
      %v924 = vld [vmem:[%s506 + $0x1ba] sm:$0xff]
      %v925 = vld [vmem:[%s506 + $0x1ca] sm:$0xff]
      %v926 = vld [vmem:[%s506 + $0x1d2] sm:$0xff]
      %v927 = vld [vmem:[%s506 + $0x1e2] sm:$0xff]
      %v928 = vld [vmem:[%s506 + $0x1ea] sm:$0xff]
      %v929 = vld [vmem:[%s506 + $0x1fa] sm:$0xff]
      %v930 = vld [vmem:[%s506 + $0x202] sm:$0xff]
      %v931 = vld [vmem:[%s506 + $0x212] sm:$0xff]
      %v932 = vld [vmem:[%s506 + $0x21a] sm:$0xff]
      %v933 = vld [vmem:[%s506 + $0x22a] sm:$0xff]
      %v934 = vld [vmem:[%s506 + $0x232] sm:$0xff]
      %v935 = vld [vmem:[%s506 + $0x242] sm:$0xff]
      %v936 = vld [vmem:[%s506 + $0x24a] sm:$0xff]
      %v937 = vld [vmem:[%s506 + $0x25a] sm:$0xff]
      %v938 = vld [vmem:[%s506 + $0x262] sm:$0xff]
      %v939 = vld [vmem:[%s506 + $0x272] sm:$0xff]
      %v940 = vld [vmem:[%s506 + $0x27a] sm:$0xff]
      %v941 = vld [vmem:[%s506 + $0x28a] sm:$0xff]
      %v942 = vld [vmem:[%s506 + $0x292] sm:$0xff]
      %v943 = vld [vmem:[%s506 + $0x2a2] sm:$0xff]
      %v944 = vld [vmem:[%s506 + $0x2aa] sm:$0xff]
      %v945 = vld [vmem:[%s506 + $0x2ba] sm:$0xff]
      %v946 = vld [vmem:[%s506 + $0x2c2] sm:$0xff]
      %v947 = vld [vmem:[%s506 + $0x2d2] sm:$0xff]
      %v948 = vld [vmem:[%s506 + $0x2da] sm:$0xff]
      %v949 = vld [vmem:[%s506 + $0x2ea] sm:$0xff]
      %v950 = vld [vmem:[%s506 + $0x2f2] sm:$0xff]
      %v951 = vld [vmem:[%s506 + $0x302] sm:$0xff]
      %v952 = vld [vmem:[%s506 + $0x30a] sm:$0xff]
      %v953 = vld [vmem:[%s506 + $0x31a] sm:$0xff]
      %v954 = vld [vmem:[%s506 + $0x322] sm:$0xff]
      %s955 = scalar_lea.vmem [#allocation2], 48
      %v956 = vld [vmem:[%s955] sm:$0xff]
      %v957 = vld [vmem:[%s955 + $0x8] sm:$0xff]
      %v958 = vld [vmem:[%s955 + $0x18] sm:$0xff]
      %v959 = vld [vmem:[%s955 + $0x20] sm:$0xff]
      %v960 = vld [vmem:[%s955 + $0x30] sm:$0xff]
      %v961 = vld [vmem:[%s955 + $0x38] sm:$0xff]
      %v962 = vld [vmem:[%s955 + $0x48] sm:$0xff]
      %v963 = vld [vmem:[%s955 + $0x50] sm:$0xff]
      %v964 = vld [vmem:[%s955 + $0x60] sm:$0xff]
      %v965 = vld [vmem:[%s955 + $0x68] sm:$0xff]
      %v966 = vld [vmem:[%s955 + $0x78] sm:$0xff]
      %v967 = vld [vmem:[%s955 + $0x80] sm:$0xff]
      %v968 = vld [vmem:[%s955 + $0x90] sm:$0xff]
      %v969 = vld [vmem:[%s955 + $0x98] sm:$0xff]
      %v970 = vld [vmem:[%s955 + $0xa8] sm:$0xff]
      %v971 = vld [vmem:[%s955 + $0xb0] sm:$0xff]
      %v972 = vld [vmem:[%s955 + $0xc0] sm:$0xff]
      %v973 = vld [vmem:[%s955 + $0xc8] sm:$0xff]
      %v974 = vld [vmem:[%s955 + $0xd8] sm:$0xff]
      %v975 = vld [vmem:[%s955 + $0xe0] sm:$0xff]
      %v976 = vld [vmem:[%s955 + $0xf0] sm:$0xff]
      %v977 = vld [vmem:[%s955 + $0xf8] sm:$0xff]
      %v978 = vld [vmem:[%s955 + $0x108] sm:$0xff]
      %v979 = vld [vmem:[%s955 + $0x110] sm:$0xff]
      %v980 = vld [vmem:[%s955 + $0x120] sm:$0xff]
      %v981 = vld [vmem:[%s955 + $0x128] sm:$0xff]
      %v982 = vld [vmem:[%s955 + $0x138] sm:$0xff]
      %v983 = vld [vmem:[%s955 + $0x140] sm:$0xff]
      %v984 = vld [vmem:[%s955 + $0x150] sm:$0xff]
      %v985 = vld [vmem:[%s955 + $0x158] sm:$0xff]
      %v986 = vld [vmem:[%s955 + $0x168] sm:$0xff]
      %v987 = vld [vmem:[%s955 + $0x170] sm:$0xff]
      %v988 = vld [vmem:[%s955 + $0x1b0] sm:$0xff]
      %v989 = vld [vmem:[%s955 + $0x1b8] sm:$0xff]
      %v990 = vld [vmem:[%s955 + $0x1c8] sm:$0xff]
      %v991 = vld [vmem:[%s955 + $0x1d0] sm:$0xff]
      %v992 = vld [vmem:[%s955 + $0x1e0] sm:$0xff]
      %v993 = vld [vmem:[%s955 + $0x1e8] sm:$0xff]
      %v994 = vld [vmem:[%s955 + $0x1f8] sm:$0xff]
      %v995 = vld [vmem:[%s955 + $0x200] sm:$0xff]
      %v996 = vld [vmem:[%s955 + $0x210] sm:$0xff]
      %v997 = vld [vmem:[%s955 + $0x218] sm:$0xff]
      %v998 = vld [vmem:[%s955 + $0x228] sm:$0xff]
      %v999 = vld [vmem:[%s955 + $0x230] sm:$0xff]
      %v1000 = vld [vmem:[%s955 + $0x240] sm:$0xff]
      %v1001 = vld [vmem:[%s955 + $0x248] sm:$0xff]
      %v1002 = vld [vmem:[%s955 + $0x258] sm:$0xff]
      %v1003 = vld [vmem:[%s955 + $0x260] sm:$0xff]
      %v1004 = vld [vmem:[%s955 + $0x270] sm:$0xff]
      %v1005 = vld [vmem:[%s955 + $0x278] sm:$0xff]
      %v1006 = vld [vmem:[%s955 + $0x288] sm:$0xff]
      %v1007 = vld [vmem:[%s955 + $0x290] sm:$0xff]
      %v1008 = vld [vmem:[%s955 + $0x2a0] sm:$0xff]
      %v1009 = vld [vmem:[%s955 + $0x2a8] sm:$0xff]
      %v1010 = vld [vmem:[%s955 + $0x2b8] sm:$0xff]
      %v1011 = vld [vmem:[%s955 + $0x2c0] sm:$0xff]
      %v1012 = vld [vmem:[%s955 + $0x2d0] sm:$0xff]
      %v1013 = vld [vmem:[%s955 + $0x2d8] sm:$0xff]
      %v1014 = vld [vmem:[%s955 + $0x2e8] sm:$0xff]
      %v1015 = vld [vmem:[%s955 + $0x2f0] sm:$0xff]
      %v1016 = vld [vmem:[%s955 + $0x300] sm:$0xff]
      %v1017 = vld [vmem:[%s955 + $0x308] sm:$0xff]
      %v1018 = vld [vmem:[%s955 + $0x318] sm:$0xff]
      %v1019 = vld [vmem:[%s955 + $0x320] sm:$0xff]
      %v1020 = vld [vmem:[%s955 + $0x1] sm:$0xff]
      %v1021 = vld [vmem:[%s955 + $0x9] sm:$0xff]
      %v1022 = vld [vmem:[%s955 + $0x19] sm:$0xff]
      %v1023 = vld [vmem:[%s955 + $0x21] sm:$0xff]
      %v1024 = vld [vmem:[%s955 + $0x31] sm:$0xff]
      %v1025 = vld [vmem:[%s955 + $0x39] sm:$0xff]
      %v1026 = vld [vmem:[%s955 + $0x49] sm:$0xff]
      %v1027 = vld [vmem:[%s955 + $0x51] sm:$0xff]
      %v1028 = vld [vmem:[%s955 + $0x61] sm:$0xff]
      %v1029 = vld [vmem:[%s955 + $0x69] sm:$0xff]
      %v1030 = vld [vmem:[%s955 + $0x79] sm:$0xff]
      %v1031 = vld [vmem:[%s955 + $0x81] sm:$0xff]
      %v1032 = vld [vmem:[%s955 + $0x91] sm:$0xff]
      %v1033 = vld [vmem:[%s955 + $0x99] sm:$0xff]
      %v1034 = vld [vmem:[%s955 + $0xa9] sm:$0xff]
      %v1035 = vld [vmem:[%s955 + $0xb1] sm:$0xff]
      %v1036 = vld [vmem:[%s955 + $0xc1] sm:$0xff]
      %v1037 = vld [vmem:[%s955 + $0xc9] sm:$0xff]
      %v1038 = vld [vmem:[%s955 + $0xd9] sm:$0xff]
      %v1039 = vld [vmem:[%s955 + $0xe1] sm:$0xff]
      %v1040 = vld [vmem:[%s955 + $0xf1] sm:$0xff]
      %v1041 = vld [vmem:[%s955 + $0xf9] sm:$0xff]
      %v1042 = vld [vmem:[%s955 + $0x109] sm:$0xff]
      %v1043 = vld [vmem:[%s955 + $0x111] sm:$0xff]
      %v1044 = vld [vmem:[%s955 + $0x121] sm:$0xff]
      %v1045 = vld [vmem:[%s955 + $0x129] sm:$0xff]
      %v1046 = vld [vmem:[%s955 + $0x139] sm:$0xff]
      %v1047 = vld [vmem:[%s955 + $0x141] sm:$0xff]
      %v1048 = vld [vmem:[%s955 + $0x151] sm:$0xff]
      %v1049 = vld [vmem:[%s955 + $0x159] sm:$0xff]
      %v1050 = vld [vmem:[%s955 + $0x169] sm:$0xff]
      %v1051 = vld [vmem:[%s955 + $0x171] sm:$0xff]
      %v1052 = vld [vmem:[%s955 + $0x1b1] sm:$0xff]
      %v1053 = vld [vmem:[%s955 + $0x1b9] sm:$0xff]
      %v1054 = vld [vmem:[%s955 + $0x1c9] sm:$0xff]
      %v1055 = vld [vmem:[%s955 + $0x1d1] sm:$0xff]
      %v1056 = vld [vmem:[%s955 + $0x1e1] sm:$0xff]
      %v1057 = vld [vmem:[%s955 + $0x1e9] sm:$0xff]
      %v1058 = vld [vmem:[%s955 + $0x1f9] sm:$0xff]
      %v1059 = vld [vmem:[%s955 + $0x201] sm:$0xff]
      %v1060 = vld [vmem:[%s955 + $0x211] sm:$0xff]
      %v1061 = vld [vmem:[%s955 + $0x219] sm:$0xff]
      %v1062 = vld [vmem:[%s955 + $0x229] sm:$0xff]
      %v1063 = vld [vmem:[%s955 + $0x231] sm:$0xff]
      %v1064 = vld [vmem:[%s955 + $0x241] sm:$0xff]
      %v1065 = vld [vmem:[%s955 + $0x249] sm:$0xff]
      %v1066 = vld [vmem:[%s955 + $0x259] sm:$0xff]
      %v1067 = vld [vmem:[%s955 + $0x261] sm:$0xff]
      %v1068 = vld [vmem:[%s955 + $0x271] sm:$0xff]
      %v1069 = vld [vmem:[%s955 + $0x279] sm:$0xff]
      %v1070 = vld [vmem:[%s955 + $0x289] sm:$0xff]
      %v1071 = vld [vmem:[%s955 + $0x291] sm:$0xff]
      %v1072 = vld [vmem:[%s955 + $0x2a1] sm:$0xff]
      %v1073 = vld [vmem:[%s955 + $0x2a9] sm:$0xff]
      %v1074 = vld [vmem:[%s955 + $0x2b9] sm:$0xff]
      %v1075 = vld [vmem:[%s955 + $0x2c1] sm:$0xff]
      %v1076 = vld [vmem:[%s955 + $0x2d1] sm:$0xff]
      %v1077 = vld [vmem:[%s955 + $0x2d9] sm:$0xff]
      %v1078 = vld [vmem:[%s955 + $0x2e9] sm:$0xff]
      %v1079 = vld [vmem:[%s955 + $0x2f1] sm:$0xff]
      %v1080 = vld [vmem:[%s955 + $0x301] sm:$0xff]
      %v1081 = vld [vmem:[%s955 + $0x309] sm:$0xff]
      %v1082 = vld [vmem:[%s955 + $0x319] sm:$0xff]
      %v1083 = vld [vmem:[%s955 + $0x321] sm:$0xff]
      %v1084 = vld [vmem:[%s955 + $0x2] sm:$0xff]
      %v1085 = vld [vmem:[%s955 + $0xa] sm:$0xff]
      %v1086 = vld [vmem:[%s955 + $0x1a] sm:$0xff]
      %v1087 = vld [vmem:[%s955 + $0x22] sm:$0xff]
      %v1088 = vld [vmem:[%s955 + $0x32] sm:$0xff]
      %v1089 = vld [vmem:[%s955 + $0x3a] sm:$0xff]
      %v1090 = vld [vmem:[%s955 + $0x4a] sm:$0xff]
      %v1091 = vld [vmem:[%s955 + $0x52] sm:$0xff]
      %v1092 = vld [vmem:[%s955 + $0x62] sm:$0xff]
      %v1093 = vld [vmem:[%s955 + $0x6a] sm:$0xff]
      %v1094 = vld [vmem:[%s955 + $0x7a] sm:$0xff]
      %v1095 = vld [vmem:[%s955 + $0x82] sm:$0xff]
      %v1096 = vld [vmem:[%s955 + $0x92] sm:$0xff]
      %v1097 = vld [vmem:[%s955 + $0x9a] sm:$0xff]
      %v1098 = vld [vmem:[%s955 + $0xaa] sm:$0xff]
      %v1099 = vld [vmem:[%s955 + $0xb2] sm:$0xff]
      %v1100 = vld [vmem:[%s955 + $0xc2] sm:$0xff]
      %v1101 = vld [vmem:[%s955 + $0xca] sm:$0xff]
      %v1102 = vld [vmem:[%s955 + $0xda] sm:$0xff]
      %v1103 = vld [vmem:[%s955 + $0xe2] sm:$0xff]
      %v1104 = vld [vmem:[%s955 + $0xf2] sm:$0xff]
      %v1105 = vld [vmem:[%s955 + $0xfa] sm:$0xff]
      %v1106 = vld [vmem:[%s955 + $0x10a] sm:$0xff]
      %v1107 = vld [vmem:[%s955 + $0x112] sm:$0xff]
      %v1108 = vld [vmem:[%s955 + $0x122] sm:$0xff]
      %v1109 = vld [vmem:[%s955 + $0x12a] sm:$0xff]
      %v1110 = vld [vmem:[%s955 + $0x13a] sm:$0xff]
      %v1111 = vld [vmem:[%s955 + $0x142] sm:$0xff]
      %v1112 = vld [vmem:[%s955 + $0x152] sm:$0xff]
      %v1113 = vld [vmem:[%s955 + $0x15a] sm:$0xff]
      %v1114 = vld [vmem:[%s955 + $0x16a] sm:$0xff]
      %v1115 = vld [vmem:[%s955 + $0x172] sm:$0xff]
      %v1116 = vld [vmem:[%s955 + $0x1b2] sm:$0xff]
      %v1117 = vld [vmem:[%s955 + $0x1ba] sm:$0xff]
      %v1118 = vld [vmem:[%s955 + $0x1ca] sm:$0xff]
      %v1119 = vld [vmem:[%s955 + $0x1d2] sm:$0xff]
      %v1120 = vld [vmem:[%s955 + $0x1e2] sm:$0xff]
      %v1121 = vld [vmem:[%s955 + $0x1ea] sm:$0xff]
      %v1122 = vld [vmem:[%s955 + $0x1fa] sm:$0xff]
      %v1123 = vld [vmem:[%s955 + $0x202] sm:$0xff]
      %v1124 = vld [vmem:[%s955 + $0x212] sm:$0xff]
      %v1125 = vld [vmem:[%s955 + $0x21a] sm:$0xff]
      %v1126 = vld [vmem:[%s955 + $0x22a] sm:$0xff]
      %v1127 = vld [vmem:[%s955 + $0x232] sm:$0xff]
      %v1128 = vld [vmem:[%s955 + $0x242] sm:$0xff]
      %v1129 = vld [vmem:[%s955 + $0x24a] sm:$0xff]
      %v1130 = vld [vmem:[%s955 + $0x25a] sm:$0xff]
      %v1131 = vld [vmem:[%s955 + $0x262] sm:$0xff]
      %v1132 = vld [vmem:[%s955 + $0x272] sm:$0xff]
      %v1133 = vld [vmem:[%s955 + $0x27a] sm:$0xff]
      %v1134 = vld [vmem:[%s955 + $0x28a] sm:$0xff]
      %v1135 = vld [vmem:[%s955 + $0x292] sm:$0xff]
      %v1136 = vld [vmem:[%s955 + $0x2a2] sm:$0xff]
      %v1137 = vld [vmem:[%s955 + $0x2aa] sm:$0xff]
      %v1138 = vld [vmem:[%s955 + $0x2ba] sm:$0xff]
      %v1139 = vld [vmem:[%s955 + $0x2c2] sm:$0xff]
      %v1140 = vld [vmem:[%s955 + $0x2d2] sm:$0xff]
      %v1141 = vld [vmem:[%s955 + $0x2da] sm:$0xff]
      %v1142 = vld [vmem:[%s955 + $0x2ea] sm:$0xff]
      %v1143 = vld [vmem:[%s955 + $0x2f2] sm:$0xff]
      %v1144 = vld [vmem:[%s955 + $0x302] sm:$0xff]
      %v1145 = vld [vmem:[%s955 + $0x30a] sm:$0xff]
      %v1146 = vld [vmem:[%s955 + $0x31a] sm:$0xff]
      %v1147 = vld [vmem:[%s955 + $0x322] sm:$0xff]
      %1212 = vrot.lane.b32.xlu0 %v635, 4
      %v1213 = vpop.permute.xlu0 %1212
      %1214 = vrot.lane.b32.xlu0 %v636, 4
      %v1215 = vpop.permute.xlu0 %1214
      %1216 = vrot.lane.b32.xlu0 %v637, 4
      %v1217 = vpop.permute.xlu0 %1216
      %1218 = vrot.lane.b32.xlu0 %v638, 4
      %v1219 = vpop.permute.xlu0 %1218
      %1220 = vrot.lane.b32.xlu0 %v639, 4
      %v1221 = vpop.permute.xlu0 %1220
      %1222 = vrot.lane.b32.xlu0 %v640, 4
      %v1223 = vpop.permute.xlu0 %1222
      %1224 = vrot.lane.b32.xlu0 %v641, 4
      %v1225 = vpop.permute.xlu0 %1224
      %1226 = vrot.lane.b32.xlu0 %v642, 4
      %v1227 = vpop.permute.xlu0 %1226
      %1228 = vrot.lane.b32.xlu0 %v643, 4
      %v1229 = vpop.permute.xlu0 %1228
      %1230 = vrot.lane.b32.xlu0 %v644, 4
      %v1231 = vpop.permute.xlu0 %1230
      %1232 = vrot.lane.b32.xlu0 %v645, 4
      %v1233 = vpop.permute.xlu0 %1232
      %1234 = vrot.lane.b32.xlu0 %v646, 4
      %v1235 = vpop.permute.xlu0 %1234
      %1236 = vrot.lane.b32.xlu0 %v647, 4
      %v1237 = vpop.permute.xlu0 %1236
      %1238 = vrot.lane.b32.xlu0 %v648, 4
      %v1239 = vpop.permute.xlu0 %1238
      %1240 = vrot.lane.b32.xlu0 %v649, 4
      %v1241 = vpop.permute.xlu0 %1240
      %1242 = vrot.lane.b32.xlu0 %v650, 4
      %v1243 = vpop.permute.xlu0 %1242
      %1244 = vrot.lane.b32.xlu0 %v651, 4
      %v1245 = vpop.permute.xlu0 %1244
      %1246 = vrot.lane.b32.xlu0 %v652, 4
      %v1247 = vpop.permute.xlu0 %1246
      %1248 = vrot.lane.b32.xlu0 %v653, 4
      %v1249 = vpop.permute.xlu0 %1248
      %1250 = vrot.lane.b32.xlu0 %v654, 4
      %v1251 = vpop.permute.xlu0 %1250
      %1252 = vrot.lane.b32.xlu0 %v655, 4
      %v1253 = vpop.permute.xlu0 %1252
      %1254 = vrot.lane.b32.xlu0 %v656, 4
      %v1255 = vpop.permute.xlu0 %1254
      %1256 = vrot.lane.b32.xlu0 %v657, 4
      %v1257 = vpop.permute.xlu0 %1256
      %1258 = vrot.lane.b32.xlu0 %v658, 4
      %v1259 = vpop.permute.xlu0 %1258
      %1260 = vrot.lane.b32.xlu0 %v659, 4
      %v1261 = vpop.permute.xlu0 %1260
      %1262 = vrot.lane.b32.xlu0 %v660, 4
      %v1263 = vpop.permute.xlu0 %1262
      %1264 = vrot.lane.b32.xlu0 %v661, 4
      %v1265 = vpop.permute.xlu0 %1264
      %1266 = vrot.lane.b32.xlu0 %v662, 4
      %v1267 = vpop.permute.xlu0 %1266
      %1268 = vrot.lane.b32.xlu0 %v663, 4
      %v1269 = vpop.permute.xlu0 %1268
      %1270 = vrot.lane.b32.xlu0 %v664, 4
      %v1271 = vpop.permute.xlu0 %1270
      %1272 = vrot.lane.b32.xlu0 %v665, 4
      %v1273 = vpop.permute.xlu0 %1272
      %1274 = vrot.lane.b32.xlu0 %v666, 4
      %v1275 = vpop.permute.xlu0 %1274
      %1276 = vrot.lane.b32.xlu0 %v667, 4
      %v1277 = vpop.permute.xlu0 %1276
      %1278 = vrot.lane.b32.xlu0 %v668, 4
      %v1279 = vpop.permute.xlu0 %1278
      %1280 = vrot.lane.b32.xlu0 %v669, 4
      %v1281 = vpop.permute.xlu0 %1280
      %1282 = vrot.lane.b32.xlu0 %v670, 4
      %v1283 = vpop.permute.xlu0 %1282
      %1284 = vrot.lane.b32.xlu0 %v671, 4
      %v1285 = vpop.permute.xlu0 %1284
      %1286 = vrot.lane.b32.xlu0 %v672, 4
      %v1287 = vpop.permute.xlu0 %1286
      %1288 = vrot.lane.b32.xlu0 %v673, 4
      %v1289 = vpop.permute.xlu0 %1288
      %1290 = vrot.lane.b32.xlu0 %v674, 4
      %v1291 = vpop.permute.xlu0 %1290
      %1292 = vrot.lane.b32.xlu0 %v675, 4
      %v1293 = vpop.permute.xlu0 %1292
      %1294 = vrot.lane.b32.xlu0 %v676, 4
      %v1295 = vpop.permute.xlu0 %1294
      %1296 = vrot.lane.b32.xlu0 %v677, 4
      %v1297 = vpop.permute.xlu0 %1296
      %1298 = vrot.lane.b32.xlu0 %v678, 4
      %v1299 = vpop.permute.xlu0 %1298
      %1300 = vrot.lane.b32.xlu0 %v679, 4
      %v1301 = vpop.permute.xlu0 %1300
      %1302 = vrot.lane.b32.xlu0 %v680, 4
      %v1303 = vpop.permute.xlu0 %1302
      %1304 = vrot.lane.b32.xlu0 %v681, 4
      %v1305 = vpop.permute.xlu0 %1304
      %1306 = vrot.lane.b32.xlu0 %v682, 4
      %v1307 = vpop.permute.xlu0 %1306
      %1308 = vrot.lane.b32.xlu0 %v683, 4
      %v1309 = vpop.permute.xlu0 %1308
      %1310 = vrot.lane.b32.xlu0 %v684, 4
      %v1311 = vpop.permute.xlu0 %1310
      %1312 = vrot.lane.b32.xlu0 %v685, 4
      %v1313 = vpop.permute.xlu0 %1312
      %1314 = vrot.lane.b32.xlu0 %v686, 4
      %v1315 = vpop.permute.xlu0 %1314
      %1316 = vrot.lane.b32.xlu0 %v687, 4
      %v1317 = vpop.permute.xlu0 %1316
      %1318 = vrot.lane.b32.xlu0 %v688, 4
      %v1319 = vpop.permute.xlu0 %1318
      %1320 = vrot.lane.b32.xlu0 %v689, 4
      %v1321 = vpop.permute.xlu0 %1320
      %1322 = vrot.lane.b32.xlu0 %v690, 4
      %v1323 = vpop.permute.xlu0 %1322
      %1324 = vrot.lane.b32.xlu0 %v691, 4
      %v1325 = vpop.permute.xlu0 %1324
      %1326 = vrot.lane.b32.xlu0 %v692, 4
      %v1327 = vpop.permute.xlu0 %1326
      %1328 = vrot.lane.b32.xlu0 %v693, 4
      %v1329 = vpop.permute.xlu0 %1328
      %1330 = vrot.lane.b32.xlu0 %v694, 4
      %v1331 = vpop.permute.xlu0 %1330
      %1332 = vrot.lane.b32.xlu0 %v695, 4
      %v1333 = vpop.permute.xlu0 %1332
      %1334 = vrot.lane.b32.xlu0 %v696, 4
      %v1335 = vpop.permute.xlu0 %1334
      %1336 = vrot.lane.b32.xlu0 %v697, 4
      %v1337 = vpop.permute.xlu0 %1336
      %1338 = vrot.lane.b32.xlu0 %v698, 4
      %v1339 = vpop.permute.xlu0 %1338
      %1468 = vrot.lane.b32.xlu0 %v699, 8
      %v1469 = vpop.permute.xlu0 %1468
      %1470 = vrot.lane.b32.xlu0 %v700, 8
      %v1471 = vpop.permute.xlu0 %1470
      %1472 = vrot.lane.b32.xlu0 %v701, 8
      %v1473 = vpop.permute.xlu0 %1472
      %1474 = vrot.lane.b32.xlu0 %v702, 8
      %v1475 = vpop.permute.xlu0 %1474
      %1476 = vrot.lane.b32.xlu0 %v703, 8
      %v1477 = vpop.permute.xlu0 %1476
      %1478 = vrot.lane.b32.xlu0 %v704, 8
      %v1479 = vpop.permute.xlu0 %1478
      %1480 = vrot.lane.b32.xlu0 %v705, 8
      %v1481 = vpop.permute.xlu0 %1480
      %1482 = vrot.lane.b32.xlu0 %v706, 8
      %v1483 = vpop.permute.xlu0 %1482
      %1484 = vrot.lane.b32.xlu0 %v707, 8
      %v1485 = vpop.permute.xlu0 %1484
      %1486 = vrot.lane.b32.xlu0 %v708, 8
      %v1487 = vpop.permute.xlu0 %1486
      %1488 = vrot.lane.b32.xlu0 %v709, 8
      %v1489 = vpop.permute.xlu0 %1488
      %1490 = vrot.lane.b32.xlu0 %v710, 8
      %v1491 = vpop.permute.xlu0 %1490
      %1492 = vrot.lane.b32.xlu0 %v711, 8
      %v1493 = vpop.permute.xlu0 %1492
      %1494 = vrot.lane.b32.xlu0 %v712, 8
      %v1495 = vpop.permute.xlu0 %1494
      %1496 = vrot.lane.b32.xlu0 %v713, 8
      %v1497 = vpop.permute.xlu0 %1496
      %1498 = vrot.lane.b32.xlu0 %v714, 8
      %v1499 = vpop.permute.xlu0 %1498
      %1500 = vrot.lane.b32.xlu0 %v715, 8
      %v1501 = vpop.permute.xlu0 %1500
      %1502 = vrot.lane.b32.xlu0 %v716, 8
      %v1503 = vpop.permute.xlu0 %1502
      %1504 = vrot.lane.b32.xlu0 %v717, 8
      %v1505 = vpop.permute.xlu0 %1504
      %1506 = vrot.lane.b32.xlu0 %v718, 8
      %v1507 = vpop.permute.xlu0 %1506
      %1508 = vrot.lane.b32.xlu0 %v719, 8
      %v1509 = vpop.permute.xlu0 %1508
      %1510 = vrot.lane.b32.xlu0 %v720, 8
      %v1511 = vpop.permute.xlu0 %1510
      %1512 = vrot.lane.b32.xlu0 %v721, 8
      %v1513 = vpop.permute.xlu0 %1512
      %1514 = vrot.lane.b32.xlu0 %v722, 8
      %v1515 = vpop.permute.xlu0 %1514
      %1516 = vrot.lane.b32.xlu0 %v723, 8
      %v1517 = vpop.permute.xlu0 %1516
      %1518 = vrot.lane.b32.xlu0 %v724, 8
      %v1519 = vpop.permute.xlu0 %1518
      %1520 = vrot.lane.b32.xlu0 %v725, 8
      %v1521 = vpop.permute.xlu0 %1520
      %1522 = vrot.lane.b32.xlu0 %v726, 8
      %v1523 = vpop.permute.xlu0 %1522
      %1524 = vrot.lane.b32.xlu0 %v727, 8
      %v1525 = vpop.permute.xlu0 %1524
      %1526 = vrot.lane.b32.xlu0 %v728, 8
      %v1527 = vpop.permute.xlu0 %1526
      %1528 = vrot.lane.b32.xlu0 %v729, 8
      %v1529 = vpop.permute.xlu0 %1528
      %1530 = vrot.lane.b32.xlu0 %v730, 8
      %v1531 = vpop.permute.xlu0 %1530
      %1532 = vrot.lane.b32.xlu0 %v731, 8
      %v1533 = vpop.permute.xlu0 %1532
      %1534 = vrot.lane.b32.xlu0 %v732, 8
      %v1535 = vpop.permute.xlu0 %1534
      %1536 = vrot.lane.b32.xlu0 %v733, 8
      %v1537 = vpop.permute.xlu0 %1536
      %1538 = vrot.lane.b32.xlu0 %v734, 8
      %v1539 = vpop.permute.xlu0 %1538
      %1540 = vrot.lane.b32.xlu0 %v735, 8
      %v1541 = vpop.permute.xlu0 %1540
      %1542 = vrot.lane.b32.xlu0 %v736, 8
      %v1543 = vpop.permute.xlu0 %1542
      %1544 = vrot.lane.b32.xlu0 %v737, 8
      %v1545 = vpop.permute.xlu0 %1544
      %1546 = vrot.lane.b32.xlu0 %v738, 8
      %v1547 = vpop.permute.xlu0 %1546
      %1548 = vrot.lane.b32.xlu0 %v739, 8
      %v1549 = vpop.permute.xlu0 %1548
      %1550 = vrot.lane.b32.xlu0 %v740, 8
      %v1551 = vpop.permute.xlu0 %1550
      %1552 = vrot.lane.b32.xlu0 %v741, 8
      %v1553 = vpop.permute.xlu0 %1552
      %1554 = vrot.lane.b32.xlu0 %v742, 8
      %v1555 = vpop.permute.xlu0 %1554
      %1556 = vrot.lane.b32.xlu0 %v743, 8
      %v1557 = vpop.permute.xlu0 %1556
      %1558 = vrot.lane.b32.xlu0 %v744, 8
      %v1559 = vpop.permute.xlu0 %1558
      %1560 = vrot.lane.b32.xlu0 %v745, 8
      %v1561 = vpop.permute.xlu0 %1560
      %1562 = vrot.lane.b32.xlu0 %v746, 8
      %v1563 = vpop.permute.xlu0 %1562
      %1564 = vrot.lane.b32.xlu0 %v747, 8
      %v1565 = vpop.permute.xlu0 %1564
      %1566 = vrot.lane.b32.xlu0 %v748, 8
      %v1567 = vpop.permute.xlu0 %1566
      %1568 = vrot.lane.b32.xlu0 %v749, 8
      %v1569 = vpop.permute.xlu0 %1568
      %1570 = vrot.lane.b32.xlu0 %v750, 8
      %v1571 = vpop.permute.xlu0 %1570
      %1572 = vrot.lane.b32.xlu0 %v751, 8
      %v1573 = vpop.permute.xlu0 %1572
      %1574 = vrot.lane.b32.xlu0 %v752, 8
      %v1575 = vpop.permute.xlu0 %1574
      %1576 = vrot.lane.b32.xlu0 %v753, 8
      %v1577 = vpop.permute.xlu0 %1576
      %1578 = vrot.lane.b32.xlu0 %v754, 8
      %v1579 = vpop.permute.xlu0 %1578
      %1580 = vrot.lane.b32.xlu0 %v755, 8
      %v1581 = vpop.permute.xlu0 %1580
      %1582 = vrot.lane.b32.xlu0 %v756, 8
      %v1583 = vpop.permute.xlu0 %1582
      %1584 = vrot.lane.b32.xlu0 %v757, 8
      %v1585 = vpop.permute.xlu0 %1584
      %1586 = vrot.lane.b32.xlu0 %v758, 8
      %v1587 = vpop.permute.xlu0 %1586
      %1588 = vrot.lane.b32.xlu0 %v759, 8
      %v1589 = vpop.permute.xlu0 %1588
      %1590 = vrot.lane.b32.xlu0 %v760, 8
      %v1591 = vpop.permute.xlu0 %1590
      %1592 = vrot.lane.b32.xlu0 %v761, 8
      %v1593 = vpop.permute.xlu0 %1592
      %1594 = vrot.lane.b32.xlu0 %v762, 8
      %v1595 = vpop.permute.xlu0 %1594
      %1724 = vrot.lane.b32.xlu0 %v763, 12
      %v1725 = vpop.permute.xlu0 %1724
      %1726 = vrot.lane.b32.xlu0 %v764, 12
      %v1727 = vpop.permute.xlu0 %1726
      %1728 = vrot.lane.b32.xlu0 %v765, 12
      %v1729 = vpop.permute.xlu0 %1728
      %1730 = vrot.lane.b32.xlu0 %v766, 12
      %v1731 = vpop.permute.xlu0 %1730
      %1732 = vrot.lane.b32.xlu0 %v767, 12
      %v1733 = vpop.permute.xlu0 %1732
      %1734 = vrot.lane.b32.xlu0 %v768, 12
      %v1735 = vpop.permute.xlu0 %1734
      %1736 = vrot.lane.b32.xlu0 %v769, 12
      %v1737 = vpop.permute.xlu0 %1736
      %1738 = vrot.lane.b32.xlu0 %v770, 12
      %v1739 = vpop.permute.xlu0 %1738
      %1740 = vrot.lane.b32.xlu0 %v771, 12
      %v1741 = vpop.permute.xlu0 %1740
      %1742 = vrot.lane.b32.xlu0 %v772, 12
      %v1743 = vpop.permute.xlu0 %1742
      %1744 = vrot.lane.b32.xlu0 %v773, 12
      %v1745 = vpop.permute.xlu0 %1744
      %1746 = vrot.lane.b32.xlu0 %v774, 12
      %v1747 = vpop.permute.xlu0 %1746
      %1748 = vrot.lane.b32.xlu0 %v775, 12
      %v1749 = vpop.permute.xlu0 %1748
      %1750 = vrot.lane.b32.xlu0 %v776, 12
      %v1751 = vpop.permute.xlu0 %1750
      %1752 = vrot.lane.b32.xlu0 %v777, 12
      %v1753 = vpop.permute.xlu0 %1752
      %1754 = vrot.lane.b32.xlu0 %v778, 12
      %v1755 = vpop.permute.xlu0 %1754
      %1756 = vrot.lane.b32.xlu0 %v779, 12
      %v1757 = vpop.permute.xlu0 %1756
      %1758 = vrot.lane.b32.xlu0 %v780, 12
      %v1759 = vpop.permute.xlu0 %1758
      %1760 = vrot.lane.b32.xlu0 %v781, 12
      %v1761 = vpop.permute.xlu0 %1760
      %1762 = vrot.lane.b32.xlu0 %v782, 12
      %v1763 = vpop.permute.xlu0 %1762
      %1764 = vrot.lane.b32.xlu0 %v783, 12
      %v1765 = vpop.permute.xlu0 %1764
      %1766 = vrot.lane.b32.xlu0 %v784, 12
      %v1767 = vpop.permute.xlu0 %1766
      %1768 = vrot.lane.b32.xlu0 %v785, 12
      %v1769 = vpop.permute.xlu0 %1768
      %1770 = vrot.lane.b32.xlu0 %v786, 12
      %v1771 = vpop.permute.xlu0 %1770
      %1772 = vrot.lane.b32.xlu0 %v787, 12
      %v1773 = vpop.permute.xlu0 %1772
      %1774 = vrot.lane.b32.xlu0 %v788, 12
      %v1775 = vpop.permute.xlu0 %1774
      %1776 = vrot.lane.b32.xlu0 %v789, 12
      %v1777 = vpop.permute.xlu0 %1776
      %1778 = vrot.lane.b32.xlu0 %v790, 12
      %v1779 = vpop.permute.xlu0 %1778
      %1780 = vrot.lane.b32.xlu0 %v791, 12
      %v1781 = vpop.permute.xlu0 %1780
      %1782 = vrot.lane.b32.xlu0 %v792, 12
      %v1783 = vpop.permute.xlu0 %1782
      %1784 = vrot.lane.b32.xlu0 %v793, 12
      %v1785 = vpop.permute.xlu0 %1784
      %1786 = vrot.lane.b32.xlu0 %v794, 12
      %v1787 = vpop.permute.xlu0 %1786
      %1788 = vrot.lane.b32.xlu0 %v795, 12
      %v1789 = vpop.permute.xlu0 %1788
      %1790 = vrot.lane.b32.xlu0 %v796, 12
      %v1791 = vpop.permute.xlu0 %1790
      %1792 = vrot.lane.b32.xlu0 %v797, 12
      %v1793 = vpop.permute.xlu0 %1792
      %1794 = vrot.lane.b32.xlu0 %v798, 12
      %v1795 = vpop.permute.xlu0 %1794
      %1796 = vrot.lane.b32.xlu0 %v799, 12
      %v1797 = vpop.permute.xlu0 %1796
      %1798 = vrot.lane.b32.xlu0 %v800, 12
      %v1799 = vpop.permute.xlu0 %1798
      %1800 = vrot.lane.b32.xlu0 %v801, 12
      %v1801 = vpop.permute.xlu0 %1800
      %1802 = vrot.lane.b32.xlu0 %v802, 12
      %v1803 = vpop.permute.xlu0 %1802
      %1804 = vrot.lane.b32.xlu0 %v803, 12
      %v1805 = vpop.permute.xlu0 %1804
      %1806 = vrot.lane.b32.xlu0 %v804, 12
      %v1807 = vpop.permute.xlu0 %1806
      %1808 = vrot.lane.b32.xlu0 %v805, 12
      %v1809 = vpop.permute.xlu0 %1808
      %1810 = vrot.lane.b32.xlu0 %v806, 12
      %v1811 = vpop.permute.xlu0 %1810
      %1812 = vrot.lane.b32.xlu0 %v807, 12
      %v1813 = vpop.permute.xlu0 %1812
      %1814 = vrot.lane.b32.xlu0 %v808, 12
      %v1815 = vpop.permute.xlu0 %1814
      %1816 = vrot.lane.b32.xlu0 %v809, 12
      %v1817 = vpop.permute.xlu0 %1816
      %1818 = vrot.lane.b32.xlu0 %v810, 12
      %v1819 = vpop.permute.xlu0 %1818
      %1820 = vrot.lane.b32.xlu0 %v811, 12
      %v1821 = vpop.permute.xlu0 %1820
      %1822 = vrot.lane.b32.xlu0 %v812, 12
      %v1823 = vpop.permute.xlu0 %1822
      %1824 = vrot.lane.b32.xlu0 %v813, 12
      %v1825 = vpop.permute.xlu0 %1824
      %1826 = vrot.lane.b32.xlu0 %v814, 12
      %v1827 = vpop.permute.xlu0 %1826
      %1828 = vrot.lane.b32.xlu0 %v815, 12
      %v1829 = vpop.permute.xlu0 %1828
      %1830 = vrot.lane.b32.xlu0 %v816, 12
      %v1831 = vpop.permute.xlu0 %1830
      %1832 = vrot.lane.b32.xlu0 %v817, 12
      %v1833 = vpop.permute.xlu0 %1832
      %1834 = vrot.lane.b32.xlu0 %v818, 12
      %v1835 = vpop.permute.xlu0 %1834
      %1836 = vrot.lane.b32.xlu0 %v819, 12
      %v1837 = vpop.permute.xlu0 %1836
      %1838 = vrot.lane.b32.xlu0 %v820, 12
      %v1839 = vpop.permute.xlu0 %1838
      %1840 = vrot.lane.b32.xlu0 %v821, 12
      %v1841 = vpop.permute.xlu0 %1840
      %1842 = vrot.lane.b32.xlu0 %v822, 12
      %v1843 = vpop.permute.xlu0 %1842
      %1844 = vrot.lane.b32.xlu0 %v823, 12
      %v1845 = vpop.permute.xlu0 %1844
      %1846 = vrot.lane.b32.xlu0 %v824, 12
      %v1847 = vpop.permute.xlu0 %1846
      %1848 = vrot.lane.b32.xlu0 %v825, 12
      %v1849 = vpop.permute.xlu0 %1848
      %1850 = vrot.lane.b32.xlu0 %v826, 12
      %v1851 = vpop.permute.xlu0 %1850
      %1980 = vrot.lane.b32.xlu0 %v827, 16
      %v1981 = vpop.permute.xlu0 %1980
      %1982 = vrot.lane.b32.xlu0 %v828, 16
      %v1983 = vpop.permute.xlu0 %1982
      %1984 = vrot.lane.b32.xlu0 %v829, 16
      %v1985 = vpop.permute.xlu0 %1984
      %1986 = vrot.lane.b32.xlu0 %v830, 16
      %v1987 = vpop.permute.xlu0 %1986
      %1988 = vrot.lane.b32.xlu0 %v831, 16
      %v1989 = vpop.permute.xlu0 %1988
      %1990 = vrot.lane.b32.xlu0 %v832, 16
      %v1991 = vpop.permute.xlu0 %1990
      %1992 = vrot.lane.b32.xlu0 %v833, 16
      %v1993 = vpop.permute.xlu0 %1992
      %1994 = vrot.lane.b32.xlu0 %v834, 16
      %v1995 = vpop.permute.xlu0 %1994
      %1996 = vrot.lane.b32.xlu0 %v835, 16
      %v1997 = vpop.permute.xlu0 %1996
      %1998 = vrot.lane.b32.xlu0 %v836, 16
      %v1999 = vpop.permute.xlu0 %1998
      %2000 = vrot.lane.b32.xlu0 %v837, 16
      %v2001 = vpop.permute.xlu0 %2000
      %2002 = vrot.lane.b32.xlu0 %v838, 16
      %v2003 = vpop.permute.xlu0 %2002
      %2004 = vrot.lane.b32.xlu0 %v839, 16
      %v2005 = vpop.permute.xlu0 %2004
      %2006 = vrot.lane.b32.xlu0 %v840, 16
      %v2007 = vpop.permute.xlu0 %2006
      %2008 = vrot.lane.b32.xlu0 %v841, 16
      %v2009 = vpop.permute.xlu0 %2008
      %2010 = vrot.lane.b32.xlu0 %v842, 16
      %v2011 = vpop.permute.xlu0 %2010
      %2012 = vrot.lane.b32.xlu0 %v843, 16
      %v2013 = vpop.permute.xlu0 %2012
      %2014 = vrot.lane.b32.xlu0 %v844, 16
      %v2015 = vpop.permute.xlu0 %2014
      %2016 = vrot.lane.b32.xlu0 %v845, 16
      %v2017 = vpop.permute.xlu0 %2016
      %2018 = vrot.lane.b32.xlu0 %v846, 16
      %v2019 = vpop.permute.xlu0 %2018
      %2020 = vrot.lane.b32.xlu0 %v847, 16
      %v2021 = vpop.permute.xlu0 %2020
      %2022 = vrot.lane.b32.xlu0 %v848, 16
      %v2023 = vpop.permute.xlu0 %2022
      %2024 = vrot.lane.b32.xlu0 %v849, 16
      %v2025 = vpop.permute.xlu0 %2024
      %2026 = vrot.lane.b32.xlu0 %v850, 16
      %v2027 = vpop.permute.xlu0 %2026
      %2028 = vrot.lane.b32.xlu0 %v851, 16
      %v2029 = vpop.permute.xlu0 %2028
      %2030 = vrot.lane.b32.xlu0 %v852, 16
      %v2031 = vpop.permute.xlu0 %2030
      %2032 = vrot.lane.b32.xlu0 %v853, 16
      %v2033 = vpop.permute.xlu0 %2032
      %2034 = vrot.lane.b32.xlu0 %v854, 16
      %v2035 = vpop.permute.xlu0 %2034
      %2036 = vrot.lane.b32.xlu0 %v855, 16
      %v2037 = vpop.permute.xlu0 %2036
      %2038 = vrot.lane.b32.xlu0 %v856, 16
      %v2039 = vpop.permute.xlu0 %2038
      %2040 = vrot.lane.b32.xlu0 %v857, 16
      %v2041 = vpop.permute.xlu0 %2040
      %2042 = vrot.lane.b32.xlu0 %v858, 16
      %v2043 = vpop.permute.xlu0 %2042
      %2044 = vrot.lane.b32.xlu0 %v859, 16
      %v2045 = vpop.permute.xlu0 %2044
      %2046 = vrot.lane.b32.xlu0 %v860, 16
      %v2047 = vpop.permute.xlu0 %2046
      %2048 = vrot.lane.b32.xlu0 %v861, 16
      %v2049 = vpop.permute.xlu0 %2048
      %2050 = vrot.lane.b32.xlu0 %v862, 16
      %v2051 = vpop.permute.xlu0 %2050
      %2052 = vrot.lane.b32.xlu0 %v863, 16
      %v2053 = vpop.permute.xlu0 %2052
      %2054 = vrot.lane.b32.xlu0 %v864, 16
      %v2055 = vpop.permute.xlu0 %2054
      %2056 = vrot.lane.b32.xlu0 %v865, 16
      %v2057 = vpop.permute.xlu0 %2056
      %2058 = vrot.lane.b32.xlu0 %v866, 16
      %v2059 = vpop.permute.xlu0 %2058
      %2060 = vrot.lane.b32.xlu0 %v867, 16
      %v2061 = vpop.permute.xlu0 %2060
      %2062 = vrot.lane.b32.xlu0 %v868, 16
      %v2063 = vpop.permute.xlu0 %2062
      %2064 = vrot.lane.b32.xlu0 %v869, 16
      %v2065 = vpop.permute.xlu0 %2064
      %2066 = vrot.lane.b32.xlu0 %v870, 16
      %v2067 = vpop.permute.xlu0 %2066
      %2068 = vrot.lane.b32.xlu0 %v871, 16
      %v2069 = vpop.permute.xlu0 %2068
      %2070 = vrot.lane.b32.xlu0 %v872, 16
      %v2071 = vpop.permute.xlu0 %2070
      %2072 = vrot.lane.b32.xlu0 %v873, 16
      %v2073 = vpop.permute.xlu0 %2072
      %2074 = vrot.lane.b32.xlu0 %v874, 16
      %v2075 = vpop.permute.xlu0 %2074
      %2076 = vrot.lane.b32.xlu0 %v875, 16
      %v2077 = vpop.permute.xlu0 %2076
      %2078 = vrot.lane.b32.xlu0 %v876, 16
      %v2079 = vpop.permute.xlu0 %2078
      %2080 = vrot.lane.b32.xlu0 %v877, 16
      %v2081 = vpop.permute.xlu0 %2080
      %2082 = vrot.lane.b32.xlu0 %v878, 16
      %v2083 = vpop.permute.xlu0 %2082
      %2084 = vrot.lane.b32.xlu0 %v879, 16
      %v2085 = vpop.permute.xlu0 %2084
      %2086 = vrot.lane.b32.xlu0 %v880, 16
      %v2087 = vpop.permute.xlu0 %2086
      %2088 = vrot.lane.b32.xlu0 %v881, 16
      %v2089 = vpop.permute.xlu0 %2088
      %2090 = vrot.lane.b32.xlu0 %v882, 16
      %v2091 = vpop.permute.xlu0 %2090
      %2092 = vrot.lane.b32.xlu0 %v883, 16
      %v2093 = vpop.permute.xlu0 %2092
      %2094 = vrot.lane.b32.xlu0 %v884, 16
      %v2095 = vpop.permute.xlu0 %2094
      %2096 = vrot.lane.b32.xlu0 %v885, 16
      %v2097 = vpop.permute.xlu0 %2096
      %2098 = vrot.lane.b32.xlu0 %v886, 16
      %v2099 = vpop.permute.xlu0 %2098
      %2100 = vrot.lane.b32.xlu0 %v887, 16
      %v2101 = vpop.permute.xlu0 %2100
      %2102 = vrot.lane.b32.xlu0 %v888, 16
      %v2103 = vpop.permute.xlu0 %2102
      %2104 = vrot.lane.b32.xlu0 %v889, 16
      %v2105 = vpop.permute.xlu0 %2104
      %2106 = vrot.lane.b32.xlu0 %v890, 16
      %v2107 = vpop.permute.xlu0 %2106
      %2236 = vrot.lane.b32.xlu0 %v891, 20
      %v2237 = vpop.permute.xlu0 %2236
      %2238 = vrot.lane.b32.xlu0 %v892, 20
      %v2239 = vpop.permute.xlu0 %2238
      %2240 = vrot.lane.b32.xlu0 %v893, 20
      %v2241 = vpop.permute.xlu0 %2240
      %2242 = vrot.lane.b32.xlu0 %v894, 20
      %v2243 = vpop.permute.xlu0 %2242
      %2244 = vrot.lane.b32.xlu0 %v895, 20
      %v2245 = vpop.permute.xlu0 %2244
      %2246 = vrot.lane.b32.xlu0 %v896, 20
      %v2247 = vpop.permute.xlu0 %2246
      %2248 = vrot.lane.b32.xlu0 %v897, 20
      %v2249 = vpop.permute.xlu0 %2248
      %2250 = vrot.lane.b32.xlu0 %v898, 20
      %v2251 = vpop.permute.xlu0 %2250
      %2252 = vrot.lane.b32.xlu0 %v899, 20
      %v2253 = vpop.permute.xlu0 %2252
      %2254 = vrot.lane.b32.xlu0 %v900, 20
      %v2255 = vpop.permute.xlu0 %2254
      %2256 = vrot.lane.b32.xlu0 %v901, 20
      %v2257 = vpop.permute.xlu0 %2256
      %2258 = vrot.lane.b32.xlu0 %v902, 20
      %v2259 = vpop.permute.xlu0 %2258
      %2260 = vrot.lane.b32.xlu0 %v903, 20
      %v2261 = vpop.permute.xlu0 %2260
      %2262 = vrot.lane.b32.xlu0 %v904, 20
      %v2263 = vpop.permute.xlu0 %2262
      %2264 = vrot.lane.b32.xlu0 %v905, 20
      %v2265 = vpop.permute.xlu0 %2264
      %2266 = vrot.lane.b32.xlu0 %v906, 20
      %v2267 = vpop.permute.xlu0 %2266
      %2268 = vrot.lane.b32.xlu0 %v907, 20
      %v2269 = vpop.permute.xlu0 %2268
      %2270 = vrot.lane.b32.xlu0 %v908, 20
      %v2271 = vpop.permute.xlu0 %2270
      %2272 = vrot.lane.b32.xlu0 %v909, 20
      %v2273 = vpop.permute.xlu0 %2272
      %2274 = vrot.lane.b32.xlu0 %v910, 20
      %v2275 = vpop.permute.xlu0 %2274
      %2276 = vrot.lane.b32.xlu0 %v911, 20
      %v2277 = vpop.permute.xlu0 %2276
      %2278 = vrot.lane.b32.xlu0 %v912, 20
      %v2279 = vpop.permute.xlu0 %2278
      %2280 = vrot.lane.b32.xlu0 %v913, 20
      %v2281 = vpop.permute.xlu0 %2280
      %2282 = vrot.lane.b32.xlu0 %v914, 20
      %v2283 = vpop.permute.xlu0 %2282
      %2284 = vrot.lane.b32.xlu0 %v915, 20
      %v2285 = vpop.permute.xlu0 %2284
      %2286 = vrot.lane.b32.xlu0 %v916, 20
      %v2287 = vpop.permute.xlu0 %2286
      %2288 = vrot.lane.b32.xlu0 %v917, 20
      %v2289 = vpop.permute.xlu0 %2288
      %2290 = vrot.lane.b32.xlu0 %v918, 20
      %v2291 = vpop.permute.xlu0 %2290
      %2292 = vrot.lane.b32.xlu0 %v919, 20
      %v2293 = vpop.permute.xlu0 %2292
      %2294 = vrot.lane.b32.xlu0 %v920, 20
      %v2295 = vpop.permute.xlu0 %2294
      %2296 = vrot.lane.b32.xlu0 %v921, 20
      %v2297 = vpop.permute.xlu0 %2296
      %2298 = vrot.lane.b32.xlu0 %v922, 20
      %v2299 = vpop.permute.xlu0 %2298
      %2300 = vrot.lane.b32.xlu0 %v923, 20
      %v2301 = vpop.permute.xlu0 %2300
      %2302 = vrot.lane.b32.xlu0 %v924, 20
      %v2303 = vpop.permute.xlu0 %2302
      %2304 = vrot.lane.b32.xlu0 %v925, 20
      %v2305 = vpop.permute.xlu0 %2304
      %2306 = vrot.lane.b32.xlu0 %v926, 20
      %v2307 = vpop.permute.xlu0 %2306
      %2308 = vrot.lane.b32.xlu0 %v927, 20
      %v2309 = vpop.permute.xlu0 %2308
      %2310 = vrot.lane.b32.xlu0 %v928, 20
      %v2311 = vpop.permute.xlu0 %2310
      %2312 = vrot.lane.b32.xlu0 %v929, 20
      %v2313 = vpop.permute.xlu0 %2312
      %2314 = vrot.lane.b32.xlu0 %v930, 20
      %v2315 = vpop.permute.xlu0 %2314
      %2316 = vrot.lane.b32.xlu0 %v931, 20
      %v2317 = vpop.permute.xlu0 %2316
      %2318 = vrot.lane.b32.xlu0 %v932, 20
      %v2319 = vpop.permute.xlu0 %2318
      %2320 = vrot.lane.b32.xlu0 %v933, 20
      %v2321 = vpop.permute.xlu0 %2320
      %2322 = vrot.lane.b32.xlu0 %v934, 20
      %v2323 = vpop.permute.xlu0 %2322
      %2324 = vrot.lane.b32.xlu0 %v935, 20
      %v2325 = vpop.permute.xlu0 %2324
      %2326 = vrot.lane.b32.xlu0 %v936, 20
      %v2327 = vpop.permute.xlu0 %2326
      %2328 = vrot.lane.b32.xlu0 %v937, 20
      %v2329 = vpop.permute.xlu0 %2328
      %2330 = vrot.lane.b32.xlu0 %v938, 20
      %v2331 = vpop.permute.xlu0 %2330
      %2332 = vrot.lane.b32.xlu0 %v939, 20
      %v2333 = vpop.permute.xlu0 %2332
      %2334 = vrot.lane.b32.xlu0 %v940, 20
      %v2335 = vpop.permute.xlu0 %2334
      %2336 = vrot.lane.b32.xlu0 %v941, 20
      %v2337 = vpop.permute.xlu0 %2336
      %2338 = vrot.lane.b32.xlu0 %v942, 20
      %v2339 = vpop.permute.xlu0 %2338
      %2340 = vrot.lane.b32.xlu0 %v943, 20
      %v2341 = vpop.permute.xlu0 %2340
      %2342 = vrot.lane.b32.xlu0 %v944, 20
      %v2343 = vpop.permute.xlu0 %2342
      %2344 = vrot.lane.b32.xlu0 %v945, 20
      %v2345 = vpop.permute.xlu0 %2344
      %2346 = vrot.lane.b32.xlu0 %v946, 20
      %v2347 = vpop.permute.xlu0 %2346
      %2348 = vrot.lane.b32.xlu0 %v947, 20
      %v2349 = vpop.permute.xlu0 %2348
      %2350 = vrot.lane.b32.xlu0 %v948, 20
      %v2351 = vpop.permute.xlu0 %2350
      %2352 = vrot.lane.b32.xlu0 %v949, 20
      %v2353 = vpop.permute.xlu0 %2352
      %2354 = vrot.lane.b32.xlu0 %v950, 20
      %v2355 = vpop.permute.xlu0 %2354
      %2356 = vrot.lane.b32.xlu0 %v951, 20
      %v2357 = vpop.permute.xlu0 %2356
      %2358 = vrot.lane.b32.xlu0 %v952, 20
      %v2359 = vpop.permute.xlu0 %2358
      %2360 = vrot.lane.b32.xlu0 %v953, 20
      %v2361 = vpop.permute.xlu0 %2360
      %2362 = vrot.lane.b32.xlu0 %v954, 20
      %v2363 = vpop.permute.xlu0 %2362
      %2492 = vrot.lane.b32.xlu0 %v956, 24
      %v2493 = vpop.permute.xlu0 %2492
      %2494 = vrot.lane.b32.xlu0 %v957, 24
      %v2495 = vpop.permute.xlu0 %2494
      %2496 = vrot.lane.b32.xlu0 %v958, 24
      %v2497 = vpop.permute.xlu0 %2496
      %2498 = vrot.lane.b32.xlu0 %v959, 24
      %v2499 = vpop.permute.xlu0 %2498
      %2500 = vrot.lane.b32.xlu0 %v960, 24
      %v2501 = vpop.permute.xlu0 %2500
      %2502 = vrot.lane.b32.xlu0 %v961, 24
      %v2503 = vpop.permute.xlu0 %2502
      %2504 = vrot.lane.b32.xlu0 %v962, 24
      %v2505 = vpop.permute.xlu0 %2504
      %2506 = vrot.lane.b32.xlu0 %v963, 24
      %v2507 = vpop.permute.xlu0 %2506
      %2508 = vrot.lane.b32.xlu0 %v964, 24
      %v2509 = vpop.permute.xlu0 %2508
      %2510 = vrot.lane.b32.xlu0 %v965, 24
      %v2511 = vpop.permute.xlu0 %2510
      %2512 = vrot.lane.b32.xlu0 %v966, 24
      %v2513 = vpop.permute.xlu0 %2512
      %2514 = vrot.lane.b32.xlu0 %v967, 24
      %v2515 = vpop.permute.xlu0 %2514
      %2516 = vrot.lane.b32.xlu0 %v968, 24
      %v2517 = vpop.permute.xlu0 %2516
      %2518 = vrot.lane.b32.xlu0 %v969, 24
      %v2519 = vpop.permute.xlu0 %2518
      %2520 = vrot.lane.b32.xlu0 %v970, 24
      %v2521 = vpop.permute.xlu0 %2520
      %2522 = vrot.lane.b32.xlu0 %v971, 24
      %v2523 = vpop.permute.xlu0 %2522
      %2524 = vrot.lane.b32.xlu0 %v972, 24
      %v2525 = vpop.permute.xlu0 %2524
      %2526 = vrot.lane.b32.xlu0 %v973, 24
      %v2527 = vpop.permute.xlu0 %2526
      %2528 = vrot.lane.b32.xlu0 %v974, 24
      %v2529 = vpop.permute.xlu0 %2528
      %2530 = vrot.lane.b32.xlu0 %v975, 24
      %v2531 = vpop.permute.xlu0 %2530
      %2532 = vrot.lane.b32.xlu0 %v976, 24
      %v2533 = vpop.permute.xlu0 %2532
      %2534 = vrot.lane.b32.xlu0 %v977, 24
      %v2535 = vpop.permute.xlu0 %2534
      %2536 = vrot.lane.b32.xlu0 %v978, 24
      %v2537 = vpop.permute.xlu0 %2536
      %2538 = vrot.lane.b32.xlu0 %v979, 24
      %v2539 = vpop.permute.xlu0 %2538
      %2540 = vrot.lane.b32.xlu0 %v980, 24
      %v2541 = vpop.permute.xlu0 %2540
      %2542 = vrot.lane.b32.xlu0 %v981, 24
      %v2543 = vpop.permute.xlu0 %2542
      %2544 = vrot.lane.b32.xlu0 %v982, 24
      %v2545 = vpop.permute.xlu0 %2544
      %2546 = vrot.lane.b32.xlu0 %v983, 24
      %v2547 = vpop.permute.xlu0 %2546
      %2548 = vrot.lane.b32.xlu0 %v984, 24
      %v2549 = vpop.permute.xlu0 %2548
      %2550 = vrot.lane.b32.xlu0 %v985, 24
      %v2551 = vpop.permute.xlu0 %2550
      %2552 = vrot.lane.b32.xlu0 %v986, 24
      %v2553 = vpop.permute.xlu0 %2552
      %2554 = vrot.lane.b32.xlu0 %v987, 24
      %v2555 = vpop.permute.xlu0 %2554
      %2556 = vrot.lane.b32.xlu0 %v988, 24
      %v2557 = vpop.permute.xlu0 %2556
      %2558 = vrot.lane.b32.xlu0 %v989, 24
      %v2559 = vpop.permute.xlu0 %2558
      %2560 = vrot.lane.b32.xlu0 %v990, 24
      %v2561 = vpop.permute.xlu0 %2560
      %2562 = vrot.lane.b32.xlu0 %v991, 24
      %v2563 = vpop.permute.xlu0 %2562
      %2564 = vrot.lane.b32.xlu0 %v992, 24
      %v2565 = vpop.permute.xlu0 %2564
      %2566 = vrot.lane.b32.xlu0 %v993, 24
      %v2567 = vpop.permute.xlu0 %2566
      %2568 = vrot.lane.b32.xlu0 %v994, 24
      %v2569 = vpop.permute.xlu0 %2568
      %2570 = vrot.lane.b32.xlu0 %v995, 24
      %v2571 = vpop.permute.xlu0 %2570
      %2572 = vrot.lane.b32.xlu0 %v996, 24
      %v2573 = vpop.permute.xlu0 %2572
      %2574 = vrot.lane.b32.xlu0 %v997, 24
      %v2575 = vpop.permute.xlu0 %2574
      %2576 = vrot.lane.b32.xlu0 %v998, 24
      %v2577 = vpop.permute.xlu0 %2576
      %2578 = vrot.lane.b32.xlu0 %v999, 24
      %v2579 = vpop.permute.xlu0 %2578
      %2580 = vrot.lane.b32.xlu0 %v1000, 24
      %v2581 = vpop.permute.xlu0 %2580
      %2582 = vrot.lane.b32.xlu0 %v1001, 24
      %v2583 = vpop.permute.xlu0 %2582
      %2584 = vrot.lane.b32.xlu0 %v1002, 24
      %v2585 = vpop.permute.xlu0 %2584
      %2586 = vrot.lane.b32.xlu0 %v1003, 24
      %v2587 = vpop.permute.xlu0 %2586
      %2588 = vrot.lane.b32.xlu0 %v1004, 24
      %v2589 = vpop.permute.xlu0 %2588
      %2590 = vrot.lane.b32.xlu0 %v1005, 24
      %v2591 = vpop.permute.xlu0 %2590
      %2592 = vrot.lane.b32.xlu0 %v1006, 24
      %v2593 = vpop.permute.xlu0 %2592
      %2594 = vrot.lane.b32.xlu0 %v1007, 24
      %v2595 = vpop.permute.xlu0 %2594
      %2596 = vrot.lane.b32.xlu0 %v1008, 24
      %v2597 = vpop.permute.xlu0 %2596
      %2598 = vrot.lane.b32.xlu0 %v1009, 24
      %v2599 = vpop.permute.xlu0 %2598
      %2600 = vrot.lane.b32.xlu0 %v1010, 24
      %v2601 = vpop.permute.xlu0 %2600
      %2602 = vrot.lane.b32.xlu0 %v1011, 24
      %v2603 = vpop.permute.xlu0 %2602
      %2604 = vrot.lane.b32.xlu0 %v1012, 24
      %v2605 = vpop.permute.xlu0 %2604
      %2606 = vrot.lane.b32.xlu0 %v1013, 24
      %v2607 = vpop.permute.xlu0 %2606
      %2608 = vrot.lane.b32.xlu0 %v1014, 24
      %v2609 = vpop.permute.xlu0 %2608
      %2610 = vrot.lane.b32.xlu0 %v1015, 24
      %v2611 = vpop.permute.xlu0 %2610
      %2612 = vrot.lane.b32.xlu0 %v1016, 24
      %v2613 = vpop.permute.xlu0 %2612
      %2614 = vrot.lane.b32.xlu0 %v1017, 24
      %v2615 = vpop.permute.xlu0 %2614
      %2616 = vrot.lane.b32.xlu0 %v1018, 24
      %v2617 = vpop.permute.xlu0 %2616
      %2618 = vrot.lane.b32.xlu0 %v1019, 24
      %v2619 = vpop.permute.xlu0 %2618
      %2748 = vrot.lane.b32.xlu0 %v1020, 28
      %v2749 = vpop.permute.xlu0 %2748
      %2750 = vrot.lane.b32.xlu0 %v1021, 28
      %v2751 = vpop.permute.xlu0 %2750
      %2752 = vrot.lane.b32.xlu0 %v1022, 28
      %v2753 = vpop.permute.xlu0 %2752
      %2754 = vrot.lane.b32.xlu0 %v1023, 28
      %v2755 = vpop.permute.xlu0 %2754
      %2756 = vrot.lane.b32.xlu0 %v1024, 28
      %v2757 = vpop.permute.xlu0 %2756
      %2758 = vrot.lane.b32.xlu0 %v1025, 28
      %v2759 = vpop.permute.xlu0 %2758
      %2760 = vrot.lane.b32.xlu0 %v1026, 28
      %v2761 = vpop.permute.xlu0 %2760
      %2762 = vrot.lane.b32.xlu0 %v1027, 28
      %v2763 = vpop.permute.xlu0 %2762
      %2764 = vrot.lane.b32.xlu0 %v1028, 28
      %v2765 = vpop.permute.xlu0 %2764
      %2766 = vrot.lane.b32.xlu0 %v1029, 28
      %v2767 = vpop.permute.xlu0 %2766
      %2768 = vrot.lane.b32.xlu0 %v1030, 28
      %v2769 = vpop.permute.xlu0 %2768
      %2770 = vrot.lane.b32.xlu0 %v1031, 28
      %v2771 = vpop.permute.xlu0 %2770
      %2772 = vrot.lane.b32.xlu0 %v1032, 28
      %v2773 = vpop.permute.xlu0 %2772
      %2774 = vrot.lane.b32.xlu0 %v1033, 28
      %v2775 = vpop.permute.xlu0 %2774
      %2776 = vrot.lane.b32.xlu0 %v1034, 28
      %v2777 = vpop.permute.xlu0 %2776
      %2778 = vrot.lane.b32.xlu0 %v1035, 28
      %v2779 = vpop.permute.xlu0 %2778
      %2780 = vrot.lane.b32.xlu0 %v1036, 28
      %v2781 = vpop.permute.xlu0 %2780
      %2782 = vrot.lane.b32.xlu0 %v1037, 28
      %v2783 = vpop.permute.xlu0 %2782
      %2784 = vrot.lane.b32.xlu0 %v1038, 28
      %v2785 = vpop.permute.xlu0 %2784
      %2786 = vrot.lane.b32.xlu0 %v1039, 28
      %v2787 = vpop.permute.xlu0 %2786
      %2788 = vrot.lane.b32.xlu0 %v1040, 28
      %v2789 = vpop.permute.xlu0 %2788
      %2790 = vrot.lane.b32.xlu0 %v1041, 28
      %v2791 = vpop.permute.xlu0 %2790
      %2792 = vrot.lane.b32.xlu0 %v1042, 28
      %v2793 = vpop.permute.xlu0 %2792
      %2794 = vrot.lane.b32.xlu0 %v1043, 28
      %v2795 = vpop.permute.xlu0 %2794
      %2796 = vrot.lane.b32.xlu0 %v1044, 28
      %v2797 = vpop.permute.xlu0 %2796
      %2798 = vrot.lane.b32.xlu0 %v1045, 28
      %v2799 = vpop.permute.xlu0 %2798
      %2800 = vrot.lane.b32.xlu0 %v1046, 28
      %v2801 = vpop.permute.xlu0 %2800
      %2802 = vrot.lane.b32.xlu0 %v1047, 28
      %v2803 = vpop.permute.xlu0 %2802
      %2804 = vrot.lane.b32.xlu0 %v1048, 28
      %v2805 = vpop.permute.xlu0 %2804
      %2806 = vrot.lane.b32.xlu0 %v1049, 28
      %v2807 = vpop.permute.xlu0 %2806
      %2808 = vrot.lane.b32.xlu0 %v1050, 28
      %v2809 = vpop.permute.xlu0 %2808
      %2810 = vrot.lane.b32.xlu0 %v1051, 28
      %v2811 = vpop.permute.xlu0 %2810
      %2812 = vrot.lane.b32.xlu0 %v1052, 28
      %v2813 = vpop.permute.xlu0 %2812
      %2814 = vrot.lane.b32.xlu0 %v1053, 28
      %v2815 = vpop.permute.xlu0 %2814
      %2816 = vrot.lane.b32.xlu0 %v1054, 28
      %v2817 = vpop.permute.xlu0 %2816
      %2818 = vrot.lane.b32.xlu0 %v1055, 28
      %v2819 = vpop.permute.xlu0 %2818
      %2820 = vrot.lane.b32.xlu0 %v1056, 28
      %v2821 = vpop.permute.xlu0 %2820
      %2822 = vrot.lane.b32.xlu0 %v1057, 28
      %v2823 = vpop.permute.xlu0 %2822
      %2824 = vrot.lane.b32.xlu0 %v1058, 28
      %v2825 = vpop.permute.xlu0 %2824
      %2826 = vrot.lane.b32.xlu0 %v1059, 28
      %v2827 = vpop.permute.xlu0 %2826
      %2828 = vrot.lane.b32.xlu0 %v1060, 28
      %v2829 = vpop.permute.xlu0 %2828
      %2830 = vrot.lane.b32.xlu0 %v1061, 28
      %v2831 = vpop.permute.xlu0 %2830
      %2832 = vrot.lane.b32.xlu0 %v1062, 28
      %v2833 = vpop.permute.xlu0 %2832
      %2834 = vrot.lane.b32.xlu0 %v1063, 28
      %v2835 = vpop.permute.xlu0 %2834
      %2836 = vrot.lane.b32.xlu0 %v1064, 28
      %v2837 = vpop.permute.xlu0 %2836
      %2838 = vrot.lane.b32.xlu0 %v1065, 28
      %v2839 = vpop.permute.xlu0 %2838
      %2840 = vrot.lane.b32.xlu0 %v1066, 28
      %v2841 = vpop.permute.xlu0 %2840
      %2842 = vrot.lane.b32.xlu0 %v1067, 28
      %v2843 = vpop.permute.xlu0 %2842
      %2844 = vrot.lane.b32.xlu0 %v1068, 28
      %v2845 = vpop.permute.xlu0 %2844
      %2846 = vrot.lane.b32.xlu0 %v1069, 28
      %v2847 = vpop.permute.xlu0 %2846
      %2848 = vrot.lane.b32.xlu0 %v1070, 28
      %v2849 = vpop.permute.xlu0 %2848
      %2850 = vrot.lane.b32.xlu0 %v1071, 28
      %v2851 = vpop.permute.xlu0 %2850
      %2852 = vrot.lane.b32.xlu0 %v1072, 28
      %v2853 = vpop.permute.xlu0 %2852
      %2854 = vrot.lane.b32.xlu0 %v1073, 28
      %v2855 = vpop.permute.xlu0 %2854
      %2856 = vrot.lane.b32.xlu0 %v1074, 28
      %v2857 = vpop.permute.xlu0 %2856
      %2858 = vrot.lane.b32.xlu0 %v1075, 28
      %v2859 = vpop.permute.xlu0 %2858
      %2860 = vrot.lane.b32.xlu0 %v1076, 28
      %v2861 = vpop.permute.xlu0 %2860
      %2862 = vrot.lane.b32.xlu0 %v1077, 28
      %v2863 = vpop.permute.xlu0 %2862
      %2864 = vrot.lane.b32.xlu0 %v1078, 28
      %v2865 = vpop.permute.xlu0 %2864
      %2866 = vrot.lane.b32.xlu0 %v1079, 28
      %v2867 = vpop.permute.xlu0 %2866
      %2868 = vrot.lane.b32.xlu0 %v1080, 28
      %v2869 = vpop.permute.xlu0 %2868
      %2870 = vrot.lane.b32.xlu0 %v1081, 28
      %v2871 = vpop.permute.xlu0 %2870
      %2872 = vrot.lane.b32.xlu0 %v1082, 28
      %v2873 = vpop.permute.xlu0 %2872
      %2874 = vrot.lane.b32.xlu0 %v1083, 28
      %v2875 = vpop.permute.xlu0 %2874
      %3004 = vrot.lane.b32.xlu0 %v1084, 32
      %v3005 = vpop.permute.xlu0 %3004
      %3006 = vrot.lane.b32.xlu0 %v1085, 32
      %v3007 = vpop.permute.xlu0 %3006
      %3008 = vrot.lane.b32.xlu0 %v1086, 32
      %v3009 = vpop.permute.xlu0 %3008
      %3010 = vrot.lane.b32.xlu0 %v1087, 32
      %v3011 = vpop.permute.xlu0 %3010
      %3012 = vrot.lane.b32.xlu0 %v1088, 32
      %v3013 = vpop.permute.xlu0 %3012
      %3014 = vrot.lane.b32.xlu0 %v1089, 32
      %v3015 = vpop.permute.xlu0 %3014
      %3016 = vrot.lane.b32.xlu0 %v1090, 32
      %v3017 = vpop.permute.xlu0 %3016
      %3018 = vrot.lane.b32.xlu0 %v1091, 32
      %v3019 = vpop.permute.xlu0 %3018
      %3020 = vrot.lane.b32.xlu0 %v1092, 32
      %v3021 = vpop.permute.xlu0 %3020
      %3022 = vrot.lane.b32.xlu0 %v1093, 32
      %v3023 = vpop.permute.xlu0 %3022
      %3024 = vrot.lane.b32.xlu0 %v1094, 32
      %v3025 = vpop.permute.xlu0 %3024
      %3026 = vrot.lane.b32.xlu0 %v1095, 32
      %v3027 = vpop.permute.xlu0 %3026
      %3028 = vrot.lane.b32.xlu0 %v1096, 32
      %v3029 = vpop.permute.xlu0 %3028
      %3030 = vrot.lane.b32.xlu0 %v1097, 32
      %v3031 = vpop.permute.xlu0 %3030
      %3032 = vrot.lane.b32.xlu0 %v1098, 32
      %v3033 = vpop.permute.xlu0 %3032
      %3034 = vrot.lane.b32.xlu0 %v1099, 32
      %v3035 = vpop.permute.xlu0 %3034
      %3036 = vrot.lane.b32.xlu0 %v1100, 32
      %v3037 = vpop.permute.xlu0 %3036
      %3038 = vrot.lane.b32.xlu0 %v1101, 32
      %v3039 = vpop.permute.xlu0 %3038
      %3040 = vrot.lane.b32.xlu0 %v1102, 32
      %v3041 = vpop.permute.xlu0 %3040
      %3042 = vrot.lane.b32.xlu0 %v1103, 32
      %v3043 = vpop.permute.xlu0 %3042
      %3044 = vrot.lane.b32.xlu0 %v1104, 32
      %v3045 = vpop.permute.xlu0 %3044
      %3046 = vrot.lane.b32.xlu0 %v1105, 32
      %v3047 = vpop.permute.xlu0 %3046
      %3048 = vrot.lane.b32.xlu0 %v1106, 32
      %v3049 = vpop.permute.xlu0 %3048
      %3050 = vrot.lane.b32.xlu0 %v1107, 32
      %v3051 = vpop.permute.xlu0 %3050
      %3052 = vrot.lane.b32.xlu0 %v1108, 32
      %v3053 = vpop.permute.xlu0 %3052
      %3054 = vrot.lane.b32.xlu0 %v1109, 32
      %v3055 = vpop.permute.xlu0 %3054
      %3056 = vrot.lane.b32.xlu0 %v1110, 32
      %v3057 = vpop.permute.xlu0 %3056
      %3058 = vrot.lane.b32.xlu0 %v1111, 32
      %v3059 = vpop.permute.xlu0 %3058
      %3060 = vrot.lane.b32.xlu0 %v1112, 32
      %v3061 = vpop.permute.xlu0 %3060
      %3062 = vrot.lane.b32.xlu0 %v1113, 32
      %v3063 = vpop.permute.xlu0 %3062
      %3064 = vrot.lane.b32.xlu0 %v1114, 32
      %v3065 = vpop.permute.xlu0 %3064
      %3066 = vrot.lane.b32.xlu0 %v1115, 32
      %v3067 = vpop.permute.xlu0 %3066
      %3068 = vrot.lane.b32.xlu0 %v1116, 32
      %v3069 = vpop.permute.xlu0 %3068
      %3070 = vrot.lane.b32.xlu0 %v1117, 32
      %v3071 = vpop.permute.xlu0 %3070
      %3072 = vrot.lane.b32.xlu0 %v1118, 32
      %v3073 = vpop.permute.xlu0 %3072
      %3074 = vrot.lane.b32.xlu0 %v1119, 32
      %v3075 = vpop.permute.xlu0 %3074
      %3076 = vrot.lane.b32.xlu0 %v1120, 32
      %v3077 = vpop.permute.xlu0 %3076
      %3078 = vrot.lane.b32.xlu0 %v1121, 32
      %v3079 = vpop.permute.xlu0 %3078
      %3080 = vrot.lane.b32.xlu0 %v1122, 32
      %v3081 = vpop.permute.xlu0 %3080
      %3082 = vrot.lane.b32.xlu0 %v1123, 32
      %v3083 = vpop.permute.xlu0 %3082
      %3084 = vrot.lane.b32.xlu0 %v1124, 32
      %v3085 = vpop.permute.xlu0 %3084
      %3086 = vrot.lane.b32.xlu0 %v1125, 32
      %v3087 = vpop.permute.xlu0 %3086
      %3088 = vrot.lane.b32.xlu0 %v1126, 32
      %v3089 = vpop.permute.xlu0 %3088
      %3090 = vrot.lane.b32.xlu0 %v1127, 32
      %v3091 = vpop.permute.xlu0 %3090
      %3092 = vrot.lane.b32.xlu0 %v1128, 32
      %v3093 = vpop.permute.xlu0 %3092
      %3094 = vrot.lane.b32.xlu0 %v1129, 32
      %v3095 = vpop.permute.xlu0 %3094
      %3096 = vrot.lane.b32.xlu0 %v1130, 32
      %v3097 = vpop.permute.xlu0 %3096
      %3098 = vrot.lane.b32.xlu0 %v1131, 32
      %v3099 = vpop.permute.xlu0 %3098
      %3100 = vrot.lane.b32.xlu0 %v1132, 32
      %v3101 = vpop.permute.xlu0 %3100
      %3102 = vrot.lane.b32.xlu0 %v1133, 32
      %v3103 = vpop.permute.xlu0 %3102
      %3104 = vrot.lane.b32.xlu0 %v1134, 32
      %v3105 = vpop.permute.xlu0 %3104
      %3106 = vrot.lane.b32.xlu0 %v1135, 32
      %v3107 = vpop.permute.xlu0 %3106
      %3108 = vrot.lane.b32.xlu0 %v1136, 32
      %v3109 = vpop.permute.xlu0 %3108
      %3110 = vrot.lane.b32.xlu0 %v1137, 32
      %v3111 = vpop.permute.xlu0 %3110
      %3112 = vrot.lane.b32.xlu0 %v1138, 32
      %v3113 = vpop.permute.xlu0 %3112
      %3114 = vrot.lane.b32.xlu0 %v1139, 32
      %v3115 = vpop.permute.xlu0 %3114
      %3116 = vrot.lane.b32.xlu0 %v1140, 32
      %v3117 = vpop.permute.xlu0 %3116
      %3118 = vrot.lane.b32.xlu0 %v1141, 32
      %v3119 = vpop.permute.xlu0 %3118
      %3120 = vrot.lane.b32.xlu0 %v1142, 32
      %v3121 = vpop.permute.xlu0 %3120
      %3122 = vrot.lane.b32.xlu0 %v1143, 32
      %v3123 = vpop.permute.xlu0 %3122
      %3124 = vrot.lane.b32.xlu0 %v1144, 32
      %v3125 = vpop.permute.xlu0 %3124
      %3126 = vrot.lane.b32.xlu0 %v1145, 32
      %v3127 = vpop.permute.xlu0 %3126
      %3128 = vrot.lane.b32.xlu0 %v1146, 32
      %v3129 = vpop.permute.xlu0 %3128
      %3130 = vrot.lane.b32.xlu0 %v1147, 32
      %v3131 = vpop.permute.xlu0 %3130
      %v3196 = vsel %vm396, %v571, %v1213
      %v3197 = vsel %vm396, %v572, %v1215
      %v3198 = vsel %vm396, %v573, %v1217
      %v3199 = vsel %vm396, %v574, %v1219
      %v3200 = vsel %vm396, %v575, %v1221
      %v3201 = vsel %vm396, %v576, %v1223
      %v3202 = vsel %vm396, %v577, %v1225
      %v3203 = vsel %vm396, %v578, %v1227
      %v3204 = vsel %vm396, %v579, %v1229
      %v3205 = vsel %vm396, %v580, %v1231
      %v3206 = vsel %vm396, %v581, %v1233
      %v3207 = vsel %vm396, %v582, %v1235
      %v3208 = vsel %vm396, %v583, %v1237
      %v3209 = vsel %vm396, %v584, %v1239
      %v3210 = vsel %vm396, %v585, %v1241
      %v3211 = vsel %vm396, %v586, %v1243
      %v3212 = vsel %vm396, %v587, %v1245
      %v3213 = vsel %vm396, %v588, %v1247
      %v3214 = vsel %vm396, %v589, %v1249
      %v3215 = vsel %vm396, %v590, %v1251
      %v3216 = vsel %vm396, %v591, %v1253
      %v3217 = vsel %vm396, %v592, %v1255
      %v3218 = vsel %vm396, %v593, %v1257
      %v3219 = vsel %vm396, %v594, %v1259
      %v3220 = vsel %vm396, %v595, %v1261
      %v3221 = vsel %vm396, %v596, %v1263
      %v3222 = vsel %vm396, %v597, %v1265
      %v3223 = vsel %vm396, %v598, %v1267
      %v3224 = vsel %vm396, %v599, %v1269
      %v3225 = vsel %vm396, %v600, %v1271
      %v3226 = vsel %vm396, %v601, %v1273
      %v3227 = vsel %vm396, %v602, %v1275
      %v3228 = vsel %vm396, %v603, %v1277
      %v3229 = vsel %vm396, %v604, %v1279
      %v3230 = vsel %vm396, %v605, %v1281
      %v3231 = vsel %vm396, %v606, %v1283
      %v3232 = vsel %vm396, %v607, %v1285
      %v3233 = vsel %vm396, %v608, %v1287
      %v3234 = vsel %vm396, %v609, %v1289
      %v3235 = vsel %vm396, %v610, %v1291
      %v3236 = vsel %vm396, %v611, %v1293
      %v3237 = vsel %vm396, %v612, %v1295
      %v3238 = vsel %vm396, %v613, %v1297
      %v3239 = vsel %vm396, %v614, %v1299
      %v3240 = vsel %vm396, %v615, %v1301
      %v3241 = vsel %vm396, %v616, %v1303
      %v3242 = vsel %vm396, %v617, %v1305
      %v3243 = vsel %vm396, %v618, %v1307
      %v3244 = vsel %vm396, %v619, %v1309
      %v3245 = vsel %vm396, %v620, %v1311
      %v3246 = vsel %vm396, %v621, %v1313
      %v3247 = vsel %vm396, %v622, %v1315
      %v3248 = vsel %vm396, %v623, %v1317
      %v3249 = vsel %vm396, %v624, %v1319
      %v3250 = vsel %vm396, %v625, %v1321
      %v3251 = vsel %vm396, %v626, %v1323
      %v3252 = vsel %vm396, %v627, %v1325
      %v3253 = vsel %vm396, %v628, %v1327
      %v3254 = vsel %vm396, %v629, %v1329
      %v3255 = vsel %vm396, %v630, %v1331
      %v3256 = vsel %vm396, %v631, %v1333
      %v3257 = vsel %vm396, %v632, %v1335
      %v3258 = vsel %vm396, %v633, %v1337
      %v3259 = vsel %vm396, %v634, %v1339
      %vm3260 = vcmask 64512
      %v3261 = vsel %vm3260, %v3196, %v1469
      %v3262 = vsel %vm3260, %v3197, %v1471
      %v3263 = vsel %vm3260, %v3198, %v1473
      %v3264 = vsel %vm3260, %v3199, %v1475
      %v3265 = vsel %vm3260, %v3200, %v1477
      %v3266 = vsel %vm3260, %v3201, %v1479
      %v3267 = vsel %vm3260, %v3202, %v1481
      %v3268 = vsel %vm3260, %v3203, %v1483
      %v3269 = vsel %vm3260, %v3204, %v1485
      %v3270 = vsel %vm3260, %v3205, %v1487
      %v3271 = vsel %vm3260, %v3206, %v1489
      %v3272 = vsel %vm3260, %v3207, %v1491
      %v3273 = vsel %vm3260, %v3208, %v1493
      %v3274 = vsel %vm3260, %v3209, %v1495
      %v3275 = vsel %vm3260, %v3210, %v1497
      %v3276 = vsel %vm3260, %v3211, %v1499
      %v3277 = vsel %vm3260, %v3212, %v1501
      %v3278 = vsel %vm3260, %v3213, %v1503
      %v3279 = vsel %vm3260, %v3214, %v1505
      %v3280 = vsel %vm3260, %v3215, %v1507
      %v3281 = vsel %vm3260, %v3216, %v1509
      %v3282 = vsel %vm3260, %v3217, %v1511
      %v3283 = vsel %vm3260, %v3218, %v1513
      %v3284 = vsel %vm3260, %v3219, %v1515
      %v3285 = vsel %vm3260, %v3220, %v1517
      %v3286 = vsel %vm3260, %v3221, %v1519
      %v3287 = vsel %vm3260, %v3222, %v1521
      %v3288 = vsel %vm3260, %v3223, %v1523
      %v3289 = vsel %vm3260, %v3224, %v1525
      %v3290 = vsel %vm3260, %v3225, %v1527
      %v3291 = vsel %vm3260, %v3226, %v1529
      %v3292 = vsel %vm3260, %v3227, %v1531
      %v3293 = vsel %vm3260, %v3228, %v1533
      %v3294 = vsel %vm3260, %v3229, %v1535
      %v3295 = vsel %vm3260, %v3230, %v1537
      %v3296 = vsel %vm3260, %v3231, %v1539
      %v3297 = vsel %vm3260, %v3232, %v1541
      %v3298 = vsel %vm3260, %v3233, %v1543
      %v3299 = vsel %vm3260, %v3234, %v1545
      %v3300 = vsel %vm3260, %v3235, %v1547
      %v3301 = vsel %vm3260, %v3236, %v1549
      %v3302 = vsel %vm3260, %v3237, %v1551
      %v3303 = vsel %vm3260, %v3238, %v1553
      %v3304 = vsel %vm3260, %v3239, %v1555
      %v3305 = vsel %vm3260, %v3240, %v1557
      %v3306 = vsel %vm3260, %v3241, %v1559
      %v3307 = vsel %vm3260, %v3242, %v1561
      %v3308 = vsel %vm3260, %v3243, %v1563
      %v3309 = vsel %vm3260, %v3244, %v1565
      %v3310 = vsel %vm3260, %v3245, %v1567
      %v3311 = vsel %vm3260, %v3246, %v1569
      %v3312 = vsel %vm3260, %v3247, %v1571
      %v3313 = vsel %vm3260, %v3248, %v1573
      %v3314 = vsel %vm3260, %v3249, %v1575
      %v3315 = vsel %vm3260, %v3250, %v1577
      %v3316 = vsel %vm3260, %v3251, %v1579
      %v3317 = vsel %vm3260, %v3252, %v1581
      %v3318 = vsel %vm3260, %v3253, %v1583
      %v3319 = vsel %vm3260, %v3254, %v1585
      %v3320 = vsel %vm3260, %v3255, %v1587
      %v3321 = vsel %vm3260, %v3256, %v1589
      %v3322 = vsel %vm3260, %v3257, %v1591
      %v3323 = vsel %vm3260, %v3258, %v1593
      %v3324 = vsel %vm3260, %v3259, %v1595
      %vm3325 = vcmask 97280
      %v3326 = vsel %vm3325, %v3261, %v1725
      %v3327 = vsel %vm3325, %v3262, %v1727
      %v3328 = vsel %vm3325, %v3263, %v1729
      %v3329 = vsel %vm3325, %v3264, %v1731
      %v3330 = vsel %vm3325, %v3265, %v1733
      %v3331 = vsel %vm3325, %v3266, %v1735
      %v3332 = vsel %vm3325, %v3267, %v1737
      %v3333 = vsel %vm3325, %v3268, %v1739
      %v3334 = vsel %vm3325, %v3269, %v1741
      %v3335 = vsel %vm3325, %v3270, %v1743
      %v3336 = vsel %vm3325, %v3271, %v1745
      %v3337 = vsel %vm3325, %v3272, %v1747
      %v3338 = vsel %vm3325, %v3273, %v1749
      %v3339 = vsel %vm3325, %v3274, %v1751
      %v3340 = vsel %vm3325, %v3275, %v1753
      %v3341 = vsel %vm3325, %v3276, %v1755
      %v3342 = vsel %vm3325, %v3277, %v1757
      %v3343 = vsel %vm3325, %v3278, %v1759
      %v3344 = vsel %vm3325, %v3279, %v1761
      %v3345 = vsel %vm3325, %v3280, %v1763
      %v3346 = vsel %vm3325, %v3281, %v1765
      %v3347 = vsel %vm3325, %v3282, %v1767
      %v3348 = vsel %vm3325, %v3283, %v1769
      %v3349 = vsel %vm3325, %v3284, %v1771
      %v3350 = vsel %vm3325, %v3285, %v1773
      %v3351 = vsel %vm3325, %v3286, %v1775
      %v3352 = vsel %vm3325, %v3287, %v1777
      %v3353 = vsel %vm3325, %v3288, %v1779
      %v3354 = vsel %vm3325, %v3289, %v1781
      %v3355 = vsel %vm3325, %v3290, %v1783
      %v3356 = vsel %vm3325, %v3291, %v1785
      %v3357 = vsel %vm3325, %v3292, %v1787
      %v3358 = vsel %vm3325, %v3293, %v1789
      %v3359 = vsel %vm3325, %v3294, %v1791
      %v3360 = vsel %vm3325, %v3295, %v1793
      %v3361 = vsel %vm3325, %v3296, %v1795
      %v3362 = vsel %vm3325, %v3297, %v1797
      %v3363 = vsel %vm3325, %v3298, %v1799
      %v3364 = vsel %vm3325, %v3299, %v1801
      %v3365 = vsel %vm3325, %v3300, %v1803
      %v3366 = vsel %vm3325, %v3301, %v1805
      %v3367 = vsel %vm3325, %v3302, %v1807
      %v3368 = vsel %vm3325, %v3303, %v1809
      %v3369 = vsel %vm3325, %v3304, %v1811
      %v3370 = vsel %vm3325, %v3305, %v1813
      %v3371 = vsel %vm3325, %v3306, %v1815
      %v3372 = vsel %vm3325, %v3307, %v1817
      %v3373 = vsel %vm3325, %v3308, %v1819
      %v3374 = vsel %vm3325, %v3309, %v1821
      %v3375 = vsel %vm3325, %v3310, %v1823
      %v3376 = vsel %vm3325, %v3311, %v1825
      %v3377 = vsel %vm3325, %v3312, %v1827
      %v3378 = vsel %vm3325, %v3313, %v1829
      %v3379 = vsel %vm3325, %v3314, %v1831
      %v3380 = vsel %vm3325, %v3315, %v1833
      %v3381 = vsel %vm3325, %v3316, %v1835
      %v3382 = vsel %vm3325, %v3317, %v1837
      %v3383 = vsel %vm3325, %v3318, %v1839
      %v3384 = vsel %vm3325, %v3319, %v1841
      %v3385 = vsel %vm3325, %v3320, %v1843
      %v3386 = vsel %vm3325, %v3321, %v1845
      %v3387 = vsel %vm3325, %v3322, %v1847
      %v3388 = vsel %vm3325, %v3323, %v1849
      %v3389 = vsel %vm3325, %v3324, %v1851
      %vm3390 = vcmask 130048
      %v3391 = vsel %vm3390, %v3326, %v1981
      %v3392 = vsel %vm3390, %v3327, %v1983
      %v3393 = vsel %vm3390, %v3328, %v1985
      %v3394 = vsel %vm3390, %v3329, %v1987
      %v3395 = vsel %vm3390, %v3330, %v1989
      %v3396 = vsel %vm3390, %v3331, %v1991
      %v3397 = vsel %vm3390, %v3332, %v1993
      %v3398 = vsel %vm3390, %v3333, %v1995
      %v3399 = vsel %vm3390, %v3334, %v1997
      %v3400 = vsel %vm3390, %v3335, %v1999
      %v3401 = vsel %vm3390, %v3336, %v2001
      %v3402 = vsel %vm3390, %v3337, %v2003
      %v3403 = vsel %vm3390, %v3338, %v2005
      %v3404 = vsel %vm3390, %v3339, %v2007
      %v3405 = vsel %vm3390, %v3340, %v2009
      %v3406 = vsel %vm3390, %v3341, %v2011
      %v3407 = vsel %vm3390, %v3342, %v2013
      %v3408 = vsel %vm3390, %v3343, %v2015
      %v3409 = vsel %vm3390, %v3344, %v2017
      %v3410 = vsel %vm3390, %v3345, %v2019
      %v3411 = vsel %vm3390, %v3346, %v2021
      %v3412 = vsel %vm3390, %v3347, %v2023
      %v3413 = vsel %vm3390, %v3348, %v2025
      %v3414 = vsel %vm3390, %v3349, %v2027
      %v3415 = vsel %vm3390, %v3350, %v2029
      %v3416 = vsel %vm3390, %v3351, %v2031
      %v3417 = vsel %vm3390, %v3352, %v2033
      %v3418 = vsel %vm3390, %v3353, %v2035
      %v3419 = vsel %vm3390, %v3354, %v2037
      %v3420 = vsel %vm3390, %v3355, %v2039
      %v3421 = vsel %vm3390, %v3356, %v2041
      %v3422 = vsel %vm3390, %v3357, %v2043
      %v3423 = vsel %vm3390, %v3358, %v2045
      %v3424 = vsel %vm3390, %v3359, %v2047
      %v3425 = vsel %vm3390, %v3360, %v2049
      %v3426 = vsel %vm3390, %v3361, %v2051
      %v3427 = vsel %vm3390, %v3362, %v2053
      %v3428 = vsel %vm3390, %v3363, %v2055
      %v3429 = vsel %vm3390, %v3364, %v2057
      %v3430 = vsel %vm3390, %v3365, %v2059
      %v3431 = vsel %vm3390, %v3366, %v2061
      %v3432 = vsel %vm3390, %v3367, %v2063
      %v3433 = vsel %vm3390, %v3368, %v2065
      %v3434 = vsel %vm3390, %v3369, %v2067
      %v3435 = vsel %vm3390, %v3370, %v2069
      %v3436 = vsel %vm3390, %v3371, %v2071
      %v3437 = vsel %vm3390, %v3372, %v2073
      %v3438 = vsel %vm3390, %v3373, %v2075
      %v3439 = vsel %vm3390, %v3374, %v2077
      %v3440 = vsel %vm3390, %v3375, %v2079
      %v3441 = vsel %vm3390, %v3376, %v2081
      %v3442 = vsel %vm3390, %v3377, %v2083
      %v3443 = vsel %vm3390, %v3378, %v2085
      %v3444 = vsel %vm3390, %v3379, %v2087
      %v3445 = vsel %vm3390, %v3380, %v2089
      %v3446 = vsel %vm3390, %v3381, %v2091
      %v3447 = vsel %vm3390, %v3382, %v2093
      %v3448 = vsel %vm3390, %v3383, %v2095
      %v3449 = vsel %vm3390, %v3384, %v2097
      %v3450 = vsel %vm3390, %v3385, %v2099
      %v3451 = vsel %vm3390, %v3386, %v2101
      %v3452 = vsel %vm3390, %v3387, %v2103
      %v3453 = vsel %vm3390, %v3388, %v2105
      %v3454 = vsel %vm3390, %v3389, %v2107
      %vm3455 = vcmask 162816
      %v3456 = vsel %vm3455, %v3391, %v2237
      %v3457 = vsel %vm3455, %v3392, %v2239
      %v3458 = vsel %vm3455, %v3393, %v2241
      %v3459 = vsel %vm3455, %v3394, %v2243
      %v3460 = vsel %vm3455, %v3395, %v2245
      %v3461 = vsel %vm3455, %v3396, %v2247
      %v3462 = vsel %vm3455, %v3397, %v2249
      %v3463 = vsel %vm3455, %v3398, %v2251
      %v3464 = vsel %vm3455, %v3399, %v2253
      %v3465 = vsel %vm3455, %v3400, %v2255
      %v3466 = vsel %vm3455, %v3401, %v2257
      %v3467 = vsel %vm3455, %v3402, %v2259
      %v3468 = vsel %vm3455, %v3403, %v2261
      %v3469 = vsel %vm3455, %v3404, %v2263
      %v3470 = vsel %vm3455, %v3405, %v2265
      %v3471 = vsel %vm3455, %v3406, %v2267
      %v3472 = vsel %vm3455, %v3407, %v2269
      %v3473 = vsel %vm3455, %v3408, %v2271
      %v3474 = vsel %vm3455, %v3409, %v2273
      %v3475 = vsel %vm3455, %v3410, %v2275
      %v3476 = vsel %vm3455, %v3411, %v2277
      %v3477 = vsel %vm3455, %v3412, %v2279
      %v3478 = vsel %vm3455, %v3413, %v2281
      %v3479 = vsel %vm3455, %v3414, %v2283
      %v3480 = vsel %vm3455, %v3415, %v2285
      %v3481 = vsel %vm3455, %v3416, %v2287
      %v3482 = vsel %vm3455, %v3417, %v2289
      %v3483 = vsel %vm3455, %v3418, %v2291
      %v3484 = vsel %vm3455, %v3419, %v2293
      %v3485 = vsel %vm3455, %v3420, %v2295
      %v3486 = vsel %vm3455, %v3421, %v2297
      %v3487 = vsel %vm3455, %v3422, %v2299
      %v3488 = vsel %vm3455, %v3423, %v2301
      %v3489 = vsel %vm3455, %v3424, %v2303
      %v3490 = vsel %vm3455, %v3425, %v2305
      %v3491 = vsel %vm3455, %v3426, %v2307
      %v3492 = vsel %vm3455, %v3427, %v2309
      %v3493 = vsel %vm3455, %v3428, %v2311
      %v3494 = vsel %vm3455, %v3429, %v2313
      %v3495 = vsel %vm3455, %v3430, %v2315
      %v3496 = vsel %vm3455, %v3431, %v2317
      %v3497 = vsel %vm3455, %v3432, %v2319
      %v3498 = vsel %vm3455, %v3433, %v2321
      %v3499 = vsel %vm3455, %v3434, %v2323
      %v3500 = vsel %vm3455, %v3435, %v2325
      %v3501 = vsel %vm3455, %v3436, %v2327
      %v3502 = vsel %vm3455, %v3437, %v2329
      %v3503 = vsel %vm3455, %v3438, %v2331
      %v3504 = vsel %vm3455, %v3439, %v2333
      %v3505 = vsel %vm3455, %v3440, %v2335
      %v3506 = vsel %vm3455, %v3441, %v2337
      %v3507 = vsel %vm3455, %v3442, %v2339
      %v3508 = vsel %vm3455, %v3443, %v2341
      %v3509 = vsel %vm3455, %v3444, %v2343
      %v3510 = vsel %vm3455, %v3445, %v2345
      %v3511 = vsel %vm3455, %v3446, %v2347
      %v3512 = vsel %vm3455, %v3447, %v2349
      %v3513 = vsel %vm3455, %v3448, %v2351
      %v3514 = vsel %vm3455, %v3449, %v2353
      %v3515 = vsel %vm3455, %v3450, %v2355
      %v3516 = vsel %vm3455, %v3451, %v2357
      %v3517 = vsel %vm3455, %v3452, %v2359
      %v3518 = vsel %vm3455, %v3453, %v2361
      %v3519 = vsel %vm3455, %v3454, %v2363
      %vm3520 = vcmask 195584
      %v3521 = vsel %vm3520, %v3456, %v2493
      %v3522 = vsel %vm3520, %v3457, %v2495
      %v3523 = vsel %vm3520, %v3458, %v2497
      %v3524 = vsel %vm3520, %v3459, %v2499
      %v3525 = vsel %vm3520, %v3460, %v2501
      %v3526 = vsel %vm3520, %v3461, %v2503
      %v3527 = vsel %vm3520, %v3462, %v2505
      %v3528 = vsel %vm3520, %v3463, %v2507
      %v3529 = vsel %vm3520, %v3464, %v2509
      %v3530 = vsel %vm3520, %v3465, %v2511
      %v3531 = vsel %vm3520, %v3466, %v2513
      %v3532 = vsel %vm3520, %v3467, %v2515
      %v3533 = vsel %vm3520, %v3468, %v2517
      %v3534 = vsel %vm3520, %v3469, %v2519
      %v3535 = vsel %vm3520, %v3470, %v2521
      %v3536 = vsel %vm3520, %v3471, %v2523
      %v3537 = vsel %vm3520, %v3472, %v2525
      %v3538 = vsel %vm3520, %v3473, %v2527
      %v3539 = vsel %vm3520, %v3474, %v2529
      %v3540 = vsel %vm3520, %v3475, %v2531
      %v3541 = vsel %vm3520, %v3476, %v2533
      %v3542 = vsel %vm3520, %v3477, %v2535
      %v3543 = vsel %vm3520, %v3478, %v2537
      %v3544 = vsel %vm3520, %v3479, %v2539
      %v3545 = vsel %vm3520, %v3480, %v2541
      %v3546 = vsel %vm3520, %v3481, %v2543
      %v3547 = vsel %vm3520, %v3482, %v2545
      %v3548 = vsel %vm3520, %v3483, %v2547
      %v3549 = vsel %vm3520, %v3484, %v2549
      %v3550 = vsel %vm3520, %v3485, %v2551
      %v3551 = vsel %vm3520, %v3486, %v2553
      %v3552 = vsel %vm3520, %v3487, %v2555
      %v3553 = vsel %vm3520, %v3488, %v2557
      %v3554 = vsel %vm3520, %v3489, %v2559
      %v3555 = vsel %vm3520, %v3490, %v2561
      %v3556 = vsel %vm3520, %v3491, %v2563
      %v3557 = vsel %vm3520, %v3492, %v2565
      %v3558 = vsel %vm3520, %v3493, %v2567
      %v3559 = vsel %vm3520, %v3494, %v2569
      %v3560 = vsel %vm3520, %v3495, %v2571
      %v3561 = vsel %vm3520, %v3496, %v2573
      %v3562 = vsel %vm3520, %v3497, %v2575
      %v3563 = vsel %vm3520, %v3498, %v2577
      %v3564 = vsel %vm3520, %v3499, %v2579
      %v3565 = vsel %vm3520, %v3500, %v2581
      %v3566 = vsel %vm3520, %v3501, %v2583
      %v3567 = vsel %vm3520, %v3502, %v2585
      %v3568 = vsel %vm3520, %v3503, %v2587
      %v3569 = vsel %vm3520, %v3504, %v2589
      %v3570 = vsel %vm3520, %v3505, %v2591
      %v3571 = vsel %vm3520, %v3506, %v2593
      %v3572 = vsel %vm3520, %v3507, %v2595
      %v3573 = vsel %vm3520, %v3508, %v2597
      %v3574 = vsel %vm3520, %v3509, %v2599
      %v3575 = vsel %vm3520, %v3510, %v2601
      %v3576 = vsel %vm3520, %v3511, %v2603
      %v3577 = vsel %vm3520, %v3512, %v2605
      %v3578 = vsel %vm3520, %v3513, %v2607
      %v3579 = vsel %vm3520, %v3514, %v2609
      %v3580 = vsel %vm3520, %v3515, %v2611
      %v3581 = vsel %vm3520, %v3516, %v2613
      %v3582 = vsel %vm3520, %v3517, %v2615
      %v3583 = vsel %vm3520, %v3518, %v2617
      %v3584 = vsel %vm3520, %v3519, %v2619
      %vm3585 = vcmask 228352
      %v3586 = vsel %vm3585, %v3521, %v2749
      %v3587 = vsel %vm3585, %v3522, %v2751
      %v3588 = vsel %vm3585, %v3523, %v2753
      %v3589 = vsel %vm3585, %v3524, %v2755
      %v3590 = vsel %vm3585, %v3525, %v2757
      %v3591 = vsel %vm3585, %v3526, %v2759
      %v3592 = vsel %vm3585, %v3527, %v2761
      %v3593 = vsel %vm3585, %v3528, %v2763
      %v3594 = vsel %vm3585, %v3529, %v2765
      %v3595 = vsel %vm3585, %v3530, %v2767
      %v3596 = vsel %vm3585, %v3531, %v2769
      %v3597 = vsel %vm3585, %v3532, %v2771
      %v3598 = vsel %vm3585, %v3533, %v2773
      %v3599 = vsel %vm3585, %v3534, %v2775
      %v3600 = vsel %vm3585, %v3535, %v2777
      %v3601 = vsel %vm3585, %v3536, %v2779
      %v3602 = vsel %vm3585, %v3537, %v2781
      %v3603 = vsel %vm3585, %v3538, %v2783
      %v3604 = vsel %vm3585, %v3539, %v2785
      %v3605 = vsel %vm3585, %v3540, %v2787
      %v3606 = vsel %vm3585, %v3541, %v2789
      %v3607 = vsel %vm3585, %v3542, %v2791
      %v3608 = vsel %vm3585, %v3543, %v2793
      %v3609 = vsel %vm3585, %v3544, %v2795
      %v3610 = vsel %vm3585, %v3545, %v2797
      %v3611 = vsel %vm3585, %v3546, %v2799
      %v3612 = vsel %vm3585, %v3547, %v2801
      %v3613 = vsel %vm3585, %v3548, %v2803
      %v3614 = vsel %vm3585, %v3549, %v2805
      %v3615 = vsel %vm3585, %v3550, %v2807
      %v3616 = vsel %vm3585, %v3551, %v2809
      %v3617 = vsel %vm3585, %v3552, %v2811
      %v3618 = vsel %vm3585, %v3553, %v2813
      %v3619 = vsel %vm3585, %v3554, %v2815
      %v3620 = vsel %vm3585, %v3555, %v2817
      %v3621 = vsel %vm3585, %v3556, %v2819
      %v3622 = vsel %vm3585, %v3557, %v2821
      %v3623 = vsel %vm3585, %v3558, %v2823
      %v3624 = vsel %vm3585, %v3559, %v2825
      %v3625 = vsel %vm3585, %v3560, %v2827
      %v3626 = vsel %vm3585, %v3561, %v2829
      %v3627 = vsel %vm3585, %v3562, %v2831
      %v3628 = vsel %vm3585, %v3563, %v2833
      %v3629 = vsel %vm3585, %v3564, %v2835
      %v3630 = vsel %vm3585, %v3565, %v2837
      %v3631 = vsel %vm3585, %v3566, %v2839
      %v3632 = vsel %vm3585, %v3567, %v2841
      %v3633 = vsel %vm3585, %v3568, %v2843
      %v3634 = vsel %vm3585, %v3569, %v2845
      %v3635 = vsel %vm3585, %v3570, %v2847
      %v3636 = vsel %vm3585, %v3571, %v2849
      %v3637 = vsel %vm3585, %v3572, %v2851
      %v3638 = vsel %vm3585, %v3573, %v2853
      %v3639 = vsel %vm3585, %v3574, %v2855
      %v3640 = vsel %vm3585, %v3575, %v2857
      %v3641 = vsel %vm3585, %v3576, %v2859
      %v3642 = vsel %vm3585, %v3577, %v2861
      %v3643 = vsel %vm3585, %v3578, %v2863
      %v3644 = vsel %vm3585, %v3579, %v2865
      %v3645 = vsel %vm3585, %v3580, %v2867
      %v3646 = vsel %vm3585, %v3581, %v2869
      %v3647 = vsel %vm3585, %v3582, %v2871
      %v3648 = vsel %vm3585, %v3583, %v2873
      %v3649 = vsel %vm3585, %v3584, %v2875
      %vm3650 = vcmask 261120
      %v3651 = vsel %vm3650, %v3586, %v3005
      %v3652 = vsel %vm3650, %v3587, %v3007
      %v3653 = vsel %vm3650, %v3588, %v3009
      %v3654 = vsel %vm3650, %v3589, %v3011
      %v3655 = vsel %vm3650, %v3590, %v3013
      %v3656 = vsel %vm3650, %v3591, %v3015
      %v3657 = vsel %vm3650, %v3592, %v3017
      %v3658 = vsel %vm3650, %v3593, %v3019
      %v3659 = vsel %vm3650, %v3594, %v3021
      %v3660 = vsel %vm3650, %v3595, %v3023
      %v3661 = vsel %vm3650, %v3596, %v3025
      %v3662 = vsel %vm3650, %v3597, %v3027
      %v3663 = vsel %vm3650, %v3598, %v3029
      %v3664 = vsel %vm3650, %v3599, %v3031
      %v3665 = vsel %vm3650, %v3600, %v3033
      %v3666 = vsel %vm3650, %v3601, %v3035
      %v3667 = vsel %vm3650, %v3602, %v3037
      %v3668 = vsel %vm3650, %v3603, %v3039
      %v3669 = vsel %vm3650, %v3604, %v3041
      %v3670 = vsel %vm3650, %v3605, %v3043
      %v3671 = vsel %vm3650, %v3606, %v3045
      %v3672 = vsel %vm3650, %v3607, %v3047
      %v3673 = vsel %vm3650, %v3608, %v3049
      %v3674 = vsel %vm3650, %v3609, %v3051
      %v3675 = vsel %vm3650, %v3610, %v3053
      %v3676 = vsel %vm3650, %v3611, %v3055
      %v3677 = vsel %vm3650, %v3612, %v3057
      %v3678 = vsel %vm3650, %v3613, %v3059
      %v3679 = vsel %vm3650, %v3614, %v3061
      %v3680 = vsel %vm3650, %v3615, %v3063
      %v3681 = vsel %vm3650, %v3616, %v3065
      %v3682 = vsel %vm3650, %v3617, %v3067
      %v3683 = vsel %vm3650, %v3618, %v3069
      %v3684 = vsel %vm3650, %v3619, %v3071
      %v3685 = vsel %vm3650, %v3620, %v3073
      %v3686 = vsel %vm3650, %v3621, %v3075
      %v3687 = vsel %vm3650, %v3622, %v3077
      %v3688 = vsel %vm3650, %v3623, %v3079
      %v3689 = vsel %vm3650, %v3624, %v3081
      %v3690 = vsel %vm3650, %v3625, %v3083
      %v3691 = vsel %vm3650, %v3626, %v3085
      %v3692 = vsel %vm3650, %v3627, %v3087
      %v3693 = vsel %vm3650, %v3628, %v3089
      %v3694 = vsel %vm3650, %v3629, %v3091
      %v3695 = vsel %vm3650, %v3630, %v3093
      %v3696 = vsel %vm3650, %v3631, %v3095
      %v3697 = vsel %vm3650, %v3632, %v3097
      %v3698 = vsel %vm3650, %v3633, %v3099
      %v3699 = vsel %vm3650, %v3634, %v3101
      %v3700 = vsel %vm3650, %v3635, %v3103
      %v3701 = vsel %vm3650, %v3636, %v3105
      %v3702 = vsel %vm3650, %v3637, %v3107
      %v3703 = vsel %vm3650, %v3638, %v3109
      %v3704 = vsel %vm3650, %v3639, %v3111
      %v3705 = vsel %vm3650, %v3640, %v3113
      %v3706 = vsel %vm3650, %v3641, %v3115
      %v3707 = vsel %vm3650, %v3642, %v3117
      %v3708 = vsel %vm3650, %v3643, %v3119
      %v3709 = vsel %vm3650, %v3644, %v3121
      %v3710 = vsel %vm3650, %v3645, %v3123
      %v3711 = vsel %vm3650, %v3646, %v3125
      %v3712 = vsel %vm3650, %v3647, %v3127
      %v3713 = vsel %vm3650, %v3648, %v3129
      %v3714 = vsel %vm3650, %v3649, %v3131
      %v3715 = vpack.c.bf16 %v3652, %v3651
      %v3716 = vpack.c.bf16 %v3654, %v3653
      %v3717 = vpack.c.bf16 %v3656, %v3655
      %v3718 = vpack.c.bf16 %v3658, %v3657
      %v3719 = vpack.c.bf16 %v3660, %v3659
      %v3720 = vpack.c.bf16 %v3662, %v3661
      %v3721 = vpack.c.bf16 %v3664, %v3663
      %v3722 = vpack.c.bf16 %v3666, %v3665
      %v3723 = vpack.c.bf16 %v3668, %v3667
      %v3724 = vpack.c.bf16 %v3670, %v3669
      %v3725 = vpack.c.bf16 %v3672, %v3671
      %v3726 = vpack.c.bf16 %v3674, %v3673
      %v3727 = vpack.c.bf16 %v3676, %v3675
      %v3728 = vpack.c.bf16 %v3678, %v3677
      %v3729 = vpack.c.bf16 %v3680, %v3679
      %v3730 = vpack.c.bf16 %v3682, %v3681
      %v3731 = vpack.c.bf16 %v3684, %v3683
      %v3732 = vpack.c.bf16 %v3686, %v3685
      %v3733 = vpack.c.bf16 %v3688, %v3687
      %v3734 = vpack.c.bf16 %v3690, %v3689
      %v3735 = vpack.c.bf16 %v3692, %v3691
      %v3736 = vpack.c.bf16 %v3694, %v3693
      %v3737 = vpack.c.bf16 %v3696, %v3695
      %v3738 = vpack.c.bf16 %v3698, %v3697
      %v3739 = vpack.c.bf16 %v3700, %v3699
      %v3740 = vpack.c.bf16 %v3702, %v3701
      %v3741 = vpack.c.bf16 %v3704, %v3703
      %v3742 = vpack.c.bf16 %v3706, %v3705
      %v3743 = vpack.c.bf16 %v3708, %v3707
      %v3744 = vpack.c.bf16 %v3710, %v3709
      %v3745 = vpack.c.bf16 %v3712, %v3711
      %v3746 = vpack.c.bf16 %v3714, %v3713
      %v3747 = vld [vmem:[%s1] sm:$0xf]
      %v3748 = vld [vmem:[%s1 + $0x4] sm:$0xf]
      %v3749 = vld [vmem:[%s1 + $0x8] sm:$0xf]
      %v3750 = vld [vmem:[%s1 + $0xc] sm:$0xf]
      %v3751 = vld [vmem:[%s1 + $0x10] sm:$0x3]
      %v3757 = vunpack.c.l.b16 %v3747
      %v3758 = vunpack.c.l.b16 %v3748
      %v3759 = vunpack.c.l.b16 %v3749
      %v3760 = vunpack.c.l.b16 %v3750
      %v3761 = vunpack.c.l.b16 %v3751
      %v3762 = vpack.c.b16 %v3758, %v3757
      %v3763 = vpack.c.b16 %v3760, %v3759
      %v3764 = vpack.c.b16 %v3761, %v3761
      %vm3767 = vcmask 293888
      %v3769 = vsel %vm3767, %v3715, 0
      %v3772 = vsel %vm3767, %v3716, 0
      %v3775 = vsel %vm3767, %v3717, 0
      %v3778 = vsel %vm3767, %v3718, 0
      %v3781 = vsel %vm3767, %v3719, 0
      %v3784 = vsel %vm3767, %v3720, 0
      %v3787 = vsel %vm3767, %v3721, 0
      %v3790 = vsel %vm3767, %v3722, 0
      %v3793 = vsel %vm3767, %v3723, 0
      %v3796 = vsel %vm3767, %v3724, 0
      %v3799 = vsel %vm3767, %v3725, 0
      %v3802 = vsel %vm3767, %v3726, 0
      %v3805 = vsel %vm3767, %v3727, 0
      %v3808 = vsel %vm3767, %v3728, 0
      %v3811 = vsel %vm3767, %v3729, 0
      %v3814 = vsel %vm3767, %v3730, 0
      %v3817 = vsel %vm3767, %v3731, 0
      %v3820 = vsel %vm3767, %v3732, 0
      %v3823 = vsel %vm3767, %v3733, 0
      %v3826 = vsel %vm3767, %v3734, 0
      %v3829 = vsel %vm3767, %v3735, 0
      %v3832 = vsel %vm3767, %v3736, 0
      %v3835 = vsel %vm3767, %v3737, 0
      %v3838 = vsel %vm3767, %v3738, 0
      %v3841 = vsel %vm3767, %v3739, 0
      %v3844 = vsel %vm3767, %v3740, 0
      %v3847 = vsel %vm3767, %v3741, 0
      %v3850 = vsel %vm3767, %v3742, 0
      %v3853 = vsel %vm3767, %v3743, 0
      %v3856 = vsel %vm3767, %v3744, 0
      %v3859 = vsel %vm3767, %v3745, 0
      %v3862 = vsel %vm3767, %v3746, 0
      %vm3864 = vcmask 1041408
      %v3866 = vsel %vm3864, %v3764, 0
      %3868 = vmatprep.subr.bf16.mxu0 0
      %3869 = vmatpush1.bf16.msra.mxu0 0
      %3870 = vmatprep.subr.bf16.mxu0 0
      %3871 = vmatpush1.bf16.msra.mxu0 0
      %3872 = vmatprep.subr.bf16.mxu0 0
      %3873 = vmatpush1.bf16.msra.mxu0 0
      %3874 = vmatprep.subr.bf16.mxu0 0
      %3875 = vmatpush1.bf16.msra.mxu0 0
      %3876 = vmatprep.subr.bf16.mxu0 0
      %3877 = vmatpush1.bf16.msra.mxu0 0
      %3878 = vmatprep.subr.bf16.mxu0 0
      %3879 = vmatpush1.bf16.msra.mxu0 %v3866
      %3880 = vmatprep.subr.bf16.mxu0 0
      %3881 = vmatpush1.bf16.msra.mxu0 %v3763
      %3882 = vmatprep.subr.bf16.mxu0 0
      %3883 = vmatpush1.bf16.msra.mxu0 %v3762
      %3884 = vmatprep.subr.bf16.mxu0 0
      %3885 = vmatpush2.bf16.msra.mxu0 0
      %3886 = vmatprep.subr.bf16.mxu0 0
      %3887 = vmatpush2.bf16.msra.mxu0 0
      %3888 = vmatprep.subr.bf16.mxu0 0
      %3889 = vmatpush2.bf16.msra.mxu0 0
      %3890 = vmatprep.subr.bf16.mxu0 0
      %3891 = vmatpush2.bf16.msra.mxu0 0
      %3892 = vmatprep.subr.bf16.mxu0 0
      %3893 = vmatpush2.bf16.msra.mxu0 0
      %3894 = vmatprep.subr.bf16.mxu0 0
      %3895 = vmatpush2.bf16.msra.mxu0 0
      %3896 = vmatprep.subr.bf16.mxu0 0
      %3897 = vmatpush2.bf16.msra.mxu0 0
      %3898 = vmatprep.subr.bf16.mxu0 0
      %3899 = vmatpush2.bf16.msra.mxu0 0
      %3900 = vmatprep.mubr.bf16.mxu0 0
      %3901 = vmatmul.mubr.bf16.gmra.mxu0 %v3769
      %v3902 = vpop.f32.mrf.mxu0
      %v3903 = vadd.f32 0.0, %v3902
      %v3904 = vpop.f32.mrf.mxu0
      %v3905 = vpop.f32.mrf.mxu0
      %v3906 = vadd.f32 0.0, %v3905
      %v3907 = vpop.f32.mrf.mxu0
      %3908 = vmatprep.mubr.bf16.mxu0 0
      %3909 = vmatmul.mubr.bf16.gmra.mxu0 %v3772
      %v3910 = vpop.f32.mrf.mxu0
      %v3911 = vadd.f32 0.0, %v3910
      %v3912 = vpop.f32.mrf.mxu0
      %v3913 = vpop.f32.mrf.mxu0
      %v3914 = vadd.f32 0.0, %v3913
      %v3915 = vpop.f32.mrf.mxu0
      %3916 = vmatprep.mubr.bf16.mxu0 0
      %3917 = vmatmul.mubr.bf16.gmra.mxu0 %v3775
      %v3918 = vpop.f32.mrf.mxu0
      %v3919 = vadd.f32 0.0, %v3918
      %v3920 = vpop.f32.mrf.mxu0
      %v3921 = vpop.f32.mrf.mxu0
      %v3922 = vadd.f32 0.0, %v3921
      %v3923 = vpop.f32.mrf.mxu0
      %3924 = vmatprep.mubr.bf16.mxu0 0
      %3925 = vmatmul.mubr.bf16.gmra.mxu0 %v3778
      %v3926 = vpop.f32.mrf.mxu0
      %v3927 = vadd.f32 0.0, %v3926
      %v3928 = vpop.f32.mrf.mxu0
      %v3929 = vpop.f32.mrf.mxu0
      %v3930 = vadd.f32 0.0, %v3929
      %v3931 = vpop.f32.mrf.mxu0
      %3932 = vmatprep.mubr.bf16.mxu0 0
      %3933 = vmatmul.mubr.bf16.gmra.mxu0 %v3781
      %v3934 = vpop.f32.mrf.mxu0
      %v3935 = vadd.f32 0.0, %v3934
      %v3936 = vpop.f32.mrf.mxu0
      %v3937 = vpop.f32.mrf.mxu0
      %v3938 = vadd.f32 0.0, %v3937
      %v3939 = vpop.f32.mrf.mxu0
      %3940 = vmatprep.mubr.bf16.mxu0 0
      %3941 = vmatmul.mubr.bf16.gmra.mxu0 %v3784
      %v3942 = vpop.f32.mrf.mxu0
      %v3943 = vadd.f32 0.0, %v3942
      %v3944 = vpop.f32.mrf.mxu0
      %v3945 = vpop.f32.mrf.mxu0
      %v3946 = vadd.f32 0.0, %v3945
      %v3947 = vpop.f32.mrf.mxu0
      %3948 = vmatprep.mubr.bf16.mxu0 0
      %3949 = vmatmul.mubr.bf16.gmra.mxu0 %v3787
      %v3950 = vpop.f32.mrf.mxu0
      %v3951 = vadd.f32 0.0, %v3950
      %v3952 = vpop.f32.mrf.mxu0
      %v3953 = vpop.f32.mrf.mxu0
      %v3954 = vadd.f32 0.0, %v3953
      %v3955 = vpop.f32.mrf.mxu0
      %3956 = vmatprep.mubr.bf16.mxu0 0
      %3957 = vmatmul.mubr.bf16.gmra.mxu0 %v3790
      %v3958 = vpop.f32.mrf.mxu0
      %v3959 = vadd.f32 0.0, %v3958
      %v3960 = vpop.f32.mrf.mxu0
      %v3961 = vpop.f32.mrf.mxu0
      %v3962 = vadd.f32 0.0, %v3961
      %v3963 = vpop.f32.mrf.mxu0
      %3964 = vmatprep.mubr.bf16.mxu0 0
      %3965 = vmatmul.mubr.bf16.gmra.mxu0 %v3793
      %v3966 = vpop.f32.mrf.mxu0
      %v3967 = vadd.f32 0.0, %v3966
      %v3968 = vpop.f32.mrf.mxu0
      %v3969 = vpop.f32.mrf.mxu0
      %v3970 = vadd.f32 0.0, %v3969
      %v3971 = vpop.f32.mrf.mxu0
      %3972 = vmatprep.mubr.bf16.mxu0 0
      %3973 = vmatmul.mubr.bf16.gmra.mxu0 %v3796
      %v3974 = vpop.f32.mrf.mxu0
      %v3975 = vadd.f32 0.0, %v3974
      %v3976 = vpop.f32.mrf.mxu0
      %v3977 = vpop.f32.mrf.mxu0
      %v3978 = vadd.f32 0.0, %v3977
      %v3979 = vpop.f32.mrf.mxu0
      %3980 = vmatprep.mubr.bf16.mxu0 0
      %3981 = vmatmul.mubr.bf16.gmra.mxu0 %v3799
      %v3982 = vpop.f32.mrf.mxu0
      %v3983 = vadd.f32 0.0, %v3982
      %v3984 = vpop.f32.mrf.mxu0
      %v3985 = vpop.f32.mrf.mxu0
      %v3986 = vadd.f32 0.0, %v3985
      %v3987 = vpop.f32.mrf.mxu0
      %3988 = vmatprep.mubr.bf16.mxu0 0
      %3989 = vmatmul.mubr.bf16.gmra.mxu0 %v3802
      %v3990 = vpop.f32.mrf.mxu0
      %v3991 = vadd.f32 0.0, %v3990
      %v3992 = vpop.f32.mrf.mxu0
      %v3993 = vpop.f32.mrf.mxu0
      %v3994 = vadd.f32 0.0, %v3993
      %v3995 = vpop.f32.mrf.mxu0
      %3996 = vmatprep.mubr.bf16.mxu0 0
      %3997 = vmatmul.mubr.bf16.gmra.mxu0 %v3805
      %v3998 = vpop.f32.mrf.mxu0
      %v3999 = vadd.f32 0.0, %v3998
      %v4000 = vpop.f32.mrf.mxu0
      %v4001 = vpop.f32.mrf.mxu0
      %v4002 = vadd.f32 0.0, %v4001
      %v4003 = vpop.f32.mrf.mxu0
      %4004 = vmatprep.mubr.bf16.mxu0 0
      %4005 = vmatmul.mubr.bf16.gmra.mxu0 %v3808
      %v4006 = vpop.f32.mrf.mxu0
      %v4007 = vadd.f32 0.0, %v4006
      %v4008 = vpop.f32.mrf.mxu0
      %v4009 = vpop.f32.mrf.mxu0
      %v4010 = vadd.f32 0.0, %v4009
      %v4011 = vpop.f32.mrf.mxu0
      %4012 = vmatprep.mubr.bf16.mxu0 0
      %4013 = vmatmul.mubr.bf16.gmra.mxu0 %v3811
      %v4014 = vpop.f32.mrf.mxu0
      %v4015 = vadd.f32 0.0, %v4014
      %v4016 = vpop.f32.mrf.mxu0
      %v4017 = vpop.f32.mrf.mxu0
      %v4018 = vadd.f32 0.0, %v4017
      %v4019 = vpop.f32.mrf.mxu0
      %4020 = vmatprep.mubr.bf16.mxu0 0
      %4021 = vmatmul.mubr.bf16.gmra.mxu0 %v3814
      %v4022 = vpop.f32.mrf.mxu0
      %v4023 = vadd.f32 0.0, %v4022
      %v4024 = vpop.f32.mrf.mxu0
      %v4025 = vpop.f32.mrf.mxu0
      %v4026 = vadd.f32 0.0, %v4025
      %v4027 = vpop.f32.mrf.mxu0
      %4028 = vmatprep.mubr.bf16.mxu0 0
      %4029 = vmatmul.mubr.bf16.gmra.mxu0 %v3817
      %v4030 = vpop.f32.mrf.mxu0
      %v4031 = vadd.f32 0.0, %v4030
      %v4032 = vpop.f32.mrf.mxu0
      %v4033 = vpop.f32.mrf.mxu0
      %v4034 = vadd.f32 0.0, %v4033
      %v4035 = vpop.f32.mrf.mxu0
      %4036 = vmatprep.mubr.bf16.mxu0 0
      %4037 = vmatmul.mubr.bf16.gmra.mxu0 %v3820
      %v4038 = vpop.f32.mrf.mxu0
      %v4039 = vadd.f32 0.0, %v4038
      %v4040 = vpop.f32.mrf.mxu0
      %v4041 = vpop.f32.mrf.mxu0
      %v4042 = vadd.f32 0.0, %v4041
      %v4043 = vpop.f32.mrf.mxu0
      %4044 = vmatprep.mubr.bf16.mxu0 0
      %4045 = vmatmul.mubr.bf16.gmra.mxu0 %v3823
      %v4046 = vpop.f32.mrf.mxu0
      %v4047 = vadd.f32 0.0, %v4046
      %v4048 = vpop.f32.mrf.mxu0
      %v4049 = vpop.f32.mrf.mxu0
      %v4050 = vadd.f32 0.0, %v4049
      %v4051 = vpop.f32.mrf.mxu0
      %4052 = vmatprep.mubr.bf16.mxu0 0
      %4053 = vmatmul.mubr.bf16.gmra.mxu0 %v3826
      %v4054 = vpop.f32.mrf.mxu0
      %v4055 = vadd.f32 0.0, %v4054
      %v4056 = vpop.f32.mrf.mxu0
      %v4057 = vpop.f32.mrf.mxu0
      %v4058 = vadd.f32 0.0, %v4057
      %v4059 = vpop.f32.mrf.mxu0
      %4060 = vmatprep.mubr.bf16.mxu0 0
      %4061 = vmatmul.mubr.bf16.gmra.mxu0 %v3829
      %v4062 = vpop.f32.mrf.mxu0
      %v4063 = vadd.f32 0.0, %v4062
      %v4064 = vpop.f32.mrf.mxu0
      %v4065 = vpop.f32.mrf.mxu0
      %v4066 = vadd.f32 0.0, %v4065
      %v4067 = vpop.f32.mrf.mxu0
      %4068 = vmatprep.mubr.bf16.mxu0 0
      %4069 = vmatmul.mubr.bf16.gmra.mxu0 %v3832
      %v4070 = vpop.f32.mrf.mxu0
      %v4071 = vadd.f32 0.0, %v4070
      %v4072 = vpop.f32.mrf.mxu0
      %v4073 = vpop.f32.mrf.mxu0
      %v4074 = vadd.f32 0.0, %v4073
      %v4075 = vpop.f32.mrf.mxu0
      %4076 = vmatprep.mubr.bf16.mxu0 0
      %4077 = vmatmul.mubr.bf16.gmra.mxu0 %v3835
      %v4078 = vpop.f32.mrf.mxu0
      %v4079 = vadd.f32 0.0, %v4078
      %v4080 = vpop.f32.mrf.mxu0
      %v4081 = vpop.f32.mrf.mxu0
      %v4082 = vadd.f32 0.0, %v4081
      %v4083 = vpop.f32.mrf.mxu0
      %4084 = vmatprep.mubr.bf16.mxu0 0
      %4085 = vmatmul.mubr.bf16.gmra.mxu0 %v3838
      %v4086 = vpop.f32.mrf.mxu0
      %v4087 = vadd.f32 0.0, %v4086
      %v4088 = vpop.f32.mrf.mxu0
      %v4089 = vpop.f32.mrf.mxu0
      %v4090 = vadd.f32 0.0, %v4089
      %v4091 = vpop.f32.mrf.mxu0
      %4092 = vmatprep.mubr.bf16.mxu0 0
      %4093 = vmatmul.mubr.bf16.gmra.mxu0 %v3841
      %v4094 = vpop.f32.mrf.mxu0
      %v4095 = vadd.f32 0.0, %v4094
      %v4096 = vpop.f32.mrf.mxu0
      %v4097 = vpop.f32.mrf.mxu0
      %v4098 = vadd.f32 0.0, %v4097
      %v4099 = vpop.f32.mrf.mxu0
      %4100 = vmatprep.mubr.bf16.mxu0 0
      %4101 = vmatmul.mubr.bf16.gmra.mxu0 %v3844
      %v4102 = vpop.f32.mrf.mxu0
      %v4103 = vadd.f32 0.0, %v4102
      %v4104 = vpop.f32.mrf.mxu0
      %v4105 = vpop.f32.mrf.mxu0
      %v4106 = vadd.f32 0.0, %v4105
      %v4107 = vpop.f32.mrf.mxu0
      %4108 = vmatprep.mubr.bf16.mxu0 0
      %4109 = vmatmul.mubr.bf16.gmra.mxu0 %v3847
      %v4110 = vpop.f32.mrf.mxu0
      %v4111 = vadd.f32 0.0, %v4110
      %v4112 = vpop.f32.mrf.mxu0
      %v4113 = vpop.f32.mrf.mxu0
      %v4114 = vadd.f32 0.0, %v4113
      %v4115 = vpop.f32.mrf.mxu0
      %4116 = vmatprep.mubr.bf16.mxu0 0
      %4117 = vmatmul.mubr.bf16.gmra.mxu0 %v3850
      %v4118 = vpop.f32.mrf.mxu0
      %v4119 = vadd.f32 0.0, %v4118
      %v4120 = vpop.f32.mrf.mxu0
      %v4121 = vpop.f32.mrf.mxu0
      %v4122 = vadd.f32 0.0, %v4121
      %v4123 = vpop.f32.mrf.mxu0
      %4124 = vmatprep.mubr.bf16.mxu0 0
      %4125 = vmatmul.mubr.bf16.gmra.mxu0 %v3853
      %v4126 = vpop.f32.mrf.mxu0
      %v4127 = vadd.f32 0.0, %v4126
      %v4128 = vpop.f32.mrf.mxu0
      %v4129 = vpop.f32.mrf.mxu0
      %v4130 = vadd.f32 0.0, %v4129
      %v4131 = vpop.f32.mrf.mxu0
      %4132 = vmatprep.mubr.bf16.mxu0 0
      %4133 = vmatmul.mubr.bf16.gmra.mxu0 %v3856
      %v4134 = vpop.f32.mrf.mxu0
      %v4135 = vadd.f32 0.0, %v4134
      %v4136 = vpop.f32.mrf.mxu0
      %v4137 = vpop.f32.mrf.mxu0
      %v4138 = vadd.f32 0.0, %v4137
      %v4139 = vpop.f32.mrf.mxu0
      %4140 = vmatprep.mubr.bf16.mxu0 0
      %4141 = vmatmul.mubr.bf16.gmra.mxu0 %v3859
      %v4142 = vpop.f32.mrf.mxu0
      %v4143 = vadd.f32 0.0, %v4142
      %v4144 = vpop.f32.mrf.mxu0
      %v4145 = vpop.f32.mrf.mxu0
      %v4146 = vadd.f32 0.0, %v4145
      %v4147 = vpop.f32.mrf.mxu0
      %4148 = vmatprep.mubr.bf16.mxu0 0
      %4149 = vmatmul.mubr.bf16.gmra.mxu0 %v3862
      %v4150 = vpop.f32.mrf.mxu0
      %v4151 = vadd.f32 0.0, %v4150
      %v4152 = vpop.f32.mrf.mxu0
      %v4153 = vpop.f32.mrf.mxu0
      %v4154 = vadd.f32 0.0, %v4153
      %v4155 = vpop.f32.mrf.mxu0
      %4156 = vdwg.mxu0
      %v4157 = vld [vmem:[%s2] sm:$0x1]
      %v4159 = vlaneseq
      %v4160 = vshrl.u32 %v4159, 7
      %v4161 = vsub.s32 0, %v4160
      %v4162 = vrot.slane %v4157, %v4161
      %v4164 = vmul.f32 %v3903, %v4162
      %v4165 = vmul.f32 %v3906, %v4162
      %v4166 = vmul.f32 %v3911, %v4162
      %v4167 = vmul.f32 %v3914, %v4162
      %v4168 = vmul.f32 %v3919, %v4162
      %v4169 = vmul.f32 %v3922, %v4162
      %v4170 = vmul.f32 %v3927, %v4162
      %v4171 = vmul.f32 %v3930, %v4162
      %v4172 = vmul.f32 %v3935, %v4162
      %v4173 = vmul.f32 %v3938, %v4162
      %v4174 = vmul.f32 %v3943, %v4162
      %v4175 = vmul.f32 %v3946, %v4162
      %v4176 = vmul.f32 %v3951, %v4162
      %v4177 = vmul.f32 %v3954, %v4162
      %v4178 = vmul.f32 %v3959, %v4162
      %v4179 = vmul.f32 %v3962, %v4162
      %v4180 = vmul.f32 %v3967, %v4162
      %v4181 = vmul.f32 %v3970, %v4162
      %v4182 = vmul.f32 %v3975, %v4162
      %v4183 = vmul.f32 %v3978, %v4162
      %v4184 = vmul.f32 %v3983, %v4162
      %v4185 = vmul.f32 %v3986, %v4162
      %v4186 = vmul.f32 %v3991, %v4162
      %v4187 = vmul.f32 %v3994, %v4162
      %v4188 = vmul.f32 %v3999, %v4162
      %v4189 = vmul.f32 %v4002, %v4162
      %v4190 = vmul.f32 %v4007, %v4162
      %v4191 = vmul.f32 %v4010, %v4162
      %v4192 = vmul.f32 %v4015, %v4162
      %v4193 = vmul.f32 %v4018, %v4162
      %v4194 = vmul.f32 %v4023, %v4162
      %v4195 = vmul.f32 %v4026, %v4162
      %v4196 = vmul.f32 %v4031, %v4162
      %v4197 = vmul.f32 %v4034, %v4162
      %v4198 = vmul.f32 %v4039, %v4162
      %v4199 = vmul.f32 %v4042, %v4162
      %v4200 = vmul.f32 %v4047, %v4162
      %v4201 = vmul.f32 %v4050, %v4162
      %v4202 = vmul.f32 %v4055, %v4162
      %v4203 = vmul.f32 %v4058, %v4162
      %v4204 = vmul.f32 %v4063, %v4162
      %v4205 = vmul.f32 %v4066, %v4162
      %v4206 = vmul.f32 %v4071, %v4162
      %v4207 = vmul.f32 %v4074, %v4162
      %v4208 = vmul.f32 %v4079, %v4162
      %v4209 = vmul.f32 %v4082, %v4162
      %v4210 = vmul.f32 %v4087, %v4162
      %v4211 = vmul.f32 %v4090, %v4162
      %v4212 = vmul.f32 %v4095, %v4162
      %v4213 = vmul.f32 %v4098, %v4162
      %v4214 = vmul.f32 %v4103, %v4162
      %v4215 = vmul.f32 %v4106, %v4162
      %v4216 = vmul.f32 %v4111, %v4162
      %v4217 = vmul.f32 %v4114, %v4162
      %v4218 = vmul.f32 %v4119, %v4162
      %v4219 = vmul.f32 %v4122, %v4162
      %v4220 = vmul.f32 %v4127, %v4162
      %v4221 = vmul.f32 %v4130, %v4162
      %v4222 = vmul.f32 %v4135, %v4162
      %v4223 = vmul.f32 %v4138, %v4162
      %v4224 = vmul.f32 %v4143, %v4162
      %v4225 = vmul.f32 %v4146, %v4162
      %v4226 = vmul.f32 %v4151, %v4162
      %v4227 = vmul.f32 %v4154, %v4162
      %v4228 = vld [vmem:[%s3] sm:$0x1]
      %v4230 = vlaneseq
      %v4231 = vshrl.u32 %v4230, 7
      %v4232 = vsub.s32 0, %v4231
      %v4233 = vrot.slane %v4228, %v4232
      %v4235 = vadd.f32 %v4164, %v4233
      %v4236 = vadd.f32 %v4165, %v4233
      %v4237 = vadd.f32 %v4166, %v4233
      %v4238 = vadd.f32 %v4167, %v4233
      %v4239 = vadd.f32 %v4168, %v4233
      %v4240 = vadd.f32 %v4169, %v4233
      %v4241 = vadd.f32 %v4170, %v4233
      %v4242 = vadd.f32 %v4171, %v4233
      %v4243 = vadd.f32 %v4172, %v4233
      %v4244 = vadd.f32 %v4173, %v4233
      %v4245 = vadd.f32 %v4174, %v4233
      %v4246 = vadd.f32 %v4175, %v4233
      %v4247 = vadd.f32 %v4176, %v4233
      %v4248 = vadd.f32 %v4177, %v4233
      %v4249 = vadd.f32 %v4178, %v4233
      %v4250 = vadd.f32 %v4179, %v4233
      %v4251 = vadd.f32 %v4180, %v4233
      %v4252 = vadd.f32 %v4181, %v4233
      %v4253 = vadd.f32 %v4182, %v4233
      %v4254 = vadd.f32 %v4183, %v4233
      %v4255 = vadd.f32 %v4184, %v4233
      %v4256 = vadd.f32 %v4185, %v4233
      %v4257 = vadd.f32 %v4186, %v4233
      %v4258 = vadd.f32 %v4187, %v4233
      %v4259 = vadd.f32 %v4188, %v4233
      %v4260 = vadd.f32 %v4189, %v4233
      %v4261 = vadd.f32 %v4190, %v4233
      %v4262 = vadd.f32 %v4191, %v4233
      %v4263 = vadd.f32 %v4192, %v4233
      %v4264 = vadd.f32 %v4193, %v4233
      %v4265 = vadd.f32 %v4194, %v4233
      %v4266 = vadd.f32 %v4195, %v4233
      %v4267 = vadd.f32 %v4196, %v4233
      %v4268 = vadd.f32 %v4197, %v4233
      %v4269 = vadd.f32 %v4198, %v4233
      %v4270 = vadd.f32 %v4199, %v4233
      %v4271 = vadd.f32 %v4200, %v4233
      %v4272 = vadd.f32 %v4201, %v4233
      %v4273 = vadd.f32 %v4202, %v4233
      %v4274 = vadd.f32 %v4203, %v4233
      %v4275 = vadd.f32 %v4204, %v4233
      %v4276 = vadd.f32 %v4205, %v4233
      %v4277 = vadd.f32 %v4206, %v4233
      %v4278 = vadd.f32 %v4207, %v4233
      %v4279 = vadd.f32 %v4208, %v4233
      %v4280 = vadd.f32 %v4209, %v4233
      %v4281 = vadd.f32 %v4210, %v4233
      %v4282 = vadd.f32 %v4211, %v4233
      %v4283 = vadd.f32 %v4212, %v4233
      %v4284 = vadd.f32 %v4213, %v4233
      %v4285 = vadd.f32 %v4214, %v4233
      %v4286 = vadd.f32 %v4215, %v4233
      %v4287 = vadd.f32 %v4216, %v4233
      %v4288 = vadd.f32 %v4217, %v4233
      %v4289 = vadd.f32 %v4218, %v4233
      %v4290 = vadd.f32 %v4219, %v4233
      %v4291 = vadd.f32 %v4220, %v4233
      %v4292 = vadd.f32 %v4221, %v4233
      %v4293 = vadd.f32 %v4222, %v4233
      %v4294 = vadd.f32 %v4223, %v4233
      %v4295 = vadd.f32 %v4224, %v4233
      %v4296 = vadd.f32 %v4225, %v4233
      %v4297 = vadd.f32 %v4226, %v4233
      %v4298 = vadd.f32 %v4227, %v4233
      %v4299 = vmax.f32 %v4235, 0.0
      %v4300 = vmax.f32 %v4236, 0.0
      %v4301 = vmax.f32 %v4237, 0.0
      %v4302 = vmax.f32 %v4238, 0.0
      %v4303 = vmax.f32 %v4239, 0.0
      %v4304 = vmax.f32 %v4240, 0.0
      %v4305 = vmax.f32 %v4241, 0.0
      %v4306 = vmax.f32 %v4242, 0.0
      %v4307 = vmax.f32 %v4243, 0.0
      %v4308 = vmax.f32 %v4244, 0.0
      %v4309 = vmax.f32 %v4245, 0.0
      %v4310 = vmax.f32 %v4246, 0.0
      %v4311 = vmax.f32 %v4247, 0.0
      %v4312 = vmax.f32 %v4248, 0.0
      %v4313 = vmax.f32 %v4249, 0.0
      %v4314 = vmax.f32 %v4250, 0.0
      %v4315 = vmax.f32 %v4251, 0.0
      %v4316 = vmax.f32 %v4252, 0.0
      %v4317 = vmax.f32 %v4253, 0.0
      %v4318 = vmax.f32 %v4254, 0.0
      %v4319 = vmax.f32 %v4255, 0.0
      %v4320 = vmax.f32 %v4256, 0.0
      %v4321 = vmax.f32 %v4257, 0.0
      %v4322 = vmax.f32 %v4258, 0.0
      %v4323 = vmax.f32 %v4259, 0.0
      %v4324 = vmax.f32 %v4260, 0.0
      %v4325 = vmax.f32 %v4261, 0.0
      %v4326 = vmax.f32 %v4262, 0.0
      %v4327 = vmax.f32 %v4263, 0.0
      %v4328 = vmax.f32 %v4264, 0.0
      %v4329 = vmax.f32 %v4265, 0.0
      %v4330 = vmax.f32 %v4266, 0.0
      %v4331 = vmax.f32 %v4267, 0.0
      %v4332 = vmax.f32 %v4268, 0.0
      %v4333 = vmax.f32 %v4269, 0.0
      %v4334 = vmax.f32 %v4270, 0.0
      %v4335 = vmax.f32 %v4271, 0.0
      %v4336 = vmax.f32 %v4272, 0.0
      %v4337 = vmax.f32 %v4273, 0.0
      %v4338 = vmax.f32 %v4274, 0.0
      %v4339 = vmax.f32 %v4275, 0.0
      %v4340 = vmax.f32 %v4276, 0.0
      %v4341 = vmax.f32 %v4277, 0.0
      %v4342 = vmax.f32 %v4278, 0.0
      %v4343 = vmax.f32 %v4279, 0.0
      %v4344 = vmax.f32 %v4280, 0.0
      %v4345 = vmax.f32 %v4281, 0.0
      %v4346 = vmax.f32 %v4282, 0.0
      %v4347 = vmax.f32 %v4283, 0.0
      %v4348 = vmax.f32 %v4284, 0.0
      %v4349 = vmax.f32 %v4285, 0.0
      %v4350 = vmax.f32 %v4286, 0.0
      %v4351 = vmax.f32 %v4287, 0.0
      %v4352 = vmax.f32 %v4288, 0.0
      %v4353 = vmax.f32 %v4289, 0.0
      %v4354 = vmax.f32 %v4290, 0.0
      %v4355 = vmax.f32 %v4291, 0.0
      %v4356 = vmax.f32 %v4292, 0.0
      %v4357 = vmax.f32 %v4293, 0.0
      %v4358 = vmax.f32 %v4294, 0.0
      %v4359 = vmax.f32 %v4295, 0.0
      %v4360 = vmax.f32 %v4296, 0.0
      %v4361 = vmax.f32 %v4297, 0.0
      %v4362 = vmax.f32 %v4298, 0.0
      %4363 = vst.msk [vmem:[#allocation3] sm:$0xff] %vm3260, 0.0
      %4364 = vst.msk [vmem:[#allocation3 + $0x8] sm:$0xff] %vm3260, 0.0
      %vm4365 = vcmask 58368
      %4366 = vst.msk [vmem:[#allocation3 + $0x10] sm:$0x3] %vm4365, 0.0
      %4367 = vst.msk [vmem:[#allocation3 + $0x18] sm:$0xff] %vm3260, 0.0
      %4368 = vst.msk [vmem:[#allocation3 + $0x20] sm:$0xff] %vm3260, 0.0
      %4369 = vst.msk [vmem:[#allocation3 + $0x28] sm:$0x3] %vm4365, 0.0
      %4370 = vst.msk [vmem:[#allocation3 + $0x30] sm:$0xff] %vm3260, 0.0
      %4371 = vst.msk [vmem:[#allocation3 + $0x38] sm:$0xff] %vm3260, 0.0
      %4372 = vst.msk [vmem:[#allocation3 + $0x40] sm:$0x3] %vm4365, 0.0
      %4373 = vst.msk [vmem:[#allocation3 + $0x48] sm:$0xff] %vm3260, 0.0
      %4374 = vst.msk [vmem:[#allocation3 + $0x50] sm:$0xff] %vm3260, 0.0
      %4375 = vst.msk [vmem:[#allocation3 + $0x58] sm:$0x3] %vm4365, 0.0
      %4376 = vst.msk [vmem:[#allocation3 + $0x60] sm:$0xff] %vm3260, 0.0
      %4377 = vst.msk [vmem:[#allocation3 + $0x68] sm:$0xff] %vm3260, 0.0
      %4378 = vst.msk [vmem:[#allocation3 + $0x70] sm:$0x3] %vm4365, 0.0
      %4379 = vst.msk [vmem:[#allocation3 + $0x78] sm:$0xff] %vm3260, 0.0
      %4380 = vst.msk [vmem:[#allocation3 + $0x80] sm:$0xff] %vm3260, 0.0
      %4381 = vst.msk [vmem:[#allocation3 + $0x88] sm:$0x3] %vm4365, 0.0
      %4382 = vst.msk [vmem:[#allocation3 + $0x90] sm:$0xff] %vm3260, 0.0
      %4383 = vst.msk [vmem:[#allocation3 + $0x98] sm:$0xff] %vm3260, 0.0
      %4384 = vst.msk [vmem:[#allocation3 + $0xa0] sm:$0x3] %vm4365, 0.0
      %4385 = vst.msk [vmem:[#allocation3 + $0xa8] sm:$0xff] %vm3260, 0.0
      %4386 = vst.msk [vmem:[#allocation3 + $0xb0] sm:$0xff] %vm3260, 0.0
      %4387 = vst.msk [vmem:[#allocation3 + $0xb8] sm:$0x3] %vm4365, 0.0
      %4388 = vst.msk [vmem:[#allocation3 + $0xc0] sm:$0xff] %vm3260, 0.0
      %4389 = vst.msk [vmem:[#allocation3 + $0xc8] sm:$0xff] %vm3260, 0.0
      %4390 = vst.msk [vmem:[#allocation3 + $0xd0] sm:$0x3] %vm4365, 0.0
      %4391 = vst.msk [vmem:[#allocation3 + $0xd8] sm:$0xff] %vm3260, 0.0
      %4392 = vst.msk [vmem:[#allocation3 + $0xe0] sm:$0xff] %vm3260, 0.0
      %4393 = vst.msk [vmem:[#allocation3 + $0xe8] sm:$0x3] %vm4365, 0.0
      %4394 = vst.msk [vmem:[#allocation3 + $0xf0] sm:$0xff] %vm3260, 0.0
      %4395 = vst.msk [vmem:[#allocation3 + $0xf8] sm:$0xff] %vm3260, 0.0
      %4396 = vst.msk [vmem:[#allocation3 + $0x100] sm:$0x3] %vm4365, 0.0
      %4397 = vst.msk [vmem:[#allocation3 + $0x108] sm:$0xff] %vm3260, 0.0
      %4398 = vst.msk [vmem:[#allocation3 + $0x110] sm:$0xff] %vm3260, 0.0
      %4399 = vst.msk [vmem:[#allocation3 + $0x118] sm:$0x3] %vm4365, 0.0
      %4400 = vst.msk [vmem:[#allocation3 + $0x120] sm:$0xff] %vm3260, 0.0
      %4401 = vst.msk [vmem:[#allocation3 + $0x128] sm:$0xff] %vm3260, 0.0
      %4402 = vst.msk [vmem:[#allocation3 + $0x130] sm:$0x3] %vm4365, 0.0
      %4403 = vst.msk [vmem:[#allocation3 + $0x138] sm:$0xff] %vm3260, 0.0
      %4404 = vst.msk [vmem:[#allocation3 + $0x140] sm:$0xff] %vm3260, 0.0
      %4405 = vst.msk [vmem:[#allocation3 + $0x148] sm:$0x3] %vm4365, 0.0
      %4406 = vst.msk [vmem:[#allocation3 + $0x150] sm:$0xff] %vm3260, 0.0
      %4407 = vst.msk [vmem:[#allocation3 + $0x158] sm:$0xff] %vm3260, 0.0
      %4408 = vst.msk [vmem:[#allocation3 + $0x160] sm:$0x3] %vm4365, 0.0
      %4409 = vst.msk [vmem:[#allocation3 + $0x168] sm:$0xff] %vm3260, 0.0
      %4410 = vst.msk [vmem:[#allocation3 + $0x170] sm:$0xff] %vm3260, 0.0
      %4411 = vst.msk [vmem:[#allocation3 + $0x178] sm:$0x3] %vm4365, 0.0
      %4412 = vst.msk [vmem:[#allocation3 + $0x180] sm:$0xff] %vm3260, 0.0
      %4413 = vst.msk [vmem:[#allocation3 + $0x188] sm:$0xff] %vm3260, 0.0
      %4414 = vst.msk [vmem:[#allocation3 + $0x190] sm:$0x3] %vm4365, 0.0
      %4415 = vst.msk [vmem:[#allocation3 + $0x198] sm:$0xff] %vm3260, 0.0
      %4416 = vst.msk [vmem:[#allocation3 + $0x1a0] sm:$0xff] %vm3260, 0.0
      %4417 = vst.msk [vmem:[#allocation3 + $0x1a8] sm:$0x3] %vm4365, 0.0
      %4418 = vst.msk [vmem:[#allocation3 + $0x1b0] sm:$0xff] %vm3260, 0.0
      %4419 = vst.msk [vmem:[#allocation3 + $0x1b8] sm:$0xff] %vm3260, 0.0
      %4420 = vst.msk [vmem:[#allocation3 + $0x1c0] sm:$0x3] %vm4365, 0.0
      %4421 = vst.msk [vmem:[#allocation3 + $0x1c8] sm:$0xff] %vm3260, 0.0
      %4422 = vst.msk [vmem:[#allocation3 + $0x1d0] sm:$0xff] %vm3260, 0.0
      %4423 = vst.msk [vmem:[#allocation3 + $0x1d8] sm:$0x3] %vm4365, 0.0
      %4424 = vst.msk [vmem:[#allocation3 + $0x1e0] sm:$0xff] %vm3260, 0.0
      %4425 = vst.msk [vmem:[#allocation3 + $0x1e8] sm:$0xff] %vm3260, 0.0
      %4426 = vst.msk [vmem:[#allocation3 + $0x1f0] sm:$0x3] %vm4365, 0.0
      %4427 = vst.msk [vmem:[#allocation3 + $0x1f8] sm:$0xff] %vm3260, 0.0
      %4428 = vst.msk [vmem:[#allocation3 + $0x200] sm:$0xff] %vm3260, 0.0
      %4429 = vst.msk [vmem:[#allocation3 + $0x208] sm:$0x3] %vm4365, 0.0
      %4430 = vst.msk [vmem:[#allocation3 + $0x210] sm:$0xff] %vm3260, 0.0
      %4431 = vst.msk [vmem:[#allocation3 + $0x218] sm:$0xff] %vm3260, 0.0
      %4432 = vst.msk [vmem:[#allocation3 + $0x220] sm:$0x3] %vm4365, 0.0
      %4433 = vst.msk [vmem:[#allocation3 + $0x228] sm:$0xff] %vm3260, 0.0
      %4434 = vst.msk [vmem:[#allocation3 + $0x230] sm:$0xff] %vm3260, 0.0
      %4435 = vst.msk [vmem:[#allocation3 + $0x238] sm:$0x3] %vm4365, 0.0
      %4436 = vst.msk [vmem:[#allocation3 + $0x240] sm:$0xff] %vm3260, 0.0
      %4437 = vst.msk [vmem:[#allocation3 + $0x248] sm:$0xff] %vm3260, 0.0
      %4438 = vst.msk [vmem:[#allocation3 + $0x250] sm:$0x3] %vm4365, 0.0
      %4439 = vst.msk [vmem:[#allocation3 + $0x258] sm:$0xff] %vm3260, 0.0
      %4440 = vst.msk [vmem:[#allocation3 + $0x260] sm:$0xff] %vm3260, 0.0
      %4441 = vst.msk [vmem:[#allocation3 + $0x268] sm:$0x3] %vm4365, 0.0
      %4442 = vst.msk [vmem:[#allocation3 + $0x270] sm:$0xff] %vm3260, 0.0
      %4443 = vst.msk [vmem:[#allocation3 + $0x278] sm:$0xff] %vm3260, 0.0
      %4444 = vst.msk [vmem:[#allocation3 + $0x280] sm:$0x3] %vm4365, 0.0
      %4445 = vst.msk [vmem:[#allocation3 + $0x288] sm:$0xff] %vm3260, 0.0
      %4446 = vst.msk [vmem:[#allocation3 + $0x290] sm:$0xff] %vm3260, 0.0
      %4447 = vst.msk [vmem:[#allocation3 + $0x298] sm:$0x3] %vm4365, 0.0
      %4448 = vst.msk [vmem:[#allocation3 + $0x2a0] sm:$0xff] %vm3260, 0.0
      %4449 = vst.msk [vmem:[#allocation3 + $0x2a8] sm:$0xff] %vm3260, 0.0
      %4450 = vst.msk [vmem:[#allocation3 + $0x2b0] sm:$0x3] %vm4365, 0.0
      %4451 = vst.msk [vmem:[#allocation3 + $0x2b8] sm:$0xff] %vm3260, 0.0
      %4452 = vst.msk [vmem:[#allocation3 + $0x2c0] sm:$0xff] %vm3260, 0.0
      %4453 = vst.msk [vmem:[#allocation3 + $0x2c8] sm:$0x3] %vm4365, 0.0
      %4454 = vst.msk [vmem:[#allocation3 + $0x2d0] sm:$0xff] %vm3260, 0.0
      %4455 = vst.msk [vmem:[#allocation3 + $0x2d8] sm:$0xff] %vm3260, 0.0
      %4456 = vst.msk [vmem:[#allocation3 + $0x2e0] sm:$0x3] %vm4365, 0.0
      %4457 = vst.msk [vmem:[#allocation3 + $0x2e8] sm:$0xff] %vm3260, 0.0
      %4458 = vst.msk [vmem:[#allocation3 + $0x2f0] sm:$0xff] %vm3260, 0.0
      %4459 = vst.msk [vmem:[#allocation3 + $0x2f8] sm:$0x3] %vm4365, 0.0
      %4460 = vst.msk [vmem:[#allocation3 + $0x300] sm:$0xff] %vm3260, 0.0
      %4461 = vst.msk [vmem:[#allocation3 + $0x308] sm:$0xff] %vm3260, 0.0
      %4462 = vst.msk [vmem:[#allocation3 + $0x310] sm:$0x3] %vm4365, 0.0
      %4463 = vst.msk [vmem:[#allocation3 + $0x318] sm:$0xff] %vm3260, 0.0
      %4464 = vst.msk [vmem:[#allocation3 + $0x320] sm:$0xff] %vm3260, 0.0
      %4465 = vst.msk [vmem:[#allocation3 + $0x328] sm:$0x3] %vm4365, 0.0
      %4466 = vst.msk [vmem:[#allocation3 + $0x330] sm:$0xff] %vm3260, 0.0
      %4467 = vst.msk [vmem:[#allocation3 + $0x338] sm:$0xff] %vm3260, 0.0
      %4468 = vst.msk [vmem:[#allocation3 + $0x340] sm:$0x3] %vm4365, 0.0
      %4469 = vst.msk [vmem:[#allocation3 + $0x348] sm:$0xff] %vm3260, 0.0
      %4470 = vst.msk [vmem:[#allocation3 + $0x350] sm:$0xff] %vm3260, 0.0
      %4471 = vst.msk [vmem:[#allocation3 + $0x358] sm:$0x3] %vm4365, 0.0
      %s4472 = scalar_lea.vmem [#allocation3], 24
      %4473 = vst.msk [vmem:[%s4472 + $0x1] sm:$0xff] %vm3260, %v4299
      %4474 = vst.msk [vmem:[%s4472 + $0x9] sm:$0xff] %vm3260, %v4300
      %4475 = vst.msk [vmem:[%s4472 + $0x19] sm:$0xff] %vm3260, %v4301
      %4476 = vst.msk [vmem:[%s4472 + $0x21] sm:$0xff] %vm3260, %v4302
      %4477 = vst.msk [vmem:[%s4472 + $0x31] sm:$0xff] %vm3260, %v4303
      %4478 = vst.msk [vmem:[%s4472 + $0x39] sm:$0xff] %vm3260, %v4304
      %4479 = vst.msk [vmem:[%s4472 + $0x49] sm:$0xff] %vm3260, %v4305
      %4480 = vst.msk [vmem:[%s4472 + $0x51] sm:$0xff] %vm3260, %v4306
      %4481 = vst.msk [vmem:[%s4472 + $0x61] sm:$0xff] %vm3260, %v4307
      %4482 = vst.msk [vmem:[%s4472 + $0x69] sm:$0xff] %vm3260, %v4308
      %4483 = vst.msk [vmem:[%s4472 + $0x79] sm:$0xff] %vm3260, %v4309
      %4484 = vst.msk [vmem:[%s4472 + $0x81] sm:$0xff] %vm3260, %v4310
      %4485 = vst.msk [vmem:[%s4472 + $0x91] sm:$0xff] %vm3260, %v4311
      %4486 = vst.msk [vmem:[%s4472 + $0x99] sm:$0xff] %vm3260, %v4312
      %4487 = vst.msk [vmem:[%s4472 + $0xa9] sm:$0xff] %vm3260, %v4313
      %4488 = vst.msk [vmem:[%s4472 + $0xb1] sm:$0xff] %vm3260, %v4314
      %4489 = vst.msk [vmem:[%s4472 + $0xc1] sm:$0xff] %vm3260, %v4315
      %4490 = vst.msk [vmem:[%s4472 + $0xc9] sm:$0xff] %vm3260, %v4316
      %4491 = vst.msk [vmem:[%s4472 + $0xd9] sm:$0xff] %vm3260, %v4317
      %4492 = vst.msk [vmem:[%s4472 + $0xe1] sm:$0xff] %vm3260, %v4318
      %4493 = vst.msk [vmem:[%s4472 + $0xf1] sm:$0xff] %vm3260, %v4319
      %4494 = vst.msk [vmem:[%s4472 + $0xf9] sm:$0xff] %vm3260, %v4320
      %4495 = vst.msk [vmem:[%s4472 + $0x109] sm:$0xff] %vm3260, %v4321
      %4496 = vst.msk [vmem:[%s4472 + $0x111] sm:$0xff] %vm3260, %v4322
      %4497 = vst.msk [vmem:[%s4472 + $0x121] sm:$0xff] %vm3260, %v4323
      %4498 = vst.msk [vmem:[%s4472 + $0x129] sm:$0xff] %vm3260, %v4324
      %4499 = vst.msk [vmem:[%s4472 + $0x139] sm:$0xff] %vm3260, %v4325
      %4500 = vst.msk [vmem:[%s4472 + $0x141] sm:$0xff] %vm3260, %v4326
      %4501 = vst.msk [vmem:[%s4472 + $0x151] sm:$0xff] %vm3260, %v4327
      %4502 = vst.msk [vmem:[%s4472 + $0x159] sm:$0xff] %vm3260, %v4328
      %4503 = vst.msk [vmem:[%s4472 + $0x169] sm:$0xff] %vm3260, %v4329
      %4504 = vst.msk [vmem:[%s4472 + $0x171] sm:$0xff] %vm3260, %v4330
      %4505 = vst.msk [vmem:[%s4472 + $0x1b1] sm:$0xff] %vm3260, %v4331
      %4506 = vst.msk [vmem:[%s4472 + $0x1b9] sm:$0xff] %vm3260, %v4332
      %4507 = vst.msk [vmem:[%s4472 + $0x1c9] sm:$0xff] %vm3260, %v4333
      %4508 = vst.msk [vmem:[%s4472 + $0x1d1] sm:$0xff] %vm3260, %v4334
      %4509 = vst.msk [vmem:[%s4472 + $0x1e1] sm:$0xff] %vm3260, %v4335
      %4510 = vst.msk [vmem:[%s4472 + $0x1e9] sm:$0xff] %vm3260, %v4336
      %4511 = vst.msk [vmem:[%s4472 + $0x1f9] sm:$0xff] %vm3260, %v4337
      %4512 = vst.msk [vmem:[%s4472 + $0x201] sm:$0xff] %vm3260, %v4338
      %4513 = vst.msk [vmem:[%s4472 + $0x211] sm:$0xff] %vm3260, %v4339
      %4514 = vst.msk [vmem:[%s4472 + $0x219] sm:$0xff] %vm3260, %v4340
      %4515 = vst.msk [vmem:[%s4472 + $0x229] sm:$0xff] %vm3260, %v4341
      %4516 = vst.msk [vmem:[%s4472 + $0x231] sm:$0xff] %vm3260, %v4342
      %4517 = vst.msk [vmem:[%s4472 + $0x241] sm:$0xff] %vm3260, %v4343
      %4518 = vst.msk [vmem:[%s4472 + $0x249] sm:$0xff] %vm3260, %v4344
      %4519 = vst.msk [vmem:[%s4472 + $0x259] sm:$0xff] %vm3260, %v4345
      %4520 = vst.msk [vmem:[%s4472 + $0x261] sm:$0xff] %vm3260, %v4346
      %4521 = vst.msk [vmem:[%s4472 + $0x271] sm:$0xff] %vm3260, %v4347
      %4522 = vst.msk [vmem:[%s4472 + $0x279] sm:$0xff] %vm3260, %v4348
      %4523 = vst.msk [vmem:[%s4472 + $0x289] sm:$0xff] %vm3260, %v4349
      %4524 = vst.msk [vmem:[%s4472 + $0x291] sm:$0xff] %vm3260, %v4350
      %4525 = vst.msk [vmem:[%s4472 + $0x2a1] sm:$0xff] %vm3260, %v4351
      %4526 = vst.msk [vmem:[%s4472 + $0x2a9] sm:$0xff] %vm3260, %v4352
      %4527 = vst.msk [vmem:[%s4472 + $0x2b9] sm:$0xff] %vm3260, %v4353
      %4528 = vst.msk [vmem:[%s4472 + $0x2c1] sm:$0xff] %vm3260, %v4354
      %4529 = vst.msk [vmem:[%s4472 + $0x2d1] sm:$0xff] %vm3260, %v4355
      %4530 = vst.msk [vmem:[%s4472 + $0x2d9] sm:$0xff] %vm3260, %v4356
      %4531 = vst.msk [vmem:[%s4472 + $0x2e9] sm:$0xff] %vm3260, %v4357
      %4532 = vst.msk [vmem:[%s4472 + $0x2f1] sm:$0xff] %vm3260, %v4358
      %4533 = vst.msk [vmem:[%s4472 + $0x301] sm:$0xff] %vm3260, %v4359
      %4534 = vst.msk [vmem:[%s4472 + $0x309] sm:$0xff] %vm3260, %v4360
      %4535 = vst.msk [vmem:[%s4472 + $0x319] sm:$0xff] %vm3260, %v4361
      %4536 = vst.msk [vmem:[%s4472 + $0x321] sm:$0xff] %vm3260, %v4362
      %v4537 = vld [vmem:[#allocation3] sm:$0xff]
      %v4538 = vld [vmem:[#allocation3 + $0x8] sm:$0xff]
      %v4539 = vld [vmem:[#allocation3 + $0x18] sm:$0xff]
      %v4540 = vld [vmem:[#allocation3 + $0x20] sm:$0xff]
      %v4541 = vld [vmem:[#allocation3 + $0x30] sm:$0xff]
      %v4542 = vld [vmem:[#allocation3 + $0x38] sm:$0xff]
      %v4543 = vld [vmem:[#allocation3 + $0x48] sm:$0xff]
      %v4544 = vld [vmem:[#allocation3 + $0x50] sm:$0xff]
      %v4545 = vld [vmem:[#allocation3 + $0x60] sm:$0xff]
      %v4546 = vld [vmem:[#allocation3 + $0x68] sm:$0xff]
      %v4547 = vld [vmem:[#allocation3 + $0x78] sm:$0xff]
      %v4548 = vld [vmem:[#allocation3 + $0x80] sm:$0xff]
      %v4549 = vld [vmem:[#allocation3 + $0x90] sm:$0xff]
      %v4550 = vld [vmem:[#allocation3 + $0x98] sm:$0xff]
      %v4551 = vld [vmem:[#allocation3 + $0xa8] sm:$0xff]
      %v4552 = vld [vmem:[#allocation3 + $0xb0] sm:$0xff]
      %v4553 = vld [vmem:[#allocation3 + $0xc0] sm:$0xff]
      %v4554 = vld [vmem:[#allocation3 + $0xc8] sm:$0xff]
      %v4555 = vld [vmem:[#allocation3 + $0xd8] sm:$0xff]
      %v4556 = vld [vmem:[#allocation3 + $0xe0] sm:$0xff]
      %v4557 = vld [vmem:[#allocation3 + $0xf0] sm:$0xff]
      %v4558 = vld [vmem:[#allocation3 + $0xf8] sm:$0xff]
      %v4559 = vld [vmem:[#allocation3 + $0x108] sm:$0xff]
      %v4560 = vld [vmem:[#allocation3 + $0x110] sm:$0xff]
      %v4561 = vld [vmem:[#allocation3 + $0x120] sm:$0xff]
      %v4562 = vld [vmem:[#allocation3 + $0x128] sm:$0xff]
      %v4563 = vld [vmem:[#allocation3 + $0x138] sm:$0xff]
      %v4564 = vld [vmem:[#allocation3 + $0x140] sm:$0xff]
      %v4565 = vld [vmem:[#allocation3 + $0x150] sm:$0xff]
      %v4566 = vld [vmem:[#allocation3 + $0x158] sm:$0xff]
      %v4567 = vld [vmem:[#allocation3 + $0x168] sm:$0xff]
      %v4568 = vld [vmem:[#allocation3 + $0x170] sm:$0xff]
      %v4569 = vld [vmem:[#allocation3 + $0x1b0] sm:$0xff]
      %v4570 = vld [vmem:[#allocation3 + $0x1b8] sm:$0xff]
      %v4571 = vld [vmem:[#allocation3 + $0x1c8] sm:$0xff]
      %v4572 = vld [vmem:[#allocation3 + $0x1d0] sm:$0xff]
      %v4573 = vld [vmem:[#allocation3 + $0x1e0] sm:$0xff]
      %v4574 = vld [vmem:[#allocation3 + $0x1e8] sm:$0xff]
      %v4575 = vld [vmem:[#allocation3 + $0x1f8] sm:$0xff]
      %v4576 = vld [vmem:[#allocation3 + $0x200] sm:$0xff]
      %v4577 = vld [vmem:[#allocation3 + $0x210] sm:$0xff]
      %v4578 = vld [vmem:[#allocation3 + $0x218] sm:$0xff]
      %v4579 = vld [vmem:[#allocation3 + $0x228] sm:$0xff]
      %v4580 = vld [vmem:[#allocation3 + $0x230] sm:$0xff]
      %v4581 = vld [vmem:[#allocation3 + $0x240] sm:$0xff]
      %v4582 = vld [vmem:[#allocation3 + $0x248] sm:$0xff]
      %v4583 = vld [vmem:[#allocation3 + $0x258] sm:$0xff]
      %v4584 = vld [vmem:[#allocation3 + $0x260] sm:$0xff]
      %v4585 = vld [vmem:[#allocation3 + $0x270] sm:$0xff]
      %v4586 = vld [vmem:[#allocation3 + $0x278] sm:$0xff]
      %v4587 = vld [vmem:[#allocation3 + $0x288] sm:$0xff]
      %v4588 = vld [vmem:[#allocation3 + $0x290] sm:$0xff]
      %v4589 = vld [vmem:[#allocation3 + $0x2a0] sm:$0xff]
      %v4590 = vld [vmem:[#allocation3 + $0x2a8] sm:$0xff]
      %v4591 = vld [vmem:[#allocation3 + $0x2b8] sm:$0xff]
      %v4592 = vld [vmem:[#allocation3 + $0x2c0] sm:$0xff]
      %v4593 = vld [vmem:[#allocation3 + $0x2d0] sm:$0xff]
      %v4594 = vld [vmem:[#allocation3 + $0x2d8] sm:$0xff]
      %v4595 = vld [vmem:[#allocation3 + $0x2e8] sm:$0xff]
      %v4596 = vld [vmem:[#allocation3 + $0x2f0] sm:$0xff]
      %v4597 = vld [vmem:[#allocation3 + $0x300] sm:$0xff]
      %v4598 = vld [vmem:[#allocation3 + $0x308] sm:$0xff]
      %v4599 = vld [vmem:[#allocation3 + $0x318] sm:$0xff]
      %v4600 = vld [vmem:[#allocation3 + $0x320] sm:$0xff]
      %v4601 = vld [vmem:[#allocation3 + $0x1] sm:$0xff]
      %v4602 = vld [vmem:[#allocation3 + $0x9] sm:$0xff]
      %v4603 = vld [vmem:[#allocation3 + $0x19] sm:$0xff]
      %v4604 = vld [vmem:[#allocation3 + $0x21] sm:$0xff]
      %v4605 = vld [vmem:[#allocation3 + $0x31] sm:$0xff]
      %v4606 = vld [vmem:[#allocation3 + $0x39] sm:$0xff]
      %v4607 = vld [vmem:[#allocation3 + $0x49] sm:$0xff]
      %v4608 = vld [vmem:[#allocation3 + $0x51] sm:$0xff]
      %v4609 = vld [vmem:[#allocation3 + $0x61] sm:$0xff]
      %v4610 = vld [vmem:[#allocation3 + $0x69] sm:$0xff]
      %v4611 = vld [vmem:[#allocation3 + $0x79] sm:$0xff]
      %v4612 = vld [vmem:[#allocation3 + $0x81] sm:$0xff]
      %v4613 = vld [vmem:[#allocation3 + $0x91] sm:$0xff]
      %v4614 = vld [vmem:[#allocation3 + $0x99] sm:$0xff]
      %v4615 = vld [vmem:[#allocation3 + $0xa9] sm:$0xff]
      %v4616 = vld [vmem:[#allocation3 + $0xb1] sm:$0xff]
      %v4617 = vld [vmem:[#allocation3 + $0xc1] sm:$0xff]
      %v4618 = vld [vmem:[#allocation3 + $0xc9] sm:$0xff]
      %v4619 = vld [vmem:[#allocation3 + $0xd9] sm:$0xff]
      %v4620 = vld [vmem:[#allocation3 + $0xe1] sm:$0xff]
      %v4621 = vld [vmem:[#allocation3 + $0xf1] sm:$0xff]
      %v4622 = vld [vmem:[#allocation3 + $0xf9] sm:$0xff]
      %v4623 = vld [vmem:[#allocation3 + $0x109] sm:$0xff]
      %v4624 = vld [vmem:[#allocation3 + $0x111] sm:$0xff]
      %v4625 = vld [vmem:[#allocation3 + $0x121] sm:$0xff]
      %v4626 = vld [vmem:[#allocation3 + $0x129] sm:$0xff]
      %v4627 = vld [vmem:[#allocation3 + $0x139] sm:$0xff]
      %v4628 = vld [vmem:[#allocation3 + $0x141] sm:$0xff]
      %v4629 = vld [vmem:[#allocation3 + $0x151] sm:$0xff]
      %v4630 = vld [vmem:[#allocation3 + $0x159] sm:$0xff]
      %v4631 = vld [vmem:[#allocation3 + $0x169] sm:$0xff]
      %v4632 = vld [vmem:[#allocation3 + $0x171] sm:$0xff]
      %v4633 = vld [vmem:[#allocation3 + $0x1b1] sm:$0xff]
      %v4634 = vld [vmem:[#allocation3 + $0x1b9] sm:$0xff]
      %v4635 = vld [vmem:[#allocation3 + $0x1c9] sm:$0xff]
      %v4636 = vld [vmem:[#allocation3 + $0x1d1] sm:$0xff]
      %v4637 = vld [vmem:[#allocation3 + $0x1e1] sm:$0xff]
      %v4638 = vld [vmem:[#allocation3 + $0x1e9] sm:$0xff]
      %v4639 = vld [vmem:[#allocation3 + $0x1f9] sm:$0xff]
      %v4640 = vld [vmem:[#allocation3 + $0x201] sm:$0xff]
      %v4641 = vld [vmem:[#allocation3 + $0x211] sm:$0xff]
      %v4642 = vld [vmem:[#allocation3 + $0x219] sm:$0xff]
      %v4643 = vld [vmem:[#allocation3 + $0x229] sm:$0xff]
      %v4644 = vld [vmem:[#allocation3 + $0x231] sm:$0xff]
      %v4645 = vld [vmem:[#allocation3 + $0x241] sm:$0xff]
      %v4646 = vld [vmem:[#allocation3 + $0x249] sm:$0xff]
      %v4647 = vld [vmem:[#allocation3 + $0x259] sm:$0xff]
      %v4648 = vld [vmem:[#allocation3 + $0x261] sm:$0xff]
      %v4649 = vld [vmem:[#allocation3 + $0x271] sm:$0xff]
      %v4650 = vld [vmem:[#allocation3 + $0x279] sm:$0xff]
      %v4651 = vld [vmem:[#allocation3 + $0x289] sm:$0xff]
      %v4652 = vld [vmem:[#allocation3 + $0x291] sm:$0xff]
      %v4653 = vld [vmem:[#allocation3 + $0x2a1] sm:$0xff]
      %v4654 = vld [vmem:[#allocation3 + $0x2a9] sm:$0xff]
      %v4655 = vld [vmem:[#allocation3 + $0x2b9] sm:$0xff]
      %v4656 = vld [vmem:[#allocation3 + $0x2c1] sm:$0xff]
      %v4657 = vld [vmem:[#allocation3 + $0x2d1] sm:$0xff]
      %v4658 = vld [vmem:[#allocation3 + $0x2d9] sm:$0xff]
      %v4659 = vld [vmem:[#allocation3 + $0x2e9] sm:$0xff]
      %v4660 = vld [vmem:[#allocation3 + $0x2f1] sm:$0xff]
      %v4661 = vld [vmem:[#allocation3 + $0x301] sm:$0xff]
      %v4662 = vld [vmem:[#allocation3 + $0x309] sm:$0xff]
      %v4663 = vld [vmem:[#allocation3 + $0x319] sm:$0xff]
      %v4664 = vld [vmem:[#allocation3 + $0x321] sm:$0xff]
      %v4665 = vld [vmem:[#allocation3 + $0x2] sm:$0xff]
      %v4666 = vld [vmem:[#allocation3 + $0xa] sm:$0xff]
      %v4667 = vld [vmem:[#allocation3 + $0x1a] sm:$0xff]
      %v4668 = vld [vmem:[#allocation3 + $0x22] sm:$0xff]
      %v4669 = vld [vmem:[#allocation3 + $0x32] sm:$0xff]
      %v4670 = vld [vmem:[#allocation3 + $0x3a] sm:$0xff]
      %v4671 = vld [vmem:[#allocation3 + $0x4a] sm:$0xff]
      %v4672 = vld [vmem:[#allocation3 + $0x52] sm:$0xff]
      %v4673 = vld [vmem:[#allocation3 + $0x62] sm:$0xff]
      %v4674 = vld [vmem:[#allocation3 + $0x6a] sm:$0xff]
      %v4675 = vld [vmem:[#allocation3 + $0x7a] sm:$0xff]
      %v4676 = vld [vmem:[#allocation3 + $0x82] sm:$0xff]
      %v4677 = vld [vmem:[#allocation3 + $0x92] sm:$0xff]
      %v4678 = vld [vmem:[#allocation3 + $0x9a] sm:$0xff]
      %v4679 = vld [vmem:[#allocation3 + $0xaa] sm:$0xff]
      %v4680 = vld [vmem:[#allocation3 + $0xb2] sm:$0xff]
      %v4681 = vld [vmem:[#allocation3 + $0xc2] sm:$0xff]
      %v4682 = vld [vmem:[#allocation3 + $0xca] sm:$0xff]
      %v4683 = vld [vmem:[#allocation3 + $0xda] sm:$0xff]
      %v4684 = vld [vmem:[#allocation3 + $0xe2] sm:$0xff]
      %v4685 = vld [vmem:[#allocation3 + $0xf2] sm:$0xff]
      %v4686 = vld [vmem:[#allocation3 + $0xfa] sm:$0xff]
      %v4687 = vld [vmem:[#allocation3 + $0x10a] sm:$0xff]
      %v4688 = vld [vmem:[#allocation3 + $0x112] sm:$0xff]
      %v4689 = vld [vmem:[#allocation3 + $0x122] sm:$0xff]
      %v4690 = vld [vmem:[#allocation3 + $0x12a] sm:$0xff]
      %v4691 = vld [vmem:[#allocation3 + $0x13a] sm:$0xff]
      %v4692 = vld [vmem:[#allocation3 + $0x142] sm:$0xff]
      %v4693 = vld [vmem:[#allocation3 + $0x152] sm:$0xff]
      %v4694 = vld [vmem:[#allocation3 + $0x15a] sm:$0xff]
      %v4695 = vld [vmem:[#allocation3 + $0x16a] sm:$0xff]
      %v4696 = vld [vmem:[#allocation3 + $0x172] sm:$0xff]
      %v4697 = vld [vmem:[#allocation3 + $0x1b2] sm:$0xff]
      %v4698 = vld [vmem:[#allocation3 + $0x1ba] sm:$0xff]
      %v4699 = vld [vmem:[#allocation3 + $0x1ca] sm:$0xff]
      %v4700 = vld [vmem:[#allocation3 + $0x1d2] sm:$0xff]
      %v4701 = vld [vmem:[#allocation3 + $0x1e2] sm:$0xff]
      %v4702 = vld [vmem:[#allocation3 + $0x1ea] sm:$0xff]
      %v4703 = vld [vmem:[#allocation3 + $0x1fa] sm:$0xff]
      %v4704 = vld [vmem:[#allocation3 + $0x202] sm:$0xff]
      %v4705 = vld [vmem:[#allocation3 + $0x212] sm:$0xff]
      %v4706 = vld [vmem:[#allocation3 + $0x21a] sm:$0xff]
      %v4707 = vld [vmem:[#allocation3 + $0x22a] sm:$0xff]
      %v4708 = vld [vmem:[#allocation3 + $0x232] sm:$0xff]
      %v4709 = vld [vmem:[#allocation3 + $0x242] sm:$0xff]
      %v4710 = vld [vmem:[#allocation3 + $0x24a] sm:$0xff]
      %v4711 = vld [vmem:[#allocation3 + $0x25a] sm:$0xff]
      %v4712 = vld [vmem:[#allocation3 + $0x262] sm:$0xff]
      %v4713 = vld [vmem:[#allocation3 + $0x272] sm:$0xff]
      %v4714 = vld [vmem:[#allocation3 + $0x27a] sm:$0xff]
      %v4715 = vld [vmem:[#allocation3 + $0x28a] sm:$0xff]
      %v4716 = vld [vmem:[#allocation3 + $0x292] sm:$0xff]
      %v4717 = vld [vmem:[#allocation3 + $0x2a2] sm:$0xff]
      %v4718 = vld [vmem:[#allocation3 + $0x2aa] sm:$0xff]
      %v4719 = vld [vmem:[#allocation3 + $0x2ba] sm:$0xff]
      %v4720 = vld [vmem:[#allocation3 + $0x2c2] sm:$0xff]
      %v4721 = vld [vmem:[#allocation3 + $0x2d2] sm:$0xff]
      %v4722 = vld [vmem:[#allocation3 + $0x2da] sm:$0xff]
      %v4723 = vld [vmem:[#allocation3 + $0x2ea] sm:$0xff]
      %v4724 = vld [vmem:[#allocation3 + $0x2f2] sm:$0xff]
      %v4725 = vld [vmem:[#allocation3 + $0x302] sm:$0xff]
      %v4726 = vld [vmem:[#allocation3 + $0x30a] sm:$0xff]
      %v4727 = vld [vmem:[#allocation3 + $0x31a] sm:$0xff]
      %v4728 = vld [vmem:[#allocation3 + $0x322] sm:$0xff]
      %v4729 = vld [vmem:[%s4472] sm:$0xff]
      %v4730 = vld [vmem:[%s4472 + $0x8] sm:$0xff]
      %v4731 = vld [vmem:[%s4472 + $0x18] sm:$0xff]
      %v4732 = vld [vmem:[%s4472 + $0x20] sm:$0xff]
      %v4733 = vld [vmem:[%s4472 + $0x30] sm:$0xff]
      %v4734 = vld [vmem:[%s4472 + $0x38] sm:$0xff]
      %v4735 = vld [vmem:[%s4472 + $0x48] sm:$0xff]
      %v4736 = vld [vmem:[%s4472 + $0x50] sm:$0xff]
      %v4737 = vld [vmem:[%s4472 + $0x60] sm:$0xff]
      %v4738 = vld [vmem:[%s4472 + $0x68] sm:$0xff]
      %v4739 = vld [vmem:[%s4472 + $0x78] sm:$0xff]
      %v4740 = vld [vmem:[%s4472 + $0x80] sm:$0xff]
      %v4741 = vld [vmem:[%s4472 + $0x90] sm:$0xff]
      %v4742 = vld [vmem:[%s4472 + $0x98] sm:$0xff]
      %v4743 = vld [vmem:[%s4472 + $0xa8] sm:$0xff]
      %v4744 = vld [vmem:[%s4472 + $0xb0] sm:$0xff]
      %v4745 = vld [vmem:[%s4472 + $0xc0] sm:$0xff]
      %v4746 = vld [vmem:[%s4472 + $0xc8] sm:$0xff]
      %v4747 = vld [vmem:[%s4472 + $0xd8] sm:$0xff]
      %v4748 = vld [vmem:[%s4472 + $0xe0] sm:$0xff]
      %v4749 = vld [vmem:[%s4472 + $0xf0] sm:$0xff]
      %v4750 = vld [vmem:[%s4472 + $0xf8] sm:$0xff]
      %v4751 = vld [vmem:[%s4472 + $0x108] sm:$0xff]
      %v4752 = vld [vmem:[%s4472 + $0x110] sm:$0xff]
      %v4753 = vld [vmem:[%s4472 + $0x120] sm:$0xff]
      %v4754 = vld [vmem:[%s4472 + $0x128] sm:$0xff]
      %v4755 = vld [vmem:[%s4472 + $0x138] sm:$0xff]
      %v4756 = vld [vmem:[%s4472 + $0x140] sm:$0xff]
      %v4757 = vld [vmem:[%s4472 + $0x150] sm:$0xff]
      %v4758 = vld [vmem:[%s4472 + $0x158] sm:$0xff]
      %v4759 = vld [vmem:[%s4472 + $0x168] sm:$0xff]
      %v4760 = vld [vmem:[%s4472 + $0x170] sm:$0xff]
      %v4761 = vld [vmem:[%s4472 + $0x1b0] sm:$0xff]
      %v4762 = vld [vmem:[%s4472 + $0x1b8] sm:$0xff]
      %v4763 = vld [vmem:[%s4472 + $0x1c8] sm:$0xff]
      %v4764 = vld [vmem:[%s4472 + $0x1d0] sm:$0xff]
      %v4765 = vld [vmem:[%s4472 + $0x1e0] sm:$0xff]
      %v4766 = vld [vmem:[%s4472 + $0x1e8] sm:$0xff]
      %v4767 = vld [vmem:[%s4472 + $0x1f8] sm:$0xff]
      %v4768 = vld [vmem:[%s4472 + $0x200] sm:$0xff]
      %v4769 = vld [vmem:[%s4472 + $0x210] sm:$0xff]
      %v4770 = vld [vmem:[%s4472 + $0x218] sm:$0xff]
      %v4771 = vld [vmem:[%s4472 + $0x228] sm:$0xff]
      %v4772 = vld [vmem:[%s4472 + $0x230] sm:$0xff]
      %v4773 = vld [vmem:[%s4472 + $0x240] sm:$0xff]
      %v4774 = vld [vmem:[%s4472 + $0x248] sm:$0xff]
      %v4775 = vld [vmem:[%s4472 + $0x258] sm:$0xff]
      %v4776 = vld [vmem:[%s4472 + $0x260] sm:$0xff]
      %v4777 = vld [vmem:[%s4472 + $0x270] sm:$0xff]
      %v4778 = vld [vmem:[%s4472 + $0x278] sm:$0xff]
      %v4779 = vld [vmem:[%s4472 + $0x288] sm:$0xff]
      %v4780 = vld [vmem:[%s4472 + $0x290] sm:$0xff]
      %v4781 = vld [vmem:[%s4472 + $0x2a0] sm:$0xff]
      %v4782 = vld [vmem:[%s4472 + $0x2a8] sm:$0xff]
      %v4783 = vld [vmem:[%s4472 + $0x2b8] sm:$0xff]
      %v4784 = vld [vmem:[%s4472 + $0x2c0] sm:$0xff]
      %v4785 = vld [vmem:[%s4472 + $0x2d0] sm:$0xff]
      %v4786 = vld [vmem:[%s4472 + $0x2d8] sm:$0xff]
      %v4787 = vld [vmem:[%s4472 + $0x2e8] sm:$0xff]
      %v4788 = vld [vmem:[%s4472 + $0x2f0] sm:$0xff]
      %v4789 = vld [vmem:[%s4472 + $0x300] sm:$0xff]
      %v4790 = vld [vmem:[%s4472 + $0x308] sm:$0xff]
      %v4791 = vld [vmem:[%s4472 + $0x318] sm:$0xff]
      %v4792 = vld [vmem:[%s4472 + $0x320] sm:$0xff]
      %v4793 = vld [vmem:[%s4472 + $0x1] sm:$0xff]
      %v4794 = vld [vmem:[%s4472 + $0x9] sm:$0xff]
      %v4795 = vld [vmem:[%s4472 + $0x19] sm:$0xff]
      %v4796 = vld [vmem:[%s4472 + $0x21] sm:$0xff]
      %v4797 = vld [vmem:[%s4472 + $0x31] sm:$0xff]
      %v4798 = vld [vmem:[%s4472 + $0x39] sm:$0xff]
      %v4799 = vld [vmem:[%s4472 + $0x49] sm:$0xff]
      %v4800 = vld [vmem:[%s4472 + $0x51] sm:$0xff]
      %v4801 = vld [vmem:[%s4472 + $0x61] sm:$0xff]
      %v4802 = vld [vmem:[%s4472 + $0x69] sm:$0xff]
      %v4803 = vld [vmem:[%s4472 + $0x79] sm:$0xff]
      %v4804 = vld [vmem:[%s4472 + $0x81] sm:$0xff]
      %v4805 = vld [vmem:[%s4472 + $0x91] sm:$0xff]
      %v4806 = vld [vmem:[%s4472 + $0x99] sm:$0xff]
      %v4807 = vld [vmem:[%s4472 + $0xa9] sm:$0xff]
      %v4808 = vld [vmem:[%s4472 + $0xb1] sm:$0xff]
      %v4809 = vld [vmem:[%s4472 + $0xc1] sm:$0xff]
      %v4810 = vld [vmem:[%s4472 + $0xc9] sm:$0xff]
      %v4811 = vld [vmem:[%s4472 + $0xd9] sm:$0xff]
      %v4812 = vld [vmem:[%s4472 + $0xe1] sm:$0xff]
      %v4813 = vld [vmem:[%s4472 + $0xf1] sm:$0xff]
      %v4814 = vld [vmem:[%s4472 + $0xf9] sm:$0xff]
      %v4815 = vld [vmem:[%s4472 + $0x109] sm:$0xff]
      %v4816 = vld [vmem:[%s4472 + $0x111] sm:$0xff]
      %v4817 = vld [vmem:[%s4472 + $0x121] sm:$0xff]
      %v4818 = vld [vmem:[%s4472 + $0x129] sm:$0xff]
      %v4819 = vld [vmem:[%s4472 + $0x139] sm:$0xff]
      %v4820 = vld [vmem:[%s4472 + $0x141] sm:$0xff]
      %v4821 = vld [vmem:[%s4472 + $0x151] sm:$0xff]
      %v4822 = vld [vmem:[%s4472 + $0x159] sm:$0xff]
      %v4823 = vld [vmem:[%s4472 + $0x169] sm:$0xff]
      %v4824 = vld [vmem:[%s4472 + $0x171] sm:$0xff]
      %v4825 = vld [vmem:[%s4472 + $0x1b1] sm:$0xff]
      %v4826 = vld [vmem:[%s4472 + $0x1b9] sm:$0xff]
      %v4827 = vld [vmem:[%s4472 + $0x1c9] sm:$0xff]
      %v4828 = vld [vmem:[%s4472 + $0x1d1] sm:$0xff]
      %v4829 = vld [vmem:[%s4472 + $0x1e1] sm:$0xff]
      %v4830 = vld [vmem:[%s4472 + $0x1e9] sm:$0xff]
      %v4831 = vld [vmem:[%s4472 + $0x1f9] sm:$0xff]
      %v4832 = vld [vmem:[%s4472 + $0x201] sm:$0xff]
      %v4833 = vld [vmem:[%s4472 + $0x211] sm:$0xff]
      %v4834 = vld [vmem:[%s4472 + $0x219] sm:$0xff]
      %v4835 = vld [vmem:[%s4472 + $0x229] sm:$0xff]
      %v4836 = vld [vmem:[%s4472 + $0x231] sm:$0xff]
      %v4837 = vld [vmem:[%s4472 + $0x241] sm:$0xff]
      %v4838 = vld [vmem:[%s4472 + $0x249] sm:$0xff]
      %v4839 = vld [vmem:[%s4472 + $0x259] sm:$0xff]
      %v4840 = vld [vmem:[%s4472 + $0x261] sm:$0xff]
      %v4841 = vld [vmem:[%s4472 + $0x271] sm:$0xff]
      %v4842 = vld [vmem:[%s4472 + $0x279] sm:$0xff]
      %v4843 = vld [vmem:[%s4472 + $0x289] sm:$0xff]
      %v4844 = vld [vmem:[%s4472 + $0x291] sm:$0xff]
      %v4845 = vld [vmem:[%s4472 + $0x2a1] sm:$0xff]
      %v4846 = vld [vmem:[%s4472 + $0x2a9] sm:$0xff]
      %v4847 = vld [vmem:[%s4472 + $0x2b9] sm:$0xff]
      %v4848 = vld [vmem:[%s4472 + $0x2c1] sm:$0xff]
      %v4849 = vld [vmem:[%s4472 + $0x2d1] sm:$0xff]
      %v4850 = vld [vmem:[%s4472 + $0x2d9] sm:$0xff]
      %v4851 = vld [vmem:[%s4472 + $0x2e9] sm:$0xff]
      %v4852 = vld [vmem:[%s4472 + $0x2f1] sm:$0xff]
      %v4853 = vld [vmem:[%s4472 + $0x301] sm:$0xff]
      %v4854 = vld [vmem:[%s4472 + $0x309] sm:$0xff]
      %v4855 = vld [vmem:[%s4472 + $0x319] sm:$0xff]
      %v4856 = vld [vmem:[%s4472 + $0x321] sm:$0xff]
      %v4857 = vld [vmem:[%s4472 + $0x2] sm:$0xff]
      %v4858 = vld [vmem:[%s4472 + $0xa] sm:$0xff]
      %v4859 = vld [vmem:[%s4472 + $0x1a] sm:$0xff]
      %v4860 = vld [vmem:[%s4472 + $0x22] sm:$0xff]
      %v4861 = vld [vmem:[%s4472 + $0x32] sm:$0xff]
      %v4862 = vld [vmem:[%s4472 + $0x3a] sm:$0xff]
      %v4863 = vld [vmem:[%s4472 + $0x4a] sm:$0xff]
      %v4864 = vld [vmem:[%s4472 + $0x52] sm:$0xff]
      %v4865 = vld [vmem:[%s4472 + $0x62] sm:$0xff]
      %v4866 = vld [vmem:[%s4472 + $0x6a] sm:$0xff]
      %v4867 = vld [vmem:[%s4472 + $0x7a] sm:$0xff]
      %v4868 = vld [vmem:[%s4472 + $0x82] sm:$0xff]
      %v4869 = vld [vmem:[%s4472 + $0x92] sm:$0xff]
      %v4870 = vld [vmem:[%s4472 + $0x9a] sm:$0xff]
      %v4871 = vld [vmem:[%s4472 + $0xaa] sm:$0xff]
      %v4872 = vld [vmem:[%s4472 + $0xb2] sm:$0xff]
      %v4873 = vld [vmem:[%s4472 + $0xc2] sm:$0xff]
      %v4874 = vld [vmem:[%s4472 + $0xca] sm:$0xff]
      %v4875 = vld [vmem:[%s4472 + $0xda] sm:$0xff]
      %v4876 = vld [vmem:[%s4472 + $0xe2] sm:$0xff]
      %v4877 = vld [vmem:[%s4472 + $0xf2] sm:$0xff]
      %v4878 = vld [vmem:[%s4472 + $0xfa] sm:$0xff]
      %v4879 = vld [vmem:[%s4472 + $0x10a] sm:$0xff]
      %v4880 = vld [vmem:[%s4472 + $0x112] sm:$0xff]
      %v4881 = vld [vmem:[%s4472 + $0x122] sm:$0xff]
      %v4882 = vld [vmem:[%s4472 + $0x12a] sm:$0xff]
      %v4883 = vld [vmem:[%s4472 + $0x13a] sm:$0xff]
      %v4884 = vld [vmem:[%s4472 + $0x142] sm:$0xff]
      %v4885 = vld [vmem:[%s4472 + $0x152] sm:$0xff]
      %v4886 = vld [vmem:[%s4472 + $0x15a] sm:$0xff]
      %v4887 = vld [vmem:[%s4472 + $0x16a] sm:$0xff]
      %v4888 = vld [vmem:[%s4472 + $0x172] sm:$0xff]
      %v4889 = vld [vmem:[%s4472 + $0x1b2] sm:$0xff]
      %v4890 = vld [vmem:[%s4472 + $0x1ba] sm:$0xff]
      %v4891 = vld [vmem:[%s4472 + $0x1ca] sm:$0xff]
      %v4892 = vld [vmem:[%s4472 + $0x1d2] sm:$0xff]
      %v4893 = vld [vmem:[%s4472 + $0x1e2] sm:$0xff]
      %v4894 = vld [vmem:[%s4472 + $0x1ea] sm:$0xff]
      %v4895 = vld [vmem:[%s4472 + $0x1fa] sm:$0xff]
      %v4896 = vld [vmem:[%s4472 + $0x202] sm:$0xff]
      %v4897 = vld [vmem:[%s4472 + $0x212] sm:$0xff]
      %v4898 = vld [vmem:[%s4472 + $0x21a] sm:$0xff]
      %v4899 = vld [vmem:[%s4472 + $0x22a] sm:$0xff]
      %v4900 = vld [vmem:[%s4472 + $0x232] sm:$0xff]
      %v4901 = vld [vmem:[%s4472 + $0x242] sm:$0xff]
      %v4902 = vld [vmem:[%s4472 + $0x24a] sm:$0xff]
      %v4903 = vld [vmem:[%s4472 + $0x25a] sm:$0xff]
      %v4904 = vld [vmem:[%s4472 + $0x262] sm:$0xff]
      %v4905 = vld [vmem:[%s4472 + $0x272] sm:$0xff]
      %v4906 = vld [vmem:[%s4472 + $0x27a] sm:$0xff]
      %v4907 = vld [vmem:[%s4472 + $0x28a] sm:$0xff]
      %v4908 = vld [vmem:[%s4472 + $0x292] sm:$0xff]
      %v4909 = vld [vmem:[%s4472 + $0x2a2] sm:$0xff]
      %v4910 = vld [vmem:[%s4472 + $0x2aa] sm:$0xff]
      %v4911 = vld [vmem:[%s4472 + $0x2ba] sm:$0xff]
      %v4912 = vld [vmem:[%s4472 + $0x2c2] sm:$0xff]
      %v4913 = vld [vmem:[%s4472 + $0x2d2] sm:$0xff]
      %v4914 = vld [vmem:[%s4472 + $0x2da] sm:$0xff]
      %v4915 = vld [vmem:[%s4472 + $0x2ea] sm:$0xff]
      %v4916 = vld [vmem:[%s4472 + $0x2f2] sm:$0xff]
      %v4917 = vld [vmem:[%s4472 + $0x302] sm:$0xff]
      %v4918 = vld [vmem:[%s4472 + $0x30a] sm:$0xff]
      %v4919 = vld [vmem:[%s4472 + $0x31a] sm:$0xff]
      %v4920 = vld [vmem:[%s4472 + $0x322] sm:$0xff]
      %s4921 = scalar_lea.vmem [#allocation3], 48
      %v4922 = vld [vmem:[%s4921] sm:$0xff]
      %v4923 = vld [vmem:[%s4921 + $0x8] sm:$0xff]
      %v4924 = vld [vmem:[%s4921 + $0x18] sm:$0xff]
      %v4925 = vld [vmem:[%s4921 + $0x20] sm:$0xff]
      %v4926 = vld [vmem:[%s4921 + $0x30] sm:$0xff]
      %v4927 = vld [vmem:[%s4921 + $0x38] sm:$0xff]
      %v4928 = vld [vmem:[%s4921 + $0x48] sm:$0xff]
      %v4929 = vld [vmem:[%s4921 + $0x50] sm:$0xff]
      %v4930 = vld [vmem:[%s4921 + $0x60] sm:$0xff]
      %v4931 = vld [vmem:[%s4921 + $0x68] sm:$0xff]
      %v4932 = vld [vmem:[%s4921 + $0x78] sm:$0xff]
      %v4933 = vld [vmem:[%s4921 + $0x80] sm:$0xff]
      %v4934 = vld [vmem:[%s4921 + $0x90] sm:$0xff]
      %v4935 = vld [vmem:[%s4921 + $0x98] sm:$0xff]
      %v4936 = vld [vmem:[%s4921 + $0xa8] sm:$0xff]
      %v4937 = vld [vmem:[%s4921 + $0xb0] sm:$0xff]
      %v4938 = vld [vmem:[%s4921 + $0xc0] sm:$0xff]
      %v4939 = vld [vmem:[%s4921 + $0xc8] sm:$0xff]
      %v4940 = vld [vmem:[%s4921 + $0xd8] sm:$0xff]
      %v4941 = vld [vmem:[%s4921 + $0xe0] sm:$0xff]
      %v4942 = vld [vmem:[%s4921 + $0xf0] sm:$0xff]
      %v4943 = vld [vmem:[%s4921 + $0xf8] sm:$0xff]
      %v4944 = vld [vmem:[%s4921 + $0x108] sm:$0xff]
      %v4945 = vld [vmem:[%s4921 + $0x110] sm:$0xff]
      %v4946 = vld [vmem:[%s4921 + $0x120] sm:$0xff]
      %v4947 = vld [vmem:[%s4921 + $0x128] sm:$0xff]
      %v4948 = vld [vmem:[%s4921 + $0x138] sm:$0xff]
      %v4949 = vld [vmem:[%s4921 + $0x140] sm:$0xff]
      %v4950 = vld [vmem:[%s4921 + $0x150] sm:$0xff]
      %v4951 = vld [vmem:[%s4921 + $0x158] sm:$0xff]
      %v4952 = vld [vmem:[%s4921 + $0x168] sm:$0xff]
      %v4953 = vld [vmem:[%s4921 + $0x170] sm:$0xff]
      %v4954 = vld [vmem:[%s4921 + $0x1b0] sm:$0xff]
      %v4955 = vld [vmem:[%s4921 + $0x1b8] sm:$0xff]
      %v4956 = vld [vmem:[%s4921 + $0x1c8] sm:$0xff]
      %v4957 = vld [vmem:[%s4921 + $0x1d0] sm:$0xff]
      %v4958 = vld [vmem:[%s4921 + $0x1e0] sm:$0xff]
      %v4959 = vld [vmem:[%s4921 + $0x1e8] sm:$0xff]
      %v4960 = vld [vmem:[%s4921 + $0x1f8] sm:$0xff]
      %v4961 = vld [vmem:[%s4921 + $0x200] sm:$0xff]
      %v4962 = vld [vmem:[%s4921 + $0x210] sm:$0xff]
      %v4963 = vld [vmem:[%s4921 + $0x218] sm:$0xff]
      %v4964 = vld [vmem:[%s4921 + $0x228] sm:$0xff]
      %v4965 = vld [vmem:[%s4921 + $0x230] sm:$0xff]
      %v4966 = vld [vmem:[%s4921 + $0x240] sm:$0xff]
      %v4967 = vld [vmem:[%s4921 + $0x248] sm:$0xff]
      %v4968 = vld [vmem:[%s4921 + $0x258] sm:$0xff]
      %v4969 = vld [vmem:[%s4921 + $0x260] sm:$0xff]
      %v4970 = vld [vmem:[%s4921 + $0x270] sm:$0xff]
      %v4971 = vld [vmem:[%s4921 + $0x278] sm:$0xff]
      %v4972 = vld [vmem:[%s4921 + $0x288] sm:$0xff]
      %v4973 = vld [vmem:[%s4921 + $0x290] sm:$0xff]
      %v4974 = vld [vmem:[%s4921 + $0x2a0] sm:$0xff]
      %v4975 = vld [vmem:[%s4921 + $0x2a8] sm:$0xff]
      %v4976 = vld [vmem:[%s4921 + $0x2b8] sm:$0xff]
      %v4977 = vld [vmem:[%s4921 + $0x2c0] sm:$0xff]
      %v4978 = vld [vmem:[%s4921 + $0x2d0] sm:$0xff]
      %v4979 = vld [vmem:[%s4921 + $0x2d8] sm:$0xff]
      %v4980 = vld [vmem:[%s4921 + $0x2e8] sm:$0xff]
      %v4981 = vld [vmem:[%s4921 + $0x2f0] sm:$0xff]
      %v4982 = vld [vmem:[%s4921 + $0x300] sm:$0xff]
      %v4983 = vld [vmem:[%s4921 + $0x308] sm:$0xff]
      %v4984 = vld [vmem:[%s4921 + $0x318] sm:$0xff]
      %v4985 = vld [vmem:[%s4921 + $0x320] sm:$0xff]
      %v4986 = vld [vmem:[%s4921 + $0x1] sm:$0xff]
      %v4987 = vld [vmem:[%s4921 + $0x9] sm:$0xff]
      %v4988 = vld [vmem:[%s4921 + $0x19] sm:$0xff]
      %v4989 = vld [vmem:[%s4921 + $0x21] sm:$0xff]
      %v4990 = vld [vmem:[%s4921 + $0x31] sm:$0xff]
      %v4991 = vld [vmem:[%s4921 + $0x39] sm:$0xff]
      %v4992 = vld [vmem:[%s4921 + $0x49] sm:$0xff]
      %v4993 = vld [vmem:[%s4921 + $0x51] sm:$0xff]
      %v4994 = vld [vmem:[%s4921 + $0x61] sm:$0xff]
      %v4995 = vld [vmem:[%s4921 + $0x69] sm:$0xff]
      %v4996 = vld [vmem:[%s4921 + $0x79] sm:$0xff]
      %v4997 = vld [vmem:[%s4921 + $0x81] sm:$0xff]
      %v4998 = vld [vmem:[%s4921 + $0x91] sm:$0xff]
      %v4999 = vld [vmem:[%s4921 + $0x99] sm:$0xff]
      %v5000 = vld [vmem:[%s4921 + $0xa9] sm:$0xff]
      %v5001 = vld [vmem:[%s4921 + $0xb1] sm:$0xff]
      %v5002 = vld [vmem:[%s4921 + $0xc1] sm:$0xff]
      %v5003 = vld [vmem:[%s4921 + $0xc9] sm:$0xff]
      %v5004 = vld [vmem:[%s4921 + $0xd9] sm:$0xff]
      %v5005 = vld [vmem:[%s4921 + $0xe1] sm:$0xff]
      %v5006 = vld [vmem:[%s4921 + $0xf1] sm:$0xff]
      %v5007 = vld [vmem:[%s4921 + $0xf9] sm:$0xff]
      %v5008 = vld [vmem:[%s4921 + $0x109] sm:$0xff]
      %v5009 = vld [vmem:[%s4921 + $0x111] sm:$0xff]
      %v5010 = vld [vmem:[%s4921 + $0x121] sm:$0xff]
      %v5011 = vld [vmem:[%s4921 + $0x129] sm:$0xff]
      %v5012 = vld [vmem:[%s4921 + $0x139] sm:$0xff]
      %v5013 = vld [vmem:[%s4921 + $0x141] sm:$0xff]
      %v5014 = vld [vmem:[%s4921 + $0x151] sm:$0xff]
      %v5015 = vld [vmem:[%s4921 + $0x159] sm:$0xff]
      %v5016 = vld [vmem:[%s4921 + $0x169] sm:$0xff]
      %v5017 = vld [vmem:[%s4921 + $0x171] sm:$0xff]
      %v5018 = vld [vmem:[%s4921 + $0x1b1] sm:$0xff]
      %v5019 = vld [vmem:[%s4921 + $0x1b9] sm:$0xff]
      %v5020 = vld [vmem:[%s4921 + $0x1c9] sm:$0xff]
      %v5021 = vld [vmem:[%s4921 + $0x1d1] sm:$0xff]
      %v5022 = vld [vmem:[%s4921 + $0x1e1] sm:$0xff]
      %v5023 = vld [vmem:[%s4921 + $0x1e9] sm:$0xff]
      %v5024 = vld [vmem:[%s4921 + $0x1f9] sm:$0xff]
      %v5025 = vld [vmem:[%s4921 + $0x201] sm:$0xff]
      %v5026 = vld [vmem:[%s4921 + $0x211] sm:$0xff]
      %v5027 = vld [vmem:[%s4921 + $0x219] sm:$0xff]
      %v5028 = vld [vmem:[%s4921 + $0x229] sm:$0xff]
      %v5029 = vld [vmem:[%s4921 + $0x231] sm:$0xff]
      %v5030 = vld [vmem:[%s4921 + $0x241] sm:$0xff]
      %v5031 = vld [vmem:[%s4921 + $0x249] sm:$0xff]
      %v5032 = vld [vmem:[%s4921 + $0x259] sm:$0xff]
      %v5033 = vld [vmem:[%s4921 + $0x261] sm:$0xff]
      %v5034 = vld [vmem:[%s4921 + $0x271] sm:$0xff]
      %v5035 = vld [vmem:[%s4921 + $0x279] sm:$0xff]
      %v5036 = vld [vmem:[%s4921 + $0x289] sm:$0xff]
      %v5037 = vld [vmem:[%s4921 + $0x291] sm:$0xff]
      %v5038 = vld [vmem:[%s4921 + $0x2a1] sm:$0xff]
      %v5039 = vld [vmem:[%s4921 + $0x2a9] sm:$0xff]
      %v5040 = vld [vmem:[%s4921 + $0x2b9] sm:$0xff]
      %v5041 = vld [vmem:[%s4921 + $0x2c1] sm:$0xff]
      %v5042 = vld [vmem:[%s4921 + $0x2d1] sm:$0xff]
      %v5043 = vld [vmem:[%s4921 + $0x2d9] sm:$0xff]
      %v5044 = vld [vmem:[%s4921 + $0x2e9] sm:$0xff]
      %v5045 = vld [vmem:[%s4921 + $0x2f1] sm:$0xff]
      %v5046 = vld [vmem:[%s4921 + $0x301] sm:$0xff]
      %v5047 = vld [vmem:[%s4921 + $0x309] sm:$0xff]
      %v5048 = vld [vmem:[%s4921 + $0x319] sm:$0xff]
      %v5049 = vld [vmem:[%s4921 + $0x321] sm:$0xff]
      %v5050 = vld [vmem:[%s4921 + $0x2] sm:$0xff]
      %v5051 = vld [vmem:[%s4921 + $0xa] sm:$0xff]
      %v5052 = vld [vmem:[%s4921 + $0x1a] sm:$0xff]
      %v5053 = vld [vmem:[%s4921 + $0x22] sm:$0xff]
      %v5054 = vld [vmem:[%s4921 + $0x32] sm:$0xff]
      %v5055 = vld [vmem:[%s4921 + $0x3a] sm:$0xff]
      %v5056 = vld [vmem:[%s4921 + $0x4a] sm:$0xff]
      %v5057 = vld [vmem:[%s4921 + $0x52] sm:$0xff]
      %v5058 = vld [vmem:[%s4921 + $0x62] sm:$0xff]
      %v5059 = vld [vmem:[%s4921 + $0x6a] sm:$0xff]
      %v5060 = vld [vmem:[%s4921 + $0x7a] sm:$0xff]
      %v5061 = vld [vmem:[%s4921 + $0x82] sm:$0xff]
      %v5062 = vld [vmem:[%s4921 + $0x92] sm:$0xff]
      %v5063 = vld [vmem:[%s4921 + $0x9a] sm:$0xff]
      %v5064 = vld [vmem:[%s4921 + $0xaa] sm:$0xff]
      %v5065 = vld [vmem:[%s4921 + $0xb2] sm:$0xff]
      %v5066 = vld [vmem:[%s4921 + $0xc2] sm:$0xff]
      %v5067 = vld [vmem:[%s4921 + $0xca] sm:$0xff]
      %v5068 = vld [vmem:[%s4921 + $0xda] sm:$0xff]
      %v5069 = vld [vmem:[%s4921 + $0xe2] sm:$0xff]
      %v5070 = vld [vmem:[%s4921 + $0xf2] sm:$0xff]
      %v5071 = vld [vmem:[%s4921 + $0xfa] sm:$0xff]
      %v5072 = vld [vmem:[%s4921 + $0x10a] sm:$0xff]
      %v5073 = vld [vmem:[%s4921 + $0x112] sm:$0xff]
      %v5074 = vld [vmem:[%s4921 + $0x122] sm:$0xff]
      %v5075 = vld [vmem:[%s4921 + $0x12a] sm:$0xff]
      %v5076 = vld [vmem:[%s4921 + $0x13a] sm:$0xff]
      %v5077 = vld [vmem:[%s4921 + $0x142] sm:$0xff]
      %v5078 = vld [vmem:[%s4921 + $0x152] sm:$0xff]
      %v5079 = vld [vmem:[%s4921 + $0x15a] sm:$0xff]
      %v5080 = vld [vmem:[%s4921 + $0x16a] sm:$0xff]
      %v5081 = vld [vmem:[%s4921 + $0x172] sm:$0xff]
      %v5082 = vld [vmem:[%s4921 + $0x1b2] sm:$0xff]
      %v5083 = vld [vmem:[%s4921 + $0x1ba] sm:$0xff]
      %v5084 = vld [vmem:[%s4921 + $0x1ca] sm:$0xff]
      %v5085 = vld [vmem:[%s4921 + $0x1d2] sm:$0xff]
      %v5086 = vld [vmem:[%s4921 + $0x1e2] sm:$0xff]
      %v5087 = vld [vmem:[%s4921 + $0x1ea] sm:$0xff]
      %v5088 = vld [vmem:[%s4921 + $0x1fa] sm:$0xff]
      %v5089 = vld [vmem:[%s4921 + $0x202] sm:$0xff]
      %v5090 = vld [vmem:[%s4921 + $0x212] sm:$0xff]
      %v5091 = vld [vmem:[%s4921 + $0x21a] sm:$0xff]
      %v5092 = vld [vmem:[%s4921 + $0x22a] sm:$0xff]
      %v5093 = vld [vmem:[%s4921 + $0x232] sm:$0xff]
      %v5094 = vld [vmem:[%s4921 + $0x242] sm:$0xff]
      %v5095 = vld [vmem:[%s4921 + $0x24a] sm:$0xff]
      %v5096 = vld [vmem:[%s4921 + $0x25a] sm:$0xff]
      %v5097 = vld [vmem:[%s4921 + $0x262] sm:$0xff]
      %v5098 = vld [vmem:[%s4921 + $0x272] sm:$0xff]
      %v5099 = vld [vmem:[%s4921 + $0x27a] sm:$0xff]
      %v5100 = vld [vmem:[%s4921 + $0x28a] sm:$0xff]
      %v5101 = vld [vmem:[%s4921 + $0x292] sm:$0xff]
      %v5102 = vld [vmem:[%s4921 + $0x2a2] sm:$0xff]
      %v5103 = vld [vmem:[%s4921 + $0x2aa] sm:$0xff]
      %v5104 = vld [vmem:[%s4921 + $0x2ba] sm:$0xff]
      %v5105 = vld [vmem:[%s4921 + $0x2c2] sm:$0xff]
      %v5106 = vld [vmem:[%s4921 + $0x2d2] sm:$0xff]
      %v5107 = vld [vmem:[%s4921 + $0x2da] sm:$0xff]
      %v5108 = vld [vmem:[%s4921 + $0x2ea] sm:$0xff]
      %v5109 = vld [vmem:[%s4921 + $0x2f2] sm:$0xff]
      %v5110 = vld [vmem:[%s4921 + $0x302] sm:$0xff]
      %v5111 = vld [vmem:[%s4921 + $0x30a] sm:$0xff]
      %v5112 = vld [vmem:[%s4921 + $0x31a] sm:$0xff]
      %v5113 = vld [vmem:[%s4921 + $0x322] sm:$0xff]
      %5178 = vrot.lane.b32.xlu0 %v4601, 8
      %v5179 = vpop.permute.xlu0 %5178
      %5180 = vrot.lane.b32.xlu0 %v4602, 8
      %v5181 = vpop.permute.xlu0 %5180
      %5182 = vrot.lane.b32.xlu0 %v4603, 8
      %v5183 = vpop.permute.xlu0 %5182
      %5184 = vrot.lane.b32.xlu0 %v4604, 8
      %v5185 = vpop.permute.xlu0 %5184
      %5186 = vrot.lane.b32.xlu0 %v4605, 8
      %v5187 = vpop.permute.xlu0 %5186
      %5188 = vrot.lane.b32.xlu0 %v4606, 8
      %v5189 = vpop.permute.xlu0 %5188
      %5190 = vrot.lane.b32.xlu0 %v4607, 8
      %v5191 = vpop.permute.xlu0 %5190
      %5192 = vrot.lane.b32.xlu0 %v4608, 8
      %v5193 = vpop.permute.xlu0 %5192
      %5194 = vrot.lane.b32.xlu0 %v4609, 8
      %v5195 = vpop.permute.xlu0 %5194
      %5196 = vrot.lane.b32.xlu0 %v4610, 8
      %v5197 = vpop.permute.xlu0 %5196
      %5198 = vrot.lane.b32.xlu0 %v4611, 8
      %v5199 = vpop.permute.xlu0 %5198
      %5200 = vrot.lane.b32.xlu0 %v4612, 8
      %v5201 = vpop.permute.xlu0 %5200
      %5202 = vrot.lane.b32.xlu0 %v4613, 8
      %v5203 = vpop.permute.xlu0 %5202
      %5204 = vrot.lane.b32.xlu0 %v4614, 8
      %v5205 = vpop.permute.xlu0 %5204
      %5206 = vrot.lane.b32.xlu0 %v4615, 8
      %v5207 = vpop.permute.xlu0 %5206
      %5208 = vrot.lane.b32.xlu0 %v4616, 8
      %v5209 = vpop.permute.xlu0 %5208
      %5210 = vrot.lane.b32.xlu0 %v4617, 8
      %v5211 = vpop.permute.xlu0 %5210
      %5212 = vrot.lane.b32.xlu0 %v4618, 8
      %v5213 = vpop.permute.xlu0 %5212
      %5214 = vrot.lane.b32.xlu0 %v4619, 8
      %v5215 = vpop.permute.xlu0 %5214
      %5216 = vrot.lane.b32.xlu0 %v4620, 8
      %v5217 = vpop.permute.xlu0 %5216
      %5218 = vrot.lane.b32.xlu0 %v4621, 8
      %v5219 = vpop.permute.xlu0 %5218
      %5220 = vrot.lane.b32.xlu0 %v4622, 8
      %v5221 = vpop.permute.xlu0 %5220
      %5222 = vrot.lane.b32.xlu0 %v4623, 8
      %v5223 = vpop.permute.xlu0 %5222
      %5224 = vrot.lane.b32.xlu0 %v4624, 8
      %v5225 = vpop.permute.xlu0 %5224
      %5226 = vrot.lane.b32.xlu0 %v4625, 8
      %v5227 = vpop.permute.xlu0 %5226
      %5228 = vrot.lane.b32.xlu0 %v4626, 8
      %v5229 = vpop.permute.xlu0 %5228
      %5230 = vrot.lane.b32.xlu0 %v4627, 8
      %v5231 = vpop.permute.xlu0 %5230
      %5232 = vrot.lane.b32.xlu0 %v4628, 8
      %v5233 = vpop.permute.xlu0 %5232
      %5234 = vrot.lane.b32.xlu0 %v4629, 8
      %v5235 = vpop.permute.xlu0 %5234
      %5236 = vrot.lane.b32.xlu0 %v4630, 8
      %v5237 = vpop.permute.xlu0 %5236
      %5238 = vrot.lane.b32.xlu0 %v4631, 8
      %v5239 = vpop.permute.xlu0 %5238
      %5240 = vrot.lane.b32.xlu0 %v4632, 8
      %v5241 = vpop.permute.xlu0 %5240
      %5242 = vrot.lane.b32.xlu0 %v4633, 8
      %v5243 = vpop.permute.xlu0 %5242
      %5244 = vrot.lane.b32.xlu0 %v4634, 8
      %v5245 = vpop.permute.xlu0 %5244
      %5246 = vrot.lane.b32.xlu0 %v4635, 8
      %v5247 = vpop.permute.xlu0 %5246
      %5248 = vrot.lane.b32.xlu0 %v4636, 8
      %v5249 = vpop.permute.xlu0 %5248
      %5250 = vrot.lane.b32.xlu0 %v4637, 8
      %v5251 = vpop.permute.xlu0 %5250
      %5252 = vrot.lane.b32.xlu0 %v4638, 8
      %v5253 = vpop.permute.xlu0 %5252
      %5254 = vrot.lane.b32.xlu0 %v4639, 8
      %v5255 = vpop.permute.xlu0 %5254
      %5256 = vrot.lane.b32.xlu0 %v4640, 8
      %v5257 = vpop.permute.xlu0 %5256
      %5258 = vrot.lane.b32.xlu0 %v4641, 8
      %v5259 = vpop.permute.xlu0 %5258
      %5260 = vrot.lane.b32.xlu0 %v4642, 8
      %v5261 = vpop.permute.xlu0 %5260
      %5262 = vrot.lane.b32.xlu0 %v4643, 8
      %v5263 = vpop.permute.xlu0 %5262
      %5264 = vrot.lane.b32.xlu0 %v4644, 8
      %v5265 = vpop.permute.xlu0 %5264
      %5266 = vrot.lane.b32.xlu0 %v4645, 8
      %v5267 = vpop.permute.xlu0 %5266
      %5268 = vrot.lane.b32.xlu0 %v4646, 8
      %v5269 = vpop.permute.xlu0 %5268
      %5270 = vrot.lane.b32.xlu0 %v4647, 8
      %v5271 = vpop.permute.xlu0 %5270
      %5272 = vrot.lane.b32.xlu0 %v4648, 8
      %v5273 = vpop.permute.xlu0 %5272
      %5274 = vrot.lane.b32.xlu0 %v4649, 8
      %v5275 = vpop.permute.xlu0 %5274
      %5276 = vrot.lane.b32.xlu0 %v4650, 8
      %v5277 = vpop.permute.xlu0 %5276
      %5278 = vrot.lane.b32.xlu0 %v4651, 8
      %v5279 = vpop.permute.xlu0 %5278
      %5280 = vrot.lane.b32.xlu0 %v4652, 8
      %v5281 = vpop.permute.xlu0 %5280
      %5282 = vrot.lane.b32.xlu0 %v4653, 8
      %v5283 = vpop.permute.xlu0 %5282
      %5284 = vrot.lane.b32.xlu0 %v4654, 8
      %v5285 = vpop.permute.xlu0 %5284
      %5286 = vrot.lane.b32.xlu0 %v4655, 8
      %v5287 = vpop.permute.xlu0 %5286
      %5288 = vrot.lane.b32.xlu0 %v4656, 8
      %v5289 = vpop.permute.xlu0 %5288
      %5290 = vrot.lane.b32.xlu0 %v4657, 8
      %v5291 = vpop.permute.xlu0 %5290
      %5292 = vrot.lane.b32.xlu0 %v4658, 8
      %v5293 = vpop.permute.xlu0 %5292
      %5294 = vrot.lane.b32.xlu0 %v4659, 8
      %v5295 = vpop.permute.xlu0 %5294
      %5296 = vrot.lane.b32.xlu0 %v4660, 8
      %v5297 = vpop.permute.xlu0 %5296
      %5298 = vrot.lane.b32.xlu0 %v4661, 8
      %v5299 = vpop.permute.xlu0 %5298
      %5300 = vrot.lane.b32.xlu0 %v4662, 8
      %v5301 = vpop.permute.xlu0 %5300
      %5302 = vrot.lane.b32.xlu0 %v4663, 8
      %v5303 = vpop.permute.xlu0 %5302
      %5304 = vrot.lane.b32.xlu0 %v4664, 8
      %v5305 = vpop.permute.xlu0 %5304
      %5434 = vrot.lane.b32.xlu0 %v4665, 16
      %v5435 = vpop.permute.xlu0 %5434
      %5436 = vrot.lane.b32.xlu0 %v4666, 16
      %v5437 = vpop.permute.xlu0 %5436
      %5438 = vrot.lane.b32.xlu0 %v4667, 16
      %v5439 = vpop.permute.xlu0 %5438
      %5440 = vrot.lane.b32.xlu0 %v4668, 16
      %v5441 = vpop.permute.xlu0 %5440
      %5442 = vrot.lane.b32.xlu0 %v4669, 16
      %v5443 = vpop.permute.xlu0 %5442
      %5444 = vrot.lane.b32.xlu0 %v4670, 16
      %v5445 = vpop.permute.xlu0 %5444
      %5446 = vrot.lane.b32.xlu0 %v4671, 16
      %v5447 = vpop.permute.xlu0 %5446
      %5448 = vrot.lane.b32.xlu0 %v4672, 16
      %v5449 = vpop.permute.xlu0 %5448
      %5450 = vrot.lane.b32.xlu0 %v4673, 16
      %v5451 = vpop.permute.xlu0 %5450
      %5452 = vrot.lane.b32.xlu0 %v4674, 16
      %v5453 = vpop.permute.xlu0 %5452
      %5454 = vrot.lane.b32.xlu0 %v4675, 16
      %v5455 = vpop.permute.xlu0 %5454
      %5456 = vrot.lane.b32.xlu0 %v4676, 16
      %v5457 = vpop.permute.xlu0 %5456
      %5458 = vrot.lane.b32.xlu0 %v4677, 16
      %v5459 = vpop.permute.xlu0 %5458
      %5460 = vrot.lane.b32.xlu0 %v4678, 16
      %v5461 = vpop.permute.xlu0 %5460
      %5462 = vrot.lane.b32.xlu0 %v4679, 16
      %v5463 = vpop.permute.xlu0 %5462
      %5464 = vrot.lane.b32.xlu0 %v4680, 16
      %v5465 = vpop.permute.xlu0 %5464
      %5466 = vrot.lane.b32.xlu0 %v4681, 16
      %v5467 = vpop.permute.xlu0 %5466
      %5468 = vrot.lane.b32.xlu0 %v4682, 16
      %v5469 = vpop.permute.xlu0 %5468
      %5470 = vrot.lane.b32.xlu0 %v4683, 16
      %v5471 = vpop.permute.xlu0 %5470
      %5472 = vrot.lane.b32.xlu0 %v4684, 16
      %v5473 = vpop.permute.xlu0 %5472
      %5474 = vrot.lane.b32.xlu0 %v4685, 16
      %v5475 = vpop.permute.xlu0 %5474
      %5476 = vrot.lane.b32.xlu0 %v4686, 16
      %v5477 = vpop.permute.xlu0 %5476
      %5478 = vrot.lane.b32.xlu0 %v4687, 16
      %v5479 = vpop.permute.xlu0 %5478
      %5480 = vrot.lane.b32.xlu0 %v4688, 16
      %v5481 = vpop.permute.xlu0 %5480
      %5482 = vrot.lane.b32.xlu0 %v4689, 16
      %v5483 = vpop.permute.xlu0 %5482
      %5484 = vrot.lane.b32.xlu0 %v4690, 16
      %v5485 = vpop.permute.xlu0 %5484
      %5486 = vrot.lane.b32.xlu0 %v4691, 16
      %v5487 = vpop.permute.xlu0 %5486
      %5488 = vrot.lane.b32.xlu0 %v4692, 16
      %v5489 = vpop.permute.xlu0 %5488
      %5490 = vrot.lane.b32.xlu0 %v4693, 16
      %v5491 = vpop.permute.xlu0 %5490
      %5492 = vrot.lane.b32.xlu0 %v4694, 16
      %v5493 = vpop.permute.xlu0 %5492
      %5494 = vrot.lane.b32.xlu0 %v4695, 16
      %v5495 = vpop.permute.xlu0 %5494
      %5496 = vrot.lane.b32.xlu0 %v4696, 16
      %v5497 = vpop.permute.xlu0 %5496
      %5498 = vrot.lane.b32.xlu0 %v4697, 16
      %v5499 = vpop.permute.xlu0 %5498
      %5500 = vrot.lane.b32.xlu0 %v4698, 16
      %v5501 = vpop.permute.xlu0 %5500
      %5502 = vrot.lane.b32.xlu0 %v4699, 16
      %v5503 = vpop.permute.xlu0 %5502
      %5504 = vrot.lane.b32.xlu0 %v4700, 16
      %v5505 = vpop.permute.xlu0 %5504
      %5506 = vrot.lane.b32.xlu0 %v4701, 16
      %v5507 = vpop.permute.xlu0 %5506
      %5508 = vrot.lane.b32.xlu0 %v4702, 16
      %v5509 = vpop.permute.xlu0 %5508
      %5510 = vrot.lane.b32.xlu0 %v4703, 16
      %v5511 = vpop.permute.xlu0 %5510
      %5512 = vrot.lane.b32.xlu0 %v4704, 16
      %v5513 = vpop.permute.xlu0 %5512
      %5514 = vrot.lane.b32.xlu0 %v4705, 16
      %v5515 = vpop.permute.xlu0 %5514
      %5516 = vrot.lane.b32.xlu0 %v4706, 16
      %v5517 = vpop.permute.xlu0 %5516
      %5518 = vrot.lane.b32.xlu0 %v4707, 16
      %v5519 = vpop.permute.xlu0 %5518
      %5520 = vrot.lane.b32.xlu0 %v4708, 16
      %v5521 = vpop.permute.xlu0 %5520
      %5522 = vrot.lane.b32.xlu0 %v4709, 16
      %v5523 = vpop.permute.xlu0 %5522
      %5524 = vrot.lane.b32.xlu0 %v4710, 16
      %v5525 = vpop.permute.xlu0 %5524
      %5526 = vrot.lane.b32.xlu0 %v4711, 16
      %v5527 = vpop.permute.xlu0 %5526
      %5528 = vrot.lane.b32.xlu0 %v4712, 16
      %v5529 = vpop.permute.xlu0 %5528
      %5530 = vrot.lane.b32.xlu0 %v4713, 16
      %v5531 = vpop.permute.xlu0 %5530
      %5532 = vrot.lane.b32.xlu0 %v4714, 16
      %v5533 = vpop.permute.xlu0 %5532
      %5534 = vrot.lane.b32.xlu0 %v4715, 16
      %v5535 = vpop.permute.xlu0 %5534
      %5536 = vrot.lane.b32.xlu0 %v4716, 16
      %v5537 = vpop.permute.xlu0 %5536
      %5538 = vrot.lane.b32.xlu0 %v4717, 16
      %v5539 = vpop.permute.xlu0 %5538
      %5540 = vrot.lane.b32.xlu0 %v4718, 16
      %v5541 = vpop.permute.xlu0 %5540
      %5542 = vrot.lane.b32.xlu0 %v4719, 16
      %v5543 = vpop.permute.xlu0 %5542
      %5544 = vrot.lane.b32.xlu0 %v4720, 16
      %v5545 = vpop.permute.xlu0 %5544
      %5546 = vrot.lane.b32.xlu0 %v4721, 16
      %v5547 = vpop.permute.xlu0 %5546
      %5548 = vrot.lane.b32.xlu0 %v4722, 16
      %v5549 = vpop.permute.xlu0 %5548
      %5550 = vrot.lane.b32.xlu0 %v4723, 16
      %v5551 = vpop.permute.xlu0 %5550
      %5552 = vrot.lane.b32.xlu0 %v4724, 16
      %v5553 = vpop.permute.xlu0 %5552
      %5554 = vrot.lane.b32.xlu0 %v4725, 16
      %v5555 = vpop.permute.xlu0 %5554
      %5556 = vrot.lane.b32.xlu0 %v4726, 16
      %v5557 = vpop.permute.xlu0 %5556
      %5558 = vrot.lane.b32.xlu0 %v4727, 16
      %v5559 = vpop.permute.xlu0 %5558
      %5560 = vrot.lane.b32.xlu0 %v4728, 16
      %v5561 = vpop.permute.xlu0 %5560
      %5690 = vrot.lane.b32.xlu0 %v4729, 24
      %v5691 = vpop.permute.xlu0 %5690
      %5692 = vrot.lane.b32.xlu0 %v4730, 24
      %v5693 = vpop.permute.xlu0 %5692
      %5694 = vrot.lane.b32.xlu0 %v4731, 24
      %v5695 = vpop.permute.xlu0 %5694
      %5696 = vrot.lane.b32.xlu0 %v4732, 24
      %v5697 = vpop.permute.xlu0 %5696
      %5698 = vrot.lane.b32.xlu0 %v4733, 24
      %v5699 = vpop.permute.xlu0 %5698
      %5700 = vrot.lane.b32.xlu0 %v4734, 24
      %v5701 = vpop.permute.xlu0 %5700
      %5702 = vrot.lane.b32.xlu0 %v4735, 24
      %v5703 = vpop.permute.xlu0 %5702
      %5704 = vrot.lane.b32.xlu0 %v4736, 24
      %v5705 = vpop.permute.xlu0 %5704
      %5706 = vrot.lane.b32.xlu0 %v4737, 24
      %v5707 = vpop.permute.xlu0 %5706
      %5708 = vrot.lane.b32.xlu0 %v4738, 24
      %v5709 = vpop.permute.xlu0 %5708
      %5710 = vrot.lane.b32.xlu0 %v4739, 24
      %v5711 = vpop.permute.xlu0 %5710
      %5712 = vrot.lane.b32.xlu0 %v4740, 24
      %v5713 = vpop.permute.xlu0 %5712
      %5714 = vrot.lane.b32.xlu0 %v4741, 24
      %v5715 = vpop.permute.xlu0 %5714
      %5716 = vrot.lane.b32.xlu0 %v4742, 24
      %v5717 = vpop.permute.xlu0 %5716
      %5718 = vrot.lane.b32.xlu0 %v4743, 24
      %v5719 = vpop.permute.xlu0 %5718
      %5720 = vrot.lane.b32.xlu0 %v4744, 24
      %v5721 = vpop.permute.xlu0 %5720
      %5722 = vrot.lane.b32.xlu0 %v4745, 24
      %v5723 = vpop.permute.xlu0 %5722
      %5724 = vrot.lane.b32.xlu0 %v4746, 24
      %v5725 = vpop.permute.xlu0 %5724
      %5726 = vrot.lane.b32.xlu0 %v4747, 24
      %v5727 = vpop.permute.xlu0 %5726
      %5728 = vrot.lane.b32.xlu0 %v4748, 24
      %v5729 = vpop.permute.xlu0 %5728
      %5730 = vrot.lane.b32.xlu0 %v4749, 24
      %v5731 = vpop.permute.xlu0 %5730
      %5732 = vrot.lane.b32.xlu0 %v4750, 24
      %v5733 = vpop.permute.xlu0 %5732
      %5734 = vrot.lane.b32.xlu0 %v4751, 24
      %v5735 = vpop.permute.xlu0 %5734
      %5736 = vrot.lane.b32.xlu0 %v4752, 24
      %v5737 = vpop.permute.xlu0 %5736
      %5738 = vrot.lane.b32.xlu0 %v4753, 24
      %v5739 = vpop.permute.xlu0 %5738
      %5740 = vrot.lane.b32.xlu0 %v4754, 24
      %v5741 = vpop.permute.xlu0 %5740
      %5742 = vrot.lane.b32.xlu0 %v4755, 24
      %v5743 = vpop.permute.xlu0 %5742
      %5744 = vrot.lane.b32.xlu0 %v4756, 24
      %v5745 = vpop.permute.xlu0 %5744
      %5746 = vrot.lane.b32.xlu0 %v4757, 24
      %v5747 = vpop.permute.xlu0 %5746
      %5748 = vrot.lane.b32.xlu0 %v4758, 24
      %v5749 = vpop.permute.xlu0 %5748
      %5750 = vrot.lane.b32.xlu0 %v4759, 24
      %v5751 = vpop.permute.xlu0 %5750
      %5752 = vrot.lane.b32.xlu0 %v4760, 24
      %v5753 = vpop.permute.xlu0 %5752
      %5754 = vrot.lane.b32.xlu0 %v4761, 24
      %v5755 = vpop.permute.xlu0 %5754
      %5756 = vrot.lane.b32.xlu0 %v4762, 24
      %v5757 = vpop.permute.xlu0 %5756
      %5758 = vrot.lane.b32.xlu0 %v4763, 24
      %v5759 = vpop.permute.xlu0 %5758
      %5760 = vrot.lane.b32.xlu0 %v4764, 24
      %v5761 = vpop.permute.xlu0 %5760
      %5762 = vrot.lane.b32.xlu0 %v4765, 24
      %v5763 = vpop.permute.xlu0 %5762
      %5764 = vrot.lane.b32.xlu0 %v4766, 24
      %v5765 = vpop.permute.xlu0 %5764
      %5766 = vrot.lane.b32.xlu0 %v4767, 24
      %v5767 = vpop.permute.xlu0 %5766
      %5768 = vrot.lane.b32.xlu0 %v4768, 24
      %v5769 = vpop.permute.xlu0 %5768
      %5770 = vrot.lane.b32.xlu0 %v4769, 24
      %v5771 = vpop.permute.xlu0 %5770
      %5772 = vrot.lane.b32.xlu0 %v4770, 24
      %v5773 = vpop.permute.xlu0 %5772
      %5774 = vrot.lane.b32.xlu0 %v4771, 24
      %v5775 = vpop.permute.xlu0 %5774
      %5776 = vrot.lane.b32.xlu0 %v4772, 24
      %v5777 = vpop.permute.xlu0 %5776
      %5778 = vrot.lane.b32.xlu0 %v4773, 24
      %v5779 = vpop.permute.xlu0 %5778
      %5780 = vrot.lane.b32.xlu0 %v4774, 24
      %v5781 = vpop.permute.xlu0 %5780
      %5782 = vrot.lane.b32.xlu0 %v4775, 24
      %v5783 = vpop.permute.xlu0 %5782
      %5784 = vrot.lane.b32.xlu0 %v4776, 24
      %v5785 = vpop.permute.xlu0 %5784
      %5786 = vrot.lane.b32.xlu0 %v4777, 24
      %v5787 = vpop.permute.xlu0 %5786
      %5788 = vrot.lane.b32.xlu0 %v4778, 24
      %v5789 = vpop.permute.xlu0 %5788
      %5790 = vrot.lane.b32.xlu0 %v4779, 24
      %v5791 = vpop.permute.xlu0 %5790
      %5792 = vrot.lane.b32.xlu0 %v4780, 24
      %v5793 = vpop.permute.xlu0 %5792
      %5794 = vrot.lane.b32.xlu0 %v4781, 24
      %v5795 = vpop.permute.xlu0 %5794
      %5796 = vrot.lane.b32.xlu0 %v4782, 24
      %v5797 = vpop.permute.xlu0 %5796
      %5798 = vrot.lane.b32.xlu0 %v4783, 24
      %v5799 = vpop.permute.xlu0 %5798
      %5800 = vrot.lane.b32.xlu0 %v4784, 24
      %v5801 = vpop.permute.xlu0 %5800
      %5802 = vrot.lane.b32.xlu0 %v4785, 24
      %v5803 = vpop.permute.xlu0 %5802
      %5804 = vrot.lane.b32.xlu0 %v4786, 24
      %v5805 = vpop.permute.xlu0 %5804
      %5806 = vrot.lane.b32.xlu0 %v4787, 24
      %v5807 = vpop.permute.xlu0 %5806
      %5808 = vrot.lane.b32.xlu0 %v4788, 24
      %v5809 = vpop.permute.xlu0 %5808
      %5810 = vrot.lane.b32.xlu0 %v4789, 24
      %v5811 = vpop.permute.xlu0 %5810
      %5812 = vrot.lane.b32.xlu0 %v4790, 24
      %v5813 = vpop.permute.xlu0 %5812
      %5814 = vrot.lane.b32.xlu0 %v4791, 24
      %v5815 = vpop.permute.xlu0 %5814
      %5816 = vrot.lane.b32.xlu0 %v4792, 24
      %v5817 = vpop.permute.xlu0 %5816
      %5946 = vrot.lane.b32.xlu0 %v4793, 32
      %v5947 = vpop.permute.xlu0 %5946
      %5948 = vrot.lane.b32.xlu0 %v4794, 32
      %v5949 = vpop.permute.xlu0 %5948
      %5950 = vrot.lane.b32.xlu0 %v4795, 32
      %v5951 = vpop.permute.xlu0 %5950
      %5952 = vrot.lane.b32.xlu0 %v4796, 32
      %v5953 = vpop.permute.xlu0 %5952
      %5954 = vrot.lane.b32.xlu0 %v4797, 32
      %v5955 = vpop.permute.xlu0 %5954
      %5956 = vrot.lane.b32.xlu0 %v4798, 32
      %v5957 = vpop.permute.xlu0 %5956
      %5958 = vrot.lane.b32.xlu0 %v4799, 32
      %v5959 = vpop.permute.xlu0 %5958
      %5960 = vrot.lane.b32.xlu0 %v4800, 32
      %v5961 = vpop.permute.xlu0 %5960
      %5962 = vrot.lane.b32.xlu0 %v4801, 32
      %v5963 = vpop.permute.xlu0 %5962
      %5964 = vrot.lane.b32.xlu0 %v4802, 32
      %v5965 = vpop.permute.xlu0 %5964
      %5966 = vrot.lane.b32.xlu0 %v4803, 32
      %v5967 = vpop.permute.xlu0 %5966
      %5968 = vrot.lane.b32.xlu0 %v4804, 32
      %v5969 = vpop.permute.xlu0 %5968
      %5970 = vrot.lane.b32.xlu0 %v4805, 32
      %v5971 = vpop.permute.xlu0 %5970
      %5972 = vrot.lane.b32.xlu0 %v4806, 32
      %v5973 = vpop.permute.xlu0 %5972
      %5974 = vrot.lane.b32.xlu0 %v4807, 32
      %v5975 = vpop.permute.xlu0 %5974
      %5976 = vrot.lane.b32.xlu0 %v4808, 32
      %v5977 = vpop.permute.xlu0 %5976
      %5978 = vrot.lane.b32.xlu0 %v4809, 32
      %v5979 = vpop.permute.xlu0 %5978
      %5980 = vrot.lane.b32.xlu0 %v4810, 32
      %v5981 = vpop.permute.xlu0 %5980
      %5982 = vrot.lane.b32.xlu0 %v4811, 32
      %v5983 = vpop.permute.xlu0 %5982
      %5984 = vrot.lane.b32.xlu0 %v4812, 32
      %v5985 = vpop.permute.xlu0 %5984
      %5986 = vrot.lane.b32.xlu0 %v4813, 32
      %v5987 = vpop.permute.xlu0 %5986
      %5988 = vrot.lane.b32.xlu0 %v4814, 32
      %v5989 = vpop.permute.xlu0 %5988
      %5990 = vrot.lane.b32.xlu0 %v4815, 32
      %v5991 = vpop.permute.xlu0 %5990
      %5992 = vrot.lane.b32.xlu0 %v4816, 32
      %v5993 = vpop.permute.xlu0 %5992
      %5994 = vrot.lane.b32.xlu0 %v4817, 32
      %v5995 = vpop.permute.xlu0 %5994
      %5996 = vrot.lane.b32.xlu0 %v4818, 32
      %v5997 = vpop.permute.xlu0 %5996
      %5998 = vrot.lane.b32.xlu0 %v4819, 32
      %v5999 = vpop.permute.xlu0 %5998
      %6000 = vrot.lane.b32.xlu0 %v4820, 32
      %v6001 = vpop.permute.xlu0 %6000
      %6002 = vrot.lane.b32.xlu0 %v4821, 32
      %v6003 = vpop.permute.xlu0 %6002
      %6004 = vrot.lane.b32.xlu0 %v4822, 32
      %v6005 = vpop.permute.xlu0 %6004
      %6006 = vrot.lane.b32.xlu0 %v4823, 32
      %v6007 = vpop.permute.xlu0 %6006
      %6008 = vrot.lane.b32.xlu0 %v4824, 32
      %v6009 = vpop.permute.xlu0 %6008
      %6010 = vrot.lane.b32.xlu0 %v4825, 32
      %v6011 = vpop.permute.xlu0 %6010
      %6012 = vrot.lane.b32.xlu0 %v4826, 32
      %v6013 = vpop.permute.xlu0 %6012
      %6014 = vrot.lane.b32.xlu0 %v4827, 32
      %v6015 = vpop.permute.xlu0 %6014
      %6016 = vrot.lane.b32.xlu0 %v4828, 32
      %v6017 = vpop.permute.xlu0 %6016
      %6018 = vrot.lane.b32.xlu0 %v4829, 32
      %v6019 = vpop.permute.xlu0 %6018
      %6020 = vrot.lane.b32.xlu0 %v4830, 32
      %v6021 = vpop.permute.xlu0 %6020
      %6022 = vrot.lane.b32.xlu0 %v4831, 32
      %v6023 = vpop.permute.xlu0 %6022
      %6024 = vrot.lane.b32.xlu0 %v4832, 32
      %v6025 = vpop.permute.xlu0 %6024
      %6026 = vrot.lane.b32.xlu0 %v4833, 32
      %v6027 = vpop.permute.xlu0 %6026
      %6028 = vrot.lane.b32.xlu0 %v4834, 32
      %v6029 = vpop.permute.xlu0 %6028
      %6030 = vrot.lane.b32.xlu0 %v4835, 32
      %v6031 = vpop.permute.xlu0 %6030
      %6032 = vrot.lane.b32.xlu0 %v4836, 32
      %v6033 = vpop.permute.xlu0 %6032
      %6034 = vrot.lane.b32.xlu0 %v4837, 32
      %v6035 = vpop.permute.xlu0 %6034
      %6036 = vrot.lane.b32.xlu0 %v4838, 32
      %v6037 = vpop.permute.xlu0 %6036
      %6038 = vrot.lane.b32.xlu0 %v4839, 32
      %v6039 = vpop.permute.xlu0 %6038
      %6040 = vrot.lane.b32.xlu0 %v4840, 32
      %v6041 = vpop.permute.xlu0 %6040
      %6042 = vrot.lane.b32.xlu0 %v4841, 32
      %v6043 = vpop.permute.xlu0 %6042
      %6044 = vrot.lane.b32.xlu0 %v4842, 32
      %v6045 = vpop.permute.xlu0 %6044
      %6046 = vrot.lane.b32.xlu0 %v4843, 32
      %v6047 = vpop.permute.xlu0 %6046
      %6048 = vrot.lane.b32.xlu0 %v4844, 32
      %v6049 = vpop.permute.xlu0 %6048
      %6050 = vrot.lane.b32.xlu0 %v4845, 32
      %v6051 = vpop.permute.xlu0 %6050
      %6052 = vrot.lane.b32.xlu0 %v4846, 32
      %v6053 = vpop.permute.xlu0 %6052
      %6054 = vrot.lane.b32.xlu0 %v4847, 32
      %v6055 = vpop.permute.xlu0 %6054
      %6056 = vrot.lane.b32.xlu0 %v4848, 32
      %v6057 = vpop.permute.xlu0 %6056
      %6058 = vrot.lane.b32.xlu0 %v4849, 32
      %v6059 = vpop.permute.xlu0 %6058
      %6060 = vrot.lane.b32.xlu0 %v4850, 32
      %v6061 = vpop.permute.xlu0 %6060
      %6062 = vrot.lane.b32.xlu0 %v4851, 32
      %v6063 = vpop.permute.xlu0 %6062
      %6064 = vrot.lane.b32.xlu0 %v4852, 32
      %v6065 = vpop.permute.xlu0 %6064
      %6066 = vrot.lane.b32.xlu0 %v4853, 32
      %v6067 = vpop.permute.xlu0 %6066
      %6068 = vrot.lane.b32.xlu0 %v4854, 32
      %v6069 = vpop.permute.xlu0 %6068
      %6070 = vrot.lane.b32.xlu0 %v4855, 32
      %v6071 = vpop.permute.xlu0 %6070
      %6072 = vrot.lane.b32.xlu0 %v4856, 32
      %v6073 = vpop.permute.xlu0 %6072
      %6202 = vrot.lane.b32.xlu0 %v4857, 40
      %v6203 = vpop.permute.xlu0 %6202
      %6204 = vrot.lane.b32.xlu0 %v4858, 40
      %v6205 = vpop.permute.xlu0 %6204
      %6206 = vrot.lane.b32.xlu0 %v4859, 40
      %v6207 = vpop.permute.xlu0 %6206
      %6208 = vrot.lane.b32.xlu0 %v4860, 40
      %v6209 = vpop.permute.xlu0 %6208
      %6210 = vrot.lane.b32.xlu0 %v4861, 40
      %v6211 = vpop.permute.xlu0 %6210
      %6212 = vrot.lane.b32.xlu0 %v4862, 40
      %v6213 = vpop.permute.xlu0 %6212
      %6214 = vrot.lane.b32.xlu0 %v4863, 40
      %v6215 = vpop.permute.xlu0 %6214
      %6216 = vrot.lane.b32.xlu0 %v4864, 40
      %v6217 = vpop.permute.xlu0 %6216
      %6218 = vrot.lane.b32.xlu0 %v4865, 40
      %v6219 = vpop.permute.xlu0 %6218
      %6220 = vrot.lane.b32.xlu0 %v4866, 40
      %v6221 = vpop.permute.xlu0 %6220
      %6222 = vrot.lane.b32.xlu0 %v4867, 40
      %v6223 = vpop.permute.xlu0 %6222
      %6224 = vrot.lane.b32.xlu0 %v4868, 40
      %v6225 = vpop.permute.xlu0 %6224
      %6226 = vrot.lane.b32.xlu0 %v4869, 40
      %v6227 = vpop.permute.xlu0 %6226
      %6228 = vrot.lane.b32.xlu0 %v4870, 40
      %v6229 = vpop.permute.xlu0 %6228
      %6230 = vrot.lane.b32.xlu0 %v4871, 40
      %v6231 = vpop.permute.xlu0 %6230
      %6232 = vrot.lane.b32.xlu0 %v4872, 40
      %v6233 = vpop.permute.xlu0 %6232
      %6234 = vrot.lane.b32.xlu0 %v4873, 40
      %v6235 = vpop.permute.xlu0 %6234
      %6236 = vrot.lane.b32.xlu0 %v4874, 40
      %v6237 = vpop.permute.xlu0 %6236
      %6238 = vrot.lane.b32.xlu0 %v4875, 40
      %v6239 = vpop.permute.xlu0 %6238
      %6240 = vrot.lane.b32.xlu0 %v4876, 40
      %v6241 = vpop.permute.xlu0 %6240
      %6242 = vrot.lane.b32.xlu0 %v4877, 40
      %v6243 = vpop.permute.xlu0 %6242
      %6244 = vrot.lane.b32.xlu0 %v4878, 40
      %v6245 = vpop.permute.xlu0 %6244
      %6246 = vrot.lane.b32.xlu0 %v4879, 40
      %v6247 = vpop.permute.xlu0 %6246
      %6248 = vrot.lane.b32.xlu0 %v4880, 40
      %v6249 = vpop.permute.xlu0 %6248
      %6250 = vrot.lane.b32.xlu0 %v4881, 40
      %v6251 = vpop.permute.xlu0 %6250
      %6252 = vrot.lane.b32.xlu0 %v4882, 40
      %v6253 = vpop.permute.xlu0 %6252
      %6254 = vrot.lane.b32.xlu0 %v4883, 40
      %v6255 = vpop.permute.xlu0 %6254
      %6256 = vrot.lane.b32.xlu0 %v4884, 40
      %v6257 = vpop.permute.xlu0 %6256
      %6258 = vrot.lane.b32.xlu0 %v4885, 40
      %v6259 = vpop.permute.xlu0 %6258
      %6260 = vrot.lane.b32.xlu0 %v4886, 40
      %v6261 = vpop.permute.xlu0 %6260
      %6262 = vrot.lane.b32.xlu0 %v4887, 40
      %v6263 = vpop.permute.xlu0 %6262
      %6264 = vrot.lane.b32.xlu0 %v4888, 40
      %v6265 = vpop.permute.xlu0 %6264
      %6266 = vrot.lane.b32.xlu0 %v4889, 40
      %v6267 = vpop.permute.xlu0 %6266
      %6268 = vrot.lane.b32.xlu0 %v4890, 40
      %v6269 = vpop.permute.xlu0 %6268
      %6270 = vrot.lane.b32.xlu0 %v4891, 40
      %v6271 = vpop.permute.xlu0 %6270
      %6272 = vrot.lane.b32.xlu0 %v4892, 40
      %v6273 = vpop.permute.xlu0 %6272
      %6274 = vrot.lane.b32.xlu0 %v4893, 40
      %v6275 = vpop.permute.xlu0 %6274
      %6276 = vrot.lane.b32.xlu0 %v4894, 40
      %v6277 = vpop.permute.xlu0 %6276
      %6278 = vrot.lane.b32.xlu0 %v4895, 40
      %v6279 = vpop.permute.xlu0 %6278
      %6280 = vrot.lane.b32.xlu0 %v4896, 40
      %v6281 = vpop.permute.xlu0 %6280
      %6282 = vrot.lane.b32.xlu0 %v4897, 40
      %v6283 = vpop.permute.xlu0 %6282
      %6284 = vrot.lane.b32.xlu0 %v4898, 40
      %v6285 = vpop.permute.xlu0 %6284
      %6286 = vrot.lane.b32.xlu0 %v4899, 40
      %v6287 = vpop.permute.xlu0 %6286
      %6288 = vrot.lane.b32.xlu0 %v4900, 40
      %v6289 = vpop.permute.xlu0 %6288
      %6290 = vrot.lane.b32.xlu0 %v4901, 40
      %v6291 = vpop.permute.xlu0 %6290
      %6292 = vrot.lane.b32.xlu0 %v4902, 40
      %v6293 = vpop.permute.xlu0 %6292
      %6294 = vrot.lane.b32.xlu0 %v4903, 40
      %v6295 = vpop.permute.xlu0 %6294
      %6296 = vrot.lane.b32.xlu0 %v4904, 40
      %v6297 = vpop.permute.xlu0 %6296
      %6298 = vrot.lane.b32.xlu0 %v4905, 40
      %v6299 = vpop.permute.xlu0 %6298
      %6300 = vrot.lane.b32.xlu0 %v4906, 40
      %v6301 = vpop.permute.xlu0 %6300
      %6302 = vrot.lane.b32.xlu0 %v4907, 40
      %v6303 = vpop.permute.xlu0 %6302
      %6304 = vrot.lane.b32.xlu0 %v4908, 40
      %v6305 = vpop.permute.xlu0 %6304
      %6306 = vrot.lane.b32.xlu0 %v4909, 40
      %v6307 = vpop.permute.xlu0 %6306
      %6308 = vrot.lane.b32.xlu0 %v4910, 40
      %v6309 = vpop.permute.xlu0 %6308
      %6310 = vrot.lane.b32.xlu0 %v4911, 40
      %v6311 = vpop.permute.xlu0 %6310
      %6312 = vrot.lane.b32.xlu0 %v4912, 40
      %v6313 = vpop.permute.xlu0 %6312
      %6314 = vrot.lane.b32.xlu0 %v4913, 40
      %v6315 = vpop.permute.xlu0 %6314
      %6316 = vrot.lane.b32.xlu0 %v4914, 40
      %v6317 = vpop.permute.xlu0 %6316
      %6318 = vrot.lane.b32.xlu0 %v4915, 40
      %v6319 = vpop.permute.xlu0 %6318
      %6320 = vrot.lane.b32.xlu0 %v4916, 40
      %v6321 = vpop.permute.xlu0 %6320
      %6322 = vrot.lane.b32.xlu0 %v4917, 40
      %v6323 = vpop.permute.xlu0 %6322
      %6324 = vrot.lane.b32.xlu0 %v4918, 40
      %v6325 = vpop.permute.xlu0 %6324
      %6326 = vrot.lane.b32.xlu0 %v4919, 40
      %v6327 = vpop.permute.xlu0 %6326
      %6328 = vrot.lane.b32.xlu0 %v4920, 40
      %v6329 = vpop.permute.xlu0 %6328
      %6458 = vrot.lane.b32.xlu0 %v4922, 48
      %v6459 = vpop.permute.xlu0 %6458
      %6460 = vrot.lane.b32.xlu0 %v4923, 48
      %v6461 = vpop.permute.xlu0 %6460
      %6462 = vrot.lane.b32.xlu0 %v4924, 48
      %v6463 = vpop.permute.xlu0 %6462
      %6464 = vrot.lane.b32.xlu0 %v4925, 48
      %v6465 = vpop.permute.xlu0 %6464
      %6466 = vrot.lane.b32.xlu0 %v4926, 48
      %v6467 = vpop.permute.xlu0 %6466
      %6468 = vrot.lane.b32.xlu0 %v4927, 48
      %v6469 = vpop.permute.xlu0 %6468
      %6470 = vrot.lane.b32.xlu0 %v4928, 48
      %v6471 = vpop.permute.xlu0 %6470
      %6472 = vrot.lane.b32.xlu0 %v4929, 48
      %v6473 = vpop.permute.xlu0 %6472
      %6474 = vrot.lane.b32.xlu0 %v4930, 48
      %v6475 = vpop.permute.xlu0 %6474
      %6476 = vrot.lane.b32.xlu0 %v4931, 48
      %v6477 = vpop.permute.xlu0 %6476
      %6478 = vrot.lane.b32.xlu0 %v4932, 48
      %v6479 = vpop.permute.xlu0 %6478
      %6480 = vrot.lane.b32.xlu0 %v4933, 48
      %v6481 = vpop.permute.xlu0 %6480
      %6482 = vrot.lane.b32.xlu0 %v4934, 48
      %v6483 = vpop.permute.xlu0 %6482
      %6484 = vrot.lane.b32.xlu0 %v4935, 48
      %v6485 = vpop.permute.xlu0 %6484
      %6486 = vrot.lane.b32.xlu0 %v4936, 48
      %v6487 = vpop.permute.xlu0 %6486
      %6488 = vrot.lane.b32.xlu0 %v4937, 48
      %v6489 = vpop.permute.xlu0 %6488
      %6490 = vrot.lane.b32.xlu0 %v4938, 48
      %v6491 = vpop.permute.xlu0 %6490
      %6492 = vrot.lane.b32.xlu0 %v4939, 48
      %v6493 = vpop.permute.xlu0 %6492
      %6494 = vrot.lane.b32.xlu0 %v4940, 48
      %v6495 = vpop.permute.xlu0 %6494
      %6496 = vrot.lane.b32.xlu0 %v4941, 48
      %v6497 = vpop.permute.xlu0 %6496
      %6498 = vrot.lane.b32.xlu0 %v4942, 48
      %v6499 = vpop.permute.xlu0 %6498
      %6500 = vrot.lane.b32.xlu0 %v4943, 48
      %v6501 = vpop.permute.xlu0 %6500
      %6502 = vrot.lane.b32.xlu0 %v4944, 48
      %v6503 = vpop.permute.xlu0 %6502
      %6504 = vrot.lane.b32.xlu0 %v4945, 48
      %v6505 = vpop.permute.xlu0 %6504
      %6506 = vrot.lane.b32.xlu0 %v4946, 48
      %v6507 = vpop.permute.xlu0 %6506
      %6508 = vrot.lane.b32.xlu0 %v4947, 48
      %v6509 = vpop.permute.xlu0 %6508
      %6510 = vrot.lane.b32.xlu0 %v4948, 48
      %v6511 = vpop.permute.xlu0 %6510
      %6512 = vrot.lane.b32.xlu0 %v4949, 48
      %v6513 = vpop.permute.xlu0 %6512
      %6514 = vrot.lane.b32.xlu0 %v4950, 48
      %v6515 = vpop.permute.xlu0 %6514
      %6516 = vrot.lane.b32.xlu0 %v4951, 48
      %v6517 = vpop.permute.xlu0 %6516
      %6518 = vrot.lane.b32.xlu0 %v4952, 48
      %v6519 = vpop.permute.xlu0 %6518
      %6520 = vrot.lane.b32.xlu0 %v4953, 48
      %v6521 = vpop.permute.xlu0 %6520
      %6522 = vrot.lane.b32.xlu0 %v4954, 48
      %v6523 = vpop.permute.xlu0 %6522
      %6524 = vrot.lane.b32.xlu0 %v4955, 48
      %v6525 = vpop.permute.xlu0 %6524
      %6526 = vrot.lane.b32.xlu0 %v4956, 48
      %v6527 = vpop.permute.xlu0 %6526
      %6528 = vrot.lane.b32.xlu0 %v4957, 48
      %v6529 = vpop.permute.xlu0 %6528
      %6530 = vrot.lane.b32.xlu0 %v4958, 48
      %v6531 = vpop.permute.xlu0 %6530
      %6532 = vrot.lane.b32.xlu0 %v4959, 48
      %v6533 = vpop.permute.xlu0 %6532
      %6534 = vrot.lane.b32.xlu0 %v4960, 48
      %v6535 = vpop.permute.xlu0 %6534
      %6536 = vrot.lane.b32.xlu0 %v4961, 48
      %v6537 = vpop.permute.xlu0 %6536
      %6538 = vrot.lane.b32.xlu0 %v4962, 48
      %v6539 = vpop.permute.xlu0 %6538
      %6540 = vrot.lane.b32.xlu0 %v4963, 48
      %v6541 = vpop.permute.xlu0 %6540
      %6542 = vrot.lane.b32.xlu0 %v4964, 48
      %v6543 = vpop.permute.xlu0 %6542
      %6544 = vrot.lane.b32.xlu0 %v4965, 48
      %v6545 = vpop.permute.xlu0 %6544
      %6546 = vrot.lane.b32.xlu0 %v4966, 48
      %v6547 = vpop.permute.xlu0 %6546
      %6548 = vrot.lane.b32.xlu0 %v4967, 48
      %v6549 = vpop.permute.xlu0 %6548
      %6550 = vrot.lane.b32.xlu0 %v4968, 48
      %v6551 = vpop.permute.xlu0 %6550
      %6552 = vrot.lane.b32.xlu0 %v4969, 48
      %v6553 = vpop.permute.xlu0 %6552
      %6554 = vrot.lane.b32.xlu0 %v4970, 48
      %v6555 = vpop.permute.xlu0 %6554
      %6556 = vrot.lane.b32.xlu0 %v4971, 48
      %v6557 = vpop.permute.xlu0 %6556
      %6558 = vrot.lane.b32.xlu0 %v4972, 48
      %v6559 = vpop.permute.xlu0 %6558
      %6560 = vrot.lane.b32.xlu0 %v4973, 48
      %v6561 = vpop.permute.xlu0 %6560
      %6562 = vrot.lane.b32.xlu0 %v4974, 48
      %v6563 = vpop.permute.xlu0 %6562
      %6564 = vrot.lane.b32.xlu0 %v4975, 48
      %v6565 = vpop.permute.xlu0 %6564
      %6566 = vrot.lane.b32.xlu0 %v4976, 48
      %v6567 = vpop.permute.xlu0 %6566
      %6568 = vrot.lane.b32.xlu0 %v4977, 48
      %v6569 = vpop.permute.xlu0 %6568
      %6570 = vrot.lane.b32.xlu0 %v4978, 48
      %v6571 = vpop.permute.xlu0 %6570
      %6572 = vrot.lane.b32.xlu0 %v4979, 48
      %v6573 = vpop.permute.xlu0 %6572
      %6574 = vrot.lane.b32.xlu0 %v4980, 48
      %v6575 = vpop.permute.xlu0 %6574
      %6576 = vrot.lane.b32.xlu0 %v4981, 48
      %v6577 = vpop.permute.xlu0 %6576
      %6578 = vrot.lane.b32.xlu0 %v4982, 48
      %v6579 = vpop.permute.xlu0 %6578
      %6580 = vrot.lane.b32.xlu0 %v4983, 48
      %v6581 = vpop.permute.xlu0 %6580
      %6582 = vrot.lane.b32.xlu0 %v4984, 48
      %v6583 = vpop.permute.xlu0 %6582
      %6584 = vrot.lane.b32.xlu0 %v4985, 48
      %v6585 = vpop.permute.xlu0 %6584
      %6714 = vrot.lane.b32.xlu0 %v4986, 56
      %v6715 = vpop.permute.xlu0 %6714
      %6716 = vrot.lane.b32.xlu0 %v4987, 56
      %v6717 = vpop.permute.xlu0 %6716
      %6718 = vrot.lane.b32.xlu0 %v4988, 56
      %v6719 = vpop.permute.xlu0 %6718
      %6720 = vrot.lane.b32.xlu0 %v4989, 56
      %v6721 = vpop.permute.xlu0 %6720
      %6722 = vrot.lane.b32.xlu0 %v4990, 56
      %v6723 = vpop.permute.xlu0 %6722
      %6724 = vrot.lane.b32.xlu0 %v4991, 56
      %v6725 = vpop.permute.xlu0 %6724
      %6726 = vrot.lane.b32.xlu0 %v4992, 56
      %v6727 = vpop.permute.xlu0 %6726
      %6728 = vrot.lane.b32.xlu0 %v4993, 56
      %v6729 = vpop.permute.xlu0 %6728
      %6730 = vrot.lane.b32.xlu0 %v4994, 56
      %v6731 = vpop.permute.xlu0 %6730
      %6732 = vrot.lane.b32.xlu0 %v4995, 56
      %v6733 = vpop.permute.xlu0 %6732
      %6734 = vrot.lane.b32.xlu0 %v4996, 56
      %v6735 = vpop.permute.xlu0 %6734
      %6736 = vrot.lane.b32.xlu0 %v4997, 56
      %v6737 = vpop.permute.xlu0 %6736
      %6738 = vrot.lane.b32.xlu0 %v4998, 56
      %v6739 = vpop.permute.xlu0 %6738
      %6740 = vrot.lane.b32.xlu0 %v4999, 56
      %v6741 = vpop.permute.xlu0 %6740
      %6742 = vrot.lane.b32.xlu0 %v5000, 56
      %v6743 = vpop.permute.xlu0 %6742
      %6744 = vrot.lane.b32.xlu0 %v5001, 56
      %v6745 = vpop.permute.xlu0 %6744
      %6746 = vrot.lane.b32.xlu0 %v5002, 56
      %v6747 = vpop.permute.xlu0 %6746
      %6748 = vrot.lane.b32.xlu0 %v5003, 56
      %v6749 = vpop.permute.xlu0 %6748
      %6750 = vrot.lane.b32.xlu0 %v5004, 56
      %v6751 = vpop.permute.xlu0 %6750
      %6752 = vrot.lane.b32.xlu0 %v5005, 56
      %v6753 = vpop.permute.xlu0 %6752
      %6754 = vrot.lane.b32.xlu0 %v5006, 56
      %v6755 = vpop.permute.xlu0 %6754
      %6756 = vrot.lane.b32.xlu0 %v5007, 56
      %v6757 = vpop.permute.xlu0 %6756
      %6758 = vrot.lane.b32.xlu0 %v5008, 56
      %v6759 = vpop.permute.xlu0 %6758
      %6760 = vrot.lane.b32.xlu0 %v5009, 56
      %v6761 = vpop.permute.xlu0 %6760
      %6762 = vrot.lane.b32.xlu0 %v5010, 56
      %v6763 = vpop.permute.xlu0 %6762
      %6764 = vrot.lane.b32.xlu0 %v5011, 56
      %v6765 = vpop.permute.xlu0 %6764
      %6766 = vrot.lane.b32.xlu0 %v5012, 56
      %v6767 = vpop.permute.xlu0 %6766
      %6768 = vrot.lane.b32.xlu0 %v5013, 56
      %v6769 = vpop.permute.xlu0 %6768
      %6770 = vrot.lane.b32.xlu0 %v5014, 56
      %v6771 = vpop.permute.xlu0 %6770
      %6772 = vrot.lane.b32.xlu0 %v5015, 56
      %v6773 = vpop.permute.xlu0 %6772
      %6774 = vrot.lane.b32.xlu0 %v5016, 56
      %v6775 = vpop.permute.xlu0 %6774
      %6776 = vrot.lane.b32.xlu0 %v5017, 56
      %v6777 = vpop.permute.xlu0 %6776
      %6778 = vrot.lane.b32.xlu0 %v5018, 56
      %v6779 = vpop.permute.xlu0 %6778
      %6780 = vrot.lane.b32.xlu0 %v5019, 56
      %v6781 = vpop.permute.xlu0 %6780
      %6782 = vrot.lane.b32.xlu0 %v5020, 56
      %v6783 = vpop.permute.xlu0 %6782
      %6784 = vrot.lane.b32.xlu0 %v5021, 56
      %v6785 = vpop.permute.xlu0 %6784
      %6786 = vrot.lane.b32.xlu0 %v5022, 56
      %v6787 = vpop.permute.xlu0 %6786
      %6788 = vrot.lane.b32.xlu0 %v5023, 56
      %v6789 = vpop.permute.xlu0 %6788
      %6790 = vrot.lane.b32.xlu0 %v5024, 56
      %v6791 = vpop.permute.xlu0 %6790
      %6792 = vrot.lane.b32.xlu0 %v5025, 56
      %v6793 = vpop.permute.xlu0 %6792
      %6794 = vrot.lane.b32.xlu0 %v5026, 56
      %v6795 = vpop.permute.xlu0 %6794
      %6796 = vrot.lane.b32.xlu0 %v5027, 56
      %v6797 = vpop.permute.xlu0 %6796
      %6798 = vrot.lane.b32.xlu0 %v5028, 56
      %v6799 = vpop.permute.xlu0 %6798
      %6800 = vrot.lane.b32.xlu0 %v5029, 56
      %v6801 = vpop.permute.xlu0 %6800
      %6802 = vrot.lane.b32.xlu0 %v5030, 56
      %v6803 = vpop.permute.xlu0 %6802
      %6804 = vrot.lane.b32.xlu0 %v5031, 56
      %v6805 = vpop.permute.xlu0 %6804
      %6806 = vrot.lane.b32.xlu0 %v5032, 56
      %v6807 = vpop.permute.xlu0 %6806
      %6808 = vrot.lane.b32.xlu0 %v5033, 56
      %v6809 = vpop.permute.xlu0 %6808
      %6810 = vrot.lane.b32.xlu0 %v5034, 56
      %v6811 = vpop.permute.xlu0 %6810
      %6812 = vrot.lane.b32.xlu0 %v5035, 56
      %v6813 = vpop.permute.xlu0 %6812
      %6814 = vrot.lane.b32.xlu0 %v5036, 56
      %v6815 = vpop.permute.xlu0 %6814
      %6816 = vrot.lane.b32.xlu0 %v5037, 56
      %v6817 = vpop.permute.xlu0 %6816
      %6818 = vrot.lane.b32.xlu0 %v5038, 56
      %v6819 = vpop.permute.xlu0 %6818
      %6820 = vrot.lane.b32.xlu0 %v5039, 56
      %v6821 = vpop.permute.xlu0 %6820
      %6822 = vrot.lane.b32.xlu0 %v5040, 56
      %v6823 = vpop.permute.xlu0 %6822
      %6824 = vrot.lane.b32.xlu0 %v5041, 56
      %v6825 = vpop.permute.xlu0 %6824
      %6826 = vrot.lane.b32.xlu0 %v5042, 56
      %v6827 = vpop.permute.xlu0 %6826
      %6828 = vrot.lane.b32.xlu0 %v5043, 56
      %v6829 = vpop.permute.xlu0 %6828
      %6830 = vrot.lane.b32.xlu0 %v5044, 56
      %v6831 = vpop.permute.xlu0 %6830
      %6832 = vrot.lane.b32.xlu0 %v5045, 56
      %v6833 = vpop.permute.xlu0 %6832
      %6834 = vrot.lane.b32.xlu0 %v5046, 56
      %v6835 = vpop.permute.xlu0 %6834
      %6836 = vrot.lane.b32.xlu0 %v5047, 56
      %v6837 = vpop.permute.xlu0 %6836
      %6838 = vrot.lane.b32.xlu0 %v5048, 56
      %v6839 = vpop.permute.xlu0 %6838
      %6840 = vrot.lane.b32.xlu0 %v5049, 56
      %v6841 = vpop.permute.xlu0 %6840
      %6970 = vrot.lane.b32.xlu0 %v5050, 64
      %v6971 = vpop.permute.xlu0 %6970
      %6972 = vrot.lane.b32.xlu0 %v5051, 64
      %v6973 = vpop.permute.xlu0 %6972
      %6974 = vrot.lane.b32.xlu0 %v5052, 64
      %v6975 = vpop.permute.xlu0 %6974
      %6976 = vrot.lane.b32.xlu0 %v5053, 64
      %v6977 = vpop.permute.xlu0 %6976
      %6978 = vrot.lane.b32.xlu0 %v5054, 64
      %v6979 = vpop.permute.xlu0 %6978
      %6980 = vrot.lane.b32.xlu0 %v5055, 64
      %v6981 = vpop.permute.xlu0 %6980
      %6982 = vrot.lane.b32.xlu0 %v5056, 64
      %v6983 = vpop.permute.xlu0 %6982
      %6984 = vrot.lane.b32.xlu0 %v5057, 64
      %v6985 = vpop.permute.xlu0 %6984
      %6986 = vrot.lane.b32.xlu0 %v5058, 64
      %v6987 = vpop.permute.xlu0 %6986
      %6988 = vrot.lane.b32.xlu0 %v5059, 64
      %v6989 = vpop.permute.xlu0 %6988
      %6990 = vrot.lane.b32.xlu0 %v5060, 64
      %v6991 = vpop.permute.xlu0 %6990
      %6992 = vrot.lane.b32.xlu0 %v5061, 64
      %v6993 = vpop.permute.xlu0 %6992
      %6994 = vrot.lane.b32.xlu0 %v5062, 64
      %v6995 = vpop.permute.xlu0 %6994
      %6996 = vrot.lane.b32.xlu0 %v5063, 64
      %v6997 = vpop.permute.xlu0 %6996
      %6998 = vrot.lane.b32.xlu0 %v5064, 64
      %v6999 = vpop.permute.xlu0 %6998
      %7000 = vrot.lane.b32.xlu0 %v5065, 64
      %v7001 = vpop.permute.xlu0 %7000
      %7002 = vrot.lane.b32.xlu0 %v5066, 64
      %v7003 = vpop.permute.xlu0 %7002
      %7004 = vrot.lane.b32.xlu0 %v5067, 64
      %v7005 = vpop.permute.xlu0 %7004
      %7006 = vrot.lane.b32.xlu0 %v5068, 64
      %v7007 = vpop.permute.xlu0 %7006
      %7008 = vrot.lane.b32.xlu0 %v5069, 64
      %v7009 = vpop.permute.xlu0 %7008
      %7010 = vrot.lane.b32.xlu0 %v5070, 64
      %v7011 = vpop.permute.xlu0 %7010
      %7012 = vrot.lane.b32.xlu0 %v5071, 64
      %v7013 = vpop.permute.xlu0 %7012
      %7014 = vrot.lane.b32.xlu0 %v5072, 64
      %v7015 = vpop.permute.xlu0 %7014
      %7016 = vrot.lane.b32.xlu0 %v5073, 64
      %v7017 = vpop.permute.xlu0 %7016
      %7018 = vrot.lane.b32.xlu0 %v5074, 64
      %v7019 = vpop.permute.xlu0 %7018
      %7020 = vrot.lane.b32.xlu0 %v5075, 64
      %v7021 = vpop.permute.xlu0 %7020
      %7022 = vrot.lane.b32.xlu0 %v5076, 64
      %v7023 = vpop.permute.xlu0 %7022
      %7024 = vrot.lane.b32.xlu0 %v5077, 64
      %v7025 = vpop.permute.xlu0 %7024
      %7026 = vrot.lane.b32.xlu0 %v5078, 64
      %v7027 = vpop.permute.xlu0 %7026
      %7028 = vrot.lane.b32.xlu0 %v5079, 64
      %v7029 = vpop.permute.xlu0 %7028
      %7030 = vrot.lane.b32.xlu0 %v5080, 64
      %v7031 = vpop.permute.xlu0 %7030
      %7032 = vrot.lane.b32.xlu0 %v5081, 64
      %v7033 = vpop.permute.xlu0 %7032
      %7034 = vrot.lane.b32.xlu0 %v5082, 64
      %v7035 = vpop.permute.xlu0 %7034
      %7036 = vrot.lane.b32.xlu0 %v5083, 64
      %v7037 = vpop.permute.xlu0 %7036
      %7038 = vrot.lane.b32.xlu0 %v5084, 64
      %v7039 = vpop.permute.xlu0 %7038
      %7040 = vrot.lane.b32.xlu0 %v5085, 64
      %v7041 = vpop.permute.xlu0 %7040
      %7042 = vrot.lane.b32.xlu0 %v5086, 64
      %v7043 = vpop.permute.xlu0 %7042
      %7044 = vrot.lane.b32.xlu0 %v5087, 64
      %v7045 = vpop.permute.xlu0 %7044
      %7046 = vrot.lane.b32.xlu0 %v5088, 64
      %v7047 = vpop.permute.xlu0 %7046
      %7048 = vrot.lane.b32.xlu0 %v5089, 64
      %v7049 = vpop.permute.xlu0 %7048
      %7050 = vrot.lane.b32.xlu0 %v5090, 64
      %v7051 = vpop.permute.xlu0 %7050
      %7052 = vrot.lane.b32.xlu0 %v5091, 64
      %v7053 = vpop.permute.xlu0 %7052
      %7054 = vrot.lane.b32.xlu0 %v5092, 64
      %v7055 = vpop.permute.xlu0 %7054
      %7056 = vrot.lane.b32.xlu0 %v5093, 64
      %v7057 = vpop.permute.xlu0 %7056
      %7058 = vrot.lane.b32.xlu0 %v5094, 64
      %v7059 = vpop.permute.xlu0 %7058
      %7060 = vrot.lane.b32.xlu0 %v5095, 64
      %v7061 = vpop.permute.xlu0 %7060
      %7062 = vrot.lane.b32.xlu0 %v5096, 64
      %v7063 = vpop.permute.xlu0 %7062
      %7064 = vrot.lane.b32.xlu0 %v5097, 64
      %v7065 = vpop.permute.xlu0 %7064
      %7066 = vrot.lane.b32.xlu0 %v5098, 64
      %v7067 = vpop.permute.xlu0 %7066
      %7068 = vrot.lane.b32.xlu0 %v5099, 64
      %v7069 = vpop.permute.xlu0 %7068
      %7070 = vrot.lane.b32.xlu0 %v5100, 64
      %v7071 = vpop.permute.xlu0 %7070
      %7072 = vrot.lane.b32.xlu0 %v5101, 64
      %v7073 = vpop.permute.xlu0 %7072
      %7074 = vrot.lane.b32.xlu0 %v5102, 64
      %v7075 = vpop.permute.xlu0 %7074
      %7076 = vrot.lane.b32.xlu0 %v5103, 64
      %v7077 = vpop.permute.xlu0 %7076
      %7078 = vrot.lane.b32.xlu0 %v5104, 64
      %v7079 = vpop.permute.xlu0 %7078
      %7080 = vrot.lane.b32.xlu0 %v5105, 64
      %v7081 = vpop.permute.xlu0 %7080
      %7082 = vrot.lane.b32.xlu0 %v5106, 64
      %v7083 = vpop.permute.xlu0 %7082
      %7084 = vrot.lane.b32.xlu0 %v5107, 64
      %v7085 = vpop.permute.xlu0 %7084
      %7086 = vrot.lane.b32.xlu0 %v5108, 64
      %v7087 = vpop.permute.xlu0 %7086
      %7088 = vrot.lane.b32.xlu0 %v5109, 64
      %v7089 = vpop.permute.xlu0 %7088
      %7090 = vrot.lane.b32.xlu0 %v5110, 64
      %v7091 = vpop.permute.xlu0 %7090
      %7092 = vrot.lane.b32.xlu0 %v5111, 64
      %v7093 = vpop.permute.xlu0 %7092
      %7094 = vrot.lane.b32.xlu0 %v5112, 64
      %v7095 = vpop.permute.xlu0 %7094
      %7096 = vrot.lane.b32.xlu0 %v5113, 64
      %v7097 = vpop.permute.xlu0 %7096
      %v7162 = vsel %vm3260, %v4537, %v5179
      %v7163 = vsel %vm3260, %v4538, %v5181
      %v7164 = vsel %vm3260, %v4539, %v5183
      %v7165 = vsel %vm3260, %v4540, %v5185
      %v7166 = vsel %vm3260, %v4541, %v5187
      %v7167 = vsel %vm3260, %v4542, %v5189
      %v7168 = vsel %vm3260, %v4543, %v5191
      %v7169 = vsel %vm3260, %v4544, %v5193
      %v7170 = vsel %vm3260, %v4545, %v5195
      %v7171 = vsel %vm3260, %v4546, %v5197
      %v7172 = vsel %vm3260, %v4547, %v5199
      %v7173 = vsel %vm3260, %v4548, %v5201
      %v7174 = vsel %vm3260, %v4549, %v5203
      %v7175 = vsel %vm3260, %v4550, %v5205
      %v7176 = vsel %vm3260, %v4551, %v5207
      %v7177 = vsel %vm3260, %v4552, %v5209
      %v7178 = vsel %vm3260, %v4553, %v5211
      %v7179 = vsel %vm3260, %v4554, %v5213
      %v7180 = vsel %vm3260, %v4555, %v5215
      %v7181 = vsel %vm3260, %v4556, %v5217
      %v7182 = vsel %vm3260, %v4557, %v5219
      %v7183 = vsel %vm3260, %v4558, %v5221
      %v7184 = vsel %vm3260, %v4559, %v5223
      %v7185 = vsel %vm3260, %v4560, %v5225
      %v7186 = vsel %vm3260, %v4561, %v5227
      %v7187 = vsel %vm3260, %v4562, %v5229
      %v7188 = vsel %vm3260, %v4563, %v5231
      %v7189 = vsel %vm3260, %v4564, %v5233
      %v7190 = vsel %vm3260, %v4565, %v5235
      %v7191 = vsel %vm3260, %v4566, %v5237
      %v7192 = vsel %vm3260, %v4567, %v5239
      %v7193 = vsel %vm3260, %v4568, %v5241
      %v7194 = vsel %vm3260, %v4569, %v5243
      %v7195 = vsel %vm3260, %v4570, %v5245
      %v7196 = vsel %vm3260, %v4571, %v5247
      %v7197 = vsel %vm3260, %v4572, %v5249
      %v7198 = vsel %vm3260, %v4573, %v5251
      %v7199 = vsel %vm3260, %v4574, %v5253
      %v7200 = vsel %vm3260, %v4575, %v5255
      %v7201 = vsel %vm3260, %v4576, %v5257
      %v7202 = vsel %vm3260, %v4577, %v5259
      %v7203 = vsel %vm3260, %v4578, %v5261
      %v7204 = vsel %vm3260, %v4579, %v5263
      %v7205 = vsel %vm3260, %v4580, %v5265
      %v7206 = vsel %vm3260, %v4581, %v5267
      %v7207 = vsel %vm3260, %v4582, %v5269
      %v7208 = vsel %vm3260, %v4583, %v5271
      %v7209 = vsel %vm3260, %v4584, %v5273
      %v7210 = vsel %vm3260, %v4585, %v5275
      %v7211 = vsel %vm3260, %v4586, %v5277
      %v7212 = vsel %vm3260, %v4587, %v5279
      %v7213 = vsel %vm3260, %v4588, %v5281
      %v7214 = vsel %vm3260, %v4589, %v5283
      %v7215 = vsel %vm3260, %v4590, %v5285
      %v7216 = vsel %vm3260, %v4591, %v5287
      %v7217 = vsel %vm3260, %v4592, %v5289
      %v7218 = vsel %vm3260, %v4593, %v5291
      %v7219 = vsel %vm3260, %v4594, %v5293
      %v7220 = vsel %vm3260, %v4595, %v5295
      %v7221 = vsel %vm3260, %v4596, %v5297
      %v7222 = vsel %vm3260, %v4597, %v5299
      %v7223 = vsel %vm3260, %v4598, %v5301
      %v7224 = vsel %vm3260, %v4599, %v5303
      %v7225 = vsel %vm3260, %v4600, %v5305
      %v7226 = vsel %vm3390, %v7162, %v5435
      %v7227 = vsel %vm3390, %v7163, %v5437
      %v7228 = vsel %vm3390, %v7164, %v5439
      %v7229 = vsel %vm3390, %v7165, %v5441
      %v7230 = vsel %vm3390, %v7166, %v5443
      %v7231 = vsel %vm3390, %v7167, %v5445
      %v7232 = vsel %vm3390, %v7168, %v5447
      %v7233 = vsel %vm3390, %v7169, %v5449
      %v7234 = vsel %vm3390, %v7170, %v5451
      %v7235 = vsel %vm3390, %v7171, %v5453
      %v7236 = vsel %vm3390, %v7172, %v5455
      %v7237 = vsel %vm3390, %v7173, %v5457
      %v7238 = vsel %vm3390, %v7174, %v5459
      %v7239 = vsel %vm3390, %v7175, %v5461
      %v7240 = vsel %vm3390, %v7176, %v5463
      %v7241 = vsel %vm3390, %v7177, %v5465
      %v7242 = vsel %vm3390, %v7178, %v5467
      %v7243 = vsel %vm3390, %v7179, %v5469
      %v7244 = vsel %vm3390, %v7180, %v5471
      %v7245 = vsel %vm3390, %v7181, %v5473
      %v7246 = vsel %vm3390, %v7182, %v5475
      %v7247 = vsel %vm3390, %v7183, %v5477
      %v7248 = vsel %vm3390, %v7184, %v5479
      %v7249 = vsel %vm3390, %v7185, %v5481
      %v7250 = vsel %vm3390, %v7186, %v5483
      %v7251 = vsel %vm3390, %v7187, %v5485
      %v7252 = vsel %vm3390, %v7188, %v5487
      %v7253 = vsel %vm3390, %v7189, %v5489
      %v7254 = vsel %vm3390, %v7190, %v5491
      %v7255 = vsel %vm3390, %v7191, %v5493
      %v7256 = vsel %vm3390, %v7192, %v5495
      %v7257 = vsel %vm3390, %v7193, %v5497
      %v7258 = vsel %vm3390, %v7194, %v5499
      %v7259 = vsel %vm3390, %v7195, %v5501
      %v7260 = vsel %vm3390, %v7196, %v5503
      %v7261 = vsel %vm3390, %v7197, %v5505
      %v7262 = vsel %vm3390, %v7198, %v5507
      %v7263 = vsel %vm3390, %v7199, %v5509
      %v7264 = vsel %vm3390, %v7200, %v5511
      %v7265 = vsel %vm3390, %v7201, %v5513
      %v7266 = vsel %vm3390, %v7202, %v5515
      %v7267 = vsel %vm3390, %v7203, %v5517
      %v7268 = vsel %vm3390, %v7204, %v5519
      %v7269 = vsel %vm3390, %v7205, %v5521
      %v7270 = vsel %vm3390, %v7206, %v5523
      %v7271 = vsel %vm3390, %v7207, %v5525
      %v7272 = vsel %vm3390, %v7208, %v5527
      %v7273 = vsel %vm3390, %v7209, %v5529
      %v7274 = vsel %vm3390, %v7210, %v5531
      %v7275 = vsel %vm3390, %v7211, %v5533
      %v7276 = vsel %vm3390, %v7212, %v5535
      %v7277 = vsel %vm3390, %v7213, %v5537
      %v7278 = vsel %vm3390, %v7214, %v5539
      %v7279 = vsel %vm3390, %v7215, %v5541
      %v7280 = vsel %vm3390, %v7216, %v5543
      %v7281 = vsel %vm3390, %v7217, %v5545
      %v7282 = vsel %vm3390, %v7218, %v5547
      %v7283 = vsel %vm3390, %v7219, %v5549
      %v7284 = vsel %vm3390, %v7220, %v5551
      %v7285 = vsel %vm3390, %v7221, %v5553
      %v7286 = vsel %vm3390, %v7222, %v5555
      %v7287 = vsel %vm3390, %v7223, %v5557
      %v7288 = vsel %vm3390, %v7224, %v5559
      %v7289 = vsel %vm3390, %v7225, %v5561
      %v7290 = vsel %vm3520, %v7226, %v5691
      %v7291 = vsel %vm3520, %v7227, %v5693
      %v7292 = vsel %vm3520, %v7228, %v5695
      %v7293 = vsel %vm3520, %v7229, %v5697
      %v7294 = vsel %vm3520, %v7230, %v5699
      %v7295 = vsel %vm3520, %v7231, %v5701
      %v7296 = vsel %vm3520, %v7232, %v5703
      %v7297 = vsel %vm3520, %v7233, %v5705
      %v7298 = vsel %vm3520, %v7234, %v5707
      %v7299 = vsel %vm3520, %v7235, %v5709
      %v7300 = vsel %vm3520, %v7236, %v5711
      %v7301 = vsel %vm3520, %v7237, %v5713
      %v7302 = vsel %vm3520, %v7238, %v5715
      %v7303 = vsel %vm3520, %v7239, %v5717
      %v7304 = vsel %vm3520, %v7240, %v5719
      %v7305 = vsel %vm3520, %v7241, %v5721
      %v7306 = vsel %vm3520, %v7242, %v5723
      %v7307 = vsel %vm3520, %v7243, %v5725
      %v7308 = vsel %vm3520, %v7244, %v5727
      %v7309 = vsel %vm3520, %v7245, %v5729
      %v7310 = vsel %vm3520, %v7246, %v5731
      %v7311 = vsel %vm3520, %v7247, %v5733
      %v7312 = vsel %vm3520, %v7248, %v5735
      %v7313 = vsel %vm3520, %v7249, %v5737
      %v7314 = vsel %vm3520, %v7250, %v5739
      %v7315 = vsel %vm3520, %v7251, %v5741
      %v7316 = vsel %vm3520, %v7252, %v5743
      %v7317 = vsel %vm3520, %v7253, %v5745
      %v7318 = vsel %vm3520, %v7254, %v5747
      %v7319 = vsel %vm3520, %v7255, %v5749
      %v7320 = vsel %vm3520, %v7256, %v5751
      %v7321 = vsel %vm3520, %v7257, %v5753
      %v7322 = vsel %vm3520, %v7258, %v5755
      %v7323 = vsel %vm3520, %v7259, %v5757
      %v7324 = vsel %vm3520, %v7260, %v5759
      %v7325 = vsel %vm3520, %v7261, %v5761
      %v7326 = vsel %vm3520, %v7262, %v5763
      %v7327 = vsel %vm3520, %v7263, %v5765
      %v7328 = vsel %vm3520, %v7264, %v5767
      %v7329 = vsel %vm3520, %v7265, %v5769
      %v7330 = vsel %vm3520, %v7266, %v5771
      %v7331 = vsel %vm3520, %v7267, %v5773
      %v7332 = vsel %vm3520, %v7268, %v5775
      %v7333 = vsel %vm3520, %v7269, %v5777
      %v7334 = vsel %vm3520, %v7270, %v5779
      %v7335 = vsel %vm3520, %v7271, %v5781
      %v7336 = vsel %vm3520, %v7272, %v5783
      %v7337 = vsel %vm3520, %v7273, %v5785
      %v7338 = vsel %vm3520, %v7274, %v5787
      %v7339 = vsel %vm3520, %v7275, %v5789
      %v7340 = vsel %vm3520, %v7276, %v5791
      %v7341 = vsel %vm3520, %v7277, %v5793
      %v7342 = vsel %vm3520, %v7278, %v5795
      %v7343 = vsel %vm3520, %v7279, %v5797
      %v7344 = vsel %vm3520, %v7280, %v5799
      %v7345 = vsel %vm3520, %v7281, %v5801
      %v7346 = vsel %vm3520, %v7282, %v5803
      %v7347 = vsel %vm3520, %v7283, %v5805
      %v7348 = vsel %vm3520, %v7284, %v5807
      %v7349 = vsel %vm3520, %v7285, %v5809
      %v7350 = vsel %vm3520, %v7286, %v5811
      %v7351 = vsel %vm3520, %v7287, %v5813
      %v7352 = vsel %vm3520, %v7288, %v5815
      %v7353 = vsel %vm3520, %v7289, %v5817
      %v7354 = vsel %vm3650, %v7290, %v5947
      %v7355 = vsel %vm3650, %v7291, %v5949
      %v7356 = vsel %vm3650, %v7292, %v5951
      %v7357 = vsel %vm3650, %v7293, %v5953
      %v7358 = vsel %vm3650, %v7294, %v5955
      %v7359 = vsel %vm3650, %v7295, %v5957
      %v7360 = vsel %vm3650, %v7296, %v5959
      %v7361 = vsel %vm3650, %v7297, %v5961
      %v7362 = vsel %vm3650, %v7298, %v5963
      %v7363 = vsel %vm3650, %v7299, %v5965
      %v7364 = vsel %vm3650, %v7300, %v5967
      %v7365 = vsel %vm3650, %v7301, %v5969
      %v7366 = vsel %vm3650, %v7302, %v5971
      %v7367 = vsel %vm3650, %v7303, %v5973
      %v7368 = vsel %vm3650, %v7304, %v5975
      %v7369 = vsel %vm3650, %v7305, %v5977
      %v7370 = vsel %vm3650, %v7306, %v5979
      %v7371 = vsel %vm3650, %v7307, %v5981
      %v7372 = vsel %vm3650, %v7308, %v5983
      %v7373 = vsel %vm3650, %v7309, %v5985
      %v7374 = vsel %vm3650, %v7310, %v5987
      %v7375 = vsel %vm3650, %v7311, %v5989
      %v7376 = vsel %vm3650, %v7312, %v5991
      %v7377 = vsel %vm3650, %v7313, %v5993
      %v7378 = vsel %vm3650, %v7314, %v5995
      %v7379 = vsel %vm3650, %v7315, %v5997
      %v7380 = vsel %vm3650, %v7316, %v5999
      %v7381 = vsel %vm3650, %v7317, %v6001
      %v7382 = vsel %vm3650, %v7318, %v6003
      %v7383 = vsel %vm3650, %v7319, %v6005
      %v7384 = vsel %vm3650, %v7320, %v6007
      %v7385 = vsel %vm3650, %v7321, %v6009
      %v7386 = vsel %vm3650, %v7322, %v6011
      %v7387 = vsel %vm3650, %v7323, %v6013
      %v7388 = vsel %vm3650, %v7324, %v6015
      %v7389 = vsel %vm3650, %v7325, %v6017
      %v7390 = vsel %vm3650, %v7326, %v6019
      %v7391 = vsel %vm3650, %v7327, %v6021
      %v7392 = vsel %vm3650, %v7328, %v6023
      %v7393 = vsel %vm3650, %v7329, %v6025
      %v7394 = vsel %vm3650, %v7330, %v6027
      %v7395 = vsel %vm3650, %v7331, %v6029
      %v7396 = vsel %vm3650, %v7332, %v6031
      %v7397 = vsel %vm3650, %v7333, %v6033
      %v7398 = vsel %vm3650, %v7334, %v6035
      %v7399 = vsel %vm3650, %v7335, %v6037
      %v7400 = vsel %vm3650, %v7336, %v6039
      %v7401 = vsel %vm3650, %v7337, %v6041
      %v7402 = vsel %vm3650, %v7338, %v6043
      %v7403 = vsel %vm3650, %v7339, %v6045
      %v7404 = vsel %vm3650, %v7340, %v6047
      %v7405 = vsel %vm3650, %v7341, %v6049
      %v7406 = vsel %vm3650, %v7342, %v6051
      %v7407 = vsel %vm3650, %v7343, %v6053
      %v7408 = vsel %vm3650, %v7344, %v6055
      %v7409 = vsel %vm3650, %v7345, %v6057
      %v7410 = vsel %vm3650, %v7346, %v6059
      %v7411 = vsel %vm3650, %v7347, %v6061
      %v7412 = vsel %vm3650, %v7348, %v6063
      %v7413 = vsel %vm3650, %v7349, %v6065
      %v7414 = vsel %vm3650, %v7350, %v6067
      %v7415 = vsel %vm3650, %v7351, %v6069
      %v7416 = vsel %vm3650, %v7352, %v6071
      %v7417 = vsel %vm3650, %v7353, %v6073
      %vm7418 = vcmask 326656
      %v7419 = vsel %vm7418, %v7354, %v6203
      %v7420 = vsel %vm7418, %v7355, %v6205
      %v7421 = vsel %vm7418, %v7356, %v6207
      %v7422 = vsel %vm7418, %v7357, %v6209
      %v7423 = vsel %vm7418, %v7358, %v6211
      %v7424 = vsel %vm7418, %v7359, %v6213
      %v7425 = vsel %vm7418, %v7360, %v6215
      %v7426 = vsel %vm7418, %v7361, %v6217
      %v7427 = vsel %vm7418, %v7362, %v6219
      %v7428 = vsel %vm7418, %v7363, %v6221
      %v7429 = vsel %vm7418, %v7364, %v6223
      %v7430 = vsel %vm7418, %v7365, %v6225
      %v7431 = vsel %vm7418, %v7366, %v6227
      %v7432 = vsel %vm7418, %v7367, %v6229
      %v7433 = vsel %vm7418, %v7368, %v6231
      %v7434 = vsel %vm7418, %v7369, %v6233
      %v7435 = vsel %vm7418, %v7370, %v6235
      %v7436 = vsel %vm7418, %v7371, %v6237
      %v7437 = vsel %vm7418, %v7372, %v6239
      %v7438 = vsel %vm7418, %v7373, %v6241
      %v7439 = vsel %vm7418, %v7374, %v6243
      %v7440 = vsel %vm7418, %v7375, %v6245
      %v7441 = vsel %vm7418, %v7376, %v6247
      %v7442 = vsel %vm7418, %v7377, %v6249
      %v7443 = vsel %vm7418, %v7378, %v6251
      %v7444 = vsel %vm7418, %v7379, %v6253
      %v7445 = vsel %vm7418, %v7380, %v6255
      %v7446 = vsel %vm7418, %v7381, %v6257
      %v7447 = vsel %vm7418, %v7382, %v6259
      %v7448 = vsel %vm7418, %v7383, %v6261
      %v7449 = vsel %vm7418, %v7384, %v6263
      %v7450 = vsel %vm7418, %v7385, %v6265
      %v7451 = vsel %vm7418, %v7386, %v6267
      %v7452 = vsel %vm7418, %v7387, %v6269
      %v7453 = vsel %vm7418, %v7388, %v6271
      %v7454 = vsel %vm7418, %v7389, %v6273
      %v7455 = vsel %vm7418, %v7390, %v6275
      %v7456 = vsel %vm7418, %v7391, %v6277
      %v7457 = vsel %vm7418, %v7392, %v6279
      %v7458 = vsel %vm7418, %v7393, %v6281
      %v7459 = vsel %vm7418, %v7394, %v6283
      %v7460 = vsel %vm7418, %v7395, %v6285
      %v7461 = vsel %vm7418, %v7396, %v6287
      %v7462 = vsel %vm7418, %v7397, %v6289
      %v7463 = vsel %vm7418, %v7398, %v6291
      %v7464 = vsel %vm7418, %v7399, %v6293
      %v7465 = vsel %vm7418, %v7400, %v6295
      %v7466 = vsel %vm7418, %v7401, %v6297
      %v7467 = vsel %vm7418, %v7402, %v6299
      %v7468 = vsel %vm7418, %v7403, %v6301
      %v7469 = vsel %vm7418, %v7404, %v6303
      %v7470 = vsel %vm7418, %v7405, %v6305
      %v7471 = vsel %vm7418, %v7406, %v6307
      %v7472 = vsel %vm7418, %v7407, %v6309
      %v7473 = vsel %vm7418, %v7408, %v6311
      %v7474 = vsel %vm7418, %v7409, %v6313
      %v7475 = vsel %vm7418, %v7410, %v6315
      %v7476 = vsel %vm7418, %v7411, %v6317
      %v7477 = vsel %vm7418, %v7412, %v6319
      %v7478 = vsel %vm7418, %v7413, %v6321
      %v7479 = vsel %vm7418, %v7414, %v6323
      %v7480 = vsel %vm7418, %v7415, %v6325
      %v7481 = vsel %vm7418, %v7416, %v6327
      %v7482 = vsel %vm7418, %v7417, %v6329
      %vm7483 = vcmask 392192
      %v7484 = vsel %vm7483, %v7419, %v6459
      %v7485 = vsel %vm7483, %v7420, %v6461
      %v7486 = vsel %vm7483, %v7421, %v6463
      %v7487 = vsel %vm7483, %v7422, %v6465
      %v7488 = vsel %vm7483, %v7423, %v6467
      %v7489 = vsel %vm7483, %v7424, %v6469
      %v7490 = vsel %vm7483, %v7425, %v6471
      %v7491 = vsel %vm7483, %v7426, %v6473
      %v7492 = vsel %vm7483, %v7427, %v6475
      %v7493 = vsel %vm7483, %v7428, %v6477
      %v7494 = vsel %vm7483, %v7429, %v6479
      %v7495 = vsel %vm7483, %v7430, %v6481
      %v7496 = vsel %vm7483, %v7431, %v6483
      %v7497 = vsel %vm7483, %v7432, %v6485
      %v7498 = vsel %vm7483, %v7433, %v6487
      %v7499 = vsel %vm7483, %v7434, %v6489
      %v7500 = vsel %vm7483, %v7435, %v6491
      %v7501 = vsel %vm7483, %v7436, %v6493
      %v7502 = vsel %vm7483, %v7437, %v6495
      %v7503 = vsel %vm7483, %v7438, %v6497
      %v7504 = vsel %vm7483, %v7439, %v6499
      %v7505 = vsel %vm7483, %v7440, %v6501
      %v7506 = vsel %vm7483, %v7441, %v6503
      %v7507 = vsel %vm7483, %v7442, %v6505
      %v7508 = vsel %vm7483, %v7443, %v6507
      %v7509 = vsel %vm7483, %v7444, %v6509
      %v7510 = vsel %vm7483, %v7445, %v6511
      %v7511 = vsel %vm7483, %v7446, %v6513
      %v7512 = vsel %vm7483, %v7447, %v6515
      %v7513 = vsel %vm7483, %v7448, %v6517
      %v7514 = vsel %vm7483, %v7449, %v6519
      %v7515 = vsel %vm7483, %v7450, %v6521
      %v7516 = vsel %vm7483, %v7451, %v6523
      %v7517 = vsel %vm7483, %v7452, %v6525
      %v7518 = vsel %vm7483, %v7453, %v6527
      %v7519 = vsel %vm7483, %v7454, %v6529
      %v7520 = vsel %vm7483, %v7455, %v6531
      %v7521 = vsel %vm7483, %v7456, %v6533
      %v7522 = vsel %vm7483, %v7457, %v6535
      %v7523 = vsel %vm7483, %v7458, %v6537
      %v7524 = vsel %vm7483, %v7459, %v6539
      %v7525 = vsel %vm7483, %v7460, %v6541
      %v7526 = vsel %vm7483, %v7461, %v6543
      %v7527 = vsel %vm7483, %v7462, %v6545
      %v7528 = vsel %vm7483, %v7463, %v6547
      %v7529 = vsel %vm7483, %v7464, %v6549
      %v7530 = vsel %vm7483, %v7465, %v6551
      %v7531 = vsel %vm7483, %v7466, %v6553
      %v7532 = vsel %vm7483, %v7467, %v6555
      %v7533 = vsel %vm7483, %v7468, %v6557
      %v7534 = vsel %vm7483, %v7469, %v6559
      %v7535 = vsel %vm7483, %v7470, %v6561
      %v7536 = vsel %vm7483, %v7471, %v6563
      %v7537 = vsel %vm7483, %v7472, %v6565
      %v7538 = vsel %vm7483, %v7473, %v6567
      %v7539 = vsel %vm7483, %v7474, %v6569
      %v7540 = vsel %vm7483, %v7475, %v6571
      %v7541 = vsel %vm7483, %v7476, %v6573
      %v7542 = vsel %vm7483, %v7477, %v6575
      %v7543 = vsel %vm7483, %v7478, %v6577
      %v7544 = vsel %vm7483, %v7479, %v6579
      %v7545 = vsel %vm7483, %v7480, %v6581
      %v7546 = vsel %vm7483, %v7481, %v6583
      %v7547 = vsel %vm7483, %v7482, %v6585
      %vm7548 = vcmask 457728
      %v7549 = vsel %vm7548, %v7484, %v6715
      %v7550 = vsel %vm7548, %v7485, %v6717
      %v7551 = vsel %vm7548, %v7486, %v6719
      %v7552 = vsel %vm7548, %v7487, %v6721
      %v7553 = vsel %vm7548, %v7488, %v6723
      %v7554 = vsel %vm7548, %v7489, %v6725
      %v7555 = vsel %vm7548, %v7490, %v6727
      %v7556 = vsel %vm7548, %v7491, %v6729
      %v7557 = vsel %vm7548, %v7492, %v6731
      %v7558 = vsel %vm7548, %v7493, %v6733
      %v7559 = vsel %vm7548, %v7494, %v6735
      %v7560 = vsel %vm7548, %v7495, %v6737
      %v7561 = vsel %vm7548, %v7496, %v6739
      %v7562 = vsel %vm7548, %v7497, %v6741
      %v7563 = vsel %vm7548, %v7498, %v6743
      %v7564 = vsel %vm7548, %v7499, %v6745
      %v7565 = vsel %vm7548, %v7500, %v6747
      %v7566 = vsel %vm7548, %v7501, %v6749
      %v7567 = vsel %vm7548, %v7502, %v6751
      %v7568 = vsel %vm7548, %v7503, %v6753
      %v7569 = vsel %vm7548, %v7504, %v6755
      %v7570 = vsel %vm7548, %v7505, %v6757
      %v7571 = vsel %vm7548, %v7506, %v6759
      %v7572 = vsel %vm7548, %v7507, %v6761
      %v7573 = vsel %vm7548, %v7508, %v6763
      %v7574 = vsel %vm7548, %v7509, %v6765
      %v7575 = vsel %vm7548, %v7510, %v6767
      %v7576 = vsel %vm7548, %v7511, %v6769
      %v7577 = vsel %vm7548, %v7512, %v6771
      %v7578 = vsel %vm7548, %v7513, %v6773
      %v7579 = vsel %vm7548, %v7514, %v6775
      %v7580 = vsel %vm7548, %v7515, %v6777
      %v7581 = vsel %vm7548, %v7516, %v6779
      %v7582 = vsel %vm7548, %v7517, %v6781
      %v7583 = vsel %vm7548, %v7518, %v6783
      %v7584 = vsel %vm7548, %v7519, %v6785
      %v7585 = vsel %vm7548, %v7520, %v6787
      %v7586 = vsel %vm7548, %v7521, %v6789
      %v7587 = vsel %vm7548, %v7522, %v6791
      %v7588 = vsel %vm7548, %v7523, %v6793
      %v7589 = vsel %vm7548, %v7524, %v6795
      %v7590 = vsel %vm7548, %v7525, %v6797
      %v7591 = vsel %vm7548, %v7526, %v6799
      %v7592 = vsel %vm7548, %v7527, %v6801
      %v7593 = vsel %vm7548, %v7528, %v6803
      %v7594 = vsel %vm7548, %v7529, %v6805
      %v7595 = vsel %vm7548, %v7530, %v6807
      %v7596 = vsel %vm7548, %v7531, %v6809
      %v7597 = vsel %vm7548, %v7532, %v6811
      %v7598 = vsel %vm7548, %v7533, %v6813
      %v7599 = vsel %vm7548, %v7534, %v6815
      %v7600 = vsel %vm7548, %v7535, %v6817
      %v7601 = vsel %vm7548, %v7536, %v6819
      %v7602 = vsel %vm7548, %v7537, %v6821
      %v7603 = vsel %vm7548, %v7538, %v6823
      %v7604 = vsel %vm7548, %v7539, %v6825
      %v7605 = vsel %vm7548, %v7540, %v6827
      %v7606 = vsel %vm7548, %v7541, %v6829
      %v7607 = vsel %vm7548, %v7542, %v6831
      %v7608 = vsel %vm7548, %v7543, %v6833
      %v7609 = vsel %vm7548, %v7544, %v6835
      %v7610 = vsel %vm7548, %v7545, %v6837
      %v7611 = vsel %vm7548, %v7546, %v6839
      %v7612 = vsel %vm7548, %v7547, %v6841
      %vm7613 = vcmask 523264
      %v7614 = vsel %vm7613, %v7549, %v6971
      %v7615 = vsel %vm7613, %v7550, %v6973
      %v7616 = vsel %vm7613, %v7551, %v6975
      %v7617 = vsel %vm7613, %v7552, %v6977
      %v7618 = vsel %vm7613, %v7553, %v6979
      %v7619 = vsel %vm7613, %v7554, %v6981
      %v7620 = vsel %vm7613, %v7555, %v6983
      %v7621 = vsel %vm7613, %v7556, %v6985
      %v7622 = vsel %vm7613, %v7557, %v6987
      %v7623 = vsel %vm7613, %v7558, %v6989
      %v7624 = vsel %vm7613, %v7559, %v6991
      %v7625 = vsel %vm7613, %v7560, %v6993
      %v7626 = vsel %vm7613, %v7561, %v6995
      %v7627 = vsel %vm7613, %v7562, %v6997
      %v7628 = vsel %vm7613, %v7563, %v6999
      %v7629 = vsel %vm7613, %v7564, %v7001
      %v7630 = vsel %vm7613, %v7565, %v7003
      %v7631 = vsel %vm7613, %v7566, %v7005
      %v7632 = vsel %vm7613, %v7567, %v7007
      %v7633 = vsel %vm7613, %v7568, %v7009
      %v7634 = vsel %vm7613, %v7569, %v7011
      %v7635 = vsel %vm7613, %v7570, %v7013
      %v7636 = vsel %vm7613, %v7571, %v7015
      %v7637 = vsel %vm7613, %v7572, %v7017
      %v7638 = vsel %vm7613, %v7573, %v7019
      %v7639 = vsel %vm7613, %v7574, %v7021
      %v7640 = vsel %vm7613, %v7575, %v7023
      %v7641 = vsel %vm7613, %v7576, %v7025
      %v7642 = vsel %vm7613, %v7577, %v7027
      %v7643 = vsel %vm7613, %v7578, %v7029
      %v7644 = vsel %vm7613, %v7579, %v7031
      %v7645 = vsel %vm7613, %v7580, %v7033
      %v7646 = vsel %vm7613, %v7581, %v7035
      %v7647 = vsel %vm7613, %v7582, %v7037
      %v7648 = vsel %vm7613, %v7583, %v7039
      %v7649 = vsel %vm7613, %v7584, %v7041
      %v7650 = vsel %vm7613, %v7585, %v7043
      %v7651 = vsel %vm7613, %v7586, %v7045
      %v7652 = vsel %vm7613, %v7587, %v7047
      %v7653 = vsel %vm7613, %v7588, %v7049
      %v7654 = vsel %vm7613, %v7589, %v7051
      %v7655 = vsel %vm7613, %v7590, %v7053
      %v7656 = vsel %vm7613, %v7591, %v7055
      %v7657 = vsel %vm7613, %v7592, %v7057
      %v7658 = vsel %vm7613, %v7593, %v7059
      %v7659 = vsel %vm7613, %v7594, %v7061
      %v7660 = vsel %vm7613, %v7595, %v7063
      %v7661 = vsel %vm7613, %v7596, %v7065
      %v7662 = vsel %vm7613, %v7597, %v7067
      %v7663 = vsel %vm7613, %v7598, %v7069
      %v7664 = vsel %vm7613, %v7599, %v7071
      %v7665 = vsel %vm7613, %v7600, %v7073
      %v7666 = vsel %vm7613, %v7601, %v7075
      %v7667 = vsel %vm7613, %v7602, %v7077
      %v7668 = vsel %vm7613, %v7603, %v7079
      %v7669 = vsel %vm7613, %v7604, %v7081
      %v7670 = vsel %vm7613, %v7605, %v7083
      %v7671 = vsel %vm7613, %v7606, %v7085
      %v7672 = vsel %vm7613, %v7607, %v7087
      %v7673 = vsel %vm7613, %v7608, %v7089
      %v7674 = vsel %vm7613, %v7609, %v7091
      %v7675 = vsel %vm7613, %v7610, %v7093
      %v7676 = vsel %vm7613, %v7611, %v7095
      %v7677 = vsel %vm7613, %v7612, %v7097
      %v7678 = vpack.c.bf16 %v7615, %v7614
      %v7679 = vpack.c.bf16 %v7617, %v7616
      %v7680 = vpack.c.bf16 %v7619, %v7618
      %v7681 = vpack.c.bf16 %v7621, %v7620
      %v7682 = vpack.c.bf16 %v7623, %v7622
      %v7683 = vpack.c.bf16 %v7625, %v7624
      %v7684 = vpack.c.bf16 %v7627, %v7626
      %v7685 = vpack.c.bf16 %v7629, %v7628
      %v7686 = vpack.c.bf16 %v7631, %v7630
      %v7687 = vpack.c.bf16 %v7633, %v7632
      %v7688 = vpack.c.bf16 %v7635, %v7634
      %v7689 = vpack.c.bf16 %v7637, %v7636
      %v7690 = vpack.c.bf16 %v7639, %v7638
      %v7691 = vpack.c.bf16 %v7641, %v7640
      %v7692 = vpack.c.bf16 %v7643, %v7642
      %v7693 = vpack.c.bf16 %v7645, %v7644
      %v7694 = vpack.c.bf16 %v7647, %v7646
      %v7695 = vpack.c.bf16 %v7649, %v7648
      %v7696 = vpack.c.bf16 %v7651, %v7650
      %v7697 = vpack.c.bf16 %v7653, %v7652
      %v7698 = vpack.c.bf16 %v7655, %v7654
      %v7699 = vpack.c.bf16 %v7657, %v7656
      %v7700 = vpack.c.bf16 %v7659, %v7658
      %v7701 = vpack.c.bf16 %v7661, %v7660
      %v7702 = vpack.c.bf16 %v7663, %v7662
      %v7703 = vpack.c.bf16 %v7665, %v7664
      %v7704 = vpack.c.bf16 %v7667, %v7666
      %v7705 = vpack.c.bf16 %v7669, %v7668
      %v7706 = vpack.c.bf16 %v7671, %v7670
      %v7707 = vpack.c.bf16 %v7673, %v7672
      %v7708 = vpack.c.bf16 %v7675, %v7674
      %v7709 = vpack.c.bf16 %v7677, %v7676
      %v7710 = vld [vmem:[%s4] sm:$0xf]
      %v7711 = vld [vmem:[%s4 + $0x4] sm:$0xf]
      %v7712 = vld [vmem:[%s4 + $0x8] sm:$0xf]
      %v7713 = vld [vmem:[%s4 + $0xc] sm:$0xf]
      %v7714 = vld [vmem:[%s4 + $0x10] sm:$0xf]
      %v7715 = vld [vmem:[%s4 + $0x14] sm:$0xf]
      %v7716 = vld [vmem:[%s4 + $0x18] sm:$0xf]
      %v7717 = vld [vmem:[%s4 + $0x1c] sm:$0xf]
      %v7718 = vld [vmem:[%s4 + $0x20] sm:$0xf]
      %v7728 = vunpack.c.l.b16 %v7710
      %v7729 = vunpack.c.l.b16 %v7711
      %v7730 = vunpack.c.l.b16 %v7712
      %v7731 = vunpack.c.l.b16 %v7713
      %v7732 = vunpack.c.l.b16 %v7714
      %v7733 = vunpack.c.l.b16 %v7715
      %v7734 = vunpack.c.l.b16 %v7716
      %v7735 = vunpack.c.l.b16 %v7717
      %v7736 = vunpack.c.l.b16 %v7718
      %v7737 = vpack.c.b16 %v7729, %v7728
      %v7738 = vpack.c.b16 %v7731, %v7730
      %v7739 = vpack.c.b16 %v7733, %v7732
      %v7740 = vpack.c.b16 %v7735, %v7734
      %v7741 = vpack.c.b16 %v7736, %v7736
      %vm7746 = vcmask 588800
      %v7748 = vsel %vm7746, %v7678, 0
      %v7751 = vsel %vm7746, %v7679, 0
      %v7754 = vsel %vm7746, %v7680, 0
      %v7757 = vsel %vm7746, %v7681, 0
      %v7760 = vsel %vm7746, %v7682, 0
      %v7763 = vsel %vm7746, %v7683, 0
      %v7766 = vsel %vm7746, %v7684, 0
      %v7769 = vsel %vm7746, %v7685, 0
      %v7772 = vsel %vm7746, %v7686, 0
      %v7775 = vsel %vm7746, %v7687, 0
      %v7778 = vsel %vm7746, %v7688, 0
      %v7781 = vsel %vm7746, %v7689, 0
      %v7784 = vsel %vm7746, %v7690, 0
      %v7787 = vsel %vm7746, %v7691, 0
      %v7790 = vsel %vm7746, %v7692, 0
      %v7793 = vsel %vm7746, %v7693, 0
      %v7796 = vsel %vm7746, %v7694, 0
      %v7799 = vsel %vm7746, %v7695, 0
      %v7802 = vsel %vm7746, %v7696, 0
      %v7805 = vsel %vm7746, %v7697, 0
      %v7808 = vsel %vm7746, %v7698, 0
      %v7811 = vsel %vm7746, %v7699, 0
      %v7814 = vsel %vm7746, %v7700, 0
      %v7817 = vsel %vm7746, %v7701, 0
      %v7820 = vsel %vm7746, %v7702, 0
      %v7823 = vsel %vm7746, %v7703, 0
      %v7826 = vsel %vm7746, %v7704, 0
      %v7829 = vsel %vm7746, %v7705, 0
      %v7832 = vsel %vm7746, %v7706, 0
      %v7835 = vsel %vm7746, %v7707, 0
      %v7838 = vsel %vm7746, %v7708, 0
      %v7841 = vsel %vm7746, %v7709, 0
      %vm7843 = vcmask 1043456
      %v7845 = vsel %vm7843, %v7741, 0
      %7847 = vmatprep.subr.bf16.mxu0 0
      %7848 = vmatpush1.bf16.msra.mxu0 0
      %7849 = vmatprep.subr.bf16.mxu0 0
      %7850 = vmatpush1.bf16.msra.mxu0 0
      %7851 = vmatprep.subr.bf16.mxu0 0
      %7852 = vmatpush1.bf16.msra.mxu0 0
      %7853 = vmatprep.subr.bf16.mxu0 0
      %7854 = vmatpush1.bf16.msra.mxu0 %v7845
      %7855 = vmatprep.subr.bf16.mxu0 0
      %7856 = vmatpush1.bf16.msra.mxu0 %v7740
      %7857 = vmatprep.subr.bf16.mxu0 0
      %7858 = vmatpush1.bf16.msra.mxu0 %v7739
      %7859 = vmatprep.subr.bf16.mxu0 0
      %7860 = vmatpush1.bf16.msra.mxu0 %v7738
      %7861 = vmatprep.subr.bf16.mxu0 0
      %7862 = vmatpush1.bf16.msra.mxu0 %v7737
      %7863 = vmatprep.subr.bf16.mxu0 0
      %7864 = vmatpush2.bf16.msra.mxu0 0
      %7865 = vmatprep.subr.bf16.mxu0 0
      %7866 = vmatpush2.bf16.msra.mxu0 0
      %7867 = vmatprep.subr.bf16.mxu0 0
      %7868 = vmatpush2.bf16.msra.mxu0 0
      %7869 = vmatprep.subr.bf16.mxu0 0
      %7870 = vmatpush2.bf16.msra.mxu0 0
      %7871 = vmatprep.subr.bf16.mxu0 0
      %7872 = vmatpush2.bf16.msra.mxu0 0
      %7873 = vmatprep.subr.bf16.mxu0 0
      %7874 = vmatpush2.bf16.msra.mxu0 0
      %7875 = vmatprep.subr.bf16.mxu0 0
      %7876 = vmatpush2.bf16.msra.mxu0 0
      %7877 = vmatprep.subr.bf16.mxu0 0
      %7878 = vmatpush2.bf16.msra.mxu0 0
      %7879 = vmatprep.mubr.bf16.mxu0 0
      %7880 = vmatmul.mubr.bf16.gmra.mxu0 %v7748
      %v7881 = vpop.f32.mrf.mxu0
      %v7882 = vadd.f32 0.0, %v7881
      %v7883 = vpop.f32.mrf.mxu0
      %v7884 = vpop.f32.mrf.mxu0
      %v7885 = vadd.f32 0.0, %v7884
      %v7886 = vpop.f32.mrf.mxu0
      %7887 = vmatprep.mubr.bf16.mxu0 0
      %7888 = vmatmul.mubr.bf16.gmra.mxu0 %v7751
      %v7889 = vpop.f32.mrf.mxu0
      %v7890 = vadd.f32 0.0, %v7889
      %v7891 = vpop.f32.mrf.mxu0
      %v7892 = vpop.f32.mrf.mxu0
      %v7893 = vadd.f32 0.0, %v7892
      %v7894 = vpop.f32.mrf.mxu0
      %7895 = vmatprep.mubr.bf16.mxu0 0
      %7896 = vmatmul.mubr.bf16.gmra.mxu0 %v7754
      %v7897 = vpop.f32.mrf.mxu0
      %v7898 = vadd.f32 0.0, %v7897
      %v7899 = vpop.f32.mrf.mxu0
      %v7900 = vpop.f32.mrf.mxu0
      %v7901 = vadd.f32 0.0, %v7900
      %v7902 = vpop.f32.mrf.mxu0
      %7903 = vmatprep.mubr.bf16.mxu0 0
      %7904 = vmatmul.mubr.bf16.gmra.mxu0 %v7757
      %v7905 = vpop.f32.mrf.mxu0
      %v7906 = vadd.f32 0.0, %v7905
      %v7907 = vpop.f32.mrf.mxu0
      %v7908 = vpop.f32.mrf.mxu0
      %v7909 = vadd.f32 0.0, %v7908
      %v7910 = vpop.f32.mrf.mxu0
      %7911 = vmatprep.mubr.bf16.mxu0 0
      %7912 = vmatmul.mubr.bf16.gmra.mxu0 %v7760
      %v7913 = vpop.f32.mrf.mxu0
      %v7914 = vadd.f32 0.0, %v7913
      %v7915 = vpop.f32.mrf.mxu0
      %v7916 = vpop.f32.mrf.mxu0
      %v7917 = vadd.f32 0.0, %v7916
      %v7918 = vpop.f32.mrf.mxu0
      %7919 = vmatprep.mubr.bf16.mxu0 0
      %7920 = vmatmul.mubr.bf16.gmra.mxu0 %v7763
      %v7921 = vpop.f32.mrf.mxu0
      %v7922 = vadd.f32 0.0, %v7921
      %v7923 = vpop.f32.mrf.mxu0
      %v7924 = vpop.f32.mrf.mxu0
      %v7925 = vadd.f32 0.0, %v7924
      %v7926 = vpop.f32.mrf.mxu0
      %7927 = vmatprep.mubr.bf16.mxu0 0
      %7928 = vmatmul.mubr.bf16.gmra.mxu0 %v7766
      %v7929 = vpop.f32.mrf.mxu0
      %v7930 = vadd.f32 0.0, %v7929
      %v7931 = vpop.f32.mrf.mxu0
      %v7932 = vpop.f32.mrf.mxu0
      %v7933 = vadd.f32 0.0, %v7932
      %v7934 = vpop.f32.mrf.mxu0
      %7935 = vmatprep.mubr.bf16.mxu0 0
      %7936 = vmatmul.mubr.bf16.gmra.mxu0 %v7769
      %v7937 = vpop.f32.mrf.mxu0
      %v7938 = vadd.f32 0.0, %v7937
      %v7939 = vpop.f32.mrf.mxu0
      %v7940 = vpop.f32.mrf.mxu0
      %v7941 = vadd.f32 0.0, %v7940
      %v7942 = vpop.f32.mrf.mxu0
      %7943 = vmatprep.mubr.bf16.mxu0 0
      %7944 = vmatmul.mubr.bf16.gmra.mxu0 %v7772
      %v7945 = vpop.f32.mrf.mxu0
      %v7946 = vadd.f32 0.0, %v7945
      %v7947 = vpop.f32.mrf.mxu0
      %v7948 = vpop.f32.mrf.mxu0
      %v7949 = vadd.f32 0.0, %v7948
      %v7950 = vpop.f32.mrf.mxu0
      %7951 = vmatprep.mubr.bf16.mxu0 0
      %7952 = vmatmul.mubr.bf16.gmra.mxu0 %v7775
      %v7953 = vpop.f32.mrf.mxu0
      %v7954 = vadd.f32 0.0, %v7953
      %v7955 = vpop.f32.mrf.mxu0
      %v7956 = vpop.f32.mrf.mxu0
      %v7957 = vadd.f32 0.0, %v7956
      %v7958 = vpop.f32.mrf.mxu0
      %7959 = vmatprep.mubr.bf16.mxu0 0
      %7960 = vmatmul.mubr.bf16.gmra.mxu0 %v7778
      %v7961 = vpop.f32.mrf.mxu0
      %v7962 = vadd.f32 0.0, %v7961
      %v7963 = vpop.f32.mrf.mxu0
      %v7964 = vpop.f32.mrf.mxu0
      %v7965 = vadd.f32 0.0, %v7964
      %v7966 = vpop.f32.mrf.mxu0
      %7967 = vmatprep.mubr.bf16.mxu0 0
      %7968 = vmatmul.mubr.bf16.gmra.mxu0 %v7781
      %v7969 = vpop.f32.mrf.mxu0
      %v7970 = vadd.f32 0.0, %v7969
      %v7971 = vpop.f32.mrf.mxu0
      %v7972 = vpop.f32.mrf.mxu0
      %v7973 = vadd.f32 0.0, %v7972
      %v7974 = vpop.f32.mrf.mxu0
      %7975 = vmatprep.mubr.bf16.mxu0 0
      %7976 = vmatmul.mubr.bf16.gmra.mxu0 %v7784
      %v7977 = vpop.f32.mrf.mxu0
      %v7978 = vadd.f32 0.0, %v7977
      %v7979 = vpop.f32.mrf.mxu0
      %v7980 = vpop.f32.mrf.mxu0
      %v7981 = vadd.f32 0.0, %v7980
      %v7982 = vpop.f32.mrf.mxu0
      %7983 = vmatprep.mubr.bf16.mxu0 0
      %7984 = vmatmul.mubr.bf16.gmra.mxu0 %v7787
      %v7985 = vpop.f32.mrf.mxu0
      %v7986 = vadd.f32 0.0, %v7985
      %v7987 = vpop.f32.mrf.mxu0
      %v7988 = vpop.f32.mrf.mxu0
      %v7989 = vadd.f32 0.0, %v7988
      %v7990 = vpop.f32.mrf.mxu0
      %7991 = vmatprep.mubr.bf16.mxu0 0
      %7992 = vmatmul.mubr.bf16.gmra.mxu0 %v7790
      %v7993 = vpop.f32.mrf.mxu0
      %v7994 = vadd.f32 0.0, %v7993
      %v7995 = vpop.f32.mrf.mxu0
      %v7996 = vpop.f32.mrf.mxu0
      %v7997 = vadd.f32 0.0, %v7996
      %v7998 = vpop.f32.mrf.mxu0
      %7999 = vmatprep.mubr.bf16.mxu0 0
      %8000 = vmatmul.mubr.bf16.gmra.mxu0 %v7793
      %v8001 = vpop.f32.mrf.mxu0
      %v8002 = vadd.f32 0.0, %v8001
      %v8003 = vpop.f32.mrf.mxu0
      %v8004 = vpop.f32.mrf.mxu0
      %v8005 = vadd.f32 0.0, %v8004
      %v8006 = vpop.f32.mrf.mxu0
      %8007 = vmatprep.mubr.bf16.mxu0 0
      %8008 = vmatmul.mubr.bf16.gmra.mxu0 %v7796
      %v8009 = vpop.f32.mrf.mxu0
      %v8010 = vadd.f32 0.0, %v8009
      %v8011 = vpop.f32.mrf.mxu0
      %v8012 = vpop.f32.mrf.mxu0
      %v8013 = vadd.f32 0.0, %v8012
      %v8014 = vpop.f32.mrf.mxu0
      %8015 = vmatprep.mubr.bf16.mxu0 0
      %8016 = vmatmul.mubr.bf16.gmra.mxu0 %v7799
      %v8017 = vpop.f32.mrf.mxu0
      %v8018 = vadd.f32 0.0, %v8017
      %v8019 = vpop.f32.mrf.mxu0
      %v8020 = vpop.f32.mrf.mxu0
      %v8021 = vadd.f32 0.0, %v8020
      %v8022 = vpop.f32.mrf.mxu0
      %8023 = vmatprep.mubr.bf16.mxu0 0
      %8024 = vmatmul.mubr.bf16.gmra.mxu0 %v7802
      %v8025 = vpop.f32.mrf.mxu0
      %v8026 = vadd.f32 0.0, %v8025
      %v8027 = vpop.f32.mrf.mxu0
      %v8028 = vpop.f32.mrf.mxu0
      %v8029 = vadd.f32 0.0, %v8028
      %v8030 = vpop.f32.mrf.mxu0
      %8031 = vmatprep.mubr.bf16.mxu0 0
      %8032 = vmatmul.mubr.bf16.gmra.mxu0 %v7805
      %v8033 = vpop.f32.mrf.mxu0
      %v8034 = vadd.f32 0.0, %v8033
      %v8035 = vpop.f32.mrf.mxu0
      %v8036 = vpop.f32.mrf.mxu0
      %v8037 = vadd.f32 0.0, %v8036
      %v8038 = vpop.f32.mrf.mxu0
      %8039 = vmatprep.mubr.bf16.mxu0 0
      %8040 = vmatmul.mubr.bf16.gmra.mxu0 %v7808
      %v8041 = vpop.f32.mrf.mxu0
      %v8042 = vadd.f32 0.0, %v8041
      %v8043 = vpop.f32.mrf.mxu0
      %v8044 = vpop.f32.mrf.mxu0
      %v8045 = vadd.f32 0.0, %v8044
      %v8046 = vpop.f32.mrf.mxu0
      %8047 = vmatprep.mubr.bf16.mxu0 0
      %8048 = vmatmul.mubr.bf16.gmra.mxu0 %v7811
      %v8049 = vpop.f32.mrf.mxu0
      %v8050 = vadd.f32 0.0, %v8049
      %v8051 = vpop.f32.mrf.mxu0
      %v8052 = vpop.f32.mrf.mxu0
      %v8053 = vadd.f32 0.0, %v8052
      %v8054 = vpop.f32.mrf.mxu0
      %8055 = vmatprep.mubr.bf16.mxu0 0
      %8056 = vmatmul.mubr.bf16.gmra.mxu0 %v7814
      %v8057 = vpop.f32.mrf.mxu0
      %v8058 = vadd.f32 0.0, %v8057
      %v8059 = vpop.f32.mrf.mxu0
      %v8060 = vpop.f32.mrf.mxu0
      %v8061 = vadd.f32 0.0, %v8060
      %v8062 = vpop.f32.mrf.mxu0
      %8063 = vmatprep.mubr.bf16.mxu0 0
      %8064 = vmatmul.mubr.bf16.gmra.mxu0 %v7817
      %v8065 = vpop.f32.mrf.mxu0
      %v8066 = vadd.f32 0.0, %v8065
      %v8067 = vpop.f32.mrf.mxu0
      %v8068 = vpop.f32.mrf.mxu0
      %v8069 = vadd.f32 0.0, %v8068
      %v8070 = vpop.f32.mrf.mxu0
      %8071 = vmatprep.mubr.bf16.mxu0 0
      %8072 = vmatmul.mubr.bf16.gmra.mxu0 %v7820
      %v8073 = vpop.f32.mrf.mxu0
      %v8074 = vadd.f32 0.0, %v8073
      %v8075 = vpop.f32.mrf.mxu0
      %v8076 = vpop.f32.mrf.mxu0
      %v8077 = vadd.f32 0.0, %v8076
      %v8078 = vpop.f32.mrf.mxu0
      %8079 = vmatprep.mubr.bf16.mxu0 0
      %8080 = vmatmul.mubr.bf16.gmra.mxu0 %v7823
      %v8081 = vpop.f32.mrf.mxu0
      %v8082 = vadd.f32 0.0, %v8081
      %v8083 = vpop.f32.mrf.mxu0
      %v8084 = vpop.f32.mrf.mxu0
      %v8085 = vadd.f32 0.0, %v8084
      %v8086 = vpop.f32.mrf.mxu0
      %8087 = vmatprep.mubr.bf16.mxu0 0
      %8088 = vmatmul.mubr.bf16.gmra.mxu0 %v7826
      %v8089 = vpop.f32.mrf.mxu0
      %v8090 = vadd.f32 0.0, %v8089
      %v8091 = vpop.f32.mrf.mxu0
      %v8092 = vpop.f32.mrf.mxu0
      %v8093 = vadd.f32 0.0, %v8092
      %v8094 = vpop.f32.mrf.mxu0
      %8095 = vmatprep.mubr.bf16.mxu0 0
      %8096 = vmatmul.mubr.bf16.gmra.mxu0 %v7829
      %v8097 = vpop.f32.mrf.mxu0
      %v8098 = vadd.f32 0.0, %v8097
      %v8099 = vpop.f32.mrf.mxu0
      %v8100 = vpop.f32.mrf.mxu0
      %v8101 = vadd.f32 0.0, %v8100
      %v8102 = vpop.f32.mrf.mxu0
      %8103 = vmatprep.mubr.bf16.mxu0 0
      %8104 = vmatmul.mubr.bf16.gmra.mxu0 %v7832
      %v8105 = vpop.f32.mrf.mxu0
      %v8106 = vadd.f32 0.0, %v8105
      %v8107 = vpop.f32.mrf.mxu0
      %v8108 = vpop.f32.mrf.mxu0
      %v8109 = vadd.f32 0.0, %v8108
      %v8110 = vpop.f32.mrf.mxu0
      %8111 = vmatprep.mubr.bf16.mxu0 0
      %8112 = vmatmul.mubr.bf16.gmra.mxu0 %v7835
      %v8113 = vpop.f32.mrf.mxu0
      %v8114 = vadd.f32 0.0, %v8113
      %v8115 = vpop.f32.mrf.mxu0
      %v8116 = vpop.f32.mrf.mxu0
      %v8117 = vadd.f32 0.0, %v8116
      %v8118 = vpop.f32.mrf.mxu0
      %8119 = vmatprep.mubr.bf16.mxu0 0
      %8120 = vmatmul.mubr.bf16.gmra.mxu0 %v7838
      %v8121 = vpop.f32.mrf.mxu0
      %v8122 = vadd.f32 0.0, %v8121
      %v8123 = vpop.f32.mrf.mxu0
      %v8124 = vpop.f32.mrf.mxu0
      %v8125 = vadd.f32 0.0, %v8124
      %v8126 = vpop.f32.mrf.mxu0
      %8127 = vmatprep.mubr.bf16.mxu0 0
      %8128 = vmatmul.mubr.bf16.gmra.mxu0 %v7841
      %v8129 = vpop.f32.mrf.mxu0
      %v8130 = vadd.f32 0.0, %v8129
      %v8131 = vpop.f32.mrf.mxu0
      %v8132 = vpop.f32.mrf.mxu0
      %v8133 = vadd.f32 0.0, %v8132
      %v8134 = vpop.f32.mrf.mxu0
      %8135 = vdwg.mxu0
      %v8136 = vld [vmem:[%s5] sm:$0x1]
      %v8138 = vlaneseq
      %v8139 = vshrl.u32 %v8138, 7
      %v8140 = vsub.s32 0, %v8139
      %v8141 = vrot.slane %v8136, %v8140
      %v8143 = vmul.f32 %v7882, %v8141
      %v8144 = vmul.f32 %v7885, %v8141
      %v8145 = vmul.f32 %v7890, %v8141
      %v8146 = vmul.f32 %v7893, %v8141
      %v8147 = vmul.f32 %v7898, %v8141
      %v8148 = vmul.f32 %v7901, %v8141
      %v8149 = vmul.f32 %v7906, %v8141
      %v8150 = vmul.f32 %v7909, %v8141
      %v8151 = vmul.f32 %v7914, %v8141
      %v8152 = vmul.f32 %v7917, %v8141
      %v8153 = vmul.f32 %v7922, %v8141
      %v8154 = vmul.f32 %v7925, %v8141
      %v8155 = vmul.f32 %v7930, %v8141
      %v8156 = vmul.f32 %v7933, %v8141
      %v8157 = vmul.f32 %v7938, %v8141
      %v8158 = vmul.f32 %v7941, %v8141
      %v8159 = vmul.f32 %v7946, %v8141
      %v8160 = vmul.f32 %v7949, %v8141
      %v8161 = vmul.f32 %v7954, %v8141
      %v8162 = vmul.f32 %v7957, %v8141
      %v8163 = vmul.f32 %v7962, %v8141
      %v8164 = vmul.f32 %v7965, %v8141
      %v8165 = vmul.f32 %v7970, %v8141
      %v8166 = vmul.f32 %v7973, %v8141
      %v8167 = vmul.f32 %v7978, %v8141
      %v8168 = vmul.f32 %v7981, %v8141
      %v8169 = vmul.f32 %v7986, %v8141
      %v8170 = vmul.f32 %v7989, %v8141
      %v8171 = vmul.f32 %v7994, %v8141
      %v8172 = vmul.f32 %v7997, %v8141
      %v8173 = vmul.f32 %v8002, %v8141
      %v8174 = vmul.f32 %v8005, %v8141
      %v8175 = vmul.f32 %v8010, %v8141
      %v8176 = vmul.f32 %v8013, %v8141
      %v8177 = vmul.f32 %v8018, %v8141
      %v8178 = vmul.f32 %v8021, %v8141
      %v8179 = vmul.f32 %v8026, %v8141
      %v8180 = vmul.f32 %v8029, %v8141
      %v8181 = vmul.f32 %v8034, %v8141
      %v8182 = vmul.f32 %v8037, %v8141
      %v8183 = vmul.f32 %v8042, %v8141
      %v8184 = vmul.f32 %v8045, %v8141
      %v8185 = vmul.f32 %v8050, %v8141
      %v8186 = vmul.f32 %v8053, %v8141
      %v8187 = vmul.f32 %v8058, %v8141
      %v8188 = vmul.f32 %v8061, %v8141
      %v8189 = vmul.f32 %v8066, %v8141
      %v8190 = vmul.f32 %v8069, %v8141
      %v8191 = vmul.f32 %v8074, %v8141
      %v8192 = vmul.f32 %v8077, %v8141
      %v8193 = vmul.f32 %v8082, %v8141
      %v8194 = vmul.f32 %v8085, %v8141
      %v8195 = vmul.f32 %v8090, %v8141
      %v8196 = vmul.f32 %v8093, %v8141
      %v8197 = vmul.f32 %v8098, %v8141
      %v8198 = vmul.f32 %v8101, %v8141
      %v8199 = vmul.f32 %v8106, %v8141
      %v8200 = vmul.f32 %v8109, %v8141
      %v8201 = vmul.f32 %v8114, %v8141
      %v8202 = vmul.f32 %v8117, %v8141
      %v8203 = vmul.f32 %v8122, %v8141
      %v8204 = vmul.f32 %v8125, %v8141
      %v8205 = vmul.f32 %v8130, %v8141
      %v8206 = vmul.f32 %v8133, %v8141
      %v8207 = vld [vmem:[%s6] sm:$0x1]
      %v8209 = vlaneseq
      %v8210 = vshrl.u32 %v8209, 7
      %v8211 = vsub.s32 0, %v8210
      %v8212 = vrot.slane %v8207, %v8211
      %v8214 = vadd.f32 %v8143, %v8212
      %v8215 = vadd.f32 %v8144, %v8212
      %v8216 = vadd.f32 %v8145, %v8212
      %v8217 = vadd.f32 %v8146, %v8212
      %v8218 = vadd.f32 %v8147, %v8212
      %v8219 = vadd.f32 %v8148, %v8212
      %v8220 = vadd.f32 %v8149, %v8212
      %v8221 = vadd.f32 %v8150, %v8212
      %v8222 = vadd.f32 %v8151, %v8212
      %v8223 = vadd.f32 %v8152, %v8212
      %v8224 = vadd.f32 %v8153, %v8212
      %v8225 = vadd.f32 %v8154, %v8212
      %v8226 = vadd.f32 %v8155, %v8212
      %v8227 = vadd.f32 %v8156, %v8212
      %v8228 = vadd.f32 %v8157, %v8212
      %v8229 = vadd.f32 %v8158, %v8212
      %v8230 = vadd.f32 %v8159, %v8212
      %v8231 = vadd.f32 %v8160, %v8212
      %v8232 = vadd.f32 %v8161, %v8212
      %v8233 = vadd.f32 %v8162, %v8212
      %v8234 = vadd.f32 %v8163, %v8212
      %v8235 = vadd.f32 %v8164, %v8212
      %v8236 = vadd.f32 %v8165, %v8212
      %v8237 = vadd.f32 %v8166, %v8212
      %v8238 = vadd.f32 %v8167, %v8212
      %v8239 = vadd.f32 %v8168, %v8212
      %v8240 = vadd.f32 %v8169, %v8212
      %v8241 = vadd.f32 %v8170, %v8212
      %v8242 = vadd.f32 %v8171, %v8212
      %v8243 = vadd.f32 %v8172, %v8212
      %v8244 = vadd.f32 %v8173, %v8212
      %v8245 = vadd.f32 %v8174, %v8212
      %v8246 = vadd.f32 %v8175, %v8212
      %v8247 = vadd.f32 %v8176, %v8212
      %v8248 = vadd.f32 %v8177, %v8212
      %v8249 = vadd.f32 %v8178, %v8212
      %v8250 = vadd.f32 %v8179, %v8212
      %v8251 = vadd.f32 %v8180, %v8212
      %v8252 = vadd.f32 %v8181, %v8212
      %v8253 = vadd.f32 %v8182, %v8212
      %v8254 = vadd.f32 %v8183, %v8212
      %v8255 = vadd.f32 %v8184, %v8212
      %v8256 = vadd.f32 %v8185, %v8212
      %v8257 = vadd.f32 %v8186, %v8212
      %v8258 = vadd.f32 %v8187, %v8212
      %v8259 = vadd.f32 %v8188, %v8212
      %v8260 = vadd.f32 %v8189, %v8212
      %v8261 = vadd.f32 %v8190, %v8212
      %v8262 = vadd.f32 %v8191, %v8212
      %v8263 = vadd.f32 %v8192, %v8212
      %v8264 = vadd.f32 %v8193, %v8212
      %v8265 = vadd.f32 %v8194, %v8212
      %v8266 = vadd.f32 %v8195, %v8212
      %v8267 = vadd.f32 %v8196, %v8212
      %v8268 = vadd.f32 %v8197, %v8212
      %v8269 = vadd.f32 %v8198, %v8212
      %v8270 = vadd.f32 %v8199, %v8212
      %v8271 = vadd.f32 %v8200, %v8212
      %v8272 = vadd.f32 %v8201, %v8212
      %v8273 = vadd.f32 %v8202, %v8212
      %v8274 = vadd.f32 %v8203, %v8212
      %v8275 = vadd.f32 %v8204, %v8212
      %v8276 = vadd.f32 %v8205, %v8212
      %v8277 = vadd.f32 %v8206, %v8212
      %v8278 = vmax.f32 %v8214, 0.0
      %v8279 = vmax.f32 %v8215, 0.0
      %v8280 = vmax.f32 %v8216, 0.0
      %v8281 = vmax.f32 %v8217, 0.0
      %v8282 = vmax.f32 %v8218, 0.0
      %v8283 = vmax.f32 %v8219, 0.0
      %v8284 = vmax.f32 %v8220, 0.0
      %v8285 = vmax.f32 %v8221, 0.0
      %v8286 = vmax.f32 %v8222, 0.0
      %v8287 = vmax.f32 %v8223, 0.0
      %v8288 = vmax.f32 %v8224, 0.0
      %v8289 = vmax.f32 %v8225, 0.0
      %v8290 = vmax.f32 %v8226, 0.0
      %v8291 = vmax.f32 %v8227, 0.0
      %v8292 = vmax.f32 %v8228, 0.0
      %v8293 = vmax.f32 %v8229, 0.0
      %v8294 = vmax.f32 %v8230, 0.0
      %v8295 = vmax.f32 %v8231, 0.0
      %v8296 = vmax.f32 %v8232, 0.0
      %v8297 = vmax.f32 %v8233, 0.0
      %v8298 = vmax.f32 %v8234, 0.0
      %v8299 = vmax.f32 %v8235, 0.0
      %v8300 = vmax.f32 %v8236, 0.0
      %v8301 = vmax.f32 %v8237, 0.0
      %v8302 = vmax.f32 %v8238, 0.0
      %v8303 = vmax.f32 %v8239, 0.0
      %v8304 = vmax.f32 %v8240, 0.0
      %v8305 = vmax.f32 %v8241, 0.0
      %v8306 = vmax.f32 %v8242, 0.0
      %v8307 = vmax.f32 %v8243, 0.0
      %v8308 = vmax.f32 %v8244, 0.0
      %v8309 = vmax.f32 %v8245, 0.0
      %v8310 = vmax.f32 %v8246, 0.0
      %v8311 = vmax.f32 %v8247, 0.0
      %v8312 = vmax.f32 %v8248, 0.0
      %v8313 = vmax.f32 %v8249, 0.0
      %v8314 = vmax.f32 %v8250, 0.0
      %v8315 = vmax.f32 %v8251, 0.0
      %v8316 = vmax.f32 %v8252, 0.0
      %v8317 = vmax.f32 %v8253, 0.0
      %v8318 = vmax.f32 %v8254, 0.0
      %v8319 = vmax.f32 %v8255, 0.0
      %v8320 = vmax.f32 %v8256, 0.0
      %v8321 = vmax.f32 %v8257, 0.0
      %v8322 = vmax.f32 %v8258, 0.0
      %v8323 = vmax.f32 %v8259, 0.0
      %v8324 = vmax.f32 %v8260, 0.0
      %v8325 = vmax.f32 %v8261, 0.0
      %v8326 = vmax.f32 %v8262, 0.0
      %v8327 = vmax.f32 %v8263, 0.0
      %v8328 = vmax.f32 %v8264, 0.0
      %v8329 = vmax.f32 %v8265, 0.0
      %v8330 = vmax.f32 %v8266, 0.0
      %v8331 = vmax.f32 %v8267, 0.0
      %v8332 = vmax.f32 %v8268, 0.0
      %v8333 = vmax.f32 %v8269, 0.0
      %v8334 = vmax.f32 %v8270, 0.0
      %v8335 = vmax.f32 %v8271, 0.0
      %v8336 = vmax.f32 %v8272, 0.0
      %v8337 = vmax.f32 %v8273, 0.0
      %v8338 = vmax.f32 %v8274, 0.0
      %v8339 = vmax.f32 %v8275, 0.0
      %v8340 = vmax.f32 %v8276, 0.0
      %v8341 = vmax.f32 %v8277, 0.0
      %v8342 = vsel %vm3390, %v8278, -inf
      %v8343 = vsel %vm3390, %v8279, -inf
      %v8344 = vsel %vm3390, %v8280, -inf
      %v8345 = vmax.f32 %v8342, %v8344
      %v8346 = vsel %vm3390, %v8281, -inf
      %v8347 = vmax.f32 %v8343, %v8346
      %v8348 = vsel %vm3390, %v8282, -inf
      %v8349 = vmax.f32 %v8345, %v8348
      %v8350 = vsel %vm3390, %v8283, -inf
      %v8351 = vmax.f32 %v8347, %v8350
      %v8352 = vsel %vm3390, %v8284, -inf
      %v8353 = vmax.f32 %v8349, %v8352
      %v8354 = vsel %vm3390, %v8285, -inf
      %v8355 = vmax.f32 %v8351, %v8354
      %v8356 = vsel %vm3390, %v8286, -inf
      %v8357 = vmax.f32 %v8353, %v8356
      %v8358 = vsel %vm3390, %v8287, -inf
      %v8359 = vmax.f32 %v8355, %v8358
      %v8360 = vsel %vm3390, %v8288, -inf
      %v8361 = vmax.f32 %v8357, %v8360
      %v8362 = vsel %vm3390, %v8289, -inf
      %v8363 = vmax.f32 %v8359, %v8362
      %v8364 = vsel %vm3390, %v8290, -inf
      %v8365 = vmax.f32 %v8361, %v8364
      %v8366 = vsel %vm3390, %v8291, -inf
      %v8367 = vmax.f32 %v8363, %v8366
      %v8368 = vsel %vm3390, %v8292, -inf
      %v8369 = vmax.f32 %v8365, %v8368
      %v8370 = vsel %vm3390, %v8293, -inf
      %v8371 = vmax.f32 %v8367, %v8370
      %v8372 = vsel %vm3390, %v8294, -inf
      %v8373 = vmax.f32 %v8369, %v8372
      %v8374 = vsel %vm3390, %v8295, -inf
      %v8375 = vmax.f32 %v8371, %v8374
      %v8376 = vsel %vm3390, %v8296, -inf
      %v8377 = vmax.f32 %v8373, %v8376
      %v8378 = vsel %vm3390, %v8297, -inf
      %v8379 = vmax.f32 %v8375, %v8378
      %v8380 = vsel %vm3390, %v8298, -inf
      %v8381 = vmax.f32 %v8377, %v8380
      %v8382 = vsel %vm3390, %v8299, -inf
      %v8383 = vmax.f32 %v8379, %v8382
      %v8384 = vsel %vm3390, %v8300, -inf
      %v8385 = vmax.f32 %v8381, %v8384
      %v8386 = vsel %vm3390, %v8301, -inf
      %v8387 = vmax.f32 %v8383, %v8386
      %v8388 = vsel %vm3390, %v8302, -inf
      %v8389 = vmax.f32 %v8385, %v8388
      %v8390 = vsel %vm3390, %v8303, -inf
      %v8391 = vmax.f32 %v8387, %v8390
      %v8392 = vsel %vm3390, %v8304, -inf
      %v8393 = vmax.f32 %v8389, %v8392
      %v8394 = vsel %vm3390, %v8305, -inf
      %v8395 = vmax.f32 %v8391, %v8394
      %v8396 = vsel %vm3390, %v8306, -inf
      %v8397 = vmax.f32 %v8393, %v8396
      %v8398 = vsel %vm3390, %v8307, -inf
      %v8399 = vmax.f32 %v8395, %v8398
      %v8400 = vsel %vm3390, %v8308, -inf
      %v8401 = vmax.f32 %v8397, %v8400
      %v8402 = vsel %vm3390, %v8309, -inf
      %v8403 = vmax.f32 %v8399, %v8402
      %v8404 = vmax.f32 %v8401, %v8403
      %v8405 = vrot.slane %v8404, 4
      %v8406 = vmax.f32 %v8404, %v8405
      %v8407 = vrot.slane %v8406, 2
      %v8408 = vmax.f32 %v8406, %v8407
      %v8409 = vrot.slane %v8408, 1
      %v8410 = vmax.f32 %v8408, %v8409
      %v8411 = vsel %vm3390, %v8310, -inf
      %v8412 = vsel %vm3390, %v8311, -inf
      %v8413 = vsel %vm3390, %v8312, -inf
      %v8414 = vmax.f32 %v8411, %v8413
      %v8415 = vsel %vm3390, %v8313, -inf
      %v8416 = vmax.f32 %v8412, %v8415
      %v8417 = vsel %vm3390, %v8314, -inf
      %v8418 = vmax.f32 %v8414, %v8417
      %v8419 = vsel %vm3390, %v8315, -inf
      %v8420 = vmax.f32 %v8416, %v8419
      %v8421 = vsel %vm3390, %v8316, -inf
      %v8422 = vmax.f32 %v8418, %v8421
      %v8423 = vsel %vm3390, %v8317, -inf
      %v8424 = vmax.f32 %v8420, %v8423
      %v8425 = vsel %vm3390, %v8318, -inf
      %v8426 = vmax.f32 %v8422, %v8425
      %v8427 = vsel %vm3390, %v8319, -inf
      %v8428 = vmax.f32 %v8424, %v8427
      %v8429 = vsel %vm3390, %v8320, -inf
      %v8430 = vmax.f32 %v8426, %v8429
      %v8431 = vsel %vm3390, %v8321, -inf
      %v8432 = vmax.f32 %v8428, %v8431
      %v8433 = vsel %vm3390, %v8322, -inf
      %v8434 = vmax.f32 %v8430, %v8433
      %v8435 = vsel %vm3390, %v8323, -inf
      %v8436 = vmax.f32 %v8432, %v8435
      %v8437 = vsel %vm3390, %v8324, -inf
      %v8438 = vmax.f32 %v8434, %v8437
      %v8439 = vsel %vm3390, %v8325, -inf
      %v8440 = vmax.f32 %v8436, %v8439
      %v8441 = vsel %vm3390, %v8326, -inf
      %v8442 = vmax.f32 %v8438, %v8441
      %v8443 = vsel %vm3390, %v8327, -inf
      %v8444 = vmax.f32 %v8440, %v8443
      %v8445 = vsel %vm3390, %v8328, -inf
      %v8446 = vmax.f32 %v8442, %v8445
      %v8447 = vsel %vm3390, %v8329, -inf
      %v8448 = vmax.f32 %v8444, %v8447
      %v8449 = vsel %vm3390, %v8330, -inf
      %v8450 = vmax.f32 %v8446, %v8449
      %v8451 = vsel %vm3390, %v8331, -inf
      %v8452 = vmax.f32 %v8448, %v8451
      %v8453 = vsel %vm3390, %v8332, -inf
      %v8454 = vmax.f32 %v8450, %v8453
      %v8455 = vsel %vm3390, %v8333, -inf
      %v8456 = vmax.f32 %v8452, %v8455
      %v8457 = vsel %vm3390, %v8334, -inf
      %v8458 = vmax.f32 %v8454, %v8457
      %v8459 = vsel %vm3390, %v8335, -inf
      %v8460 = vmax.f32 %v8456, %v8459
      %v8461 = vsel %vm3390, %v8336, -inf
      %v8462 = vmax.f32 %v8458, %v8461
      %v8463 = vsel %vm3390, %v8337, -inf
      %v8464 = vmax.f32 %v8460, %v8463
      %v8465 = vsel %vm3390, %v8338, -inf
      %v8466 = vmax.f32 %v8462, %v8465
      %v8467 = vsel %vm3390, %v8339, -inf
      %v8468 = vmax.f32 %v8464, %v8467
      %v8469 = vsel %vm3390, %v8340, -inf
      %v8470 = vmax.f32 %v8466, %v8469
      %v8471 = vsel %vm3390, %v8341, -inf
      %v8472 = vmax.f32 %v8468, %v8471
      %v8473 = vmax.f32 %v8470, %v8472
      %v8474 = vrot.slane %v8473, 4
      %v8475 = vmax.f32 %v8473, %v8474
      %v8476 = vrot.slane %v8475, 2
      %v8477 = vmax.f32 %v8475, %v8476
      %v8478 = vrot.slane %v8477, 1
      %v8479 = vmax.f32 %v8477, %v8478
      %v8480 = vsel %vm3390, %v8278, 0.0
      %v8481 = vsel %vm3390, %v8279, 0.0
      %v8482 = vadd.f32 %v8480, %v8481
      %v8483 = vsel %vm3390, %v8280, 0.0
      %v8484 = vadd.f32 %v8482, %v8483
      %v8485 = vsel %vm3390, %v8281, 0.0
      %v8486 = vadd.f32 %v8484, %v8485
      %v8487 = vsel %vm3390, %v8282, 0.0
      %v8488 = vadd.f32 %v8486, %v8487
      %v8489 = vsel %vm3390, %v8283, 0.0
      %v8490 = vadd.f32 %v8488, %v8489
      %v8491 = vsel %vm3390, %v8284, 0.0
      %v8492 = vadd.f32 %v8490, %v8491
      %v8493 = vsel %vm3390, %v8285, 0.0
      %v8494 = vadd.f32 %v8492, %v8493
      %v8495 = vsel %vm3390, %v8286, 0.0
      %v8496 = vadd.f32 %v8494, %v8495
      %v8497 = vsel %vm3390, %v8287, 0.0
      %v8498 = vadd.f32 %v8496, %v8497
      %v8499 = vsel %vm3390, %v8288, 0.0
      %v8500 = vadd.f32 %v8498, %v8499
      %v8501 = vsel %vm3390, %v8289, 0.0
      %v8502 = vadd.f32 %v8500, %v8501
      %v8503 = vsel %vm3390, %v8290, 0.0
      %v8504 = vadd.f32 %v8502, %v8503
      %v8505 = vsel %vm3390, %v8291, 0.0
      %v8506 = vadd.f32 %v8504, %v8505
      %v8507 = vsel %vm3390, %v8292, 0.0
      %v8508 = vadd.f32 %v8506, %v8507
      %v8509 = vsel %vm3390, %v8293, 0.0
      %v8510 = vadd.f32 %v8508, %v8509
      %v8511 = vsel %vm3390, %v8294, 0.0
      %v8512 = vadd.f32 %v8510, %v8511
      %v8513 = vsel %vm3390, %v8295, 0.0
      %v8514 = vadd.f32 %v8512, %v8513
      %v8515 = vsel %vm3390, %v8296, 0.0
      %v8516 = vadd.f32 %v8514, %v8515
      %v8517 = vsel %vm3390, %v8297, 0.0
      %v8518 = vadd.f32 %v8516, %v8517
      %v8519 = vsel %vm3390, %v8298, 0.0
      %v8520 = vadd.f32 %v8518, %v8519
      %v8521 = vsel %vm3390, %v8299, 0.0
      %v8522 = vadd.f32 %v8520, %v8521
      %v8523 = vsel %vm3390, %v8300, 0.0
      %v8524 = vadd.f32 %v8522, %v8523
      %v8525 = vsel %vm3390, %v8301, 0.0
      %v8526 = vadd.f32 %v8524, %v8525
      %v8527 = vsel %vm3390, %v8302, 0.0
      %v8528 = vadd.f32 %v8526, %v8527
      %v8529 = vsel %vm3390, %v8303, 0.0
      %v8530 = vadd.f32 %v8528, %v8529
      %v8531 = vsel %vm3390, %v8304, 0.0
      %v8532 = vadd.f32 %v8530, %v8531
      %v8533 = vsel %vm3390, %v8305, 0.0
      %v8534 = vadd.f32 %v8532, %v8533
      %v8535 = vsel %vm3390, %v8306, 0.0
      %v8536 = vadd.f32 %v8534, %v8535
      %v8537 = vsel %vm3390, %v8307, 0.0
      %v8538 = vadd.f32 %v8536, %v8537
      %v8539 = vsel %vm3390, %v8308, 0.0
      %v8540 = vadd.f32 %v8538, %v8539
      %v8541 = vsel %vm3390, %v8309, 0.0
      %v8542 = vadd.f32 %v8540, %v8541
      %v8543 = vrot.slane %v8542, 4
      %v8544 = vadd.f32 %v8542, %v8543
      %v8545 = vrot.slane %v8544, 2
      %v8546 = vadd.f32 %v8544, %v8545
      %v8547 = vrot.slane %v8546, 1
      %v8548 = vadd.f32 %v8546, %v8547
      %v8549 = vsel %vm3390, %v8310, 0.0
      %v8550 = vsel %vm3390, %v8311, 0.0
      %v8551 = vadd.f32 %v8549, %v8550
      %v8552 = vsel %vm3390, %v8312, 0.0
      %v8553 = vadd.f32 %v8551, %v8552
      %v8554 = vsel %vm3390, %v8313, 0.0
      %v8555 = vadd.f32 %v8553, %v8554
      %v8556 = vsel %vm3390, %v8314, 0.0
      %v8557 = vadd.f32 %v8555, %v8556
      %v8558 = vsel %vm3390, %v8315, 0.0
      %v8559 = vadd.f32 %v8557, %v8558
      %v8560 = vsel %vm3390, %v8316, 0.0
      %v8561 = vadd.f32 %v8559, %v8560
      %v8562 = vsel %vm3390, %v8317, 0.0
      %v8563 = vadd.f32 %v8561, %v8562
      %v8564 = vsel %vm3390, %v8318, 0.0
      %v8565 = vadd.f32 %v8563, %v8564
      %v8566 = vsel %vm3390, %v8319, 0.0
      %v8567 = vadd.f32 %v8565, %v8566
      %v8568 = vsel %vm3390, %v8320, 0.0
      %v8569 = vadd.f32 %v8567, %v8568
      %v8570 = vsel %vm3390, %v8321, 0.0
      %v8571 = vadd.f32 %v8569, %v8570
      %v8572 = vsel %vm3390, %v8322, 0.0
      %v8573 = vadd.f32 %v8571, %v8572
      %v8574 = vsel %vm3390, %v8323, 0.0
      %v8575 = vadd.f32 %v8573, %v8574
      %v8576 = vsel %vm3390, %v8324, 0.0
      %v8577 = vadd.f32 %v8575, %v8576
      %v8578 = vsel %vm3390, %v8325, 0.0
      %v8579 = vadd.f32 %v8577, %v8578
      %v8580 = vsel %vm3390, %v8326, 0.0
      %v8581 = vadd.f32 %v8579, %v8580
      %v8582 = vsel %vm3390, %v8327, 0.0
      %v8583 = vadd.f32 %v8581, %v8582
      %v8584 = vsel %vm3390, %v8328, 0.0
      %v8585 = vadd.f32 %v8583, %v8584
      %v8586 = vsel %vm3390, %v8329, 0.0
      %v8587 = vadd.f32 %v8585, %v8586
      %v8588 = vsel %vm3390, %v8330, 0.0
      %v8589 = vadd.f32 %v8587, %v8588
      %v8590 = vsel %vm3390, %v8331, 0.0
      %v8591 = vadd.f32 %v8589, %v8590
      %v8592 = vsel %vm3390, %v8332, 0.0
      %v8593 = vadd.f32 %v8591, %v8592
      %v8594 = vsel %vm3390, %v8333, 0.0
      %v8595 = vadd.f32 %v8593, %v8594
      %v8596 = vsel %vm3390, %v8334, 0.0
      %v8597 = vadd.f32 %v8595, %v8596
      %v8598 = vsel %vm3390, %v8335, 0.0
      %v8599 = vadd.f32 %v8597, %v8598
      %v8600 = vsel %vm3390, %v8336, 0.0
      %v8601 = vadd.f32 %v8599, %v8600
      %v8602 = vsel %vm3390, %v8337, 0.0
      %v8603 = vadd.f32 %v8601, %v8602
      %v8604 = vsel %vm3390, %v8338, 0.0
      %v8605 = vadd.f32 %v8603, %v8604
      %v8606 = vsel %vm3390, %v8339, 0.0
      %v8607 = vadd.f32 %v8605, %v8606
      %v8608 = vsel %vm3390, %v8340, 0.0
      %v8609 = vadd.f32 %v8607, %v8608
      %v8610 = vsel %vm3390, %v8341, 0.0
      %v8611 = vadd.f32 %v8609, %v8610
      %v8612 = vrot.slane %v8611, 4
      %v8613 = vadd.f32 %v8611, %v8612
      %v8614 = vrot.slane %v8613, 2
      %v8615 = vadd.f32 %v8613, %v8614
      %v8616 = vrot.slane %v8615, 1
      %v8617 = vadd.f32 %v8615, %v8616
      %v8618 = vrcp.pop 256.0
      %v8619 = vmul.f32 %v8548, %v8618
      %v8620 = vmul.f32 %v8617, %v8618
      %vm8623 = vcmask 1041409
      %v8624 = vsel %vm8623, %v8479, %v8410
      %v8628 = vsel %vm8623, %v8620, %v8619
      %8629 = vrot.lane.b32.xlu0 %v8628, 16
      %v8630 = vpop.permute.xlu0 %8629
      %v8632 = vsel %vm3390, %v8624, %v8630
      %v8633 = vpack.c.bf16 %v8632, %v8632
      %v8634 = vld [vmem:[%s325] sm:$0xf]
      %v8635 = vld [vmem:[%s325 + $0x4] sm:$0xf]
      %v8636 = vld [vmem:[%s325 + $0x8] sm:$0xf]
      %v8637 = vld [vmem:[%s325 + $0xc] sm:$0xf]
      %v8642 = vunpack.c.l.b16 %v8634
      %v8643 = vunpack.c.l.b16 %v8635
      %v8644 = vunpack.c.l.b16 %v8636
      %v8645 = vunpack.c.l.b16 %v8637
      %v8646 = vpack.c.b16 %v8643, %v8642
      %v8647 = vpack.c.b16 %v8645, %v8644
      %v8651 = vsel %vm3650, %v8633, 0
      %8653 = vmatprep.subr.bf16.mxu0 0
      %8654 = vmatpush1.bf16.msra.mxu0 0
      %8655 = vmatprep.subr.bf16.mxu0 0
      %8656 = vmatpush1.bf16.msra.mxu0 0
      %8657 = vmatprep.subr.bf16.mxu0 0
      %8658 = vmatpush1.bf16.msra.mxu0 0
      %8659 = vmatprep.subr.bf16.mxu0 0
      %8660 = vmatpush1.bf16.msra.mxu0 0
      %8661 = vmatprep.subr.bf16.mxu0 0
      %8662 = vmatpush1.bf16.msra.mxu0 0
      %8663 = vmatprep.subr.bf16.mxu0 0
      %8664 = vmatpush1.bf16.msra.mxu0 0
      %8665 = vmatprep.subr.bf16.mxu0 0
      %8666 = vmatpush1.bf16.msra.mxu0 %v8647
      %8667 = vmatprep.subr.bf16.mxu0 0
      %8668 = vmatpush1.bf16.msra.mxu0 %v8646
      %8669 = vmatprep.subr.bf16.mxu0 0
      %8670 = vmatpush2.bf16.msra.mxu0 0
      %8671 = vmatprep.subr.bf16.mxu0 0
      %8672 = vmatpush2.bf16.msra.mxu0 0
      %8673 = vmatprep.subr.bf16.mxu0 0
      %8674 = vmatpush2.bf16.msra.mxu0 0
      %8675 = vmatprep.subr.bf16.mxu0 0
      %8676 = vmatpush2.bf16.msra.mxu0 0
      %8677 = vmatprep.subr.bf16.mxu0 0
      %8678 = vmatpush2.bf16.msra.mxu0 0
      %8679 = vmatprep.subr.bf16.mxu0 0
      %8680 = vmatpush2.bf16.msra.mxu0 0
      %8681 = vmatprep.subr.bf16.mxu0 0
      %8682 = vmatpush2.bf16.msra.mxu0 0
      %8683 = vmatprep.subr.bf16.mxu0 0
      %8684 = vmatpush2.bf16.msra.mxu0 0
      %8685 = vmatprep.mubr.bf16.mxu0 0
      %8686 = vmatmul.mubr.bf16.gmra.mxu0 %v8651
      %v8687 = vpop.f32.mrf.mxu0
      %v8688 = vadd.f32 0.0, %v8687
      %v8689 = vpop.f32.mrf.mxu0
      %v8690 = vpop.f32.mrf.mxu0
      %v8691 = vpop.f32.mrf.mxu0
      %8692 = vdwg.mxu0
      %vm8693 = vcmask 74752
      %8694 = vst.msk [vmem:[%s330] sm:$0x3] %vm8693, %v8688
      %p8695 = scmp.lt.s32.totalorder %s19, 1
      %s8696 = scalar_select %p8695, %s19, 1
      %s8697 = smul.addr %s8696, 2
      %s8698 = scalar_lea.vmem %s8, %s8697
      // Predicated region
      $region53: #{eye_model_forward.1} parent=51 // pred_check
        %p8699 = pneg %p215
      $region54: #{eye_model_forward.1} parent=51 // pred_check_branch
        %8701 = sbr.rel (%p8699) target = $region56
      $region55: #{eye_model_forward.1} parent=51 // pred_region
        _
      $region56: #{eye_model_forward.1} parent=51 // pred_fallthru
        _
    $region52: #{eye_model_forward.1} parent=5 // pred_fallthru
      _
    %p8702 = scmp.le.s32.totalorder 2, %s14
    // Predicated region
    $region57: #{eye_model_forward.1} parent=5 // pred_check
      %p8703 = pneg %p8702
    $region58: #{eye_model_forward.1} parent=5 // pred_check_branch
      %8705 = sbr.rel (%p8703) target = $region60
    $region59: #{eye_model_forward.1} parent=5 // pred_region
      %s8706 = ssub.s32 %s14, 2
      // Predicated region
      $region61: #{eye_model_forward.1} parent=59 // pred_check
        %p8707 = pneg %p221
      $region62: #{eye_model_forward.1} parent=59 // pred_check_branch
        %8709 = sbr.rel (%p8707) target = $region64
      $region63: #{eye_model_forward.1} parent=59 // pred_region
        %p8710 = scmp.lt.s32.totalorder %s20, 1
        %s8711 = scalar_select %p8710, %s20, 1
        %s8712 = smul.addr %s8711, 2
        %s8713 = scalar_lea.vmem %s8, %s8712
      $region64: #{eye_model_forward.1} parent=59 // pred_fallthru
        _
    $region60: #{eye_model_forward.1} parent=5 // pred_fallthru
      _
  $region6: #{eye_model_forward.1} parent=0 // loop_footer
    %s18 = sadd.s32 1, %s14
  $region7: #{eye_model_forward.1} parent=0 // loop_footer_branch
    %13 = sbr.rel target = $region3
  $region8: #{eye_model_forward.1} parent=0 // loop_exit
    _

</llo_original>
